<compile_context>
chip_gen: v7x
topology: tpu7x:2x2x1
jax: 0.10.0
libtpu: 0.0.40
codegen_flags: <defaults>
</compile_context>

<pallas_src>
import functools

import numpy as np
import jax
import jax.numpy as jnp
from jax import lax
from jax.experimental import pallas as pl
from jax.experimental.pallas import tpu as pltpu


# --------------------------- shape bookkeeping ---------------------------

def _dims(H, W):
    H1 = H - 2                      # conv1: kernel (3,1), stride (1,3), no pad
    W1 = (W - 1) // 3 + 1
    H2 = H1 - 2                     # conv2: kernel (3,1), stride (1,3), no pad
    W2 = (W1 - 1) // 3 + 1
    H3 = (H2 + 1) // 2 + 1          # conv3: 1x1, stride 2, pad 1
    W3 = (W2 + 1) // 2 + 1
    return H1, W1, H2, W2, H3, W3


# ------------------------------ fused kernel ------------------------------

def _fused_cnn_kernel(x_ref, mask_ref, sel_ref, pool_ref,
                      w1_ref, b1_ref, w2_ref, b2_ref, w3_ref, b3_ref,
                      w11_ref, b11_ref, w12_ref, b12_ref,
                      w21_ref, b21_ref, w22_ref, b22_ref,
                      fcw_ref, fcb_ref, o_ref,
                      p32_ref, p64_ref,
                      *, B_tile, H, W2, H3, W3, Wp, Np, Ntot, M1, M2, m):
    f32, bf16 = jnp.float32, jnp.bfloat16

    # Zero the padded-scratch margins once per invocation so ring-row taps that
    # fall outside the stacked batch slab read finite zeros (ring rows are
    # masked to 0 afterwards anyway; this just keeps everything NaN/Inf free).
    p32_ref[0:m, :] = jnp.zeros((m, 32), bf16)
    p32_ref[m + Ntot:2 * m + Ntot, :] = jnp.zeros((m, 32), bf16)
    p64_ref[0:m, :] = jnp.zeros((m, 64), bf16)
    p64_ref[m + Ntot:2 * m + Ntot, :] = jnp.zeros((m, 64), bf16)

    mask = mask_ref[...]                                        # (Ntot, 1) f32

    def masked_relu(v):            # zero the pad ring (NaN-safe select)
        return jnp.where(mask > 0.0, jnp.maximum(v, 0.0), 0.0)

    # ---- conv1: Conv2d(1, 8, (3,1), stride=(1,3)) + ReLU --------------------
    # rows = (image, input row), lanes = (column j, channel); 3 per-tap dots
    # against host-built block-diagonal weights.
    x = x_ref[...].reshape(B_tile * H, W2).astype(bf16)
    acc = None
    for di in range(3):
        w = w1_ref[di * W2:(di + 1) * W2, :]                    # (W2, W2*8)
        d = jnp.dot(x[di:di + M1, :], w, preferred_element_type=f32)
        acc = d if acc is None else acc + d
    a1 = jnp.maximum(acc + b1_ref[...], 0.0).astype(bf16)       # (M1, W2*8)

    # ---- conv2: Conv2d(8, 16, (3,1), stride=(1,3)) + ReLU -------------------
    acc = None
    for di in range(3):
        w = w2_ref[di * W2 * 8:(di + 1) * W2 * 8, :]            # (W2*8, W2*16)
        d = jnp.dot(a1[di:di + M2, :], w, preferred_element_type=f32)
        acc = d if acc is None else acc + d
    a2 = jnp.maximum(acc + b2_ref[...], 0.0).astype(bf16)       # (M2, W2*16)

    # ---- conv3: Conv2d(16, 32, 1, stride=2, pad=1) + ReLU -------------------
    # Strided/padded gather into the padded-flat (Hp x Wp) per-image layout via
    # 0/1 selection matmuls (one per source column), then the 1x1 conv.
    g16 = None
    for j in range(W2):
        d = jnp.dot(sel_ref[j], a2[:, j * 16:(j + 1) * 16],
                    preferred_element_type=f32)
        g16 = d if g16 is None else g16 + d                     # (Ntot, 16)
    a3 = masked_relu(jnp.dot(g16.astype(bf16), w3_ref[...],
                             preferred_element_type=f32) + b3_ref[...])  # (Ntot,32)

    # ---- 3x3 same conv (+bias+ReLU): 9 per-tap dots off the padded scratch --
    def conv3x3(p_ref, cin, w_ref, b_ref):
        acc = None
        k = 0
        for di in (-1, 0, 1):
            for dj in (-1, 0, 1):
                off = di * Wp + dj
                lhs = p_ref[m + off:m + off + Ntot, :]          # (Ntot, cin) bf16
                w_k = w_ref[k * cin:(k + 1) * cin, :]           # (cin, cout) bf16
                d = jnp.dot(lhs, w_k, preferred_element_type=f32)
                acc = d if acc is None else acc + d
                k += 1
        return masked_relu(acc + b_ref[...])

    # ---- bottleneck1 + fused residual ---------------------------------------
    p32_ref[m:m + Ntot, :] = a3.astype(bf16)
    h = conv3x3(p32_ref, 32, w11_ref, b11_ref)
    p32_ref[m:m + Ntot, :] = h.astype(bf16)
    a4 = conv3x3(p32_ref, 32, w12_ref, b12_ref)
    ar = a3 + a4                                                 # f32 residual

    # ---- bottleneck2 ---------------------------------------------------------
    p32_ref[m:m + Ntot, :] = ar.astype(bf16)
    h2 = conv3x3(p32_ref, 32, w21_ref, b21_ref)                  # (Ntot, 64)
    p64_ref[m:m + Ntot, :] = h2.astype(bf16)
    a5 = conv3x3(p64_ref, 64, w22_ref, b22_ref)                  # (Ntot, 64)

    # ---- AdaptiveAvgPool2d((1,1)) + flatten + Linear(64, 20) ----------------
    pooled = jnp.dot(pool_ref[...], a5.astype(bf16),
                     preferred_element_type=f32) * (1.0 / (H3 * W3))  # (B_tile,64)
    o_ref[...] = jnp.dot(pooled.astype(bf16), fcw_ref[...],
                         preferred_element_type=f32) + fcb_ref[...]


# -------------------------------- wrapper ---------------------------------

def cnn_forward(x, params, *, b_tile=8):
    """x: (B, H, W) float32 (PyTorch input before unsqueeze(1)). Returns (B, 20)."""
    B, H, W = x.shape
    H1, W1, H2, W2, H3, W3 = _dims(H, W)
    Hp, Wp = H3 + 2, W3 + 2
    Np = Hp * Wp
    f32, bf16 = jnp.float32, jnp.bfloat16

    # B_tile = 8 gives M = B_tile*Np rows per MXU matmul (288 at the test
    # geometry, in the v6e/v7x sweet spot); keep B a multiple of 16 for an even
    # grid length on v7x.  Small batches just use B_tile = B.
    B_tile = max(1, min(b_tile, B))
    B_pad = ((B + B_tile - 1) // B_tile) * B_tile
    steps = B_pad // B_tile
    Ntot = B_tile * Np
    M1 = B_tile * H - 2
    M2 = B_tile * H - 4
    m = ((Wp + 1 + 7) // 8) * 8      # scratch margin (>= Wp+1, sublane aligned)

    # conv1/conv2 have kernel width 1 and width-stride 3 -> only input columns
    # 9*j (j < W2) influence the output; gather them once (output unchanged).
    x_cols = x[:, :, 0:9 * (W2 - 1) + 1:9].astype(f32)           # (B, H, W2)
    if B_pad != B:
        x_cols = jnp.concatenate(
            [x_cols, jnp.zeros((B_pad - B, H, W2), f32)], axis=0)

    # ---------------- host-side constants (shape-only) ----------------------
    msk = np.zeros((Np,), np.float32)                 # interior of padded grid
    for ip in range(1, H3 + 1):
        for jp in range(1, W3 + 1):
            msk[ip * Wp + jp] = 1.0
    mask = jnp.asarray(np.tile(msk, B_tile).reshape(Ntot, 1))

    # conv3 gather as 0/1 selection matrices: sel[c, q, rz] = 1 picks a2 row rz
    # (image b, input row r = 2*i3-1) and source column c for padded-flat row q.
    sel_np = np.zeros((W2, Ntot, M2), np.float32)
    for b in range(B_tile):
        for ip in range(1, H3 + 1):
            r = 2 * (ip - 1) - 1
            if not (0 <= r < H2):
                continue
            for jp in range(1, W3 + 1):
                c = 2 * (jp - 1) - 1
                if not (0 <= c < W2):
                    continue
                sel_np[c, b * Np + ip * Wp + jp, b * H + r] = 1.0
    sel = jnp.asarray(sel_np, dtype=bf16)

    pool_np = np.zeros((B_tile, Ntot), np.float32)    # per-image avgpool sum
    for b in range(B_tile):
        pool_np[b, b * Np:(b + 1) * Np] = msk
    pool = jnp.asarray(pool_np, dtype=bf16)

    # ---------------- one-time weight repacking (param glue) ----------------
    eye = jnp.eye(W2, dtype=f32)
    w1_all = jnp.concatenate(
        [jnp.kron(eye, params["c1w"][:, 0, di, 0][None, :]) for di in range(3)],
        axis=0).astype(bf16)                                     # (3*W2, W2*8)
    w2_all = jnp.concatenate(
        [jnp.kron(eye, jnp.transpose(params["c2w"][:, :, di, 0], (1, 0)))
         for di in range(3)], axis=0).astype(bf16)               # (3*W2*8, W2*16)
    w3 = jnp.transpose(params["c3w"][:, :, 0, 0], (1, 0)).astype(bf16)   # (16, 32)

    def taps3x3(w):  # (Cout, Cin, 3, 3) -> (9*Cin, Cout), rows ordered (kh, kw, cin)
        cout, cin = w.shape[0], w.shape[1]
        return jnp.transpose(w, (2, 3, 1, 0)).reshape(9 * cin, cout).astype(bf16)

    w11, w12 = taps3x3(params["b1w1"]), taps3x3(params["b1w2"])
    w21, w22 = taps3x3(params["b2w1"]), taps3x3(params["b2w2"])
    fcw = jnp.transpose(params["fcw"], (1, 0)).astype(bf16)      # (64, 20)

    row = lambda v: v.reshape(1, -1).astype(f32)
    b1r = jnp.tile(params["c1b"], (W2,)).reshape(1, -1).astype(f32)
    b2r = jnp.tile(params["c2b"], (W2,)).reshape(1, -1).astype(f32)

    inputs = (x_cols, mask, sel, pool,
              w1_all, b1r, w2_all, b2r, w3, row(params["c3b"]),
              w11, row(params["b1b1"]), w12, row(params["b1b2"]),
              w21, row(params["b2b1"]), w22, row(params["b2b2"]),
              fcw, row(params["fcb"]))

    def const_spec(a):  # full-array block, resident across grid steps
        zeros = (0,) * a.ndim
        return pl.BlockSpec(tuple(a.shape), lambda g, z=zeros: z)

    in_specs = [pl.BlockSpec((B_tile, H, W2), lambda g: (g, 0, 0))]
    in_specs += [const_spec(a) for a in inputs[1:]]
    out_specs = pl.BlockSpec((B_tile, 20), lambda g: (g, 0))

    per_step_flops = (
        3 * 2 * M1 * W2 * (W2 * 8)
        + 3 * 2 * M2 * (W2 * 8) * (W2 * 16)
        + W2 * 2 * Ntot * M2 * 16
        + 2 * Ntot * 16 * 32
        + 2 * 9 * 2 * Ntot * 32 * 32
        + 9 * 2 * Ntot * 32 * 64
        + 9 * 2 * Ntot * 64 * 64
        + 2 * B_tile * Ntot * 64
        + 2 * B_tile * 64 * 20)
    bytes_accessed = (sum(int(np.prod(a.shape)) * a.dtype.itemsize for a in inputs)
                      + B_pad * 20 * 4)

    kernel = functools.partial(
        _fused_cnn_kernel, B_tile=B_tile, H=H, W2=W2, H3=H3, W3=W3,
        Wp=Wp, Np=Np, Ntot=Ntot, M1=M1, M2=M2, m=m)

    out = pl.pallas_call(
        kernel,
        out_shape=jax.ShapeDtypeStruct((B_pad, 20), f32),
        grid_spec=pltpu.PrefetchScalarGridSpec(
            num_scalar_prefetch=0,
            grid=(steps,),
            in_specs=in_specs,
            out_specs=out_specs,
            scratch_shapes=[pltpu.VMEM((2 * m + Ntot, 32), bf16),
                            pltpu.VMEM((2 * m + Ntot, 64), bf16)]),
        compiler_params=pltpu.CompilerParams(
            dimension_semantics=("parallel",),
            vmem_limit_bytes=32 * 1024 * 1024),
        cost_estimate=pl.CostEstimate(flops=steps * per_step_flops,
                                      transcendentals=0,
                                      bytes_accessed=bytes_accessed),
    )(*inputs)
    return out[:B]


# ------------------------- params / reference / main ------------------------

def init_params(key):
    shapes = {
        "c1w": (8, 1, 3, 1),    "c1b": (8,),
        "c2w": (16, 8, 3, 1),   "c2b": (16,),
        "c3w": (32, 16, 1, 1),  "c3b": (32,),
        "b1w1": (32, 32, 3, 3), "b1b1": (32,),
        "b1w2": (32, 32, 3, 3), "b1b2": (32,),
        "b2w1": (64, 32, 3, 3), "b2b1": (64,),
        "b2w2": (64, 64, 3, 3), "b2b2": (64,),
        "fcw": (20, 64),        "fcb": (20,),
    }
    params = {}
    keys = jax.random.split(key, len(shapes))
    for k, (name, shp) in zip(keys, shapes.items()):
        params[name] = 0.1 * jax.random.normal(k, shp, dtype=jnp.float32)
    return params


def _ref_forward(x, params):
    """Pure-JAX (lax.conv) reference mirroring the PyTorch module exactly."""
    def conv_relu(a, w, b, stride, pad):
        y = lax.conv_general_dilated(a, w, window_strides=stride,
                                     padding=[(pad[0], pad[0]), (pad[1], pad[1])],
                                     dimension_numbers=("NCHW", "OIHW", "NCHW"))
        return jax.nn.relu(y + b[None, :, None, None])

    a = x[:, None, :, :]
    a = conv_relu(a, params["c1w"], params["c1b"], (1, 3), (0, 0))
    a = conv_relu(a, params["c2w"], params["c2b"], (1, 3), (0, 0))
    x3 = conv_relu(a, params["c3w"], params["c3b"], (2, 2), (1, 1))
    h = conv_relu(x3, params["b1w1"], params["b1b1"], (1, 1), (1, 1))
    x4 = conv_relu(h, params["b1w2"], params["b1b2"], (1, 1), (1, 1))
    h = conv_relu(x3 + x4, params["b2w1"], params["b2b1"], (1, 1), (1, 1))
    x5 = conv_relu(h, params["b2w2"], params["b2b2"], (1, 1), (1, 1))
    pooled = jnp.mean(x5, axis=(2, 3))
    return pooled @ params["fcw"].T + params["fcb"]


if __name__ == "__main__":
    key = jax.random.PRNGKey(0)
    pkey, xkey = jax.random.split(key)
    params = init_params(pkey)
    x = jax.random.normal(xkey, (2, 16, 16), dtype=jnp.float32)

    out = jax.jit(cnn_forward)(x, params)
    out = jax.block_until_ready(out)
    assert out.shape == (2, 20) and out.dtype == jnp.float32

    ref = jax.block_until_ready(_ref_forward(x, params))
    # bf16 MXU operands with f32 accumulation -> relaxed tolerance (per review).
    np.testing.assert_allclose(np.asarray(out), np.asarray(ref), rtol=2e-2, atol=2e-2)

    print("KERNEL_OK")
</pallas_src>

<mosaic_0001>
module attributes {stable_mosaic.version = 11 : i64} {
  func.func @_fused_cnn_kernel(%arg0: i32, %arg1: memref<2x16x2xf32, #tpu.memory_space<vmem>>, %arg2: memref<72x1xf32, #tpu.memory_space<vmem>>, %arg3: memref<2x72x28xbf16, #tpu.memory_space<vmem>>, %arg4: memref<2x72xbf16, #tpu.memory_space<vmem>>, %arg5: memref<6x16xbf16, #tpu.memory_space<vmem>>, %arg6: memref<1x16xf32, #tpu.memory_space<vmem>>, %arg7: memref<48x32xbf16, #tpu.memory_space<vmem>>, %arg8: memref<1x32xf32, #tpu.memory_space<vmem>>, %arg9: memref<16x32xbf16, #tpu.memory_space<vmem>>, %arg10: memref<1x32xf32, #tpu.memory_space<vmem>>, %arg11: memref<288x32xbf16, #tpu.memory_space<vmem>>, %arg12: memref<1x32xf32, #tpu.memory_space<vmem>>, %arg13: memref<288x32xbf16, #tpu.memory_space<vmem>>, %arg14: memref<1x32xf32, #tpu.memory_space<vmem>>, %arg15: memref<288x64xbf16, #tpu.memory_space<vmem>>, %arg16: memref<1x64xf32, #tpu.memory_space<vmem>>, %arg17: memref<576x64xbf16, #tpu.memory_space<vmem>>, %arg18: memref<1x64xf32, #tpu.memory_space<vmem>>, %arg19: memref<64x20xbf16, #tpu.memory_space<vmem>>, %arg20: memref<1x20xf32, #tpu.memory_space<vmem>>, %arg21: memref<2x20xf32, #tpu.memory_space<vmem>>, %arg22: memref<88x32xbf16, #tpu.memory_space<vmem>>, %arg23: memref<88x64xbf16, #tpu.memory_space<vmem>>) attributes {dimension_semantics = [#tpu.dimension_semantics<parallel>], iteration_bounds = array<i64: 1>, scalar_prefetch = 0 : i64, scratch_operands = 2 : i64, tpu.core_type = #tpu.core_type<tc>, window_params = [{transform_indices = @transform_0, window_bounds = array<i64: 2, 16, 2>}, {pipeline_mode = #tpu.pipeline_mode<synchronous>, transform_indices = @transform_1, window_bounds = array<i64: 72, 1>}, {pipeline_mode = #tpu.pipeline_mode<synchronous>, transform_indices = @transform_2, window_bounds = array<i64: 2, 72, 28>}, {pipeline_mode = #tpu.pipeline_mode<synchronous>, transform_indices = @transform_3, window_bounds = array<i64: 2, 72>}, {pipeline_mode = #tpu.pipeline_mode<synchronous>, transform_indices = @transform_4, window_bounds = array<i64: 6, 16>}, {pipeline_mode = #tpu.pipeline_mode<synchronous>, transform_indices = @transform_5, window_bounds = array<i64: 1, 16>}, {pipeline_mode = #tpu.pipeline_mode<synchronous>, transform_indices = @transform_6, window_bounds = array<i64: 48, 32>}, {pipeline_mode = #tpu.pipeline_mode<synchronous>, transform_indices = @transform_7, window_bounds = array<i64: 1, 32>}, {pipeline_mode = #tpu.pipeline_mode<synchronous>, transform_indices = @transform_8, window_bounds = array<i64: 16, 32>}, {pipeline_mode = #tpu.pipeline_mode<synchronous>, transform_indices = @transform_9, window_bounds = array<i64: 1, 32>}, {pipeline_mode = #tpu.pipeline_mode<synchronous>, transform_indices = @transform_10, window_bounds = array<i64: 288, 32>}, {pipeline_mode = #tpu.pipeline_mode<synchronous>, transform_indices = @transform_11, window_bounds = array<i64: 1, 32>}, {pipeline_mode = #tpu.pipeline_mode<synchronous>, transform_indices = @transform_12, window_bounds = array<i64: 288, 32>}, {pipeline_mode = #tpu.pipeline_mode<synchronous>, transform_indices = @transform_13, window_bounds = array<i64: 1, 32>}, {pipeline_mode = #tpu.pipeline_mode<synchronous>, transform_indices = @transform_14, window_bounds = array<i64: 288, 64>}, {pipeline_mode = #tpu.pipeline_mode<synchronous>, transform_indices = @transform_15, window_bounds = array<i64: 1, 64>}, {pipeline_mode = #tpu.pipeline_mode<synchronous>, transform_indices = @transform_16, window_bounds = array<i64: 576, 64>}, {pipeline_mode = #tpu.pipeline_mode<synchronous>, transform_indices = @transform_17, window_bounds = array<i64: 1, 64>}, {pipeline_mode = #tpu.pipeline_mode<synchronous>, transform_indices = @transform_18, window_bounds = array<i64: 64, 20>}, {pipeline_mode = #tpu.pipeline_mode<synchronous>, transform_indices = @transform_19, window_bounds = array<i64: 1, 20>}, {transform_indices = @transform_20, window_bounds = array<i64: 2, 20>}]} {
    %cst = arith.constant 0.000000e+00 : bf16
    %0 = vector.broadcast %cst : bf16 to vector<8x32xbf16>
    %c0 = arith.constant 0 : index
    %c0_0 = arith.constant 0 : index
    %1 = vector.load %arg22[%c0, %c0_0] : memref<88x32xbf16, #tpu.memory_space<vmem>>, vector<8x32xbf16>
    tpu.vector_store %arg22[%c0, %c0_0], %0 {strides = array<i32>} : memref<88x32xbf16, #tpu.memory_space<vmem>>, vector<8x32xbf16>,
    %cst_1 = arith.constant 0.000000e+00 : bf16
    %2 = vector.broadcast %cst_1 : bf16 to vector<8x32xbf16>
    %c80 = arith.constant 80 : index
    %c0_2 = arith.constant 0 : index
    %3 = vector.load %arg22[%c80, %c0_2] : memref<88x32xbf16, #tpu.memory_space<vmem>>, vector<8x32xbf16>
    tpu.vector_store %arg22[%c80, %c0_2], %2 {strides = array<i32>} : memref<88x32xbf16, #tpu.memory_space<vmem>>, vector<8x32xbf16>,
    %cst_3 = arith.constant 0.000000e+00 : bf16
    %4 = vector.broadcast %cst_3 : bf16 to vector<8x64xbf16>
    %c0_4 = arith.constant 0 : index
    %c0_5 = arith.constant 0 : index
    %5 = vector.load %arg23[%c0_4, %c0_5] : memref<88x64xbf16, #tpu.memory_space<vmem>>, vector<8x64xbf16>
    tpu.vector_store %arg23[%c0_4, %c0_5], %4 {strides = array<i32>} : memref<88x64xbf16, #tpu.memory_space<vmem>>, vector<8x64xbf16>,
    %cst_6 = arith.constant 0.000000e+00 : bf16
    %6 = vector.broadcast %cst_6 : bf16 to vector<8x64xbf16>
    %c80_7 = arith.constant 80 : index
    %c0_8 = arith.constant 0 : index
    %7 = vector.load %arg23[%c80_7, %c0_8] : memref<88x64xbf16, #tpu.memory_space<vmem>>, vector<8x64xbf16>
    tpu.vector_store %arg23[%c80_7, %c0_8], %6 {strides = array<i32>} : memref<88x64xbf16, #tpu.memory_space<vmem>>, vector<8x64xbf16>,
    %c0_9 = arith.constant 0 : index
    %c0_10 = arith.constant 0 : index
    %8 = vector.load %arg2[%c0_9, %c0_10] : memref<72x1xf32, #tpu.memory_space<vmem>>, vector<72x1xf32>
    %c0_11 = arith.constant 0 : index
    %c0_12 = arith.constant 0 : index
    %c0_13 = arith.constant 0 : index
    %9 = vector.load %arg1[%c0_11, %c0_12, %c0_13] : memref<2x16x2xf32, #tpu.memory_space<vmem>>, vector<2x16x2xf32>
    %10 = vector.shape_cast %9 : vector<2x16x2xf32> to vector<32x2xf32>
    %11 = arith.truncf %10 : vector<32x2xf32> to vector<32x2xbf16>
    %c0_14 = arith.constant 0 : index
    %c0_15 = arith.constant 0 : index
    %12 = vector.load %arg5[%c0_14, %c0_15] : memref<6x16xbf16, #tpu.memory_space<vmem>>, vector<2x16xbf16>
    %13 = vector.extract_strided_slice %11 {offsets = [0, 0], sizes = [30, 2], strides = [1, 1]} : vector<32x2xbf16> to vector<30x2xbf16>
    %cst_16 = arith.constant dense<0.000000e+00> : vector<30x16xf32>
    %14 = tpu.matmul %13, %12, %cst_16 {dimension_numbers = #tpu.dot_dimension_numbers<[1], [0], [0], [1], [0, 0, 1, 1], [], []>} : vector<30x2xbf16>, vector<2x16xbf16>, vector<30x16xf32> -> vector<30x16xf32>
    %c2 = arith.constant 2 : index
    %c0_17 = arith.constant 0 : index
    %15 = vector.load %arg5[%c2, %c0_17] : memref<6x16xbf16, #tpu.memory_space<vmem>>, vector<2x16xbf16>
    %16 = vector.extract_strided_slice %11 {offsets = [1, 0], sizes = [30, 2], strides = [1, 1]} : vector<32x2xbf16> to vector<30x2xbf16>
    %cst_18 = arith.constant dense<0.000000e+00> : vector<30x16xf32>
    %17 = tpu.matmul %16, %15, %cst_18 {dimension_numbers = #tpu.dot_dimension_numbers<[1], [0], [0], [1], [0, 0, 1, 1], [], []>} : vector<30x2xbf16>, vector<2x16xbf16>, vector<30x16xf32> -> vector<30x16xf32>
    %18 = arith.addf %14, %17 : vector<30x16xf32>
    %c4 = arith.constant 4 : index
    %c0_19 = arith.constant 0 : index
    %19 = vector.load %arg5[%c4, %c0_19] : memref<6x16xbf16, #tpu.memory_space<vmem>>, vector<2x16xbf16>
    %20 = vector.extract_strided_slice %11 {offsets = [2, 0], sizes = [30, 2], strides = [1, 1]} : vector<32x2xbf16> to vector<30x2xbf16>
    %cst_20 = arith.constant dense<0.000000e+00> : vector<30x16xf32>
    %21 = tpu.matmul %20, %19, %cst_20 {dimension_numbers = #tpu.dot_dimension_numbers<[1], [0], [0], [1], [0, 0, 1, 1], [], []>} : vector<30x2xbf16>, vector<2x16xbf16>, vector<30x16xf32> -> vector<30x16xf32>
    %22 = arith.addf %18, %21 : vector<30x16xf32>
    %c0_21 = arith.constant 0 : index
    %c0_22 = arith.constant 0 : index
    %23 = vector.load %arg6[%c0_21, %c0_22] : memref<1x16xf32, #tpu.memory_space<vmem>>, vector<1x16xf32>
    %24 = vector.broadcast %23 : vector<1x16xf32> to vector<30x16xf32>
    %25 = arith.addf %22, %24 : vector<30x16xf32>
    %cst_23 = arith.constant 0.000000e+00 : f32
    %26 = vector.broadcast %cst_23 : f32 to vector<30x16xf32>
    %27 = arith.maximumf %25, %26 : vector<30x16xf32>
    %28 = arith.truncf %27 : vector<30x16xf32> to vector<30x16xbf16>
    %c0_24 = arith.constant 0 : index
    %c0_25 = arith.constant 0 : index
    %29 = vector.load %arg7[%c0_24, %c0_25] : memref<48x32xbf16, #tpu.memory_space<vmem>>, vector<16x32xbf16>
    %30 = vector.extract_strided_slice %28 {offsets = [0, 0], sizes = [28, 16], strides = [1, 1]} : vector<30x16xbf16> to vector<28x16xbf16>
    %cst_26 = arith.constant dense<0.000000e+00> : vector<28x32xf32>
    %31 = tpu.matmul %30, %29, %cst_26 {dimension_numbers = #tpu.dot_dimension_numbers<[1], [0], [0], [1], [0, 0, 1, 1], [], []>} : vector<28x16xbf16>, vector<16x32xbf16>, vector<28x32xf32> -> vector<28x32xf32>
    %c16 = arith.constant 16 : index
    %c0_27 = arith.constant 0 : index
    %32 = vector.load %arg7[%c16, %c0_27] : memref<48x32xbf16, #tpu.memory_space<vmem>>, vector<16x32xbf16>
    %33 = vector.extract_strided_slice %28 {offsets = [1, 0], sizes = [28, 16], strides = [1, 1]} : vector<30x16xbf16> to vector<28x16xbf16>
    %cst_28 = arith.constant dense<0.000000e+00> : vector<28x32xf32>
    %34 = tpu.matmul %33, %32, %cst_28 {dimension_numbers = #tpu.dot_dimension_numbers<[1], [0], [0], [1], [0, 0, 1, 1], [], []>} : vector<28x16xbf16>, vector<16x32xbf16>, vector<28x32xf32> -> vector<28x32xf32>
    %35 = arith.addf %31, %34 : vector<28x32xf32>
    %c32 = arith.constant 32 : index
    %c0_29 = arith.constant 0 : index
    %36 = vector.load %arg7[%c32, %c0_29] : memref<48x32xbf16, #tpu.memory_space<vmem>>, vector<16x32xbf16>
    %37 = vector.extract_strided_slice %28 {offsets = [2, 0], sizes = [28, 16], strides = [1, 1]} : vector<30x16xbf16> to vector<28x16xbf16>
    %cst_30 = arith.constant dense<0.000000e+00> : vector<28x32xf32>
    %38 = tpu.matmul %37, %36, %cst_30 {dimension_numbers = #tpu.dot_dimension_numbers<[1], [0], [0], [1], [0, 0, 1, 1], [], []>} : vector<28x16xbf16>, vector<16x32xbf16>, vector<28x32xf32> -> vector<28x32xf32>
    %39 = arith.addf %35, %38 : vector<28x32xf32>
    %c0_31 = arith.constant 0 : index
    %c0_32 = arith.constant 0 : index
    %40 = vector.load %arg8[%c0_31, %c0_32] : memref<1x32xf32, #tpu.memory_space<vmem>>, vector<1x32xf32>
    %41 = vector.broadcast %40 : vector<1x32xf32> to vector<28x32xf32>
    %42 = arith.addf %39, %41 : vector<28x32xf32>
    %cst_33 = arith.constant 0.000000e+00 : f32
    %43 = vector.broadcast %cst_33 : f32 to vector<28x32xf32>
    %44 = arith.maximumf %42, %43 : vector<28x32xf32>
    %45 = arith.truncf %44 : vector<28x32xf32> to vector<28x32xbf16>
    %c0_34 = arith.constant 0 : index
    %c0_35 = arith.constant 0 : index
    %c0_36 = arith.constant 0 : index
    %46 = vector.load %arg3[%c0_34, %c0_35, %c0_36] : memref<2x72x28xbf16, #tpu.memory_space<vmem>>, vector<1x72x28xbf16>
    %47 = vector.shape_cast %46 : vector<1x72x28xbf16> to vector<72x28xbf16>
    %48 = vector.extract_strided_slice %45 {offsets = [0, 0], sizes = [28, 16], strides = [1, 1]} : vector<28x32xbf16> to vector<28x16xbf16>
    %cst_37 = arith.constant dense<0.000000e+00> : vector<72x16xf32>
    %49 = tpu.matmul %47, %48, %cst_37 {dimension_numbers = #tpu.dot_dimension_numbers<[1], [0], [0], [1], [0, 0, 1, 1], [], []>} : vector<72x28xbf16>, vector<28x16xbf16>, vector<72x16xf32> -> vector<72x16xf32>
    %c1 = arith.constant 1 : index
    %c0_38 = arith.constant 0 : index
    %c0_39 = arith.constant 0 : index
    %50 = vector.load %arg3[%c1, %c0_38, %c0_39] : memref<2x72x28xbf16, #tpu.memory_space<vmem>>, vector<1x72x28xbf16>
    %51 = vector.shape_cast %50 : vector<1x72x28xbf16> to vector<72x28xbf16>
    %52 = vector.extract_strided_slice %45 {offsets = [0, 16], sizes = [28, 16], strides = [1, 1]} : vector<28x32xbf16> to vector<28x16xbf16>
    %cst_40 = arith.constant dense<0.000000e+00> : vector<72x16xf32>
    %53 = tpu.matmul %51, %52, %cst_40 {dimension_numbers = #tpu.dot_dimension_numbers<[1], [0], [0], [1], [0, 0, 1, 1], [], []>} : vector<72x28xbf16>, vector<28x16xbf16>, vector<72x16xf32> -> vector<72x16xf32>
    %54 = arith.addf %49, %53 : vector<72x16xf32>
    %55 = arith.truncf %54 : vector<72x16xf32> to vector<72x16xbf16>
    %c0_41 = arith.constant 0 : index
    %c0_42 = arith.constant 0 : index
    %56 = vector.load %arg9[%c0_41, %c0_42] : memref<16x32xbf16, #tpu.memory_space<vmem>>, vector<16x32xbf16>
    %cst_43 = arith.constant dense<0.000000e+00> : vector<72x32xf32>
    %57 = tpu.matmul %55, %56, %cst_43 {dimension_numbers = #tpu.dot_dimension_numbers<[1], [0], [0], [1], [0, 0, 1, 1], [], []>} : vector<72x16xbf16>, vector<16x32xbf16>, vector<72x32xf32> -> vector<72x32xf32>
    %c0_44 = arith.constant 0 : index
    %c0_45 = arith.constant 0 : index
    %58 = vector.load %arg10[%c0_44, %c0_45] : memref<1x32xf32, #tpu.memory_space<vmem>>, vector<1x32xf32>
    %59 = vector.broadcast %58 : vector<1x32xf32> to vector<72x32xf32>
    %60 = arith.addf %57, %59 : vector<72x32xf32>
    %cst_46 = arith.constant 0.000000e+00 : f32
    %61 = vector.broadcast %cst_46 : f32 to vector<72x1xf32>
    %62 = arith.cmpf ogt, %8, %61 : vector<72x1xf32>
    %cst_47 = arith.constant 0.000000e+00 : f32
    %63 = vector.broadcast %cst_47 : f32 to vector<72x32xf32>
    %64 = arith.maximumf %60, %63 : vector<72x32xf32>
    %cst_48 = arith.constant 0.000000e+00 : f32
    %65 = vector.shape_cast %62 : vector<72x1xi1> to vector<72x1xi1>
    %66 = vector.broadcast %65 : vector<72x1xi1> to vector<72x32xi1>
    %67 = vector.broadcast %cst_48 : f32 to vector<72x32xf32>
    %68 = arith.select %66, %64, %67 : vector<72x32xi1>, vector<72x32xf32>
    %69 = arith.truncf %68 : vector<72x32xf32> to vector<72x32xbf16>
    %c8 = arith.constant 8 : index
    %c0_49 = arith.constant 0 : index
    %70 = vector.load %arg22[%c8, %c0_49] : memref<88x32xbf16, #tpu.memory_space<vmem>>, vector<72x32xbf16>
    tpu.vector_store %arg22[%c8, %c0_49], %69 {strides = array<i32>} : memref<88x32xbf16, #tpu.memory_space<vmem>>, vector<72x32xbf16>,
    %c3 = arith.constant 3 : index
    %c0_50 = arith.constant 0 : index
    %71 = vector.load %arg22[%c3, %c0_50] : memref<88x32xbf16, #tpu.memory_space<vmem>>, vector<72x32xbf16>
    %c0_51 = arith.constant 0 : index
    %c0_52 = arith.constant 0 : index
    %72 = vector.load %arg11[%c0_51, %c0_52] : memref<288x32xbf16, #tpu.memory_space<vmem>>, vector<32x32xbf16>
    %cst_53 = arith.constant dense<0.000000e+00> : vector<72x32xf32>
    %73 = tpu.matmul %71, %72, %cst_53 {dimension_numbers = #tpu.dot_dimension_numbers<[1], [0], [0], [1], [0, 0, 1, 1], [], []>} : vector<72x32xbf16>, vector<32x32xbf16>, vector<72x32xf32> -> vector<72x32xf32>
    %c4_54 = arith.constant 4 : index
    %c0_55 = arith.constant 0 : index
    %74 = vector.load %arg22[%c4_54, %c0_55] : memref<88x32xbf16, #tpu.memory_space<vmem>>, vector<72x32xbf16>
    %c32_56 = arith.constant 32 : index
    %c0_57 = arith.constant 0 : index
    %75 = vector.load %arg11[%c32_56, %c0_57] : memref<288x32xbf16, #tpu.memory_space<vmem>>, vector<32x32xbf16>
    %cst_58 = arith.constant dense<0.000000e+00> : vector<72x32xf32>
    %76 = tpu.matmul %74, %75, %cst_58 {dimension_numbers = #tpu.dot_dimension_numbers<[1], [0], [0], [1], [0, 0, 1, 1], [], []>} : vector<72x32xbf16>, vector<32x32xbf16>, vector<72x32xf32> -> vector<72x32xf32>
    %77 = arith.addf %73, %76 : vector<72x32xf32>
    %c5 = arith.constant 5 : index
    %c0_59 = arith.constant 0 : index
    %78 = vector.load %arg22[%c5, %c0_59] : memref<88x32xbf16, #tpu.memory_space<vmem>>, vector<72x32xbf16>
    %c64 = arith.constant 64 : index
    %c0_60 = arith.constant 0 : index
    %79 = vector.load %arg11[%c64, %c0_60] : memref<288x32xbf16, #tpu.memory_space<vmem>>, vector<32x32xbf16>
    %cst_61 = arith.constant dense<0.000000e+00> : vector<72x32xf32>
    %80 = tpu.matmul %78, %79, %cst_61 {dimension_numbers = #tpu.dot_dimension_numbers<[1], [0], [0], [1], [0, 0, 1, 1], [], []>} : vector<72x32xbf16>, vector<32x32xbf16>, vector<72x32xf32> -> vector<72x32xf32>
    %81 = arith.addf %77, %80 : vector<72x32xf32>
    %c7 = arith.constant 7 : index
    %c0_62 = arith.constant 0 : index
    %82 = vector.load %arg22[%c7, %c0_62] : memref<88x32xbf16, #tpu.memory_space<vmem>>, vector<72x32xbf16>
    %c96 = arith.constant 96 : index
    %c0_63 = arith.constant 0 : index
    %83 = vector.load %arg11[%c96, %c0_63] : memref<288x32xbf16, #tpu.memory_space<vmem>>, vector<32x32xbf16>
    %cst_64 = arith.constant dense<0.000000e+00> : vector<72x32xf32>
    %84 = tpu.matmul %82, %83, %cst_64 {dimension_numbers = #tpu.dot_dimension_numbers<[1], [0], [0], [1], [0, 0, 1, 1], [], []>} : vector<72x32xbf16>, vector<32x32xbf16>, vector<72x32xf32> -> vector<72x32xf32>
    %85 = arith.addf %81, %84 : vector<72x32xf32>
    %c8_65 = arith.constant 8 : index
    %c0_66 = arith.constant 0 : index
    %86 = vector.load %arg22[%c8_65, %c0_66] : memref<88x32xbf16, #tpu.memory_space<vmem>>, vector<72x32xbf16>
    %c128 = arith.constant 128 : index
    %c0_67 = arith.constant 0 : index
    %87 = vector.load %arg11[%c128, %c0_67] : memref<288x32xbf16, #tpu.memory_space<vmem>>, vector<32x32xbf16>
    %cst_68 = arith.constant dense<0.000000e+00> : vector<72x32xf32>
    %88 = tpu.matmul %86, %87, %cst_68 {dimension_numbers = #tpu.dot_dimension_numbers<[1], [0], [0], [1], [0, 0, 1, 1], [], []>} : vector<72x32xbf16>, vector<32x32xbf16>, vector<72x32xf32> -> vector<72x32xf32>
    %89 = arith.addf %85, %88 : vector<72x32xf32>
    %c9 = arith.constant 9 : index
    %c0_69 = arith.constant 0 : index
    %90 = vector.load %arg22[%c9, %c0_69] : memref<88x32xbf16, #tpu.memory_space<vmem>>, vector<72x32xbf16>
    %c160 = arith.constant 160 : index
    %c0_70 = arith.constant 0 : index
    %91 = vector.load %arg11[%c160, %c0_70] : memref<288x32xbf16, #tpu.memory_space<vmem>>, vector<32x32xbf16>
    %cst_71 = arith.constant dense<0.000000e+00> : vector<72x32xf32>
    %92 = tpu.matmul %90, %91, %cst_71 {dimension_numbers = #tpu.dot_dimension_numbers<[1], [0], [0], [1], [0, 0, 1, 1], [], []>} : vector<72x32xbf16>, vector<32x32xbf16>, vector<72x32xf32> -> vector<72x32xf32>
    %93 = arith.addf %89, %92 : vector<72x32xf32>
    %c11 = arith.constant 11 : index
    %c0_72 = arith.constant 0 : index
    %94 = vector.load %arg22[%c11, %c0_72] : memref<88x32xbf16, #tpu.memory_space<vmem>>, vector<72x32xbf16>
    %c192 = arith.constant 192 : index
    %c0_73 = arith.constant 0 : index
    %95 = vector.load %arg11[%c192, %c0_73] : memref<288x32xbf16, #tpu.memory_space<vmem>>, vector<32x32xbf16>
    %cst_74 = arith.constant dense<0.000000e+00> : vector<72x32xf32>
    %96 = tpu.matmul %94, %95, %cst_74 {dimension_numbers = #tpu.dot_dimension_numbers<[1], [0], [0], [1], [0, 0, 1, 1], [], []>} : vector<72x32xbf16>, vector<32x32xbf16>, vector<72x32xf32> -> vector<72x32xf32>
    %97 = arith.addf %93, %96 : vector<72x32xf32>
    %c12 = arith.constant 12 : index
    %c0_75 = arith.constant 0 : index
    %98 = vector.load %arg22[%c12, %c0_75] : memref<88x32xbf16, #tpu.memory_space<vmem>>, vector<72x32xbf16>
    %c224 = arith.constant 224 : index
    %c0_76 = arith.constant 0 : index
    %99 = vector.load %arg11[%c224, %c0_76] : memref<288x32xbf16, #tpu.memory_space<vmem>>, vector<32x32xbf16>
    %cst_77 = arith.constant dense<0.000000e+00> : vector<72x32xf32>
    %100 = tpu.matmul %98, %99, %cst_77 {dimension_numbers = #tpu.dot_dimension_numbers<[1], [0], [0], [1], [0, 0, 1, 1], [], []>} : vector<72x32xbf16>, vector<32x32xbf16>, vector<72x32xf32> -> vector<72x32xf32>
    %101 = arith.addf %97, %100 : vector<72x32xf32>
    %c13 = arith.constant 13 : index
    %c0_78 = arith.constant 0 : index
    %102 = vector.load %arg22[%c13, %c0_78] : memref<88x32xbf16, #tpu.memory_space<vmem>>, vector<72x32xbf16>
    %c256 = arith.constant 256 : index
    %c0_79 = arith.constant 0 : index
    %103 = vector.load %arg11[%c256, %c0_79] : memref<288x32xbf16, #tpu.memory_space<vmem>>, vector<32x32xbf16>
    %cst_80 = arith.constant dense<0.000000e+00> : vector<72x32xf32>
    %104 = tpu.matmul %102, %103, %cst_80 {dimension_numbers = #tpu.dot_dimension_numbers<[1], [0], [0], [1], [0, 0, 1, 1], [], []>} : vector<72x32xbf16>, vector<32x32xbf16>, vector<72x32xf32> -> vector<72x32xf32>
    %105 = arith.addf %101, %104 : vector<72x32xf32>
    %c0_81 = arith.constant 0 : index
    %c0_82 = arith.constant 0 : index
    %106 = vector.load %arg12[%c0_81, %c0_82] : memref<1x32xf32, #tpu.memory_space<vmem>>, vector<1x32xf32>
    %107 = vector.broadcast %106 : vector<1x32xf32> to vector<72x32xf32>
    %108 = arith.addf %105, %107 : vector<72x32xf32>
    %cst_83 = arith.constant 0.000000e+00 : f32
    %109 = vector.broadcast %cst_83 : f32 to vector<72x1xf32>
    %110 = arith.cmpf ogt, %8, %109 : vector<72x1xf32>
    %cst_84 = arith.constant 0.000000e+00 : f32
    %111 = vector.broadcast %cst_84 : f32 to vector<72x32xf32>
    %112 = arith.maximumf %108, %111 : vector<72x32xf32>
    %cst_85 = arith.constant 0.000000e+00 : f32
    %113 = vector.shape_cast %110 : vector<72x1xi1> to vector<72x1xi1>
    %114 = vector.broadcast %113 : vector<72x1xi1> to vector<72x32xi1>
    %115 = vector.broadcast %cst_85 : f32 to vector<72x32xf32>
    %116 = arith.select %114, %112, %115 : vector<72x32xi1>, vector<72x32xf32>
    %117 = arith.truncf %116 : vector<72x32xf32> to vector<72x32xbf16>
    %c8_86 = arith.constant 8 : index
    %c0_87 = arith.constant 0 : index
    %118 = vector.load %arg22[%c8_86, %c0_87] : memref<88x32xbf16, #tpu.memory_space<vmem>>, vector<72x32xbf16>
    tpu.vector_store %arg22[%c8_86, %c0_87], %117 {strides = array<i32>} : memref<88x32xbf16, #tpu.memory_space<vmem>>, vector<72x32xbf16>,
    %c3_88 = arith.constant 3 : index
    %c0_89 = arith.constant 0 : index
    %119 = vector.load %arg22[%c3_88, %c0_89] : memref<88x32xbf16, #tpu.memory_space<vmem>>, vector<72x32xbf16>
    %c0_90 = arith.constant 0 : index
    %c0_91 = arith.constant 0 : index
    %120 = vector.load %arg13[%c0_90, %c0_91] : memref<288x32xbf16, #tpu.memory_space<vmem>>, vector<32x32xbf16>
    %cst_92 = arith.constant dense<0.000000e+00> : vector<72x32xf32>
    %121 = tpu.matmul %119, %120, %cst_92 {dimension_numbers = #tpu.dot_dimension_numbers<[1], [0], [0], [1], [0, 0, 1, 1], [], []>} : vector<72x32xbf16>, vector<32x32xbf16>, vector<72x32xf32> -> vector<72x32xf32>
    %c4_93 = arith.constant 4 : index
    %c0_94 = arith.constant 0 : index
    %122 = vector.load %arg22[%c4_93, %c0_94] : memref<88x32xbf16, #tpu.memory_space<vmem>>, vector<72x32xbf16>
    %c32_95 = arith.constant 32 : index
    %c0_96 = arith.constant 0 : index
    %123 = vector.load %arg13[%c32_95, %c0_96] : memref<288x32xbf16, #tpu.memory_space<vmem>>, vector<32x32xbf16>
    %cst_97 = arith.constant dense<0.000000e+00> : vector<72x32xf32>
    %124 = tpu.matmul %122, %123, %cst_97 {dimension_numbers = #tpu.dot_dimension_numbers<[1], [0], [0], [1], [0, 0, 1, 1], [], []>} : vector<72x32xbf16>, vector<32x32xbf16>, vector<72x32xf32> -> vector<72x32xf32>
    %125 = arith.addf %121, %124 : vector<72x32xf32>
    %c5_98 = arith.constant 5 : index
    %c0_99 = arith.constant 0 : index
    %126 = vector.load %arg22[%c5_98, %c0_99] : memref<88x32xbf16, #tpu.memory_space<vmem>>, vector<72x32xbf16>
    %c64_100 = arith.constant 64 : index
    %c0_101 = arith.constant 0 : index
    %127 = vector.load %arg13[%c64_100, %c0_101] : memref<288x32xbf16, #tpu.memory_space<vmem>>, vector<32x32xbf16>
    %cst_102 = arith.constant dense<0.000000e+00> : vector<72x32xf32>
    %128 = tpu.matmul %126, %127, %cst_102 {dimension_numbers = #tpu.dot_dimension_numbers<[1], [0], [0], [1], [0, 0, 1, 1], [], []>} : vector<72x32xbf16>, vector<32x32xbf16>, vector<72x32xf32> -> vector<72x32xf32>
    %129 = arith.addf %125, %128 : vector<72x32xf32>
    %c7_103 = arith.constant 7 : index
    %c0_104 = arith.constant 0 : index
    %130 = vector.load %arg22[%c7_103, %c0_104] : memref<88x32xbf16, #tpu.memory_space<vmem>>, vector<72x32xbf16>
    %c96_105 = arith.constant 96 : index
    %c0_106 = arith.constant 0 : index
    %131 = vector.load %arg13[%c96_105, %c0_106] : memref<288x32xbf16, #tpu.memory_space<vmem>>, vector<32x32xbf16>
    %cst_107 = arith.constant dense<0.000000e+00> : vector<72x32xf32>
    %132 = tpu.matmul %130, %131, %cst_107 {dimension_numbers = #tpu.dot_dimension_numbers<[1], [0], [0], [1], [0, 0, 1, 1], [], []>} : vector<72x32xbf16>, vector<32x32xbf16>, vector<72x32xf32> -> vector<72x32xf32>
    %133 = arith.addf %129, %132 : vector<72x32xf32>
    %c8_108 = arith.constant 8 : index
    %c0_109 = arith.constant 0 : index
    %134 = vector.load %arg22[%c8_108, %c0_109] : memref<88x32xbf16, #tpu.memory_space<vmem>>, vector<72x32xbf16>
    %c128_110 = arith.constant 128 : index
    %c0_111 = arith.constant 0 : index
    %135 = vector.load %arg13[%c128_110, %c0_111] : memref<288x32xbf16, #tpu.memory_space<vmem>>, vector<32x32xbf16>
    %cst_112 = arith.constant dense<0.000000e+00> : vector<72x32xf32>
    %136 = tpu.matmul %134, %135, %cst_112 {dimension_numbers = #tpu.dot_dimension_numbers<[1], [0], [0], [1], [0, 0, 1, 1], [], []>} : vector<72x32xbf16>, vector<32x32xbf16>, vector<72x32xf32> -> vector<72x32xf32>
    %137 = arith.addf %133, %136 : vector<72x32xf32>
    %c9_113 = arith.constant 9 : index
    %c0_114 = arith.constant 0 : index
    %138 = vector.load %arg22[%c9_113, %c0_114] : memref<88x32xbf16, #tpu.memory_space<vmem>>, vector<72x32xbf16>
    %c160_115 = arith.constant 160 : index
    %c0_116 = arith.constant 0 : index
    %139 = vector.load %arg13[%c160_115, %c0_116] : memref<288x32xbf16, #tpu.memory_space<vmem>>, vector<32x32xbf16>
    %cst_117 = arith.constant dense<0.000000e+00> : vector<72x32xf32>
    %140 = tpu.matmul %138, %139, %cst_117 {dimension_numbers = #tpu.dot_dimension_numbers<[1], [0], [0], [1], [0, 0, 1, 1], [], []>} : vector<72x32xbf16>, vector<32x32xbf16>, vector<72x32xf32> -> vector<72x32xf32>
    %141 = arith.addf %137, %140 : vector<72x32xf32>
    %c11_118 = arith.constant 11 : index
    %c0_119 = arith.constant 0 : index
    %142 = vector.load %arg22[%c11_118, %c0_119] : memref<88x32xbf16, #tpu.memory_space<vmem>>, vector<72x32xbf16>
    %c192_120 = arith.constant 192 : index
    %c0_121 = arith.constant 0 : index
    %143 = vector.load %arg13[%c192_120, %c0_121] : memref<288x32xbf16, #tpu.memory_space<vmem>>, vector<32x32xbf16>
    %cst_122 = arith.constant dense<0.000000e+00> : vector<72x32xf32>
    %144 = tpu.matmul %142, %143, %cst_122 {dimension_numbers = #tpu.dot_dimension_numbers<[1], [0], [0], [1], [0, 0, 1, 1], [], []>} : vector<72x32xbf16>, vector<32x32xbf16>, vector<72x32xf32> -> vector<72x32xf32>
    %145 = arith.addf %141, %144 : vector<72x32xf32>
    %c12_123 = arith.constant 12 : index
    %c0_124 = arith.constant 0 : index
    %146 = vector.load %arg22[%c12_123, %c0_124] : memref<88x32xbf16, #tpu.memory_space<vmem>>, vector<72x32xbf16>
    %c224_125 = arith.constant 224 : index
    %c0_126 = arith.constant 0 : index
    %147 = vector.load %arg13[%c224_125, %c0_126] : memref<288x32xbf16, #tpu.memory_space<vmem>>, vector<32x32xbf16>
    %cst_127 = arith.constant dense<0.000000e+00> : vector<72x32xf32>
    %148 = tpu.matmul %146, %147, %cst_127 {dimension_numbers = #tpu.dot_dimension_numbers<[1], [0], [0], [1], [0, 0, 1, 1], [], []>} : vector<72x32xbf16>, vector<32x32xbf16>, vector<72x32xf32> -> vector<72x32xf32>
    %149 = arith.addf %145, %148 : vector<72x32xf32>
    %c13_128 = arith.constant 13 : index
    %c0_129 = arith.constant 0 : index
    %150 = vector.load %arg22[%c13_128, %c0_129] : memref<88x32xbf16, #tpu.memory_space<vmem>>, vector<72x32xbf16>
    %c256_130 = arith.constant 256 : index
    %c0_131 = arith.constant 0 : index
    %151 = vector.load %arg13[%c256_130, %c0_131] : memref<288x32xbf16, #tpu.memory_space<vmem>>, vector<32x32xbf16>
    %cst_132 = arith.constant dense<0.000000e+00> : vector<72x32xf32>
    %152 = tpu.matmul %150, %151, %cst_132 {dimension_numbers = #tpu.dot_dimension_numbers<[1], [0], [0], [1], [0, 0, 1, 1], [], []>} : vector<72x32xbf16>, vector<32x32xbf16>, vector<72x32xf32> -> vector<72x32xf32>
    %153 = arith.addf %149, %152 : vector<72x32xf32>
    %c0_133 = arith.constant 0 : index
    %c0_134 = arith.constant 0 : index
    %154 = vector.load %arg14[%c0_133, %c0_134] : memref<1x32xf32, #tpu.memory_space<vmem>>, vector<1x32xf32>
    %155 = vector.broadcast %154 : vector<1x32xf32> to vector<72x32xf32>
    %156 = arith.addf %153, %155 : vector<72x32xf32>
    %cst_135 = arith.constant 0.000000e+00 : f32
    %157 = vector.broadcast %cst_135 : f32 to vector<72x1xf32>
    %158 = arith.cmpf ogt, %8, %157 : vector<72x1xf32>
    %cst_136 = arith.constant 0.000000e+00 : f32
    %159 = vector.broadcast %cst_136 : f32 to vector<72x32xf32>
    %160 = arith.maximumf %156, %159 : vector<72x32xf32>
    %cst_137 = arith.constant 0.000000e+00 : f32
    %161 = vector.shape_cast %158 : vector<72x1xi1> to vector<72x1xi1>
    %162 = vector.broadcast %161 : vector<72x1xi1> to vector<72x32xi1>
    %163 = vector.broadcast %cst_137 : f32 to vector<72x32xf32>
    %164 = arith.select %162, %160, %163 : vector<72x32xi1>, vector<72x32xf32>
    %165 = arith.addf %68, %164 : vector<72x32xf32>
    %166 = arith.truncf %165 : vector<72x32xf32> to vector<72x32xbf16>
    %c8_138 = arith.constant 8 : index
    %c0_139 = arith.constant 0 : index
    %167 = vector.load %arg22[%c8_138, %c0_139] : memref<88x32xbf16, #tpu.memory_space<vmem>>, vector<72x32xbf16>
    tpu.vector_store %arg22[%c8_138, %c0_139], %166 {strides = array<i32>} : memref<88x32xbf16, #tpu.memory_space<vmem>>, vector<72x32xbf16>,
    %c3_140 = arith.constant 3 : index
    %c0_141 = arith.constant 0 : index
    %168 = vector.load %arg22[%c3_140, %c0_141] : memref<88x32xbf16, #tpu.memory_space<vmem>>, vector<72x32xbf16>
    %c0_142 = arith.constant 0 : index
    %c0_143 = arith.constant 0 : index
    %169 = vector.load %arg15[%c0_142, %c0_143] : memref<288x64xbf16, #tpu.memory_space<vmem>>, vector<32x64xbf16>
    %cst_144 = arith.constant dense<0.000000e+00> : vector<72x64xf32>
    %170 = tpu.matmul %168, %169, %cst_144 {dimension_numbers = #tpu.dot_dimension_numbers<[1], [0], [0], [1], [0, 0, 1, 1], [], []>} : vector<72x32xbf16>, vector<32x64xbf16>, vector<72x64xf32> -> vector<72x64xf32>
    %c4_145 = arith.constant 4 : index
    %c0_146 = arith.constant 0 : index
    %171 = vector.load %arg22[%c4_145, %c0_146] : memref<88x32xbf16, #tpu.memory_space<vmem>>, vector<72x32xbf16>
    %c32_147 = arith.constant 32 : index
    %c0_148 = arith.constant 0 : index
    %172 = vector.load %arg15[%c32_147, %c0_148] : memref<288x64xbf16, #tpu.memory_space<vmem>>, vector<32x64xbf16>
    %cst_149 = arith.constant dense<0.000000e+00> : vector<72x64xf32>
    %173 = tpu.matmul %171, %172, %cst_149 {dimension_numbers = #tpu.dot_dimension_numbers<[1], [0], [0], [1], [0, 0, 1, 1], [], []>} : vector<72x32xbf16>, vector<32x64xbf16>, vector<72x64xf32> -> vector<72x64xf32>
    %174 = arith.addf %170, %173 : vector<72x64xf32>
    %c5_150 = arith.constant 5 : index
    %c0_151 = arith.constant 0 : index
    %175 = vector.load %arg22[%c5_150, %c0_151] : memref<88x32xbf16, #tpu.memory_space<vmem>>, vector<72x32xbf16>
    %c64_152 = arith.constant 64 : index
    %c0_153 = arith.constant 0 : index
    %176 = vector.load %arg15[%c64_152, %c0_153] : memref<288x64xbf16, #tpu.memory_space<vmem>>, vector<32x64xbf16>
    %cst_154 = arith.constant dense<0.000000e+00> : vector<72x64xf32>
    %177 = tpu.matmul %175, %176, %cst_154 {dimension_numbers = #tpu.dot_dimension_numbers<[1], [0], [0], [1], [0, 0, 1, 1], [], []>} : vector<72x32xbf16>, vector<32x64xbf16>, vector<72x64xf32> -> vector<72x64xf32>
    %178 = arith.addf %174, %177 : vector<72x64xf32>
    %c7_155 = arith.constant 7 : index
    %c0_156 = arith.constant 0 : index
    %179 = vector.load %arg22[%c7_155, %c0_156] : memref<88x32xbf16, #tpu.memory_space<vmem>>, vector<72x32xbf16>
    %c96_157 = arith.constant 96 : index
    %c0_158 = arith.constant 0 : index
    %180 = vector.load %arg15[%c96_157, %c0_158] : memref<288x64xbf16, #tpu.memory_space<vmem>>, vector<32x64xbf16>
    %cst_159 = arith.constant dense<0.000000e+00> : vector<72x64xf32>
    %181 = tpu.matmul %179, %180, %cst_159 {dimension_numbers = #tpu.dot_dimension_numbers<[1], [0], [0], [1], [0, 0, 1, 1], [], []>} : vector<72x32xbf16>, vector<32x64xbf16>, vector<72x64xf32> -> vector<72x64xf32>
    %182 = arith.addf %178, %181 : vector<72x64xf32>
    %c8_160 = arith.constant 8 : index
    %c0_161 = arith.constant 0 : index
    %183 = vector.load %arg22[%c8_160, %c0_161] : memref<88x32xbf16, #tpu.memory_space<vmem>>, vector<72x32xbf16>
    %c128_162 = arith.constant 128 : index
    %c0_163 = arith.constant 0 : index
    %184 = vector.load %arg15[%c128_162, %c0_163] : memref<288x64xbf16, #tpu.memory_space<vmem>>, vector<32x64xbf16>
    %cst_164 = arith.constant dense<0.000000e+00> : vector<72x64xf32>
    %185 = tpu.matmul %183, %184, %cst_164 {dimension_numbers = #tpu.dot_dimension_numbers<[1], [0], [0], [1], [0, 0, 1, 1], [], []>} : vector<72x32xbf16>, vector<32x64xbf16>, vector<72x64xf32> -> vector<72x64xf32>
    %186 = arith.addf %182, %185 : vector<72x64xf32>
    %c9_165 = arith.constant 9 : index
    %c0_166 = arith.constant 0 : index
    %187 = vector.load %arg22[%c9_165, %c0_166] : memref<88x32xbf16, #tpu.memory_space<vmem>>, vector<72x32xbf16>
    %c160_167 = arith.constant 160 : index
    %c0_168 = arith.constant 0 : index
    %188 = vector.load %arg15[%c160_167, %c0_168] : memref<288x64xbf16, #tpu.memory_space<vmem>>, vector<32x64xbf16>
    %cst_169 = arith.constant dense<0.000000e+00> : vector<72x64xf32>
    %189 = tpu.matmul %187, %188, %cst_169 {dimension_numbers = #tpu.dot_dimension_numbers<[1], [0], [0], [1], [0, 0, 1, 1], [], []>} : vector<72x32xbf16>, vector<32x64xbf16>, vector<72x64xf32> -> vector<72x64xf32>
    %190 = arith.addf %186, %189 : vector<72x64xf32>
    %c11_170 = arith.constant 11 : index
    %c0_171 = arith.constant 0 : index
    %191 = vector.load %arg22[%c11_170, %c0_171] : memref<88x32xbf16, #tpu.memory_space<vmem>>, vector<72x32xbf16>
    %c192_172 = arith.constant 192 : index
    %c0_173 = arith.constant 0 : index
    %192 = vector.load %arg15[%c192_172, %c0_173] : memref<288x64xbf16, #tpu.memory_space<vmem>>, vector<32x64xbf16>
    %cst_174 = arith.constant dense<0.000000e+00> : vector<72x64xf32>
    %193 = tpu.matmul %191, %192, %cst_174 {dimension_numbers = #tpu.dot_dimension_numbers<[1], [0], [0], [1], [0, 0, 1, 1], [], []>} : vector<72x32xbf16>, vector<32x64xbf16>, vector<72x64xf32> -> vector<72x64xf32>
    %194 = arith.addf %190, %193 : vector<72x64xf32>
    %c12_175 = arith.constant 12 : index
    %c0_176 = arith.constant 0 : index
    %195 = vector.load %arg22[%c12_175, %c0_176] : memref<88x32xbf16, #tpu.memory_space<vmem>>, vector<72x32xbf16>
    %c224_177 = arith.constant 224 : index
    %c0_178 = arith.constant 0 : index
    %196 = vector.load %arg15[%c224_177, %c0_178] : memref<288x64xbf16, #tpu.memory_space<vmem>>, vector<32x64xbf16>
    %cst_179 = arith.constant dense<0.000000e+00> : vector<72x64xf32>
    %197 = tpu.matmul %195, %196, %cst_179 {dimension_numbers = #tpu.dot_dimension_numbers<[1], [0], [0], [1], [0, 0, 1, 1], [], []>} : vector<72x32xbf16>, vector<32x64xbf16>, vector<72x64xf32> -> vector<72x64xf32>
    %198 = arith.addf %194, %197 : vector<72x64xf32>
    %c13_180 = arith.constant 13 : index
    %c0_181 = arith.constant 0 : index
    %199 = vector.load %arg22[%c13_180, %c0_181] : memref<88x32xbf16, #tpu.memory_space<vmem>>, vector<72x32xbf16>
    %c256_182 = arith.constant 256 : index
    %c0_183 = arith.constant 0 : index
    %200 = vector.load %arg15[%c256_182, %c0_183] : memref<288x64xbf16, #tpu.memory_space<vmem>>, vector<32x64xbf16>
    %cst_184 = arith.constant dense<0.000000e+00> : vector<72x64xf32>
    %201 = tpu.matmul %199, %200, %cst_184 {dimension_numbers = #tpu.dot_dimension_numbers<[1], [0], [0], [1], [0, 0, 1, 1], [], []>} : vector<72x32xbf16>, vector<32x64xbf16>, vector<72x64xf32> -> vector<72x64xf32>
    %202 = arith.addf %198, %201 : vector<72x64xf32>
    %c0_185 = arith.constant 0 : index
    %c0_186 = arith.constant 0 : index
    %203 = vector.load %arg16[%c0_185, %c0_186] : memref<1x64xf32, #tpu.memory_space<vmem>>, vector<1x64xf32>
    %204 = vector.broadcast %203 : vector<1x64xf32> to vector<72x64xf32>
    %205 = arith.addf %202, %204 : vector<72x64xf32>
    %cst_187 = arith.constant 0.000000e+00 : f32
    %206 = vector.broadcast %cst_187 : f32 to vector<72x1xf32>
    %207 = arith.cmpf ogt, %8, %206 : vector<72x1xf32>
    %cst_188 = arith.constant 0.000000e+00 : f32
    %208 = vector.broadcast %cst_188 : f32 to vector<72x64xf32>
    %209 = arith.maximumf %205, %208 : vector<72x64xf32>
    %cst_189 = arith.constant 0.000000e+00 : f32
    %210 = vector.shape_cast %207 : vector<72x1xi1> to vector<72x1xi1>
    %211 = vector.broadcast %210 : vector<72x1xi1> to vector<72x64xi1>
    %212 = vector.broadcast %cst_189 : f32 to vector<72x64xf32>
    %213 = arith.select %211, %209, %212 : vector<72x64xi1>, vector<72x64xf32>
    %214 = arith.truncf %213 : vector<72x64xf32> to vector<72x64xbf16>
    %c8_190 = arith.constant 8 : index
    %c0_191 = arith.constant 0 : index
    %215 = vector.load %arg23[%c8_190, %c0_191] : memref<88x64xbf16, #tpu.memory_space<vmem>>, vector<72x64xbf16>
    tpu.vector_store %arg23[%c8_190, %c0_191], %214 {strides = array<i32>} : memref<88x64xbf16, #tpu.memory_space<vmem>>, vector<72x64xbf16>,
    %c3_192 = arith.constant 3 : index
    %c0_193 = arith.constant 0 : index
    %216 = vector.load %arg23[%c3_192, %c0_193] : memref<88x64xbf16, #tpu.memory_space<vmem>>, vector<72x64xbf16>
    %c0_194 = arith.constant 0 : index
    %c0_195 = arith.constant 0 : index
    %217 = vector.load %arg17[%c0_194, %c0_195] : memref<576x64xbf16, #tpu.memory_space<vmem>>, vector<64x64xbf16>
    %cst_196 = arith.constant dense<0.000000e+00> : vector<72x64xf32>
    %218 = tpu.matmul %216, %217, %cst_196 {dimension_numbers = #tpu.dot_dimension_numbers<[1], [0], [0], [1], [0, 0, 1, 1], [], []>} : vector<72x64xbf16>, vector<64x64xbf16>, vector<72x64xf32> -> vector<72x64xf32>
    %c4_197 = arith.constant 4 : index
    %c0_198 = arith.constant 0 : index
    %219 = vector.load %arg23[%c4_197, %c0_198] : memref<88x64xbf16, #tpu.memory_space<vmem>>, vector<72x64xbf16>
    %c64_199 = arith.constant 64 : index
    %c0_200 = arith.constant 0 : index
    %220 = vector.load %arg17[%c64_199, %c0_200] : memref<576x64xbf16, #tpu.memory_space<vmem>>, vector<64x64xbf16>
    %cst_201 = arith.constant dense<0.000000e+00> : vector<72x64xf32>
    %221 = tpu.matmul %219, %220, %cst_201 {dimension_numbers = #tpu.dot_dimension_numbers<[1], [0], [0], [1], [0, 0, 1, 1], [], []>} : vector<72x64xbf16>, vector<64x64xbf16>, vector<72x64xf32> -> vector<72x64xf32>
    %222 = arith.addf %218, %221 : vector<72x64xf32>
    %c5_202 = arith.constant 5 : index
    %c0_203 = arith.constant 0 : index
    %223 = vector.load %arg23[%c5_202, %c0_203] : memref<88x64xbf16, #tpu.memory_space<vmem>>, vector<72x64xbf16>
    %c128_204 = arith.constant 128 : index
    %c0_205 = arith.constant 0 : index
    %224 = vector.load %arg17[%c128_204, %c0_205] : memref<576x64xbf16, #tpu.memory_space<vmem>>, vector<64x64xbf16>
    %cst_206 = arith.constant dense<0.000000e+00> : vector<72x64xf32>
    %225 = tpu.matmul %223, %224, %cst_206 {dimension_numbers = #tpu.dot_dimension_numbers<[1], [0], [0], [1], [0, 0, 1, 1], [], []>} : vector<72x64xbf16>, vector<64x64xbf16>, vector<72x64xf32> -> vector<72x64xf32>
    %226 = arith.addf %222, %225 : vector<72x64xf32>
    %c7_207 = arith.constant 7 : index
    %c0_208 = arith.constant 0 : index
    %227 = vector.load %arg23[%c7_207, %c0_208] : memref<88x64xbf16, #tpu.memory_space<vmem>>, vector<72x64xbf16>
    %c192_209 = arith.constant 192 : index
    %c0_210 = arith.constant 0 : index
    %228 = vector.load %arg17[%c192_209, %c0_210] : memref<576x64xbf16, #tpu.memory_space<vmem>>, vector<64x64xbf16>
    %cst_211 = arith.constant dense<0.000000e+00> : vector<72x64xf32>
    %229 = tpu.matmul %227, %228, %cst_211 {dimension_numbers = #tpu.dot_dimension_numbers<[1], [0], [0], [1], [0, 0, 1, 1], [], []>} : vector<72x64xbf16>, vector<64x64xbf16>, vector<72x64xf32> -> vector<72x64xf32>
    %230 = arith.addf %226, %229 : vector<72x64xf32>
    %c8_212 = arith.constant 8 : index
    %c0_213 = arith.constant 0 : index
    %231 = vector.load %arg23[%c8_212, %c0_213] : memref<88x64xbf16, #tpu.memory_space<vmem>>, vector<72x64xbf16>
    %c256_214 = arith.constant 256 : index
    %c0_215 = arith.constant 0 : index
    %232 = vector.load %arg17[%c256_214, %c0_215] : memref<576x64xbf16, #tpu.memory_space<vmem>>, vector<64x64xbf16>
    %cst_216 = arith.constant dense<0.000000e+00> : vector<72x64xf32>
    %233 = tpu.matmul %231, %232, %cst_216 {dimension_numbers = #tpu.dot_dimension_numbers<[1], [0], [0], [1], [0, 0, 1, 1], [], []>} : vector<72x64xbf16>, vector<64x64xbf16>, vector<72x64xf32> -> vector<72x64xf32>
    %234 = arith.addf %230, %233 : vector<72x64xf32>
    %c9_217 = arith.constant 9 : index
    %c0_218 = arith.constant 0 : index
    %235 = vector.load %arg23[%c9_217, %c0_218] : memref<88x64xbf16, #tpu.memory_space<vmem>>, vector<72x64xbf16>
    %c320 = arith.constant 320 : index
    %c0_219 = arith.constant 0 : index
    %236 = vector.load %arg17[%c320, %c0_219] : memref<576x64xbf16, #tpu.memory_space<vmem>>, vector<64x64xbf16>
    %cst_220 = arith.constant dense<0.000000e+00> : vector<72x64xf32>
    %237 = tpu.matmul %235, %236, %cst_220 {dimension_numbers = #tpu.dot_dimension_numbers<[1], [0], [0], [1], [0, 0, 1, 1], [], []>} : vector<72x64xbf16>, vector<64x64xbf16>, vector<72x64xf32> -> vector<72x64xf32>
    %238 = arith.addf %234, %237 : vector<72x64xf32>
    %c11_221 = arith.constant 11 : index
    %c0_222 = arith.constant 0 : index
    %239 = vector.load %arg23[%c11_221, %c0_222] : memref<88x64xbf16, #tpu.memory_space<vmem>>, vector<72x64xbf16>
    %c384 = arith.constant 384 : index
    %c0_223 = arith.constant 0 : index
    %240 = vector.load %arg17[%c384, %c0_223] : memref<576x64xbf16, #tpu.memory_space<vmem>>, vector<64x64xbf16>
    %cst_224 = arith.constant dense<0.000000e+00> : vector<72x64xf32>
    %241 = tpu.matmul %239, %240, %cst_224 {dimension_numbers = #tpu.dot_dimension_numbers<[1], [0], [0], [1], [0, 0, 1, 1], [], []>} : vector<72x64xbf16>, vector<64x64xbf16>, vector<72x64xf32> -> vector<72x64xf32>
    %242 = arith.addf %238, %241 : vector<72x64xf32>
    %c12_225 = arith.constant 12 : index
    %c0_226 = arith.constant 0 : index
    %243 = vector.load %arg23[%c12_225, %c0_226] : memref<88x64xbf16, #tpu.memory_space<vmem>>, vector<72x64xbf16>
    %c448 = arith.constant 448 : index
    %c0_227 = arith.constant 0 : index
    %244 = vector.load %arg17[%c448, %c0_227] : memref<576x64xbf16, #tpu.memory_space<vmem>>, vector<64x64xbf16>
    %cst_228 = arith.constant dense<0.000000e+00> : vector<72x64xf32>
    %245 = tpu.matmul %243, %244, %cst_228 {dimension_numbers = #tpu.dot_dimension_numbers<[1], [0], [0], [1], [0, 0, 1, 1], [], []>} : vector<72x64xbf16>, vector<64x64xbf16>, vector<72x64xf32> -> vector<72x64xf32>
    %246 = arith.addf %242, %245 : vector<72x64xf32>
    %c13_229 = arith.constant 13 : index
    %c0_230 = arith.constant 0 : index
    %247 = vector.load %arg23[%c13_229, %c0_230] : memref<88x64xbf16, #tpu.memory_space<vmem>>, vector<72x64xbf16>
    %c512 = arith.constant 512 : index
    %c0_231 = arith.constant 0 : index
    %248 = vector.load %arg17[%c512, %c0_231] : memref<576x64xbf16, #tpu.memory_space<vmem>>, vector<64x64xbf16>
    %cst_232 = arith.constant dense<0.000000e+00> : vector<72x64xf32>
    %249 = tpu.matmul %247, %248, %cst_232 {dimension_numbers = #tpu.dot_dimension_numbers<[1], [0], [0], [1], [0, 0, 1, 1], [], []>} : vector<72x64xbf16>, vector<64x64xbf16>, vector<72x64xf32> -> vector<72x64xf32>
    %250 = arith.addf %246, %249 : vector<72x64xf32>
    %c0_233 = arith.constant 0 : index
    %c0_234 = arith.constant 0 : index
    %251 = vector.load %arg18[%c0_233, %c0_234] : memref<1x64xf32, #tpu.memory_space<vmem>>, vector<1x64xf32>
    %252 = vector.broadcast %251 : vector<1x64xf32> to vector<72x64xf32>
    %253 = arith.addf %250, %252 : vector<72x64xf32>
    %cst_235 = arith.constant 0.000000e+00 : f32
    %254 = vector.broadcast %cst_235 : f32 to vector<72x1xf32>
    %255 = arith.cmpf ogt, %8, %254 : vector<72x1xf32>
    %cst_236 = arith.constant 0.000000e+00 : f32
    %256 = vector.broadcast %cst_236 : f32 to vector<72x64xf32>
    %257 = arith.maximumf %253, %256 : vector<72x64xf32>
    %cst_237 = arith.constant 0.000000e+00 : f32
    %258 = vector.shape_cast %255 : vector<72x1xi1> to vector<72x1xi1>
    %259 = vector.broadcast %258 : vector<72x1xi1> to vector<72x64xi1>
    %260 = vector.broadcast %cst_237 : f32 to vector<72x64xf32>
    %261 = arith.select %259, %257, %260 : vector<72x64xi1>, vector<72x64xf32>
    %c0_238 = arith.constant 0 : index
    %c0_239 = arith.constant 0 : index
    %262 = vector.load %arg4[%c0_238, %c0_239] : memref<2x72xbf16, #tpu.memory_space<vmem>>, vector<2x72xbf16>
    %263 = arith.truncf %261 : vector<72x64xf32> to vector<72x64xbf16>
    %cst_240 = arith.constant dense<0.000000e+00> : vector<2x64xf32>
    %264 = tpu.matmul %262, %263, %cst_240 {dimension_numbers = #tpu.dot_dimension_numbers<[1], [0], [0], [1], [0, 0, 1, 1], [], []>} : vector<2x72xbf16>, vector<72x64xbf16>, vector<2x64xf32> -> vector<2x64xf32>
    %cst_241 = arith.constant 0.0714285746 : f32
    %265 = vector.broadcast %cst_241 : f32 to vector<2x64xf32>
    %266 = arith.mulf %264, %265 : vector<2x64xf32>
    %267 = arith.truncf %266 : vector<2x64xf32> to vector<2x64xbf16>
    %c0_242 = arith.constant 0 : index
    %c0_243 = arith.constant 0 : index
    %268 = vector.load %arg19[%c0_242, %c0_243] : memref<64x20xbf16, #tpu.memory_space<vmem>>, vector<64x20xbf16>
    %cst_244 = arith.constant dense<0.000000e+00> : vector<2x20xf32>
    %269 = tpu.matmul %267, %268, %cst_244 {dimension_numbers = #tpu.dot_dimension_numbers<[1], [0], [0], [1], [0, 0, 1, 1], [], []>} : vector<2x64xbf16>, vector<64x20xbf16>, vector<2x20xf32> -> vector<2x20xf32>
    %c0_245 = arith.constant 0 : index
    %c0_246 = arith.constant 0 : index
    %270 = vector.load %arg20[%c0_245, %c0_246] : memref<1x20xf32, #tpu.memory_space<vmem>>, vector<1x20xf32>
    %271 = vector.broadcast %270 : vector<1x20xf32> to vector<2x20xf32>
    %272 = arith.addf %269, %271 : vector<2x20xf32>
    %c0_247 = arith.constant 0 : index
    %c0_248 = arith.constant 0 : index
    %273 = vector.load %arg21[%c0_247, %c0_248] : memref<2x20xf32, #tpu.memory_space<vmem>>, vector<2x20xf32>
    tpu.vector_store %arg21[%c0_247, %c0_248], %272 {strides = array<i32>} : memref<2x20xf32, #tpu.memory_space<vmem>>, vector<2x20xf32>,
    return
  }
  func.func @transform_0(%arg0: i32) -> (i32, i32, i32) {
    %c0_i32 = arith.constant 0 : i32
    %c0_i32_0 = arith.constant 0 : i32
    %c0_i32_1 = arith.constant 0 : i32
    return %arg0, %c0_i32, %c0_i32_0 : i32, i32, i32
  }
  func.func @transform_1(%arg0: i32) -> (i32, i32) {
    %c0_i32 = arith.constant 0 : i32
    %c0_i32_0 = arith.constant 0 : i32
    %c0_i32_1 = arith.constant 0 : i32
    return %c0_i32, %c0_i32_0 : i32, i32
  }
  func.func @transform_2(%arg0: i32) -> (i32, i32, i32) {
    %c0_i32 = arith.constant 0 : i32
    %c0_i32_0 = arith.constant 0 : i32
    %c0_i32_1 = arith.constant 0 : i32
    %c0_i32_2 = arith.constant 0 : i32
    return %c0_i32, %c0_i32_0, %c0_i32_1 : i32, i32, i32
  }
  func.func @transform_3(%arg0: i32) -> (i32, i32) {
    %c0_i32 = arith.constant 0 : i32
    %c0_i32_0 = arith.constant 0 : i32
    %c0_i32_1 = arith.constant 0 : i32
    return %c0_i32, %c0_i32_0 : i32, i32
  }
  func.func @transform_4(%arg0: i32) -> (i32, i32) {
    %c0_i32 = arith.constant 0 : i32
    %c0_i32_0 = arith.constant 0 : i32
    %c0_i32_1 = arith.constant 0 : i32
    return %c0_i32, %c0_i32_0 : i32, i32
  }
  func.func @transform_5(%arg0: i32) -> (i32, i32) {
    %c0_i32 = arith.constant 0 : i32
    %c0_i32_0 = arith.constant 0 : i32
    %c0_i32_1 = arith.constant 0 : i32
    return %c0_i32, %c0_i32_0 : i32, i32
  }
  func.func @transform_6(%arg0: i32) -> (i32, i32) {
    %c0_i32 = arith.constant 0 : i32
    %c0_i32_0 = arith.constant 0 : i32
    %c0_i32_1 = arith.constant 0 : i32
    return %c0_i32, %c0_i32_0 : i32, i32
  }
  func.func @transform_7(%arg0: i32) -> (i32, i32) {
    %c0_i32 = arith.constant 0 : i32
    %c0_i32_0 = arith.constant 0 : i32
    %c0_i32_1 = arith.constant 0 : i32
    return %c0_i32, %c0_i32_0 : i32, i32
  }
  func.func @transform_8(%arg0: i32) -> (i32, i32) {
    %c0_i32 = arith.constant 0 : i32
    %c0_i32_0 = arith.constant 0 : i32
    %c0_i32_1 = arith.constant 0 : i32
    return %c0_i32, %c0_i32_0 : i32, i32
  }
  func.func @transform_9(%arg0: i32) -> (i32, i32) {
    %c0_i32 = arith.constant 0 : i32
    %c0_i32_0 = arith.constant 0 : i32
    %c0_i32_1 = arith.constant 0 : i32
    return %c0_i32, %c0_i32_0 : i32, i32
  }
  func.func @transform_10(%arg0: i32) -> (i32, i32) {
    %c0_i32 = arith.constant 0 : i32
    %c0_i32_0 = arith.constant 0 : i32
    %c0_i32_1 = arith.constant 0 : i32
    return %c0_i32, %c0_i32_0 : i32, i32
  }
  func.func @transform_11(%arg0: i32) -> (i32, i32) {
    %c0_i32 = arith.constant 0 : i32
    %c0_i32_0 = arith.constant 0 : i32
    %c0_i32_1 = arith.constant 0 : i32
    return %c0_i32, %c0_i32_0 : i32, i32
  }
  func.func @transform_12(%arg0: i32) -> (i32, i32) {
    %c0_i32 = arith.constant 0 : i32
    %c0_i32_0 = arith.constant 0 : i32
    %c0_i32_1 = arith.constant 0 : i32
    return %c0_i32, %c0_i32_0 : i32, i32
  }
  func.func @transform_13(%arg0: i32) -> (i32, i32) {
    %c0_i32 = arith.constant 0 : i32
    %c0_i32_0 = arith.constant 0 : i32
    %c0_i32_1 = arith.constant 0 : i32
    return %c0_i32, %c0_i32_0 : i32, i32
  }
  func.func @transform_14(%arg0: i32) -> (i32, i32) {
    %c0_i32 = arith.constant 0 : i32
    %c0_i32_0 = arith.constant 0 : i32
    %c0_i32_1 = arith.constant 0 : i32
    return %c0_i32, %c0_i32_0 : i32, i32
  }
  func.func @transform_15(%arg0: i32) -> (i32, i32) {
    %c0_i32 = arith.constant 0 : i32
    %c0_i32_0 = arith.constant 0 : i32
    %c0_i32_1 = arith.constant 0 : i32
    return %c0_i32, %c0_i32_0 : i32, i32
  }
  func.func @transform_16(%arg0: i32) -> (i32, i32) {
    %c0_i32 = arith.constant 0 : i32
    %c0_i32_0 = arith.constant 0 : i32
    %c0_i32_1 = arith.constant 0 : i32
    return %c0_i32, %c0_i32_0 : i32, i32
  }
  func.func @transform_17(%arg0: i32) -> (i32, i32) {
    %c0_i32 = arith.constant 0 : i32
    %c0_i32_0 = arith.constant 0 : i32
    %c0_i32_1 = arith.constant 0 : i32
    return %c0_i32, %c0_i32_0 : i32, i32
  }
  func.func @transform_18(%arg0: i32) -> (i32, i32) {
    %c0_i32 = arith.constant 0 : i32
    %c0_i32_0 = arith.constant 0 : i32
    %c0_i32_1 = arith.constant 0 : i32
    return %c0_i32, %c0_i32_0 : i32, i32
  }
  func.func @transform_19(%arg0: i32) -> (i32, i32) {
    %c0_i32 = arith.constant 0 : i32
    %c0_i32_0 = arith.constant 0 : i32
    %c0_i32_1 = arith.constant 0 : i32
    return %c0_i32, %c0_i32_0 : i32, i32
  }
  func.func @transform_20(%arg0: i32) -> (i32, i32) {
    %c0_i32 = arith.constant 0 : i32
    %c0_i32_0 = arith.constant 0 : i32
    return %arg0, %c0_i32 : i32, i32
  }
}

</mosaic_0001>

<llo_original>
// kernel: tile.14
$region0: #{tile.14}
  %s0 = inlined_call_operand.vmem [shape: f32[2,8], index: 0, kind: input, shape index: {}]
  %s1 = inlined_call_operand.vmem [shape: f32[1,16], index: 1, kind: output, shape index: {}]
  $region1: #{tile.14} parent=0
    #allocation0 [shape = 'u8[4096]{0}', space=vmem, size = 0x1000, scoped, tag = 'scoped mem for output reshape']
    #allocation1 [shape = 'u8[4096]{0}', space=vmem, size = 0x1000, scoped, tag = 'scoped mem for input reshape']
    %s3 = sshllo.u32 0, 2
    %v4 = vld [vmem:[%s0] sm:%s3]
    %5 = vst [vmem:[#allocation1] sm:%s3] %v4
    %v6 = vld [vmem:[#allocation1] sm:$0x1]
    %vm7 = vcmask 64512
    %8 = vst.msk [vmem:[#allocation0] sm:$0x1] %vm7, %v6
    %s9 = scalar_lea.vmem [#allocation1], 1
    %v10 = vld [vmem:[%s9] sm:$0x1]
    %11 = vrot.lane.b32.xlu0 %v10, 8
    %v12 = vpop.permute.xlu0 %11
    %vm13 = vcmask 130112
    %14 = vst.msk [vmem:[#allocation0] sm:$0x1] %vm13, %v12
    %s16 = sshllo.u32 0, 1
    %v18 = vld [vmem:[#allocation0] sm:%s16]
    %s19 = sshllo.u32 0, 1
    %20 = vst [vmem:[%s1] sm:%s19] %v18

// kernel: tile.19
$region0: #{tile.19}
  %s0 = inlined_call_operand.vmem [shape: f32[2,16], index: 0, kind: input, shape index: {}]
  %s1 = inlined_call_operand.vmem [shape: f32[1,32], index: 1, kind: output, shape index: {}]
  $region1: #{tile.19} parent=0
    #allocation0 [shape = 'u8[4096]{0}', space=vmem, size = 0x1000, scoped, tag = 'scoped mem for output reshape']
    #allocation1 [shape = 'u8[4096]{0}', space=vmem, size = 0x1000, scoped, tag = 'scoped mem for input reshape']
    %s3 = sshllo.u32 0, 2
    %v4 = vld [vmem:[%s0] sm:%s3]
    %5 = vst [vmem:[#allocation1] sm:%s3] %v4
    %v6 = vld [vmem:[#allocation1] sm:$0x1]
    %vm7 = vcmask 130048
    %8 = vst.msk [vmem:[#allocation0] sm:$0x1] %vm7, %v6
    %s9 = scalar_lea.vmem [#allocation1], 1
    %v10 = vld [vmem:[%s9] sm:$0x1]
    %11 = vrot.lane.b32.xlu0 %v10, 16
    %v12 = vpop.permute.xlu0 %11
    %vm13 = vcmask 261248
    %14 = vst.msk [vmem:[#allocation0] sm:$0x1] %vm13, %v12
    %s16 = sshllo.u32 0, 1
    %v18 = vld [vmem:[#allocation0] sm:%s16]
    %s19 = sshllo.u32 0, 1
    %20 = vst [vmem:[%s1] sm:%s19] %v18

// kernel: tile.18
$region0: #{tile.18}
  #allocation0 [shape = 's32[1]{0}', space=sflag, size = 0x4, scoped, tag = 'scoped memory for tile.18']
  %s0 = inlined_call_operand.vmem [shape: f32[16], index: 0, kind: input, shape index: {}]
  %s1 = inlined_call_operand.vmem [shape: f32[2,16], index: 1, kind: output, shape index: {}]
  // Predicated region
  $region2: #{tile.18} parent=0 // pred_check
    _
  $region3: #{tile.18} parent=0 // pred_check_branch
    %3 = sbr.rel (0) target = $region5
  $region4: #{tile.18} parent=0 // pred_region
    _
  $region5: #{tile.18} parent=0 // pred_fallthru
    _
  %v4 = vld [vmem:[%s0] ss:$0 sm:$0xff]
  %5 = vst [vmem:[%s1] sm:$0x3] %v4

// kernel: cnn_forward.1
$region0: #{cnn_forward.1}
  #allocation0 [shape = 'u32[]', space=smem, size = 0x4, offset = 0x4, fixed_abs, tag = 'smem constant byte address 0x4 - core index']
  #allocation1 [shape = 'u32[144,128]{1,0:T(1,128)}', space=vmem, size = 0x12000, scoped, tag = 'internal scratch']
  #allocation2 [shape = 'bf16[88,32]{1,0:T(8,128)(2,1)}', space=vmem, size = 0x5800, scoped, tag = 'scratch operand']
  #allocation3 [shape = 'bf16[88,64]{1,0:T(8,128)(2,1)}', space=vmem, size = 0x5800, scoped, tag = 'scratch operand']
  %s0 = inlined_call_operand.vmem [shape: f32[2,16,2], index: 0, kind: input, shape index: {}]
  %s1 = inlined_call_operand.vmem [shape: f32[72,1], index: 1, kind: input, shape index: {}]
  %s2 = inlined_call_operand.vmem [shape: bf16[2,72,28], index: 2, kind: input, shape index: {}]
  %s3 = inlined_call_operand.vmem [shape: bf16[2,72], index: 3, kind: input, shape index: {}]
  %s4 = inlined_call_operand.vmem [shape: bf16[6,16], index: 4, kind: input, shape index: {}]
  %s5 = inlined_call_operand.vmem [shape: f32[1,16], index: 5, kind: input, shape index: {}]
  %s6 = inlined_call_operand.vmem [shape: bf16[48,32], index: 6, kind: input, shape index: {}]
  %s7 = inlined_call_operand.vmem [shape: f32[1,32], index: 7, kind: input, shape index: {}]
  %s8 = inlined_call_operand.vmem [shape: bf16[16,32], index: 8, kind: input, shape index: {}]
  %s9 = inlined_call_operand.vmem [shape: f32[1,32], index: 9, kind: input, shape index: {}]
  %s10 = inlined_call_operand.vmem [shape: bf16[288,32], index: 10, kind: input, shape index: {}]
  %s11 = inlined_call_operand.vmem [shape: f32[1,32], index: 11, kind: input, shape index: {}]
  %s12 = inlined_call_operand.vmem [shape: bf16[288,32], index: 12, kind: input, shape index: {}]
  %s13 = inlined_call_operand.vmem [shape: f32[1,32], index: 13, kind: input, shape index: {}]
  %s14 = inlined_call_operand.vmem [shape: bf16[288,64], index: 14, kind: input, shape index: {}]
  %s15 = inlined_call_operand.vmem [shape: f32[1,64], index: 15, kind: input, shape index: {}]
  %s16 = inlined_call_operand.vmem [shape: bf16[576,64], index: 16, kind: input, shape index: {}]
  %s17 = inlined_call_operand.vmem [shape: f32[1,64], index: 17, kind: input, shape index: {}]
  %s18 = inlined_call_operand.vmem [shape: bf16[64,20], index: 18, kind: input, shape index: {}]
  %s19 = inlined_call_operand.vmem [shape: f32[1,20], index: 19, kind: input, shape index: {}]
  %s20 = inlined_call_operand.hbm [shape: f32[2,20], index: 20, kind: output, shape index: {}]
  %s21 = sld [smem:[#allocation0]]
  $region90: #{cnn_forward.1} parent=0
    _
  %s23 = ssub.s32 1, %s21
  %s24 = scalar_select 0, %s23, %s21
  $region1: #{cnn_forward.1} parent=0
    #allocation4 [shape = 'u8[1024]{0}', space=vmem, size = 0x400, scoped, tag = 'output window, operand 0, single buffered']
    #allocation5 [shape = 's32[1]{0}', space=sflag, size = 0x4, scoped, tag = 'scoped memory for cnn_forward.1']
    %25 = vsyncpa [#allocation5], 0
    // Predicated region
    $region2: #{cnn_forward.1} parent=1 // pred_check
      _
    $region3: #{cnn_forward.1} parent=1 // pred_check_branch
      %27 = sbr.rel (0) target = $region5
    $region4: #{cnn_forward.1} parent=1 // pred_region
      _
    $region5: #{cnn_forward.1} parent=1 // pred_fallthru
      _
    // Predicated region
    $region6: #{cnn_forward.1} parent=1 // pred_check
      _
    $region7: #{cnn_forward.1} parent=1 // pred_check_branch
      %29 = sbr.rel (0) target = $region9
    $region8: #{cnn_forward.1} parent=1 // pred_region
      _
    $region9: #{cnn_forward.1} parent=1 // pred_fallthru
      _
    // Predicated region
    $region10: #{cnn_forward.1} parent=1 // pred_check
      _
    $region11: #{cnn_forward.1} parent=1 // pred_check_branch
      %31 = sbr.rel (0) target = $region13
    $region12: #{cnn_forward.1} parent=1 // pred_region
      _
    $region13: #{cnn_forward.1} parent=1 // pred_fallthru
      _
    // Predicated region
    $region14: #{cnn_forward.1} parent=1 // pred_check
      _
    $region15: #{cnn_forward.1} parent=1 // pred_check_branch
      %33 = sbr.rel (0) target = $region17
    $region16: #{cnn_forward.1} parent=1 // pred_region
      _
    $region17: #{cnn_forward.1} parent=1 // pred_fallthru
      _
    // Predicated region
    $region18: #{cnn_forward.1} parent=1 // pred_check
      _
    $region19: #{cnn_forward.1} parent=1 // pred_check_branch
      %35 = sbr.rel (0) target = $region21
    $region20: #{cnn_forward.1} parent=1 // pred_region
      _
    $region21: #{cnn_forward.1} parent=1 // pred_fallthru
      _
    // Predicated region
    $region22: #{cnn_forward.1} parent=1 // pred_check
      _
    $region23: #{cnn_forward.1} parent=1 // pred_check_branch
      %37 = sbr.rel (0) target = $region25
    $region24: #{cnn_forward.1} parent=1 // pred_region
      _
    $region25: #{cnn_forward.1} parent=1 // pred_fallthru
      _
    // Predicated region
    $region26: #{cnn_forward.1} parent=1 // pred_check
      _
    $region27: #{cnn_forward.1} parent=1 // pred_check_branch
      %39 = sbr.rel (0) target = $region29
    $region28: #{cnn_forward.1} parent=1 // pred_region
      _
    $region29: #{cnn_forward.1} parent=1 // pred_fallthru
      _
    // Predicated region
    $region30: #{cnn_forward.1} parent=1 // pred_check
      _
    $region31: #{cnn_forward.1} parent=1 // pred_check_branch
      %41 = sbr.rel (0) target = $region33
    $region32: #{cnn_forward.1} parent=1 // pred_region
      _
    $region33: #{cnn_forward.1} parent=1 // pred_fallthru
      _
    // Predicated region
    $region34: #{cnn_forward.1} parent=1 // pred_check
      _
    $region35: #{cnn_forward.1} parent=1 // pred_check_branch
      %43 = sbr.rel (0) target = $region37
    $region36: #{cnn_forward.1} parent=1 // pred_region
      _
    $region37: #{cnn_forward.1} parent=1 // pred_fallthru
      _
    // Predicated region
    $region38: #{cnn_forward.1} parent=1 // pred_check
      _
    $region39: #{cnn_forward.1} parent=1 // pred_check_branch
      %45 = sbr.rel (0) target = $region41
    $region40: #{cnn_forward.1} parent=1 // pred_region
      _
    $region41: #{cnn_forward.1} parent=1 // pred_fallthru
      _
    // Predicated region
    $region42: #{cnn_forward.1} parent=1 // pred_check
      _
    $region43: #{cnn_forward.1} parent=1 // pred_check_branch
      %47 = sbr.rel (0) target = $region45
    $region44: #{cnn_forward.1} parent=1 // pred_region
      _
    $region45: #{cnn_forward.1} parent=1 // pred_fallthru
      _
    // Predicated region
    $region46: #{cnn_forward.1} parent=1 // pred_check
      _
    $region47: #{cnn_forward.1} parent=1 // pred_check_branch
      %49 = sbr.rel (0) target = $region49
    $region48: #{cnn_forward.1} parent=1 // pred_region
      _
    $region49: #{cnn_forward.1} parent=1 // pred_fallthru
      _
    // Predicated region
    $region50: #{cnn_forward.1} parent=1 // pred_check
      _
    $region51: #{cnn_forward.1} parent=1 // pred_check_branch
      %51 = sbr.rel (0) target = $region53
    $region52: #{cnn_forward.1} parent=1 // pred_region
      _
    $region53: #{cnn_forward.1} parent=1 // pred_fallthru
      _
    // Predicated region
    $region54: #{cnn_forward.1} parent=1 // pred_check
      _
    $region55: #{cnn_forward.1} parent=1 // pred_check_branch
      %53 = sbr.rel (0) target = $region57
    $region56: #{cnn_forward.1} parent=1 // pred_region
      _
    $region57: #{cnn_forward.1} parent=1 // pred_fallthru
      _
    // Predicated region
    $region58: #{cnn_forward.1} parent=1 // pred_check
      _
    $region59: #{cnn_forward.1} parent=1 // pred_check_branch
      %55 = sbr.rel (0) target = $region61
    $region60: #{cnn_forward.1} parent=1 // pred_region
      _
    $region61: #{cnn_forward.1} parent=1 // pred_fallthru
      _
    // Predicated region
    $region62: #{cnn_forward.1} parent=1 // pred_check
      _
    $region63: #{cnn_forward.1} parent=1 // pred_check_branch
      %57 = sbr.rel (0) target = $region65
    $region64: #{cnn_forward.1} parent=1 // pred_region
      _
    $region65: #{cnn_forward.1} parent=1 // pred_fallthru
      _
    // Predicated region
    $region66: #{cnn_forward.1} parent=1 // pred_check
      _
    $region67: #{cnn_forward.1} parent=1 // pred_check_branch
      %59 = sbr.rel (0) target = $region69
    $region68: #{cnn_forward.1} parent=1 // pred_region
      _
    $region69: #{cnn_forward.1} parent=1 // pred_fallthru
      _
    // Predicated region
    $region70: #{cnn_forward.1} parent=1 // pred_check
      _
    $region71: #{cnn_forward.1} parent=1 // pred_check_branch
      %61 = sbr.rel (0) target = $region73
    $region72: #{cnn_forward.1} parent=1 // pred_region
      _
    $region73: #{cnn_forward.1} parent=1 // pred_fallthru
      _
    // Predicated region
    $region74: #{cnn_forward.1} parent=1 // pred_check
      _
    $region75: #{cnn_forward.1} parent=1 // pred_check_branch
      %63 = sbr.rel (0) target = $region77
    $region76: #{cnn_forward.1} parent=1 // pred_region
      _
    $region77: #{cnn_forward.1} parent=1 // pred_fallthru
      _
    // Predicated region
    $region78: #{cnn_forward.1} parent=1 // pred_check
      _
    $region79: #{cnn_forward.1} parent=1 // pred_check_branch
      %65 = sbr.rel (0) target = $region81
    $region80: #{cnn_forward.1} parent=1 // pred_region
      _
    $region81: #{cnn_forward.1} parent=1 // pred_fallthru
      _
    %vm67 = vcmask 257024
    %68 = vst.msk [vmem:[#allocation2] sm:$0xf] %vm67, 0
    %69 = vst.msk [vmem:[#allocation2 + $0x28] sm:$0xf] %vm67, 0
    %vm70 = vcmask 519168
    %71 = vst.msk [vmem:[#allocation3] sm:$0xf] %vm70, 0
    %72 = vst.msk [vmem:[#allocation3 + $0x28] sm:$0xf] %vm70, 0
    %v73 = vld [vmem:[%s1] sm:$0xff]
    %v74 = vld [vmem:[%s1 + $0x8] sm:$0xff]
    %v75 = vld [vmem:[%s1 + $0x10] sm:$0xff]
    %v76 = vld [vmem:[%s1 + $0x18] sm:$0xff]
    %v77 = vld [vmem:[%s1 + $0x20] sm:$0xff]
    %v78 = vld [vmem:[%s1 + $0x28] sm:$0xff]
    %v79 = vld [vmem:[%s1 + $0x30] sm:$0xff]
    %v80 = vld [vmem:[%s1 + $0x38] sm:$0xff]
    %v81 = vld [vmem:[%s1 + $0x40] sm:$0xff]
    %v82 = vld [vmem:[%s0] sm:$0xff]
    %v83 = vld [vmem:[%s0 + $0x8] sm:$0xff]
    %v84 = vld [vmem:[%s0 + $0x10] sm:$0xff]
    %v85 = vld [vmem:[%s0 + $0x18] sm:$0xff]
    %v86 = vpack.c.bf16 %v83, %v82
    %v87 = vpack.c.bf16 %v85, %v84
    %v88 = vld [vmem:[%s4] sm:$0x1]
    %v89 = vld [vmem:[%s4] sm:$0x2]
    %vm90 = vsmask.f32 7424
    %v92 = vshrl.u32 %v86, 16
    %v94 = vshll.u32 %v86, 16
    %v96 = vrot.slane %v94, 1
    %v97 = vor.u32 %v92, %v96
    %v99 = vshll.u32 %v87, 16
    %v101 = vrot.slane %v99, 1
    %v102 = vsel %vm90, %v97, %v101
    %v103 = vshrl.u32 %v87, 16
    %v105 = vor.u32 %v103, %v101
    %v107 = vunpack.c.l.b16 %v89
    %v108 = vpack.c.b16 %v107, %v107
    %v109 = vrot.slane %v108, 1
    %vm110 = vcmask 15360
    %v112 = vsel %vm110, %v102, 0
    %v115 = vsel %vm110, %v105, 0
    %vm117 = vcmask 1040384
    %v119 = vsel %vm117, %v109, 0
    %121 = vmatprep.subr.bf16.mxu0 0
    %122 = vmatpush1.bf16.msra.mxu0 %v119
    %123 = vmatprep.subr.bf16.mxu0 0
    %124 = vmatpush1.bf16.msra.mxu0 0
    %125 = vmatprep.subr.bf16.mxu0 0
    %126 = vmatpush1.bf16.msra.mxu0 0
    %127 = vmatprep.subr.bf16.mxu0 0
    %128 = vmatpush1.bf16.msra.mxu0 0
    %129 = vmatprep.subr.bf16.mxu0 0
    %130 = vmatpush1.bf16.msra.mxu0 0
    %131 = vmatprep.subr.bf16.mxu0 0
    %132 = vmatpush1.bf16.msra.mxu0 0
    %133 = vmatprep.subr.bf16.mxu0 0
    %134 = vmatpush1.bf16.msra.mxu0 0
    %135 = vmatprep.subr.bf16.mxu0 0
    %136 = vmatpush1.bf16.msra.mxu0 0
    %137 = vmatprep.subr.bf16.mxu0 0
    %138 = vmatpush1.bf16.msra.mxu0 0
    %139 = vmatprep.subr.bf16.mxu0 0
    %140 = vmatpush1.bf16.msra.mxu0 0
    %141 = vmatprep.subr.bf16.mxu0 0
    %142 = vmatpush1.bf16.msra.mxu0 0
    %143 = vmatprep.subr.bf16.mxu0 0
    %144 = vmatpush1.bf16.msra.mxu0 0
    %145 = vmatprep.subr.bf16.mxu0 0
    %146 = vmatpush1.bf16.msra.mxu0 0
    %147 = vmatprep.subr.bf16.mxu0 0
    %148 = vmatpush1.bf16.msra.mxu0 0
    %149 = vmatprep.subr.bf16.mxu0 0
    %150 = vmatpush1.bf16.msra.mxu0 0
    %151 = vmatprep.subr.bf16.mxu0 0
    %152 = vmatpush1.bf16.msra.mxu0 0
    %153 = vmatprep.mubr.bf16.mxu0 0
    %154 = vmatmul.mubr.bf16.gmra.mrb[0].mxu0 %v112
    %v155 = vpop.f32.mrb[0].mxu0
    %v156 = vadd.f32 0.0, %v155
    %v157 = vpop.f32.mrb[0].mxu0
    %v158 = vpop.f32.mrb[0].mxu0
    %v159 = vadd.f32 0.0, %v158
    %v160 = vpop.f32.mrb[0].mxu0
    %161 = vmatprep.mubr.bf16.mxu0 0
    %162 = vmatmul.mubr.bf16.gmra.mrb[0].mxu0 %v115
    %v163 = vpop.f32.mrb[0].mxu0
    %v164 = vadd.f32 0.0, %v163
    %v165 = vpop.f32.mrb[0].mxu0
    %v166 = vpop.f32.mrb[0].mxu0
    %v167 = vadd.f32 0.0, %v166
    %v168 = vpop.f32.mrb[0].mxu0
    %169 = vdwg.mxu0
    %v170 = vsel %vm110, %v86, 0
    %v172 = vsel %vm110, %v87, 0
    %v175 = vsel %vm117, %v88, 0
    %177 = vmatprep.subr.bf16.mxu0 0
    %178 = vmatpush1.bf16.msra.mxu0 %v175
    %179 = vmatprep.subr.bf16.mxu0 0
    %180 = vmatpush1.bf16.msra.mxu0 0
    %181 = vmatprep.subr.bf16.mxu0 0
    %182 = vmatpush1.bf16.msra.mxu0 0
    %183 = vmatprep.subr.bf16.mxu0 0
    %184 = vmatpush1.bf16.msra.mxu0 0
    %185 = vmatprep.subr.bf16.mxu0 0
    %186 = vmatpush1.bf16.msra.mxu0 0
    %187 = vmatprep.subr.bf16.mxu0 0
    %188 = vmatpush1.bf16.msra.mxu0 0
    %189 = vmatprep.subr.bf16.mxu0 0
    %190 = vmatpush1.bf16.msra.mxu0 0
    %191 = vmatprep.subr.bf16.mxu0 0
    %192 = vmatpush1.bf16.msra.mxu0 0
    %193 = vmatprep.subr.bf16.mxu0 0
    %194 = vmatpush1.bf16.msra.mxu0 0
    %195 = vmatprep.subr.bf16.mxu0 0
    %196 = vmatpush1.bf16.msra.mxu0 0
    %197 = vmatprep.subr.bf16.mxu0 0
    %198 = vmatpush1.bf16.msra.mxu0 0
    %199 = vmatprep.subr.bf16.mxu0 0
    %200 = vmatpush1.bf16.msra.mxu0 0
    %201 = vmatprep.subr.bf16.mxu0 0
    %202 = vmatpush1.bf16.msra.mxu0 0
    %203 = vmatprep.subr.bf16.mxu0 0
    %204 = vmatpush1.bf16.msra.mxu0 0
    %205 = vmatprep.subr.bf16.mxu0 0
    %206 = vmatpush1.bf16.msra.mxu0 0
    %207 = vmatprep.subr.bf16.mxu0 0
    %208 = vmatpush1.bf16.msra.mxu0 0
    %209 = vmatprep.mubr.bf16.mxu0 0
    %210 = vmatmul.mubr.bf16.gmra.mrb[0].mxu0 %v170
    %v211 = vpop.f32.mrb[0].mxu0
    %v212 = vadd.f32 %v156, %v211
    %v213 = vpop.f32.mrb[0].mxu0
    %v214 = vpop.f32.mrb[0].mxu0
    %v215 = vadd.f32 %v159, %v214
    %v216 = vpop.f32.mrb[0].mxu0
    %217 = vmatprep.mubr.bf16.mxu0 0
    %218 = vmatmul.mubr.bf16.gmra.mrb[0].mxu0 %v172
    %v219 = vpop.f32.mrb[0].mxu0
    %v220 = vadd.f32 %v164, %v219
    %v221 = vpop.f32.mrb[0].mxu0
    %v222 = vpop.f32.mrb[0].mxu0
    %v223 = vadd.f32 %v167, %v222
    %v224 = vpop.f32.mrb[0].mxu0
    %225 = vdwg.mxu0
    %v226 = vld [vmem:[%s4] sm:$0x4]
    %vm229 = vcmask 1046528
    %v230 = vrot.slane %v86, 1
    %v231 = vrot.slane %v87, 1
    %v232 = vsel %vm229, %v230, %v231
    %v234 = vunpack.c.l.b16 %v226
    %v235 = vpack.c.b16 %v234, %v234
    %v236 = vrot.slane %v235, 2
    %v238 = vsel %vm110, %v232, 0
    %v241 = vsel %vm110, %v231, 0
    %v244 = vsel %vm117, %v236, 0
    %246 = vmatprep.subr.bf16.mxu0 0
    %247 = vmatpush1.bf16.msra.mxu0 %v244
    %248 = vmatprep.subr.bf16.mxu0 0
    %249 = vmatpush1.bf16.msra.mxu0 0
    %250 = vmatprep.subr.bf16.mxu0 0
    %251 = vmatpush1.bf16.msra.mxu0 0
    %252 = vmatprep.subr.bf16.mxu0 0
    %253 = vmatpush1.bf16.msra.mxu0 0
    %254 = vmatprep.subr.bf16.mxu0 0
    %255 = vmatpush1.bf16.msra.mxu0 0
    %256 = vmatprep.subr.bf16.mxu0 0
    %257 = vmatpush1.bf16.msra.mxu0 0
    %258 = vmatprep.subr.bf16.mxu0 0
    %259 = vmatpush1.bf16.msra.mxu0 0
    %260 = vmatprep.subr.bf16.mxu0 0
    %261 = vmatpush1.bf16.msra.mxu0 0
    %262 = vmatprep.subr.bf16.mxu0 0
    %263 = vmatpush1.bf16.msra.mxu0 0
    %264 = vmatprep.subr.bf16.mxu0 0
    %265 = vmatpush1.bf16.msra.mxu0 0
    %266 = vmatprep.subr.bf16.mxu0 0
    %267 = vmatpush1.bf16.msra.mxu0 0
    %268 = vmatprep.subr.bf16.mxu0 0
    %269 = vmatpush1.bf16.msra.mxu0 0
    %270 = vmatprep.subr.bf16.mxu0 0
    %271 = vmatpush1.bf16.msra.mxu0 0
    %272 = vmatprep.subr.bf16.mxu0 0
    %273 = vmatpush1.bf16.msra.mxu0 0
    %274 = vmatprep.subr.bf16.mxu0 0
    %275 = vmatpush1.bf16.msra.mxu0 0
    %276 = vmatprep.subr.bf16.mxu0 0
    %277 = vmatpush1.bf16.msra.mxu0 0
    %278 = vmatprep.mubr.bf16.mxu0 0
    %279 = vmatmul.mubr.bf16.gmra.mrb[0].mxu0 %v238
    %v280 = vpop.f32.mrb[0].mxu0
    %v281 = vadd.f32 0.0, %v280
    %v282 = vpop.f32.mrb[0].mxu0
    %v283 = vpop.f32.mrb[0].mxu0
    %v284 = vadd.f32 0.0, %v283
    %v285 = vpop.f32.mrb[0].mxu0
    %286 = vmatprep.mubr.bf16.mxu0 0
    %287 = vmatmul.mubr.bf16.gmra.mrb[0].mxu0 %v241
    %v288 = vpop.f32.mrb[0].mxu0
    %v289 = vadd.f32 0.0, %v288
    %v290 = vpop.f32.mrb[0].mxu0
    %v291 = vpop.f32.mrb[0].mxu0
    %v292 = vadd.f32 0.0, %v291
    %v293 = vpop.f32.mrb[0].mxu0
    %294 = vdwg.mxu0
    %v295 = vadd.f32 %v212, %v281
    %v296 = vadd.f32 %v215, %v284
    %v297 = vadd.f32 %v220, %v289
    %v298 = vadd.f32 %v223, %v292
    %v299 = vld [vmem:[%s5] sm:$0x1]
    %v301 = vlaneseq
    %v302 = vshrl.u32 %v301, 7
    %v303 = vsub.s32 0, %v302
    %v304 = vrot.slane %v299, %v303
    %v306 = vadd.f32 %v295, %v304
    %v307 = vadd.f32 %v296, %v304
    %v308 = vadd.f32 %v297, %v304
    %v309 = vadd.f32 %v298, %v304
    %v310 = vmax.f32 %v306, 0.0
    %v311 = vmax.f32 %v307, 0.0
    %v312 = vmax.f32 %v308, 0.0
    %v313 = vmax.f32 %v309, 0.0
    %v314 = vpack.c.bf16 %v311, %v310
    %v315 = vpack.c.bf16 %v313, %v312
    %v316 = vld [vmem:[%s6] sm:$0xf]
    %v317 = vld [vmem:[%s6 + $0x4] sm:$0xf]
    %v318 = vld [vmem:[%s6 + $0x8] sm:$0xf]
    %v319 = vld [vmem:[%s6 + $0xc] sm:$0xf]
    %v321 = vshrl.u32 %v314, 16
    %v323 = vshll.u32 %v314, 16
    %v325 = vrot.slane %v323, 1
    %v326 = vor.u32 %v321, %v325
    %v328 = vshll.u32 %v315, 16
    %v330 = vrot.slane %v328, 1
    %v331 = vsel %vm90, %v326, %v330
    %v332 = vshrl.u32 %v315, 16
    %v334 = vor.u32 %v332, %v330
    %v337 = vunpack.c.l.b16 %v318
    %v338 = vunpack.c.l.b16 %v319
    %v339 = vpack.c.b16 %v338, %v337
    %vm341 = vcmask 130048
    %v343 = vsel %vm341, %v331, 0
    %v346 = vsel %vm341, %v334, 0
    %348 = vmatprep.subr.bf16.mxu0 0
    %349 = vmatpush1.bf16.msra.mxu0 %v339
    %350 = vmatprep.subr.bf16.mxu0 0
    %351 = vmatpush1.bf16.msra.mxu0 0
    %352 = vmatprep.subr.bf16.mxu0 0
    %353 = vmatpush1.bf16.msra.mxu0 0
    %354 = vmatprep.subr.bf16.mxu0 0
    %355 = vmatpush1.bf16.msra.mxu0 0
    %356 = vmatprep.subr.bf16.mxu0 0
    %357 = vmatpush1.bf16.msra.mxu0 0
    %358 = vmatprep.subr.bf16.mxu0 0
    %359 = vmatpush1.bf16.msra.mxu0 0
    %360 = vmatprep.subr.bf16.mxu0 0
    %361 = vmatpush1.bf16.msra.mxu0 0
    %362 = vmatprep.subr.bf16.mxu0 0
    %363 = vmatpush1.bf16.msra.mxu0 0
    %364 = vmatprep.subr.bf16.mxu0 0
    %365 = vmatpush1.bf16.msra.mxu0 0
    %366 = vmatprep.subr.bf16.mxu0 0
    %367 = vmatpush1.bf16.msra.mxu0 0
    %368 = vmatprep.subr.bf16.mxu0 0
    %369 = vmatpush1.bf16.msra.mxu0 0
    %370 = vmatprep.subr.bf16.mxu0 0
    %371 = vmatpush1.bf16.msra.mxu0 0
    %372 = vmatprep.subr.bf16.mxu0 0
    %373 = vmatpush1.bf16.msra.mxu0 0
    %374 = vmatprep.subr.bf16.mxu0 0
    %375 = vmatpush1.bf16.msra.mxu0 0
    %376 = vmatprep.subr.bf16.mxu0 0
    %377 = vmatpush1.bf16.msra.mxu0 0
    %378 = vmatprep.subr.bf16.mxu0 0
    %379 = vmatpush1.bf16.msra.mxu0 0
    %380 = vmatprep.mubr.bf16.mxu0 0
    %381 = vmatmul.mubr.bf16.gmra.mrb[0].mxu0 %v343
    %v382 = vpop.f32.mrb[0].mxu0
    %v383 = vadd.f32 0.0, %v382
    %v384 = vpop.f32.mrb[0].mxu0
    %v385 = vpop.f32.mrb[0].mxu0
    %v386 = vadd.f32 0.0, %v385
    %v387 = vpop.f32.mrb[0].mxu0
    %388 = vmatprep.mubr.bf16.mxu0 0
    %389 = vmatmul.mubr.bf16.gmra.mrb[0].mxu0 %v346
    %v390 = vpop.f32.mrb[0].mxu0
    %v391 = vadd.f32 0.0, %v390
    %v392 = vpop.f32.mrb[0].mxu0
    %v393 = vpop.f32.mrb[0].mxu0
    %v394 = vadd.f32 0.0, %v393
    %v395 = vpop.f32.mrb[0].mxu0
    %396 = vdwg.mxu0
    %v399 = vunpack.c.l.b16 %v316
    %v400 = vunpack.c.l.b16 %v317
    %v401 = vpack.c.b16 %v400, %v399
    %v403 = vsel %vm341, %v314, 0
    %v405 = vsel %vm341, %v315, 0
    %407 = vmatprep.subr.bf16.mxu0 0
    %408 = vmatpush1.bf16.msra.mxu0 %v401
    %409 = vmatprep.subr.bf16.mxu0 0
    %410 = vmatpush1.bf16.msra.mxu0 0
    %411 = vmatprep.subr.bf16.mxu0 0
    %412 = vmatpush1.bf16.msra.mxu0 0
    %413 = vmatprep.subr.bf16.mxu0 0
    %414 = vmatpush1.bf16.msra.mxu0 0
    %415 = vmatprep.subr.bf16.mxu0 0
    %416 = vmatpush1.bf16.msra.mxu0 0
    %417 = vmatprep.subr.bf16.mxu0 0
    %418 = vmatpush1.bf16.msra.mxu0 0
    %419 = vmatprep.subr.bf16.mxu0 0
    %420 = vmatpush1.bf16.msra.mxu0 0
    %421 = vmatprep.subr.bf16.mxu0 0
    %422 = vmatpush1.bf16.msra.mxu0 0
    %423 = vmatprep.subr.bf16.mxu0 0
    %424 = vmatpush1.bf16.msra.mxu0 0
    %425 = vmatprep.subr.bf16.mxu0 0
    %426 = vmatpush1.bf16.msra.mxu0 0
    %427 = vmatprep.subr.bf16.mxu0 0
    %428 = vmatpush1.bf16.msra.mxu0 0
    %429 = vmatprep.subr.bf16.mxu0 0
    %430 = vmatpush1.bf16.msra.mxu0 0
    %431 = vmatprep.subr.bf16.mxu0 0
    %432 = vmatpush1.bf16.msra.mxu0 0
    %433 = vmatprep.subr.bf16.mxu0 0
    %434 = vmatpush1.bf16.msra.mxu0 0
    %435 = vmatprep.subr.bf16.mxu0 0
    %436 = vmatpush1.bf16.msra.mxu0 0
    %437 = vmatprep.subr.bf16.mxu0 0
    %438 = vmatpush1.bf16.msra.mxu0 0
    %439 = vmatprep.mubr.bf16.mxu0 0
    %440 = vmatmul.mubr.bf16.gmra.mrb[0].mxu0 %v403
    %v441 = vpop.f32.mrb[0].mxu0
    %v442 = vadd.f32 %v383, %v441
    %v443 = vpop.f32.mrb[0].mxu0
    %v444 = vpop.f32.mrb[0].mxu0
    %v445 = vadd.f32 %v386, %v444
    %v446 = vpop.f32.mrb[0].mxu0
    %447 = vmatprep.mubr.bf16.mxu0 0
    %448 = vmatmul.mubr.bf16.gmra.mrb[0].mxu0 %v405
    %v449 = vpop.f32.mrb[0].mxu0
    %v450 = vadd.f32 %v391, %v449
    %v451 = vpop.f32.mrb[0].mxu0
    %v452 = vpop.f32.mrb[0].mxu0
    %v453 = vadd.f32 %v394, %v452
    %v454 = vpop.f32.mrb[0].mxu0
    %455 = vdwg.mxu0
    %v456 = vld [vmem:[%s6 + $0x10] sm:$0xf]
    %v457 = vld [vmem:[%s6 + $0x14] sm:$0xf]
    %v460 = vrot.slane %v314, 1
    %v461 = vrot.slane %v315, 1
    %v462 = vsel %vm229, %v460, %v461
    %v465 = vunpack.c.l.b16 %v456
    %v466 = vunpack.c.l.b16 %v457
    %v467 = vpack.c.b16 %v466, %v465
    %v470 = vsel %vm341, %v462, 0
    %v473 = vsel %vm341, %v461, 0
    %475 = vmatprep.subr.bf16.mxu0 0
    %476 = vmatpush1.bf16.msra.mxu0 %v467
    %477 = vmatprep.subr.bf16.mxu0 0
    %478 = vmatpush1.bf16.msra.mxu0 0
    %479 = vmatprep.subr.bf16.mxu0 0
    %480 = vmatpush1.bf16.msra.mxu0 0
    %481 = vmatprep.subr.bf16.mxu0 0
    %482 = vmatpush1.bf16.msra.mxu0 0
    %483 = vmatprep.subr.bf16.mxu0 0
    %484 = vmatpush1.bf16.msra.mxu0 0
    %485 = vmatprep.subr.bf16.mxu0 0
    %486 = vmatpush1.bf16.msra.mxu0 0
    %487 = vmatprep.subr.bf16.mxu0 0
    %488 = vmatpush1.bf16.msra.mxu0 0
    %489 = vmatprep.subr.bf16.mxu0 0
    %490 = vmatpush1.bf16.msra.mxu0 0
    %491 = vmatprep.subr.bf16.mxu0 0
    %492 = vmatpush1.bf16.msra.mxu0 0
    %493 = vmatprep.subr.bf16.mxu0 0
    %494 = vmatpush1.bf16.msra.mxu0 0
    %495 = vmatprep.subr.bf16.mxu0 0
    %496 = vmatpush1.bf16.msra.mxu0 0
    %497 = vmatprep.subr.bf16.mxu0 0
    %498 = vmatpush1.bf16.msra.mxu0 0
    %499 = vmatprep.subr.bf16.mxu0 0
    %500 = vmatpush1.bf16.msra.mxu0 0
    %501 = vmatprep.subr.bf16.mxu0 0
    %502 = vmatpush1.bf16.msra.mxu0 0
    %503 = vmatprep.subr.bf16.mxu0 0
    %504 = vmatpush1.bf16.msra.mxu0 0
    %505 = vmatprep.subr.bf16.mxu0 0
    %506 = vmatpush1.bf16.msra.mxu0 0
    %507 = vmatprep.mubr.bf16.mxu0 0
    %508 = vmatmul.mubr.bf16.gmra.mrb[0].mxu0 %v470
    %v509 = vpop.f32.mrb[0].mxu0
    %v510 = vadd.f32 0.0, %v509
    %v511 = vpop.f32.mrb[0].mxu0
    %v512 = vpop.f32.mrb[0].mxu0
    %v513 = vadd.f32 0.0, %v512
    %v514 = vpop.f32.mrb[0].mxu0
    %515 = vmatprep.mubr.bf16.mxu0 0
    %516 = vmatmul.mubr.bf16.gmra.mrb[0].mxu0 %v473
    %v517 = vpop.f32.mrb[0].mxu0
    %v518 = vadd.f32 0.0, %v517
    %v519 = vpop.f32.mrb[0].mxu0
    %v520 = vpop.f32.mrb[0].mxu0
    %v521 = vadd.f32 0.0, %v520
    %v522 = vpop.f32.mrb[0].mxu0
    %523 = vdwg.mxu0
    %v524 = vadd.f32 %v442, %v510
    %v525 = vadd.f32 %v445, %v513
    %v526 = vadd.f32 %v450, %v518
    %v527 = vadd.f32 %v453, %v521
    %v528 = vld [vmem:[%s7] sm:$0x1]
    %v530 = vlaneseq
    %v531 = vshrl.u32 %v530, 7
    %v532 = vsub.s32 0, %v531
    %v533 = vrot.slane %v528, %v532
    %v535 = vadd.f32 %v524, %v533
    %v536 = vadd.f32 %v525, %v533
    %v537 = vadd.f32 %v526, %v533
    %v538 = vadd.f32 %v527, %v533
    %v539 = vmax.f32 %v535, 0.0
    %v540 = vmax.f32 %v536, 0.0
    %v541 = vmax.f32 %v537, 0.0
    %v542 = vmax.f32 %v538, 0.0
    %v543 = vpack.c.bf16 %v540, %v539
    %v544 = vpack.c.bf16 %v542, %v541
    %v545 = vld [vmem:[%s2] sm:$0xf]
    %v546 = vld [vmem:[%s2 + $0x4] sm:$0xf]
    %v547 = vld [vmem:[%s2 + $0x8] sm:$0xf]
    %v548 = vld [vmem:[%s2 + $0xc] sm:$0xf]
    %v549 = vld [vmem:[%s2 + $0x10] sm:$0xf]
    %v550 = vld [vmem:[%s2 + $0x14] sm:$0xf]
    %v551 = vld [vmem:[%s2 + $0x18] sm:$0xf]
    %v552 = vld [vmem:[%s2 + $0x1c] sm:$0xf]
    %v553 = vld [vmem:[%s2 + $0x20] sm:$0xf]
    %s554 = scalar_lea.vmem %s2, 36
    %v555 = vld [vmem:[%s554] sm:$0xf]
    %v556 = vld [vmem:[%s554 + $0x4] sm:$0xf]
    %v557 = vld [vmem:[%s554 + $0x8] sm:$0xf]
    %v558 = vld [vmem:[%s554 + $0xc] sm:$0xf]
    %v559 = vld [vmem:[%s554 + $0x10] sm:$0xf]
    %v560 = vld [vmem:[%s554 + $0x14] sm:$0xf]
    %v561 = vld [vmem:[%s554 + $0x18] sm:$0xf]
    %v562 = vld [vmem:[%s554 + $0x1c] sm:$0xf]
    %v563 = vld [vmem:[%s554 + $0x20] sm:$0xf]
    %v573 = vunpack.c.l.b16 %v555
    %v574 = vunpack.c.l.b16 %v556
    %v575 = vunpack.c.l.b16 %v557
    %v576 = vunpack.c.l.b16 %v558
    %v577 = vunpack.c.l.b16 %v559
    %v578 = vunpack.c.l.b16 %v560
    %v579 = vunpack.c.l.b16 %v561
    %v580 = vunpack.c.l.b16 %v562
    %v581 = vunpack.c.l.b16 %v563
    %v582 = vpack.c.b16 %v574, %v573
    %v583 = vpack.c.b16 %v576, %v575
    %v584 = vpack.c.b16 %v578, %v577
    %v585 = vpack.c.b16 %v580, %v579
    %v586 = vpack.c.b16 %v581, %v581
    %589 = vrot.lane.b32.xlu0 %v543, 112
    %v590 = vpop.permute.xlu0 %589
    %591 = vrot.lane.b32.xlu0 %v544, 112
    %v592 = vpop.permute.xlu0 %591
    %vm594 = vcmask 228352
    %v596 = vsel %vm594, %v582, 0
    %v599 = vsel %vm594, %v583, 0
    %v602 = vsel %vm594, %v584, 0
    %v605 = vsel %vm594, %v585, 0
    %v608 = vsel %vm594, %v586, 0
    %vm610 = vcmask 1045504
    %v612 = vsel %vm610, %v592, 0
    %614 = vmatprep.subr.bf16.mxu0 0
    %615 = vmatpush1.bf16.msra.mxu0 %v590
    %616 = vmatprep.subr.bf16.mxu0 0
    %617 = vmatpush1.bf16.msra.mxu0 %v612
    %618 = vmatprep.subr.bf16.mxu0 0
    %619 = vmatpush1.bf16.msra.mxu0 0
    %620 = vmatprep.subr.bf16.mxu0 0
    %621 = vmatpush1.bf16.msra.mxu0 0
    %622 = vmatprep.subr.bf16.mxu0 0
    %623 = vmatpush1.bf16.msra.mxu0 0
    %624 = vmatprep.subr.bf16.mxu0 0
    %625 = vmatpush1.bf16.msra.mxu0 0
    %626 = vmatprep.subr.bf16.mxu0 0
    %627 = vmatpush1.bf16.msra.mxu0 0
    %628 = vmatprep.subr.bf16.mxu0 0
    %629 = vmatpush1.bf16.msra.mxu0 0
    %630 = vmatprep.subr.bf16.mxu0 0
    %631 = vmatpush1.bf16.msra.mxu0 0
    %632 = vmatprep.subr.bf16.mxu0 0
    %633 = vmatpush1.bf16.msra.mxu0 0
    %634 = vmatprep.subr.bf16.mxu0 0
    %635 = vmatpush1.bf16.msra.mxu0 0
    %636 = vmatprep.subr.bf16.mxu0 0
    %637 = vmatpush1.bf16.msra.mxu0 0
    %638 = vmatprep.subr.bf16.mxu0 0
    %639 = vmatpush1.bf16.msra.mxu0 0
    %640 = vmatprep.subr.bf16.mxu0 0
    %641 = vmatpush1.bf16.msra.mxu0 0
    %642 = vmatprep.subr.bf16.mxu0 0
    %643 = vmatpush1.bf16.msra.mxu0 0
    %644 = vmatprep.subr.bf16.mxu0 0
    %645 = vmatpush1.bf16.msra.mxu0 0
    %646 = vmatprep.mubr.bf16.mxu0 0
    %647 = vmatmul.mubr.bf16.gmra.mrb[0].mxu0 %v596
    %v648 = vpop.f32.mrb[0].mxu0
    %v649 = vadd.f32 0.0, %v648
    %v650 = vpop.f32.mrb[0].mxu0
    %v651 = vpop.f32.mrb[0].mxu0
    %v652 = vadd.f32 0.0, %v651
    %v653 = vpop.f32.mrb[0].mxu0
    %654 = vmatprep.mubr.bf16.mxu0 0
    %655 = vmatmul.mubr.bf16.gmra.mrb[0].mxu0 %v599
    %v656 = vpop.f32.mrb[0].mxu0
    %v657 = vadd.f32 0.0, %v656
    %v658 = vpop.f32.mrb[0].mxu0
    %v659 = vpop.f32.mrb[0].mxu0
    %v660 = vadd.f32 0.0, %v659
    %v661 = vpop.f32.mrb[0].mxu0
    %662 = vmatprep.mubr.bf16.mxu0 0
    %663 = vmatmul.mubr.bf16.gmra.mrb[0].mxu0 %v602
    %v664 = vpop.f32.mrb[0].mxu0
    %v665 = vadd.f32 0.0, %v664
    %v666 = vpop.f32.mrb[0].mxu0
    %v667 = vpop.f32.mrb[0].mxu0
    %v668 = vadd.f32 0.0, %v667
    %v669 = vpop.f32.mrb[0].mxu0
    %670 = vmatprep.mubr.bf16.mxu0 0
    %671 = vmatmul.mubr.bf16.gmra.mrb[0].mxu0 %v605
    %v672 = vpop.f32.mrb[0].mxu0
    %v673 = vadd.f32 0.0, %v672
    %v674 = vpop.f32.mrb[0].mxu0
    %v675 = vpop.f32.mrb[0].mxu0
    %v676 = vadd.f32 0.0, %v675
    %v677 = vpop.f32.mrb[0].mxu0
    %678 = vmatprep.mubr.bf16.mxu0 0
    %679 = vmatmul.mubr.bf16.gmra.mrb[0].mxu0 %v608
    %v680 = vpop.f32.mrb[0].mxu0
    %v681 = vadd.f32 0.0, %v680
    %v682 = vpop.f32.mrb[0].mxu0
    %v683 = vpop.f32.mrb[0].mxu0
    %v684 = vpop.f32.mrb[0].mxu0
    %685 = vdwg.mxu0
    %v695 = vunpack.c.l.b16 %v545
    %v696 = vunpack.c.l.b16 %v546
    %v697 = vunpack.c.l.b16 %v547
    %v698 = vunpack.c.l.b16 %v548
    %v699 = vunpack.c.l.b16 %v549
    %v700 = vunpack.c.l.b16 %v550
    %v701 = vunpack.c.l.b16 %v551
    %v702 = vunpack.c.l.b16 %v552
    %v703 = vunpack.c.l.b16 %v553
    %v704 = vpack.c.b16 %v696, %v695
    %v705 = vpack.c.b16 %v698, %v697
    %v706 = vpack.c.b16 %v700, %v699
    %v707 = vpack.c.b16 %v702, %v701
    %v708 = vpack.c.b16 %v703, %v703
    %v710 = vsel %vm594, %v704, 0
    %v713 = vsel %vm594, %v705, 0
    %v716 = vsel %vm594, %v706, 0
    %v719 = vsel %vm594, %v707, 0
    %v722 = vsel %vm594, %v708, 0
    %v725 = vsel %vm610, %v544, 0
    %727 = vmatprep.subr.bf16.mxu0 0
    %728 = vmatpush1.bf16.msra.mxu0 %v543
    %729 = vmatprep.subr.bf16.mxu0 0
    %730 = vmatpush1.bf16.msra.mxu0 %v725
    %731 = vmatprep.subr.bf16.mxu0 0
    %732 = vmatpush1.bf16.msra.mxu0 0
    %733 = vmatprep.subr.bf16.mxu0 0
    %734 = vmatpush1.bf16.msra.mxu0 0
    %735 = vmatprep.subr.bf16.mxu0 0
    %736 = vmatpush1.bf16.msra.mxu0 0
    %737 = vmatprep.subr.bf16.mxu0 0
    %738 = vmatpush1.bf16.msra.mxu0 0
    %739 = vmatprep.subr.bf16.mxu0 0
    %740 = vmatpush1.bf16.msra.mxu0 0
    %741 = vmatprep.subr.bf16.mxu0 0
    %742 = vmatpush1.bf16.msra.mxu0 0
    %743 = vmatprep.subr.bf16.mxu0 0
    %744 = vmatpush1.bf16.msra.mxu0 0
    %745 = vmatprep.subr.bf16.mxu0 0
    %746 = vmatpush1.bf16.msra.mxu0 0
    %747 = vmatprep.subr.bf16.mxu0 0
    %748 = vmatpush1.bf16.msra.mxu0 0
    %749 = vmatprep.subr.bf16.mxu0 0
    %750 = vmatpush1.bf16.msra.mxu0 0
    %751 = vmatprep.subr.bf16.mxu0 0
    %752 = vmatpush1.bf16.msra.mxu0 0
    %753 = vmatprep.subr.bf16.mxu0 0
    %754 = vmatpush1.bf16.msra.mxu0 0
    %755 = vmatprep.subr.bf16.mxu0 0
    %756 = vmatpush1.bf16.msra.mxu0 0
    %757 = vmatprep.subr.bf16.mxu0 0
    %758 = vmatpush1.bf16.msra.mxu0 0
    %759 = vmatprep.mubr.bf16.mxu0 0
    %760 = vmatmul.mubr.bf16.gmra.mrb[0].mxu0 %v710
    %v761 = vpop.f32.mrb[0].mxu0
    %v762 = vadd.f32 %v649, %v761
    %v763 = vpop.f32.mrb[0].mxu0
    %v764 = vpop.f32.mrb[0].mxu0
    %v765 = vadd.f32 %v652, %v764
    %v766 = vpop.f32.mrb[0].mxu0
    %767 = vmatprep.mubr.bf16.mxu0 0
    %768 = vmatmul.mubr.bf16.gmra.mrb[0].mxu0 %v713
    %v769 = vpop.f32.mrb[0].mxu0
    %v770 = vadd.f32 %v657, %v769
    %v771 = vpop.f32.mrb[0].mxu0
    %v772 = vpop.f32.mrb[0].mxu0
    %v773 = vadd.f32 %v660, %v772
    %v774 = vpop.f32.mrb[0].mxu0
    %775 = vmatprep.mubr.bf16.mxu0 0
    %776 = vmatmul.mubr.bf16.gmra.mrb[0].mxu0 %v716
    %v777 = vpop.f32.mrb[0].mxu0
    %v778 = vadd.f32 %v665, %v777
    %v779 = vpop.f32.mrb[0].mxu0
    %v780 = vpop.f32.mrb[0].mxu0
    %v781 = vadd.f32 %v668, %v780
    %v782 = vpop.f32.mrb[0].mxu0
    %783 = vmatprep.mubr.bf16.mxu0 0
    %784 = vmatmul.mubr.bf16.gmra.mrb[0].mxu0 %v719
    %v785 = vpop.f32.mrb[0].mxu0
    %v786 = vadd.f32 %v673, %v785
    %v787 = vpop.f32.mrb[0].mxu0
    %v788 = vpop.f32.mrb[0].mxu0
    %v789 = vadd.f32 %v676, %v788
    %v790 = vpop.f32.mrb[0].mxu0
    %791 = vmatprep.mubr.bf16.mxu0 0
    %792 = vmatmul.mubr.bf16.gmra.mrb[0].mxu0 %v722
    %v793 = vpop.f32.mrb[0].mxu0
    %v794 = vadd.f32 %v681, %v793
    %v795 = vpop.f32.mrb[0].mxu0
    %v796 = vpop.f32.mrb[0].mxu0
    %v797 = vpop.f32.mrb[0].mxu0
    %798 = vdwg.mxu0
    %v799 = vpack.c.bf16 %v765, %v762
    %v800 = vpack.c.bf16 %v773, %v770
    %v801 = vpack.c.bf16 %v781, %v778
    %v802 = vpack.c.bf16 %v789, %v786
    %v803 = vpack.c.bf16 %v794, %v794
    %v804 = vld [vmem:[%s8] sm:$0xf]
    %v805 = vld [vmem:[%s8 + $0x4] sm:$0xf]
    %v806 = vld [vmem:[%s9] sm:$0x1]
    %v808 = vlaneseq
    %v809 = vshrl.u32 %v808, 7
    %v810 = vsub.s32 0, %v809
    %v811 = vrot.slane %v806, %v810
    %v815 = vunpack.c.l.b16 %v804
    %v816 = vunpack.c.l.b16 %v805
    %v817 = vpack.c.b16 %v816, %v815
    %v820 = vsel %vm341, %v799, 0
    %v823 = vsel %vm341, %v800, 0
    %v826 = vsel %vm341, %v801, 0
    %v829 = vsel %vm341, %v802, 0
    %v832 = vsel %vm341, %v803, 0
    %834 = vmatprep.subr.bf16.mxu0 0
    %835 = vmatpush1.bf16.msra.mxu0 %v817
    %836 = vmatprep.subr.bf16.mxu0 0
    %837 = vmatpush1.bf16.msra.mxu0 0
    %838 = vmatprep.subr.bf16.mxu0 0
    %839 = vmatpush1.bf16.msra.mxu0 0
    %840 = vmatprep.subr.bf16.mxu0 0
    %841 = vmatpush1.bf16.msra.mxu0 0
    %842 = vmatprep.subr.bf16.mxu0 0
    %843 = vmatpush1.bf16.msra.mxu0 0
    %844 = vmatprep.subr.bf16.mxu0 0
    %845 = vmatpush1.bf16.msra.mxu0 0
    %846 = vmatprep.subr.bf16.mxu0 0
    %847 = vmatpush1.bf16.msra.mxu0 0
    %848 = vmatprep.subr.bf16.mxu0 0
    %849 = vmatpush1.bf16.msra.mxu0 0
    %850 = vmatprep.subr.bf16.mxu0 0
    %851 = vmatpush1.bf16.msra.mxu0 0
    %852 = vmatprep.subr.bf16.mxu0 0
    %853 = vmatpush1.bf16.msra.mxu0 0
    %854 = vmatprep.subr.bf16.mxu0 0
    %855 = vmatpush1.bf16.msra.mxu0 0
    %856 = vmatprep.subr.bf16.mxu0 0
    %857 = vmatpush1.bf16.msra.mxu0 0
    %858 = vmatprep.subr.bf16.mxu0 0
    %859 = vmatpush1.bf16.msra.mxu0 0
    %860 = vmatprep.subr.bf16.mxu0 0
    %861 = vmatpush1.bf16.msra.mxu0 0
    %862 = vmatprep.subr.bf16.mxu0 0
    %863 = vmatpush1.bf16.msra.mxu0 0
    %864 = vmatprep.subr.bf16.mxu0 0
    %865 = vmatpush1.bf16.msra.mxu0 0
    %866 = vmatprep.mubr.bf16.mxu0 0
    %867 = vmatmul.mubr.bf16.gmra.mrb[0].mxu0 %v820
    %v868 = vpop.f32.mrb[0].mxu0
    %v869 = vadd.f32 %v811, %v868
    %v870 = vpop.f32.mrb[0].mxu0
    %v871 = vpop.f32.mrb[0].mxu0
    %v872 = vadd.f32 %v811, %v871
    %v873 = vpop.f32.mrb[0].mxu0
    %874 = vmatprep.mubr.bf16.mxu0 0
    %875 = vmatmul.mubr.bf16.gmra.mrb[0].mxu0 %v823
    %v876 = vpop.f32.mrb[0].mxu0
    %v877 = vadd.f32 %v811, %v876
    %v878 = vpop.f32.mrb[0].mxu0
    %v879 = vpop.f32.mrb[0].mxu0
    %v880 = vadd.f32 %v811, %v879
    %v881 = vpop.f32.mrb[0].mxu0
    %882 = vmatprep.mubr.bf16.mxu0 0
    %883 = vmatmul.mubr.bf16.gmra.mrb[0].mxu0 %v826
    %v884 = vpop.f32.mrb[0].mxu0
    %v885 = vadd.f32 %v811, %v884
    %v886 = vpop.f32.mrb[0].mxu0
    %v887 = vpop.f32.mrb[0].mxu0
    %v888 = vadd.f32 %v811, %v887
    %v889 = vpop.f32.mrb[0].mxu0
    %890 = vmatprep.mubr.bf16.mxu0 0
    %891 = vmatmul.mubr.bf16.gmra.mrb[0].mxu0 %v829
    %v892 = vpop.f32.mrb[0].mxu0
    %v893 = vadd.f32 %v811, %v892
    %v894 = vpop.f32.mrb[0].mxu0
    %v895 = vpop.f32.mrb[0].mxu0
    %v896 = vadd.f32 %v811, %v895
    %v897 = vpop.f32.mrb[0].mxu0
    %898 = vmatprep.mubr.bf16.mxu0 0
    %899 = vmatmul.mubr.bf16.gmra.mrb[0].mxu0 %v832
    %v900 = vpop.f32.mrb[0].mxu0
    %v901 = vadd.f32 %v811, %v900
    %v902 = vpop.f32.mrb[0].mxu0
    %v903 = vpop.f32.mrb[0].mxu0
    %v904 = vpop.f32.mrb[0].mxu0
    %905 = vdwg.mxu0
    %vm906 = vcmp.gt.f32.partialorder %v73, 0.0
    %vm907 = vcmp.gt.f32.partialorder %v74, 0.0
    %vm908 = vcmp.gt.f32.partialorder %v75, 0.0
    %vm909 = vcmp.gt.f32.partialorder %v76, 0.0
    %vm910 = vcmp.gt.f32.partialorder %v77, 0.0
    %vm911 = vcmp.gt.f32.partialorder %v78, 0.0
    %vm912 = vcmp.gt.f32.partialorder %v79, 0.0
    %vm913 = vcmp.gt.f32.partialorder %v80, 0.0
    %vm914 = vcmp.gt.f32.partialorder %v81, 0.0
    %v915 = vmax.f32 %v869, 0.0
    %v916 = vmax.f32 %v872, 0.0
    %v917 = vmax.f32 %v877, 0.0
    %v918 = vmax.f32 %v880, 0.0
    %v919 = vmax.f32 %v885, 0.0
    %v920 = vmax.f32 %v888, 0.0
    %v921 = vmax.f32 %v893, 0.0
    %v922 = vmax.f32 %v896, 0.0
    %v923 = vmax.f32 %v901, 0.0
    %v924 = vsel %vm906, 1, 0
    %v925 = vsel %vm907, 1, 0
    %v926 = vsel %vm908, 1, 0
    %v927 = vsel %vm909, 1, 0
    %v928 = vsel %vm910, 1, 0
    %v929 = vsel %vm911, 1, 0
    %v930 = vsel %vm912, 1, 0
    %v931 = vsel %vm913, 1, 0
    %v932 = vsel %vm914, 1, 0
    %933 = vset.pattern.permute.xlu0 0
    %934 = vperm.xlu0 %933, %v924
    %v935 = vpop.permute.xlu0 %934
    %936 = vset.pattern.permute.xlu0 0
    %937 = vperm.xlu0 %936, %v925
    %v938 = vpop.permute.xlu0 %937
    %939 = vset.pattern.permute.xlu0 0
    %940 = vperm.xlu0 %939, %v926
    %v941 = vpop.permute.xlu0 %940
    %942 = vset.pattern.permute.xlu0 0
    %943 = vperm.xlu0 %942, %v927
    %v944 = vpop.permute.xlu0 %943
    %945 = vset.pattern.permute.xlu0 0
    %946 = vperm.xlu0 %945, %v928
    %v947 = vpop.permute.xlu0 %946
    %948 = vset.pattern.permute.xlu0 0
    %949 = vperm.xlu0 %948, %v929
    %v950 = vpop.permute.xlu0 %949
    %951 = vset.pattern.permute.xlu0 0
    %952 = vperm.xlu0 %951, %v930
    %v953 = vpop.permute.xlu0 %952
    %954 = vset.pattern.permute.xlu0 0
    %955 = vperm.xlu0 %954, %v931
    %v956 = vpop.permute.xlu0 %955
    %957 = vset.pattern.permute.xlu0 0
    %958 = vperm.xlu0 %957, %v932
    %v959 = vpop.permute.xlu0 %958
    %vm960 = vcmp.eq.s32.totalorder %v935, 1
    %vm961 = vcmp.eq.s32.totalorder %v938, 1
    %vm962 = vcmp.eq.s32.totalorder %v941, 1
    %vm963 = vcmp.eq.s32.totalorder %v944, 1
    %vm964 = vcmp.eq.s32.totalorder %v947, 1
    %vm965 = vcmp.eq.s32.totalorder %v950, 1
    %vm966 = vcmp.eq.s32.totalorder %v953, 1
    %vm967 = vcmp.eq.s32.totalorder %v956, 1
    %vm968 = vcmp.eq.s32.totalorder %v959, 1
    %v969 = vsel %vm960, %v915, 0.0
    %v970 = vsel %vm961, %v916, 0.0
    %v971 = vsel %vm962, %v917, 0.0
    %v972 = vsel %vm963, %v918, 0.0
    %v973 = vsel %vm964, %v919, 0.0
    %v974 = vsel %vm965, %v920, 0.0
    %v975 = vsel %vm966, %v921, 0.0
    %v976 = vsel %vm967, %v922, 0.0
    %v977 = vsel %vm968, %v923, 0.0
    %v978 = vpack.c.bf16 %v970, %v969
    %v979 = vpack.c.bf16 %v972, %v971
    %v980 = vpack.c.bf16 %v974, %v973
    %v981 = vpack.c.bf16 %v976, %v975
    %v982 = vpack.c.bf16 %v977, %v977
    %v988 = vunpack.c.l.b16 %v978
    %v989 = vunpack.c.h.b16 %v978
    %v990 = vunpack.c.l.b16 %v979
    %v991 = vunpack.c.h.b16 %v979
    %v992 = vunpack.c.l.b16 %v980
    %v993 = vunpack.c.h.b16 %v980
    %v994 = vunpack.c.l.b16 %v981
    %v995 = vunpack.c.h.b16 %v981
    %v996 = vunpack.c.l.b16 %v982
    %v997 = vpack.c.b16 %v988, %v988
    %v998 = vpack.c.b16 %v989, %v989
    %v999 = vpack.c.b16 %v990, %v990
    %v1000 = vpack.c.b16 %v991, %v991
    %v1001 = vpack.c.b16 %v992, %v992
    %v1002 = vpack.c.b16 %v993, %v993
    %v1003 = vpack.c.b16 %v994, %v994
    %v1004 = vpack.c.b16 %v995, %v995
    %v1005 = vpack.c.b16 %v996, %v996
    %1015 = vst.msk [vmem:[#allocation2 + $0x4] sm:$0xf] %vm67, %v997
    %1016 = vst.msk [vmem:[#allocation2 + $0x8] sm:$0xf] %vm67, %v998
    %1017 = vst.msk [vmem:[#allocation2 + $0xc] sm:$0xf] %vm67, %v999
    %1018 = vst.msk [vmem:[#allocation2 + $0x10] sm:$0xf] %vm67, %v1000
    %1019 = vst.msk [vmem:[#allocation2 + $0x14] sm:$0xf] %vm67, %v1001
    %1020 = vst.msk [vmem:[#allocation2 + $0x18] sm:$0xf] %vm67, %v1002
    %1021 = vst.msk [vmem:[#allocation2 + $0x1c] sm:$0xf] %vm67, %v1003
    %1022 = vst.msk [vmem:[#allocation2 + $0x20] sm:$0xf] %vm67, %v1004
    %1023 = vst.msk [vmem:[#allocation2 + $0x24] sm:$0xf] %vm67, %v1005
    %v1024 = vld [vmem:[#allocation2] sm:$0xe]
    %v1025 = vld [vmem:[#allocation2 + $0x4] sm:$0xf]
    %v1026 = vld [vmem:[#allocation2 + $0x8] sm:$0xf]
    %v1027 = vld [vmem:[#allocation2 + $0xc] sm:$0xf]
    %v1028 = vld [vmem:[#allocation2 + $0x10] sm:$0xf]
    %v1029 = vld [vmem:[#allocation2 + $0x14] sm:$0xf]
    %v1030 = vld [vmem:[#allocation2 + $0x18] sm:$0xf]
    %v1031 = vld [vmem:[#allocation2 + $0x1c] sm:$0xf]
    %v1032 = vld [vmem:[#allocation2 + $0x20] sm:$0xf]
    %v1033 = vld [vmem:[#allocation2 + $0x24] sm:$0x3]
    %v1034 = vld [vmem:[%s10] sm:$0xf]
    %v1035 = vld [vmem:[%s10 + $0x4] sm:$0xf]
    %v1036 = vld [vmem:[%s10 + $0x8] sm:$0xf]
    %v1037 = vld [vmem:[%s10 + $0xc] sm:$0xf]
    %v1038 = vld [vmem:[#allocation2] sm:$0xc]
    %v1039 = vld [vmem:[%s10 + $0x10] sm:$0xf]
    %v1040 = vld [vmem:[%s10 + $0x14] sm:$0xf]
    %v1041 = vld [vmem:[%s10 + $0x18] sm:$0xf]
    %v1042 = vld [vmem:[%s10 + $0x1c] sm:$0xf]
    %v1053 = vunpack.c.l.b16 %v1038
    %v1054 = vunpack.c.l.b16 %v1025
    %v1055 = vunpack.c.l.b16 %v1026
    %v1056 = vunpack.c.l.b16 %v1027
    %v1057 = vunpack.c.l.b16 %v1028
    %v1058 = vunpack.c.l.b16 %v1029
    %v1059 = vunpack.c.l.b16 %v1030
    %v1060 = vunpack.c.l.b16 %v1031
    %v1061 = vunpack.c.l.b16 %v1032
    %v1062 = vunpack.c.l.b16 %v1033
    %v1063 = vpack.c.b16 %v1054, %v1053
    %v1064 = vpack.c.b16 %v1056, %v1055
    %v1065 = vpack.c.b16 %v1058, %v1057
    %v1066 = vpack.c.b16 %v1060, %v1059
    %v1067 = vpack.c.b16 %v1062, %v1061
    %vm1068 = vcmask 1045504
    %v1069 = vrot.slane %v1063, 2
    %v1070 = vrot.slane %v1064, 2
    %v1071 = vsel %vm1068, %v1069, %v1070
    %v1072 = vrot.slane %v1065, 2
    %v1073 = vsel %vm1068, %v1070, %v1072
    %v1074 = vrot.slane %v1066, 2
    %v1075 = vsel %vm1068, %v1072, %v1074
    %v1076 = vrot.slane %v1067, 2
    %v1077 = vsel %vm1068, %v1074, %v1076
    %v1082 = vunpack.c.l.b16 %v1039
    %v1083 = vunpack.c.l.b16 %v1040
    %v1084 = vunpack.c.l.b16 %v1041
    %v1085 = vunpack.c.l.b16 %v1042
    %v1086 = vpack.c.b16 %v1083, %v1082
    %v1087 = vpack.c.b16 %v1085, %v1084
    %vm1090 = vcmask 261120
    %v1092 = vsel %vm1090, %v1071, 0
    %v1095 = vsel %vm1090, %v1073, 0
    %v1098 = vsel %vm1090, %v1075, 0
    %v1101 = vsel %vm1090, %v1077, 0
    %v1104 = vsel %vm1090, %v1076, 0
    %1106 = vmatprep.subr.bf16.mxu0 0
    %1107 = vmatpush1.bf16.msra.mxu0 %v1086
    %1108 = vmatprep.subr.bf16.mxu0 0
    %1109 = vmatpush1.bf16.msra.mxu0 %v1087
    %1110 = vmatprep.subr.bf16.mxu0 0
    %1111 = vmatpush1.bf16.msra.mxu0 0
    %1112 = vmatprep.subr.bf16.mxu0 0
    %1113 = vmatpush1.bf16.msra.mxu0 0
    %1114 = vmatprep.subr.bf16.mxu0 0
    %1115 = vmatpush1.bf16.msra.mxu0 0
    %1116 = vmatprep.subr.bf16.mxu0 0
    %1117 = vmatpush1.bf16.msra.mxu0 0
    %1118 = vmatprep.subr.bf16.mxu0 0
    %1119 = vmatpush1.bf16.msra.mxu0 0
    %1120 = vmatprep.subr.bf16.mxu0 0
    %1121 = vmatpush1.bf16.msra.mxu0 0
    %1122 = vmatprep.subr.bf16.mxu0 0
    %1123 = vmatpush1.bf16.msra.mxu0 0
    %1124 = vmatprep.subr.bf16.mxu0 0
    %1125 = vmatpush1.bf16.msra.mxu0 0
    %1126 = vmatprep.subr.bf16.mxu0 0
    %1127 = vmatpush1.bf16.msra.mxu0 0
    %1128 = vmatprep.subr.bf16.mxu0 0
    %1129 = vmatpush1.bf16.msra.mxu0 0
    %1130 = vmatprep.subr.bf16.mxu0 0
    %1131 = vmatpush1.bf16.msra.mxu0 0
    %1132 = vmatprep.subr.bf16.mxu0 0
    %1133 = vmatpush1.bf16.msra.mxu0 0
    %1134 = vmatprep.subr.bf16.mxu0 0
    %1135 = vmatpush1.bf16.msra.mxu0 0
    %1136 = vmatprep.subr.bf16.mxu0 0
    %1137 = vmatpush1.bf16.msra.mxu0 0
    %1138 = vmatprep.mubr.bf16.mxu0 0
    %1139 = vmatmul.mubr.bf16.gmra.mrb[0].mxu0 %v1092
    %v1140 = vpop.f32.mrb[0].mxu0
    %v1141 = vadd.f32 0.0, %v1140
    %v1142 = vpop.f32.mrb[0].mxu0
    %v1143 = vpop.f32.mrb[0].mxu0
    %v1144 = vadd.f32 0.0, %v1143
    %v1145 = vpop.f32.mrb[0].mxu0
    %1146 = vmatprep.mubr.bf16.mxu0 0
    %1147 = vmatmul.mubr.bf16.gmra.mrb[0].mxu0 %v1095
    %v1148 = vpop.f32.mrb[0].mxu0
    %v1149 = vadd.f32 0.0, %v1148
    %v1150 = vpop.f32.mrb[0].mxu0
    %v1151 = vpop.f32.mrb[0].mxu0
    %v1152 = vadd.f32 0.0, %v1151
    %v1153 = vpop.f32.mrb[0].mxu0
    %1154 = vmatprep.mubr.bf16.mxu0 0
    %1155 = vmatmul.mubr.bf16.gmra.mrb[0].mxu0 %v1098
    %v1156 = vpop.f32.mrb[0].mxu0
    %v1157 = vadd.f32 0.0, %v1156
    %v1158 = vpop.f32.mrb[0].mxu0
    %v1159 = vpop.f32.mrb[0].mxu0
    %v1160 = vadd.f32 0.0, %v1159
    %v1161 = vpop.f32.mrb[0].mxu0
    %1162 = vmatprep.mubr.bf16.mxu0 0
    %1163 = vmatmul.mubr.bf16.gmra.mrb[0].mxu0 %v1101
    %v1164 = vpop.f32.mrb[0].mxu0
    %v1165 = vadd.f32 0.0, %v1164
    %v1166 = vpop.f32.mrb[0].mxu0
    %v1167 = vpop.f32.mrb[0].mxu0
    %v1168 = vadd.f32 0.0, %v1167
    %v1169 = vpop.f32.mrb[0].mxu0
    %1170 = vmatprep.mubr.bf16.mxu0 0
    %1171 = vmatmul.mubr.bf16.gmra.mrb[0].mxu0 %v1104
    %v1172 = vpop.f32.mrb[0].mxu0
    %v1173 = vadd.f32 0.0, %v1172
    %v1174 = vpop.f32.mrb[0].mxu0
    %v1175 = vpop.f32.mrb[0].mxu0
    %v1176 = vpop.f32.mrb[0].mxu0
    %1177 = vdwg.mxu0
    %v1179 = vunpack.c.l.b16 %v1024
    %v1180 = vpack.c.b16 %v1054, %v1179
    %vm1181 = vsmask.f32 6400
    %v1183 = vshrl.u32 %v1180, 16
    %v1185 = vrot.slane %v1183, 1
    %v1186 = vshll.u32 %v1180, 16
    %v1188 = vrot.slane %v1186, 2
    %v1189 = vor.u32 %v1185, %v1188
    %v1191 = vshrl.u32 %v1064, 16
    %v1193 = vrot.slane %v1191, 1
    %v1194 = vshll.u32 %v1064, 16
    %v1196 = vrot.slane %v1194, 2
    %v1197 = vor.u32 %v1193, %v1196
    %v1198 = vsel %vm1181, %v1189, %v1197
    %v1200 = vshrl.u32 %v1065, 16
    %v1202 = vrot.slane %v1200, 1
    %v1203 = vshll.u32 %v1065, 16
    %v1205 = vrot.slane %v1203, 2
    %v1206 = vor.u32 %v1202, %v1205
    %v1207 = vsel %vm1181, %v1197, %v1206
    %v1209 = vshrl.u32 %v1066, 16
    %v1211 = vrot.slane %v1209, 1
    %v1212 = vshll.u32 %v1066, 16
    %v1214 = vrot.slane %v1212, 2
    %v1215 = vor.u32 %v1211, %v1214
    %v1216 = vsel %vm1181, %v1206, %v1215
    %v1218 = vshrl.u32 %v1067, 16
    %v1220 = vrot.slane %v1218, 1
    %v1221 = vshll.u32 %v1067, 16
    %v1223 = vrot.slane %v1221, 2
    %v1224 = vor.u32 %v1220, %v1223
    %v1225 = vsel %vm1181, %v1215, %v1224
    %v1230 = vunpack.c.l.b16 %v1034
    %v1231 = vunpack.c.l.b16 %v1035
    %v1232 = vunpack.c.l.b16 %v1036
    %v1233 = vunpack.c.l.b16 %v1037
    %v1234 = vpack.c.b16 %v1231, %v1230
    %v1235 = vpack.c.b16 %v1233, %v1232
    %v1239 = vsel %vm1090, %v1198, 0
    %v1242 = vsel %vm1090, %v1207, 0
    %v1245 = vsel %vm1090, %v1216, 0
    %v1248 = vsel %vm1090, %v1225, 0
    %v1251 = vsel %vm1090, %v1224, 0
    %1253 = vmatprep.subr.bf16.mxu0 0
    %1254 = vmatpush1.bf16.msra.mxu0 %v1234
    %1255 = vmatprep.subr.bf16.mxu0 0
    %1256 = vmatpush1.bf16.msra.mxu0 %v1235
    %1257 = vmatprep.subr.bf16.mxu0 0
    %1258 = vmatpush1.bf16.msra.mxu0 0
    %1259 = vmatprep.subr.bf16.mxu0 0
    %1260 = vmatpush1.bf16.msra.mxu0 0
    %1261 = vmatprep.subr.bf16.mxu0 0
    %1262 = vmatpush1.bf16.msra.mxu0 0
    %1263 = vmatprep.subr.bf16.mxu0 0
    %1264 = vmatpush1.bf16.msra.mxu0 0
    %1265 = vmatprep.subr.bf16.mxu0 0
    %1266 = vmatpush1.bf16.msra.mxu0 0
    %1267 = vmatprep.subr.bf16.mxu0 0
    %1268 = vmatpush1.bf16.msra.mxu0 0
    %1269 = vmatprep.subr.bf16.mxu0 0
    %1270 = vmatpush1.bf16.msra.mxu0 0
    %1271 = vmatprep.subr.bf16.mxu0 0
    %1272 = vmatpush1.bf16.msra.mxu0 0
    %1273 = vmatprep.subr.bf16.mxu0 0
    %1274 = vmatpush1.bf16.msra.mxu0 0
    %1275 = vmatprep.subr.bf16.mxu0 0
    %1276 = vmatpush1.bf16.msra.mxu0 0
    %1277 = vmatprep.subr.bf16.mxu0 0
    %1278 = vmatpush1.bf16.msra.mxu0 0
    %1279 = vmatprep.subr.bf16.mxu0 0
    %1280 = vmatpush1.bf16.msra.mxu0 0
    %1281 = vmatprep.subr.bf16.mxu0 0
    %1282 = vmatpush1.bf16.msra.mxu0 0
    %1283 = vmatprep.subr.bf16.mxu0 0
    %1284 = vmatpush1.bf16.msra.mxu0 0
    %1285 = vmatprep.mubr.bf16.mxu0 0
    %1286 = vmatmul.mubr.bf16.gmra.mrb[0].mxu0 %v1239
    %v1287 = vpop.f32.mrb[0].mxu0
    %v1288 = vadd.f32 %v1141, %v1287
    %v1289 = vpop.f32.mrb[0].mxu0
    %v1290 = vpop.f32.mrb[0].mxu0
    %v1291 = vadd.f32 %v1144, %v1290
    %v1292 = vpop.f32.mrb[0].mxu0
    %1293 = vmatprep.mubr.bf16.mxu0 0
    %1294 = vmatmul.mubr.bf16.gmra.mrb[0].mxu0 %v1242
    %v1295 = vpop.f32.mrb[0].mxu0
    %v1296 = vadd.f32 %v1149, %v1295
    %v1297 = vpop.f32.mrb[0].mxu0
    %v1298 = vpop.f32.mrb[0].mxu0
    %v1299 = vadd.f32 %v1152, %v1298
    %v1300 = vpop.f32.mrb[0].mxu0
    %1301 = vmatprep.mubr.bf16.mxu0 0
    %1302 = vmatmul.mubr.bf16.gmra.mrb[0].mxu0 %v1245
    %v1303 = vpop.f32.mrb[0].mxu0
    %v1304 = vadd.f32 %v1157, %v1303
    %v1305 = vpop.f32.mrb[0].mxu0
    %v1306 = vpop.f32.mrb[0].mxu0
    %v1307 = vadd.f32 %v1160, %v1306
    %v1308 = vpop.f32.mrb[0].mxu0
    %1309 = vmatprep.mubr.bf16.mxu0 0
    %1310 = vmatmul.mubr.bf16.gmra.mrb[0].mxu0 %v1248
    %v1311 = vpop.f32.mrb[0].mxu0
    %v1312 = vadd.f32 %v1165, %v1311
    %v1313 = vpop.f32.mrb[0].mxu0
    %v1314 = vpop.f32.mrb[0].mxu0
    %v1315 = vadd.f32 %v1168, %v1314
    %v1316 = vpop.f32.mrb[0].mxu0
    %1317 = vmatprep.mubr.bf16.mxu0 0
    %1318 = vmatmul.mubr.bf16.gmra.mrb[0].mxu0 %v1251
    %v1319 = vpop.f32.mrb[0].mxu0
    %v1320 = vadd.f32 %v1173, %v1319
    %v1321 = vpop.f32.mrb[0].mxu0
    %v1322 = vpop.f32.mrb[0].mxu0
    %v1323 = vpop.f32.mrb[0].mxu0
    %1324 = vdwg.mxu0
    %v1325 = vld [vmem:[#allocation2 + $0x24] sm:$0x7]
    %v1326 = vld [vmem:[%s10 + $0x20] sm:$0xf]
    %v1327 = vld [vmem:[%s10 + $0x24] sm:$0xf]
    %v1328 = vld [vmem:[%s10 + $0x28] sm:$0xf]
    %v1329 = vld [vmem:[%s10 + $0x2c] sm:$0xf]
    %v1331 = vunpack.c.l.b16 %v1325
    %v1332 = vpack.c.b16 %v1331, %v1061
    %vm1333 = vsmask.f32 5376
    %v1335 = vshrl.u32 %v1063, 16
    %v1337 = vrot.slane %v1335, 2
    %v1338 = vshll.u32 %v1063, 16
    %v1340 = vrot.slane %v1338, 3
    %v1341 = vor.u32 %v1337, %v1340
    %v1342 = vrot.slane %v1191, 2
    %v1343 = vrot.slane %v1194, 3
    %v1344 = vor.u32 %v1342, %v1343
    %v1345 = vsel %vm1333, %v1341, %v1344
    %v1346 = vrot.slane %v1200, 2
    %v1347 = vrot.slane %v1203, 3
    %v1348 = vor.u32 %v1346, %v1347
    %v1349 = vsel %vm1333, %v1344, %v1348
    %v1350 = vrot.slane %v1209, 2
    %v1351 = vrot.slane %v1212, 3
    %v1352 = vor.u32 %v1350, %v1351
    %v1353 = vsel %vm1333, %v1348, %v1352
    %v1355 = vshrl.u32 %v1332, 16
    %v1357 = vrot.slane %v1355, 2
    %v1358 = vshll.u32 %v1332, 16
    %v1360 = vrot.slane %v1358, 3
    %v1361 = vor.u32 %v1357, %v1360
    %v1362 = vsel %vm1333, %v1352, %v1361
    %v1367 = vunpack.c.l.b16 %v1326
    %v1368 = vunpack.c.l.b16 %v1327
    %v1369 = vunpack.c.l.b16 %v1328
    %v1370 = vunpack.c.l.b16 %v1329
    %v1371 = vpack.c.b16 %v1368, %v1367
    %v1372 = vpack.c.b16 %v1370, %v1369
    %v1376 = vsel %vm1090, %v1345, 0
    %v1379 = vsel %vm1090, %v1349, 0
    %v1382 = vsel %vm1090, %v1353, 0
    %v1385 = vsel %vm1090, %v1362, 0
    %v1388 = vsel %vm1090, %v1361, 0
    %1390 = vmatprep.subr.bf16.mxu0 0
    %1391 = vmatpush1.bf16.msra.mxu0 %v1371
    %1392 = vmatprep.subr.bf16.mxu0 0
    %1393 = vmatpush1.bf16.msra.mxu0 %v1372
    %1394 = vmatprep.subr.bf16.mxu0 0
    %1395 = vmatpush1.bf16.msra.mxu0 0
    %1396 = vmatprep.subr.bf16.mxu0 0
    %1397 = vmatpush1.bf16.msra.mxu0 0
    %1398 = vmatprep.subr.bf16.mxu0 0
    %1399 = vmatpush1.bf16.msra.mxu0 0
    %1400 = vmatprep.subr.bf16.mxu0 0
    %1401 = vmatpush1.bf16.msra.mxu0 0
    %1402 = vmatprep.subr.bf16.mxu0 0
    %1403 = vmatpush1.bf16.msra.mxu0 0
    %1404 = vmatprep.subr.bf16.mxu0 0
    %1405 = vmatpush1.bf16.msra.mxu0 0
    %1406 = vmatprep.subr.bf16.mxu0 0
    %1407 = vmatpush1.bf16.msra.mxu0 0
    %1408 = vmatprep.subr.bf16.mxu0 0
    %1409 = vmatpush1.bf16.msra.mxu0 0
    %1410 = vmatprep.subr.bf16.mxu0 0
    %1411 = vmatpush1.bf16.msra.mxu0 0
    %1412 = vmatprep.subr.bf16.mxu0 0
    %1413 = vmatpush1.bf16.msra.mxu0 0
    %1414 = vmatprep.subr.bf16.mxu0 0
    %1415 = vmatpush1.bf16.msra.mxu0 0
    %1416 = vmatprep.subr.bf16.mxu0 0
    %1417 = vmatpush1.bf16.msra.mxu0 0
    %1418 = vmatprep.subr.bf16.mxu0 0
    %1419 = vmatpush1.bf16.msra.mxu0 0
    %1420 = vmatprep.subr.bf16.mxu0 0
    %1421 = vmatpush1.bf16.msra.mxu0 0
    %1422 = vmatprep.mubr.bf16.mxu0 0
    %1423 = vmatmul.mubr.bf16.gmra.mrb[0].mxu0 %v1376
    %v1424 = vpop.f32.mrb[0].mxu0
    %v1425 = vadd.f32 0.0, %v1424
    %v1426 = vpop.f32.mrb[0].mxu0
    %v1427 = vpop.f32.mrb[0].mxu0
    %v1428 = vadd.f32 0.0, %v1427
    %v1429 = vpop.f32.mrb[0].mxu0
    %1430 = vmatprep.mubr.bf16.mxu0 0
    %1431 = vmatmul.mubr.bf16.gmra.mrb[0].mxu0 %v1379
    %v1432 = vpop.f32.mrb[0].mxu0
    %v1433 = vadd.f32 0.0, %v1432
    %v1434 = vpop.f32.mrb[0].mxu0
    %v1435 = vpop.f32.mrb[0].mxu0
    %v1436 = vadd.f32 0.0, %v1435
    %v1437 = vpop.f32.mrb[0].mxu0
    %1438 = vmatprep.mubr.bf16.mxu0 0
    %1439 = vmatmul.mubr.bf16.gmra.mrb[0].mxu0 %v1382
    %v1440 = vpop.f32.mrb[0].mxu0
    %v1441 = vadd.f32 0.0, %v1440
    %v1442 = vpop.f32.mrb[0].mxu0
    %v1443 = vpop.f32.mrb[0].mxu0
    %v1444 = vadd.f32 0.0, %v1443
    %v1445 = vpop.f32.mrb[0].mxu0
    %1446 = vmatprep.mubr.bf16.mxu0 0
    %1447 = vmatmul.mubr.bf16.gmra.mrb[0].mxu0 %v1385
    %v1448 = vpop.f32.mrb[0].mxu0
    %v1449 = vadd.f32 0.0, %v1448
    %v1450 = vpop.f32.mrb[0].mxu0
    %v1451 = vpop.f32.mrb[0].mxu0
    %v1452 = vadd.f32 0.0, %v1451
    %v1453 = vpop.f32.mrb[0].mxu0
    %1454 = vmatprep.mubr.bf16.mxu0 0
    %1455 = vmatmul.mubr.bf16.gmra.mrb[0].mxu0 %v1388
    %v1456 = vpop.f32.mrb[0].mxu0
    %v1457 = vadd.f32 0.0, %v1456
    %v1458 = vpop.f32.mrb[0].mxu0
    %v1459 = vpop.f32.mrb[0].mxu0
    %v1460 = vpop.f32.mrb[0].mxu0
    %1461 = vdwg.mxu0
    %v1462 = vadd.f32 %v1288, %v1425
    %v1463 = vadd.f32 %v1291, %v1428
    %v1464 = vadd.f32 %v1296, %v1433
    %v1465 = vadd.f32 %v1299, %v1436
    %v1466 = vadd.f32 %v1304, %v1441
    %v1467 = vadd.f32 %v1307, %v1444
    %v1468 = vadd.f32 %v1312, %v1449
    %v1469 = vadd.f32 %v1315, %v1452
    %v1470 = vadd.f32 %v1320, %v1457
    %v1471 = vld [vmem:[#allocation2] sm:$0x8]
    %v1472 = vld [vmem:[#allocation2 + $0x24] sm:$0xf]
    %v1473 = vld [vmem:[%s10 + $0x30] sm:$0xf]
    %v1474 = vld [vmem:[%s10 + $0x34] sm:$0xf]
    %v1475 = vld [vmem:[%s10 + $0x38] sm:$0xf]
    %v1476 = vld [vmem:[%s10 + $0x3c] sm:$0xf]
    %v1479 = vunpack.c.l.b16 %v1471
    %v1480 = vunpack.c.l.b16 %v1472
    %v1481 = vpack.c.b16 %v1054, %v1479
    %v1482 = vpack.c.b16 %v1480, %v1061
    %vm1483 = vsmask.f32 4352
    %v1485 = vshrl.u32 %v1481, 16
    %v1487 = vrot.slane %v1485, 3
    %v1488 = vshll.u32 %v1481, 16
    %v1490 = vrot.slane %v1488, 4
    %v1491 = vor.u32 %v1487, %v1490
    %v1492 = vrot.slane %v1191, 3
    %v1493 = vrot.slane %v1194, 4
    %v1494 = vor.u32 %v1492, %v1493
    %v1495 = vsel %vm1483, %v1491, %v1494
    %v1496 = vrot.slane %v1200, 3
    %v1497 = vrot.slane %v1203, 4
    %v1498 = vor.u32 %v1496, %v1497
    %v1499 = vsel %vm1483, %v1494, %v1498
    %v1500 = vrot.slane %v1209, 3
    %v1501 = vrot.slane %v1212, 4
    %v1502 = vor.u32 %v1500, %v1501
    %v1503 = vsel %vm1483, %v1498, %v1502
    %v1505 = vshrl.u32 %v1482, 16
    %v1507 = vrot.slane %v1505, 3
    %v1508 = vshll.u32 %v1482, 16
    %v1510 = vrot.slane %v1508, 4
    %v1511 = vor.u32 %v1507, %v1510
    %v1512 = vsel %vm1483, %v1502, %v1511
    %v1517 = vunpack.c.l.b16 %v1473
    %v1518 = vunpack.c.l.b16 %v1474
    %v1519 = vunpack.c.l.b16 %v1475
    %v1520 = vunpack.c.l.b16 %v1476
    %v1521 = vpack.c.b16 %v1518, %v1517
    %v1522 = vpack.c.b16 %v1520, %v1519
    %v1526 = vsel %vm1090, %v1495, 0
    %v1529 = vsel %vm1090, %v1499, 0
    %v1532 = vsel %vm1090, %v1503, 0
    %v1535 = vsel %vm1090, %v1512, 0
    %v1538 = vsel %vm1090, %v1511, 0
    %1540 = vmatprep.subr.bf16.mxu0 0
    %1541 = vmatpush1.bf16.msra.mxu0 %v1521
    %1542 = vmatprep.subr.bf16.mxu0 0
    %1543 = vmatpush1.bf16.msra.mxu0 %v1522
    %1544 = vmatprep.subr.bf16.mxu0 0
    %1545 = vmatpush1.bf16.msra.mxu0 0
    %1546 = vmatprep.subr.bf16.mxu0 0
    %1547 = vmatpush1.bf16.msra.mxu0 0
    %1548 = vmatprep.subr.bf16.mxu0 0
    %1549 = vmatpush1.bf16.msra.mxu0 0
    %1550 = vmatprep.subr.bf16.mxu0 0
    %1551 = vmatpush1.bf16.msra.mxu0 0
    %1552 = vmatprep.subr.bf16.mxu0 0
    %1553 = vmatpush1.bf16.msra.mxu0 0
    %1554 = vmatprep.subr.bf16.mxu0 0
    %1555 = vmatpush1.bf16.msra.mxu0 0
    %1556 = vmatprep.subr.bf16.mxu0 0
    %1557 = vmatpush1.bf16.msra.mxu0 0
    %1558 = vmatprep.subr.bf16.mxu0 0
    %1559 = vmatpush1.bf16.msra.mxu0 0
    %1560 = vmatprep.subr.bf16.mxu0 0
    %1561 = vmatpush1.bf16.msra.mxu0 0
    %1562 = vmatprep.subr.bf16.mxu0 0
    %1563 = vmatpush1.bf16.msra.mxu0 0
    %1564 = vmatprep.subr.bf16.mxu0 0
    %1565 = vmatpush1.bf16.msra.mxu0 0
    %1566 = vmatprep.subr.bf16.mxu0 0
    %1567 = vmatpush1.bf16.msra.mxu0 0
    %1568 = vmatprep.subr.bf16.mxu0 0
    %1569 = vmatpush1.bf16.msra.mxu0 0
    %1570 = vmatprep.subr.bf16.mxu0 0
    %1571 = vmatpush1.bf16.msra.mxu0 0
    %1572 = vmatprep.mubr.bf16.mxu0 0
    %1573 = vmatmul.mubr.bf16.gmra.mrb[0].mxu0 %v1526
    %v1574 = vpop.f32.mrb[0].mxu0
    %v1575 = vadd.f32 0.0, %v1574
    %v1576 = vpop.f32.mrb[0].mxu0
    %v1577 = vpop.f32.mrb[0].mxu0
    %v1578 = vadd.f32 0.0, %v1577
    %v1579 = vpop.f32.mrb[0].mxu0
    %1580 = vmatprep.mubr.bf16.mxu0 0
    %1581 = vmatmul.mubr.bf16.gmra.mrb[0].mxu0 %v1529
    %v1582 = vpop.f32.mrb[0].mxu0
    %v1583 = vadd.f32 0.0, %v1582
    %v1584 = vpop.f32.mrb[0].mxu0
    %v1585 = vpop.f32.mrb[0].mxu0
    %v1586 = vadd.f32 0.0, %v1585
    %v1587 = vpop.f32.mrb[0].mxu0
    %1588 = vmatprep.mubr.bf16.mxu0 0
    %1589 = vmatmul.mubr.bf16.gmra.mrb[0].mxu0 %v1532
    %v1590 = vpop.f32.mrb[0].mxu0
    %v1591 = vadd.f32 0.0, %v1590
    %v1592 = vpop.f32.mrb[0].mxu0
    %v1593 = vpop.f32.mrb[0].mxu0
    %v1594 = vadd.f32 0.0, %v1593
    %v1595 = vpop.f32.mrb[0].mxu0
    %1596 = vmatprep.mubr.bf16.mxu0 0
    %1597 = vmatmul.mubr.bf16.gmra.mrb[0].mxu0 %v1535
    %v1598 = vpop.f32.mrb[0].mxu0
    %v1599 = vadd.f32 0.0, %v1598
    %v1600 = vpop.f32.mrb[0].mxu0
    %v1601 = vpop.f32.mrb[0].mxu0
    %v1602 = vadd.f32 0.0, %v1601
    %v1603 = vpop.f32.mrb[0].mxu0
    %1604 = vmatprep.mubr.bf16.mxu0 0
    %1605 = vmatmul.mubr.bf16.gmra.mrb[0].mxu0 %v1538
    %v1606 = vpop.f32.mrb[0].mxu0
    %v1607 = vadd.f32 0.0, %v1606
    %v1608 = vpop.f32.mrb[0].mxu0
    %v1609 = vpop.f32.mrb[0].mxu0
    %v1610 = vpop.f32.mrb[0].mxu0
    %1611 = vdwg.mxu0
    %v1612 = vadd.f32 %v1462, %v1575
    %v1613 = vadd.f32 %v1463, %v1578
    %v1614 = vadd.f32 %v1464, %v1583
    %v1615 = vadd.f32 %v1465, %v1586
    %v1616 = vadd.f32 %v1466, %v1591
    %v1617 = vadd.f32 %v1467, %v1594
    %v1618 = vadd.f32 %v1468, %v1599
    %v1619 = vadd.f32 %v1469, %v1602
    %v1620 = vadd.f32 %v1470, %v1607
    %v1621 = vld [vmem:[%s10 + $0x40] sm:$0xf]
    %v1622 = vld [vmem:[%s10 + $0x44] sm:$0xf]
    %v1623 = vld [vmem:[%s10 + $0x48] sm:$0xf]
    %v1624 = vld [vmem:[%s10 + $0x4c] sm:$0xf]
    %v1625 = vpack.c.b16 %v1055, %v1054
    %v1626 = vpack.c.b16 %v1057, %v1056
    %v1627 = vpack.c.b16 %v1059, %v1058
    %v1628 = vpack.c.b16 %v1061, %v1060
    %v1629 = vpack.c.b16 %v1480, %v1480
    %v1634 = vunpack.c.l.b16 %v1621
    %v1635 = vunpack.c.l.b16 %v1622
    %v1636 = vunpack.c.l.b16 %v1623
    %v1637 = vunpack.c.l.b16 %v1624
    %v1638 = vpack.c.b16 %v1635, %v1634
    %v1639 = vpack.c.b16 %v1637, %v1636
    %v1643 = vsel %vm1090, %v1625, 0
    %v1646 = vsel %vm1090, %v1626, 0
    %v1649 = vsel %vm1090, %v1627, 0
    %v1652 = vsel %vm1090, %v1628, 0
    %v1655 = vsel %vm1090, %v1629, 0
    %1657 = vmatprep.subr.bf16.mxu0 0
    %1658 = vmatpush1.bf16.msra.mxu0 %v1638
    %1659 = vmatprep.subr.bf16.mxu0 0
    %1660 = vmatpush1.bf16.msra.mxu0 %v1639
    %1661 = vmatprep.subr.bf16.mxu0 0
    %1662 = vmatpush1.bf16.msra.mxu0 0
    %1663 = vmatprep.subr.bf16.mxu0 0
    %1664 = vmatpush1.bf16.msra.mxu0 0
    %1665 = vmatprep.subr.bf16.mxu0 0
    %1666 = vmatpush1.bf16.msra.mxu0 0
    %1667 = vmatprep.subr.bf16.mxu0 0
    %1668 = vmatpush1.bf16.msra.mxu0 0
    %1669 = vmatprep.subr.bf16.mxu0 0
    %1670 = vmatpush1.bf16.msra.mxu0 0
    %1671 = vmatprep.subr.bf16.mxu0 0
    %1672 = vmatpush1.bf16.msra.mxu0 0
    %1673 = vmatprep.subr.bf16.mxu0 0
    %1674 = vmatpush1.bf16.msra.mxu0 0
    %1675 = vmatprep.subr.bf16.mxu0 0
    %1676 = vmatpush1.bf16.msra.mxu0 0
    %1677 = vmatprep.subr.bf16.mxu0 0
    %1678 = vmatpush1.bf16.msra.mxu0 0
    %1679 = vmatprep.subr.bf16.mxu0 0
    %1680 = vmatpush1.bf16.msra.mxu0 0
    %1681 = vmatprep.subr.bf16.mxu0 0
    %1682 = vmatpush1.bf16.msra.mxu0 0
    %1683 = vmatprep.subr.bf16.mxu0 0
    %1684 = vmatpush1.bf16.msra.mxu0 0
    %1685 = vmatprep.subr.bf16.mxu0 0
    %1686 = vmatpush1.bf16.msra.mxu0 0
    %1687 = vmatprep.subr.bf16.mxu0 0
    %1688 = vmatpush1.bf16.msra.mxu0 0
    %1689 = vmatprep.mubr.bf16.mxu0 0
    %1690 = vmatmul.mubr.bf16.gmra.mrb[0].mxu0 %v1643
    %v1691 = vpop.f32.mrb[0].mxu0
    %v1692 = vadd.f32 0.0, %v1691
    %v1693 = vpop.f32.mrb[0].mxu0
    %v1694 = vpop.f32.mrb[0].mxu0
    %v1695 = vadd.f32 0.0, %v1694
    %v1696 = vpop.f32.mrb[0].mxu0
    %1697 = vmatprep.mubr.bf16.mxu0 0
    %1698 = vmatmul.mubr.bf16.gmra.mrb[0].mxu0 %v1646
    %v1699 = vpop.f32.mrb[0].mxu0
    %v1700 = vadd.f32 0.0, %v1699
    %v1701 = vpop.f32.mrb[0].mxu0
    %v1702 = vpop.f32.mrb[0].mxu0
    %v1703 = vadd.f32 0.0, %v1702
    %v1704 = vpop.f32.mrb[0].mxu0
    %1705 = vmatprep.mubr.bf16.mxu0 0
    %1706 = vmatmul.mubr.bf16.gmra.mrb[0].mxu0 %v1649
    %v1707 = vpop.f32.mrb[0].mxu0
    %v1708 = vadd.f32 0.0, %v1707
    %v1709 = vpop.f32.mrb[0].mxu0
    %v1710 = vpop.f32.mrb[0].mxu0
    %v1711 = vadd.f32 0.0, %v1710
    %v1712 = vpop.f32.mrb[0].mxu0
    %1713 = vmatprep.mubr.bf16.mxu0 0
    %1714 = vmatmul.mubr.bf16.gmra.mrb[0].mxu0 %v1652
    %v1715 = vpop.f32.mrb[0].mxu0
    %v1716 = vadd.f32 0.0, %v1715
    %v1717 = vpop.f32.mrb[0].mxu0
    %v1718 = vpop.f32.mrb[0].mxu0
    %v1719 = vadd.f32 0.0, %v1718
    %v1720 = vpop.f32.mrb[0].mxu0
    %1721 = vmatprep.mubr.bf16.mxu0 0
    %1722 = vmatmul.mubr.bf16.gmra.mrb[0].mxu0 %v1655
    %v1723 = vpop.f32.mrb[0].mxu0
    %v1724 = vadd.f32 0.0, %v1723
    %v1725 = vpop.f32.mrb[0].mxu0
    %v1726 = vpop.f32.mrb[0].mxu0
    %v1727 = vpop.f32.mrb[0].mxu0
    %1728 = vdwg.mxu0
    %v1729 = vadd.f32 %v1612, %v1692
    %v1730 = vadd.f32 %v1613, %v1695
    %v1731 = vadd.f32 %v1614, %v1700
    %v1732 = vadd.f32 %v1615, %v1703
    %v1733 = vadd.f32 %v1616, %v1708
    %v1734 = vadd.f32 %v1617, %v1711
    %v1735 = vadd.f32 %v1618, %v1716
    %v1736 = vadd.f32 %v1619, %v1719
    %v1737 = vadd.f32 %v1620, %v1724
    %v1738 = vld [vmem:[#allocation2 + $0x4] sm:$0xf]
    %v1739 = vld [vmem:[#allocation2 + $0x8] sm:$0xf]
    %v1740 = vld [vmem:[#allocation2 + $0xc] sm:$0xf]
    %v1741 = vld [vmem:[#allocation2 + $0x10] sm:$0xf]
    %v1742 = vld [vmem:[#allocation2 + $0x14] sm:$0xf]
    %v1743 = vld [vmem:[#allocation2 + $0x18] sm:$0xf]
    %v1744 = vld [vmem:[#allocation2 + $0x1c] sm:$0xf]
    %v1745 = vld [vmem:[#allocation2 + $0x20] sm:$0xf]
    %v1746 = vld [vmem:[#allocation2 + $0x24] sm:$0xf]
    %v1747 = vld [vmem:[#allocation2 + $0x28] sm:$0x1]
    %v1748 = vld [vmem:[%s10 + $0x50] sm:$0xf]
    %v1749 = vld [vmem:[%s10 + $0x54] sm:$0xf]
    %v1750 = vld [vmem:[%s10 + $0x58] sm:$0xf]
    %v1751 = vld [vmem:[%s10 + $0x5c] sm:$0xf]
    %v1762 = vunpack.c.l.b16 %v1738
    %v1763 = vunpack.c.l.b16 %v1739
    %v1764 = vunpack.c.l.b16 %v1740
    %v1765 = vunpack.c.l.b16 %v1741
    %v1766 = vunpack.c.l.b16 %v1742
    %v1767 = vunpack.c.l.b16 %v1743
    %v1768 = vunpack.c.l.b16 %v1744
    %v1769 = vunpack.c.l.b16 %v1745
    %v1770 = vunpack.c.l.b16 %v1746
    %v1771 = vunpack.c.l.b16 %v1747
    %v1772 = vpack.c.b16 %v1763, %v1762
    %v1773 = vpack.c.b16 %v1765, %v1764
    %v1774 = vpack.c.b16 %v1767, %v1766
    %v1775 = vpack.c.b16 %v1769, %v1768
    %v1776 = vpack.c.b16 %v1771, %v1770
    %v1778 = vshrl.u32 %v1772, 16
    %v1780 = vshll.u32 %v1772, 16
    %v1782 = vrot.slane %v1780, 1
    %v1783 = vor.u32 %v1778, %v1782
    %v1785 = vshll.u32 %v1773, 16
    %v1787 = vrot.slane %v1785, 1
    %v1788 = vsel %vm90, %v1783, %v1787
    %v1789 = vshrl.u32 %v1773, 16
    %v1791 = vor.u32 %v1789, %v1787
    %v1793 = vshll.u32 %v1774, 16
    %v1795 = vrot.slane %v1793, 1
    %v1796 = vsel %vm90, %v1791, %v1795
    %v1797 = vshrl.u32 %v1774, 16
    %v1799 = vor.u32 %v1797, %v1795
    %v1801 = vshll.u32 %v1775, 16
    %v1803 = vrot.slane %v1801, 1
    %v1804 = vsel %vm90, %v1799, %v1803
    %v1805 = vshrl.u32 %v1775, 16
    %v1807 = vor.u32 %v1805, %v1803
    %v1809 = vshll.u32 %v1776, 16
    %v1811 = vrot.slane %v1809, 1
    %v1812 = vsel %vm90, %v1807, %v1811
    %v1813 = vshrl.u32 %v1776, 16
    %v1815 = vor.u32 %v1813, %v1811
    %v1820 = vunpack.c.l.b16 %v1748
    %v1821 = vunpack.c.l.b16 %v1749
    %v1822 = vunpack.c.l.b16 %v1750
    %v1823 = vunpack.c.l.b16 %v1751
    %v1824 = vpack.c.b16 %v1821, %v1820
    %v1825 = vpack.c.b16 %v1823, %v1822
    %v1829 = vsel %vm1090, %v1788, 0
    %v1832 = vsel %vm1090, %v1796, 0
    %v1835 = vsel %vm1090, %v1804, 0
    %v1838 = vsel %vm1090, %v1812, 0
    %v1841 = vsel %vm1090, %v1815, 0
    %1843 = vmatprep.subr.bf16.mxu0 0
    %1844 = vmatpush1.bf16.msra.mxu0 %v1824
    %1845 = vmatprep.subr.bf16.mxu0 0
    %1846 = vmatpush1.bf16.msra.mxu0 %v1825
    %1847 = vmatprep.subr.bf16.mxu0 0
    %1848 = vmatpush1.bf16.msra.mxu0 0
    %1849 = vmatprep.subr.bf16.mxu0 0
    %1850 = vmatpush1.bf16.msra.mxu0 0
    %1851 = vmatprep.subr.bf16.mxu0 0
    %1852 = vmatpush1.bf16.msra.mxu0 0
    %1853 = vmatprep.subr.bf16.mxu0 0
    %1854 = vmatpush1.bf16.msra.mxu0 0
    %1855 = vmatprep.subr.bf16.mxu0 0
    %1856 = vmatpush1.bf16.msra.mxu0 0
    %1857 = vmatprep.subr.bf16.mxu0 0
    %1858 = vmatpush1.bf16.msra.mxu0 0
    %1859 = vmatprep.subr.bf16.mxu0 0
    %1860 = vmatpush1.bf16.msra.mxu0 0
    %1861 = vmatprep.subr.bf16.mxu0 0
    %1862 = vmatpush1.bf16.msra.mxu0 0
    %1863 = vmatprep.subr.bf16.mxu0 0
    %1864 = vmatpush1.bf16.msra.mxu0 0
    %1865 = vmatprep.subr.bf16.mxu0 0
    %1866 = vmatpush1.bf16.msra.mxu0 0
    %1867 = vmatprep.subr.bf16.mxu0 0
    %1868 = vmatpush1.bf16.msra.mxu0 0
    %1869 = vmatprep.subr.bf16.mxu0 0
    %1870 = vmatpush1.bf16.msra.mxu0 0
    %1871 = vmatprep.subr.bf16.mxu0 0
    %1872 = vmatpush1.bf16.msra.mxu0 0
    %1873 = vmatprep.subr.bf16.mxu0 0
    %1874 = vmatpush1.bf16.msra.mxu0 0
    %1875 = vmatprep.mubr.bf16.mxu0 0
    %1876 = vmatmul.mubr.bf16.gmra.mrb[0].mxu0 %v1829
    %v1877 = vpop.f32.mrb[0].mxu0
    %v1878 = vadd.f32 0.0, %v1877
    %v1879 = vpop.f32.mrb[0].mxu0
    %v1880 = vpop.f32.mrb[0].mxu0
    %v1881 = vadd.f32 0.0, %v1880
    %v1882 = vpop.f32.mrb[0].mxu0
    %1883 = vmatprep.mubr.bf16.mxu0 0
    %1884 = vmatmul.mubr.bf16.gmra.mrb[0].mxu0 %v1832
    %v1885 = vpop.f32.mrb[0].mxu0
    %v1886 = vadd.f32 0.0, %v1885
    %v1887 = vpop.f32.mrb[0].mxu0
    %v1888 = vpop.f32.mrb[0].mxu0
    %v1889 = vadd.f32 0.0, %v1888
    %v1890 = vpop.f32.mrb[0].mxu0
    %1891 = vmatprep.mubr.bf16.mxu0 0
    %1892 = vmatmul.mubr.bf16.gmra.mrb[0].mxu0 %v1835
    %v1893 = vpop.f32.mrb[0].mxu0
    %v1894 = vadd.f32 0.0, %v1893
    %v1895 = vpop.f32.mrb[0].mxu0
    %v1896 = vpop.f32.mrb[0].mxu0
    %v1897 = vadd.f32 0.0, %v1896
    %v1898 = vpop.f32.mrb[0].mxu0
    %1899 = vmatprep.mubr.bf16.mxu0 0
    %1900 = vmatmul.mubr.bf16.gmra.mrb[0].mxu0 %v1838
    %v1901 = vpop.f32.mrb[0].mxu0
    %v1902 = vadd.f32 0.0, %v1901
    %v1903 = vpop.f32.mrb[0].mxu0
    %v1904 = vpop.f32.mrb[0].mxu0
    %v1905 = vadd.f32 0.0, %v1904
    %v1906 = vpop.f32.mrb[0].mxu0
    %1907 = vmatprep.mubr.bf16.mxu0 0
    %1908 = vmatmul.mubr.bf16.gmra.mrb[0].mxu0 %v1841
    %v1909 = vpop.f32.mrb[0].mxu0
    %v1910 = vadd.f32 0.0, %v1909
    %v1911 = vpop.f32.mrb[0].mxu0
    %v1912 = vpop.f32.mrb[0].mxu0
    %v1913 = vpop.f32.mrb[0].mxu0
    %1914 = vdwg.mxu0
    %v1915 = vadd.f32 %v1729, %v1878
    %v1916 = vadd.f32 %v1730, %v1881
    %v1917 = vadd.f32 %v1731, %v1886
    %v1918 = vadd.f32 %v1732, %v1889
    %v1919 = vadd.f32 %v1733, %v1894
    %v1920 = vadd.f32 %v1734, %v1897
    %v1921 = vadd.f32 %v1735, %v1902
    %v1922 = vadd.f32 %v1736, %v1905
    %v1923 = vadd.f32 %v1737, %v1910
    %v1924 = vld [vmem:[#allocation2 + $0x4] sm:$0xe]
    %v1925 = vld [vmem:[#allocation2 + $0x28] sm:$0x3]
    %v1926 = vld [vmem:[%s10 + $0x60] sm:$0xf]
    %v1927 = vld [vmem:[%s10 + $0x64] sm:$0xf]
    %v1928 = vld [vmem:[%s10 + $0x68] sm:$0xf]
    %v1929 = vld [vmem:[%s10 + $0x6c] sm:$0xf]
    %v1932 = vunpack.c.l.b16 %v1924
    %v1933 = vunpack.c.l.b16 %v1925
    %v1934 = vpack.c.b16 %v1763, %v1932
    %v1935 = vpack.c.b16 %v1933, %v1770
    %v1937 = vshrl.u32 %v1934, 16
    %v1939 = vrot.slane %v1937, 1
    %v1940 = vshll.u32 %v1934, 16
    %v1942 = vrot.slane %v1940, 2
    %v1943 = vor.u32 %v1939, %v1942
    %v1944 = vrot.slane %v1789, 1
    %v1945 = vrot.slane %v1785, 2
    %v1946 = vor.u32 %v1944, %v1945
    %v1947 = vsel %vm1181, %v1943, %v1946
    %v1948 = vrot.slane %v1797, 1
    %v1949 = vrot.slane %v1793, 2
    %v1950 = vor.u32 %v1948, %v1949
    %v1951 = vsel %vm1181, %v1946, %v1950
    %v1952 = vrot.slane %v1805, 1
    %v1953 = vrot.slane %v1801, 2
    %v1954 = vor.u32 %v1952, %v1953
    %v1955 = vsel %vm1181, %v1950, %v1954
    %v1957 = vshrl.u32 %v1935, 16
    %v1959 = vrot.slane %v1957, 1
    %v1960 = vshll.u32 %v1935, 16
    %v1962 = vrot.slane %v1960, 2
    %v1963 = vor.u32 %v1959, %v1962
    %v1964 = vsel %vm1181, %v1954, %v1963
    %v1969 = vunpack.c.l.b16 %v1926
    %v1970 = vunpack.c.l.b16 %v1927
    %v1971 = vunpack.c.l.b16 %v1928
    %v1972 = vunpack.c.l.b16 %v1929
    %v1973 = vpack.c.b16 %v1970, %v1969
    %v1974 = vpack.c.b16 %v1972, %v1971
    %v1978 = vsel %vm1090, %v1947, 0
    %v1981 = vsel %vm1090, %v1951, 0
    %v1984 = vsel %vm1090, %v1955, 0
    %v1987 = vsel %vm1090, %v1964, 0
    %v1990 = vsel %vm1090, %v1963, 0
    %1992 = vmatprep.subr.bf16.mxu0 0
    %1993 = vmatpush1.bf16.msra.mxu0 %v1973
    %1994 = vmatprep.subr.bf16.mxu0 0
    %1995 = vmatpush1.bf16.msra.mxu0 %v1974
    %1996 = vmatprep.subr.bf16.mxu0 0
    %1997 = vmatpush1.bf16.msra.mxu0 0
    %1998 = vmatprep.subr.bf16.mxu0 0
    %1999 = vmatpush1.bf16.msra.mxu0 0
    %2000 = vmatprep.subr.bf16.mxu0 0
    %2001 = vmatpush1.bf16.msra.mxu0 0
    %2002 = vmatprep.subr.bf16.mxu0 0
    %2003 = vmatpush1.bf16.msra.mxu0 0
    %2004 = vmatprep.subr.bf16.mxu0 0
    %2005 = vmatpush1.bf16.msra.mxu0 0
    %2006 = vmatprep.subr.bf16.mxu0 0
    %2007 = vmatpush1.bf16.msra.mxu0 0
    %2008 = vmatprep.subr.bf16.mxu0 0
    %2009 = vmatpush1.bf16.msra.mxu0 0
    %2010 = vmatprep.subr.bf16.mxu0 0
    %2011 = vmatpush1.bf16.msra.mxu0 0
    %2012 = vmatprep.subr.bf16.mxu0 0
    %2013 = vmatpush1.bf16.msra.mxu0 0
    %2014 = vmatprep.subr.bf16.mxu0 0
    %2015 = vmatpush1.bf16.msra.mxu0 0
    %2016 = vmatprep.subr.bf16.mxu0 0
    %2017 = vmatpush1.bf16.msra.mxu0 0
    %2018 = vmatprep.subr.bf16.mxu0 0
    %2019 = vmatpush1.bf16.msra.mxu0 0
    %2020 = vmatprep.subr.bf16.mxu0 0
    %2021 = vmatpush1.bf16.msra.mxu0 0
    %2022 = vmatprep.subr.bf16.mxu0 0
    %2023 = vmatpush1.bf16.msra.mxu0 0
    %2024 = vmatprep.mubr.bf16.mxu0 0
    %2025 = vmatmul.mubr.bf16.gmra.mrb[0].mxu0 %v1978
    %v2026 = vpop.f32.mrb[0].mxu0
    %v2027 = vadd.f32 0.0, %v2026
    %v2028 = vpop.f32.mrb[0].mxu0
    %v2029 = vpop.f32.mrb[0].mxu0
    %v2030 = vadd.f32 0.0, %v2029
    %v2031 = vpop.f32.mrb[0].mxu0
    %2032 = vmatprep.mubr.bf16.mxu0 0
    %2033 = vmatmul.mubr.bf16.gmra.mrb[0].mxu0 %v1981
    %v2034 = vpop.f32.mrb[0].mxu0
    %v2035 = vadd.f32 0.0, %v2034
    %v2036 = vpop.f32.mrb[0].mxu0
    %v2037 = vpop.f32.mrb[0].mxu0
    %v2038 = vadd.f32 0.0, %v2037
    %v2039 = vpop.f32.mrb[0].mxu0
    %2040 = vmatprep.mubr.bf16.mxu0 0
    %2041 = vmatmul.mubr.bf16.gmra.mrb[0].mxu0 %v1984
    %v2042 = vpop.f32.mrb[0].mxu0
    %v2043 = vadd.f32 0.0, %v2042
    %v2044 = vpop.f32.mrb[0].mxu0
    %v2045 = vpop.f32.mrb[0].mxu0
    %v2046 = vadd.f32 0.0, %v2045
    %v2047 = vpop.f32.mrb[0].mxu0
    %2048 = vmatprep.mubr.bf16.mxu0 0
    %2049 = vmatmul.mubr.bf16.gmra.mrb[0].mxu0 %v1987
    %v2050 = vpop.f32.mrb[0].mxu0
    %v2051 = vadd.f32 0.0, %v2050
    %v2052 = vpop.f32.mrb[0].mxu0
    %v2053 = vpop.f32.mrb[0].mxu0
    %v2054 = vadd.f32 0.0, %v2053
    %v2055 = vpop.f32.mrb[0].mxu0
    %2056 = vmatprep.mubr.bf16.mxu0 0
    %2057 = vmatmul.mubr.bf16.gmra.mrb[0].mxu0 %v1990
    %v2058 = vpop.f32.mrb[0].mxu0
    %v2059 = vadd.f32 0.0, %v2058
    %v2060 = vpop.f32.mrb[0].mxu0
    %v2061 = vpop.f32.mrb[0].mxu0
    %v2062 = vpop.f32.mrb[0].mxu0
    %2063 = vdwg.mxu0
    %v2064 = vadd.f32 %v1915, %v2027
    %v2065 = vadd.f32 %v1916, %v2030
    %v2066 = vadd.f32 %v1917, %v2035
    %v2067 = vadd.f32 %v1918, %v2038
    %v2068 = vadd.f32 %v1919, %v2043
    %v2069 = vadd.f32 %v1920, %v2046
    %v2070 = vadd.f32 %v1921, %v2051
    %v2071 = vadd.f32 %v1922, %v2054
    %v2072 = vadd.f32 %v1923, %v2059
    %v2073 = vld [vmem:[#allocation2 + $0x4] sm:$0xc]
    %v2074 = vld [vmem:[%s10 + $0x70] sm:$0xf]
    %v2075 = vld [vmem:[%s10 + $0x74] sm:$0xf]
    %v2076 = vld [vmem:[%s10 + $0x78] sm:$0xf]
    %v2077 = vld [vmem:[%s10 + $0x7c] sm:$0xf]
    %v2079 = vunpack.c.l.b16 %v2073
    %v2080 = vpack.c.b16 %v1763, %v2079
    %v2081 = vrot.slane %v2080, 2
    %v2082 = vrot.slane %v1773, 2
    %v2083 = vsel %vm1068, %v2081, %v2082
    %v2084 = vrot.slane %v1774, 2
    %v2085 = vsel %vm1068, %v2082, %v2084
    %v2086 = vrot.slane %v1775, 2
    %v2087 = vsel %vm1068, %v2084, %v2086
    %v2088 = vrot.slane %v1935, 2
    %v2089 = vsel %vm1068, %v2086, %v2088
    %v2094 = vunpack.c.l.b16 %v2074
    %v2095 = vunpack.c.l.b16 %v2075
    %v2096 = vunpack.c.l.b16 %v2076
    %v2097 = vunpack.c.l.b16 %v2077
    %v2098 = vpack.c.b16 %v2095, %v2094
    %v2099 = vpack.c.b16 %v2097, %v2096
    %v2103 = vsel %vm1090, %v2083, 0
    %v2106 = vsel %vm1090, %v2085, 0
    %v2109 = vsel %vm1090, %v2087, 0
    %v2112 = vsel %vm1090, %v2089, 0
    %v2115 = vsel %vm1090, %v2088, 0
    %2117 = vmatprep.subr.bf16.mxu0 0
    %2118 = vmatpush1.bf16.msra.mxu0 %v2098
    %2119 = vmatprep.subr.bf16.mxu0 0
    %2120 = vmatpush1.bf16.msra.mxu0 %v2099
    %2121 = vmatprep.subr.bf16.mxu0 0
    %2122 = vmatpush1.bf16.msra.mxu0 0
    %2123 = vmatprep.subr.bf16.mxu0 0
    %2124 = vmatpush1.bf16.msra.mxu0 0
    %2125 = vmatprep.subr.bf16.mxu0 0
    %2126 = vmatpush1.bf16.msra.mxu0 0
    %2127 = vmatprep.subr.bf16.mxu0 0
    %2128 = vmatpush1.bf16.msra.mxu0 0
    %2129 = vmatprep.subr.bf16.mxu0 0
    %2130 = vmatpush1.bf16.msra.mxu0 0
    %2131 = vmatprep.subr.bf16.mxu0 0
    %2132 = vmatpush1.bf16.msra.mxu0 0
    %2133 = vmatprep.subr.bf16.mxu0 0
    %2134 = vmatpush1.bf16.msra.mxu0 0
    %2135 = vmatprep.subr.bf16.mxu0 0
    %2136 = vmatpush1.bf16.msra.mxu0 0
    %2137 = vmatprep.subr.bf16.mxu0 0
    %2138 = vmatpush1.bf16.msra.mxu0 0
    %2139 = vmatprep.subr.bf16.mxu0 0
    %2140 = vmatpush1.bf16.msra.mxu0 0
    %2141 = vmatprep.subr.bf16.mxu0 0
    %2142 = vmatpush1.bf16.msra.mxu0 0
    %2143 = vmatprep.subr.bf16.mxu0 0
    %2144 = vmatpush1.bf16.msra.mxu0 0
    %2145 = vmatprep.subr.bf16.mxu0 0
    %2146 = vmatpush1.bf16.msra.mxu0 0
    %2147 = vmatprep.subr.bf16.mxu0 0
    %2148 = vmatpush1.bf16.msra.mxu0 0
    %2149 = vmatprep.mubr.bf16.mxu0 0
    %2150 = vmatmul.mubr.bf16.gmra.mrb[0].mxu0 %v2103
    %v2151 = vpop.f32.mrb[0].mxu0
    %v2152 = vadd.f32 0.0, %v2151
    %v2153 = vpop.f32.mrb[0].mxu0
    %v2154 = vpop.f32.mrb[0].mxu0
    %v2155 = vadd.f32 0.0, %v2154
    %v2156 = vpop.f32.mrb[0].mxu0
    %2157 = vmatprep.mubr.bf16.mxu0 0
    %2158 = vmatmul.mubr.bf16.gmra.mrb[0].mxu0 %v2106
    %v2159 = vpop.f32.mrb[0].mxu0
    %v2160 = vadd.f32 0.0, %v2159
    %v2161 = vpop.f32.mrb[0].mxu0
    %v2162 = vpop.f32.mrb[0].mxu0
    %v2163 = vadd.f32 0.0, %v2162
    %v2164 = vpop.f32.mrb[0].mxu0
    %2165 = vmatprep.mubr.bf16.mxu0 0
    %2166 = vmatmul.mubr.bf16.gmra.mrb[0].mxu0 %v2109
    %v2167 = vpop.f32.mrb[0].mxu0
    %v2168 = vadd.f32 0.0, %v2167
    %v2169 = vpop.f32.mrb[0].mxu0
    %v2170 = vpop.f32.mrb[0].mxu0
    %v2171 = vadd.f32 0.0, %v2170
    %v2172 = vpop.f32.mrb[0].mxu0
    %2173 = vmatprep.mubr.bf16.mxu0 0
    %2174 = vmatmul.mubr.bf16.gmra.mrb[0].mxu0 %v2112
    %v2175 = vpop.f32.mrb[0].mxu0
    %v2176 = vadd.f32 0.0, %v2175
    %v2177 = vpop.f32.mrb[0].mxu0
    %v2178 = vpop.f32.mrb[0].mxu0
    %v2179 = vadd.f32 0.0, %v2178
    %v2180 = vpop.f32.mrb[0].mxu0
    %2181 = vmatprep.mubr.bf16.mxu0 0
    %2182 = vmatmul.mubr.bf16.gmra.mrb[0].mxu0 %v2115
    %v2183 = vpop.f32.mrb[0].mxu0
    %v2184 = vadd.f32 0.0, %v2183
    %v2185 = vpop.f32.mrb[0].mxu0
    %v2186 = vpop.f32.mrb[0].mxu0
    %v2187 = vpop.f32.mrb[0].mxu0
    %2188 = vdwg.mxu0
    %v2189 = vadd.f32 %v2064, %v2152
    %v2190 = vadd.f32 %v2065, %v2155
    %v2191 = vadd.f32 %v2066, %v2160
    %v2192 = vadd.f32 %v2067, %v2163
    %v2193 = vadd.f32 %v2068, %v2168
    %v2194 = vadd.f32 %v2069, %v2171
    %v2195 = vadd.f32 %v2070, %v2176
    %v2196 = vadd.f32 %v2071, %v2179
    %v2197 = vadd.f32 %v2072, %v2184
    %v2198 = vld [vmem:[#allocation2 + $0x28] sm:$0x7]
    %v2199 = vld [vmem:[%s10 + $0x80] sm:$0xf]
    %v2200 = vld [vmem:[%s10 + $0x84] sm:$0xf]
    %v2201 = vld [vmem:[%s10 + $0x88] sm:$0xf]
    %v2202 = vld [vmem:[%s10 + $0x8c] sm:$0xf]
    %v2204 = vunpack.c.l.b16 %v2198
    %v2205 = vpack.c.b16 %v2204, %v1770
    %v2207 = vshrl.u32 %v2080, 16
    %v2209 = vrot.slane %v2207, 2
    %v2210 = vshll.u32 %v2080, 16
    %v2212 = vrot.slane %v2210, 3
    %v2213 = vor.u32 %v2209, %v2212
    %v2214 = vrot.slane %v1789, 2
    %v2215 = vrot.slane %v1785, 3
    %v2216 = vor.u32 %v2214, %v2215
    %v2217 = vsel %vm1333, %v2213, %v2216
    %v2218 = vrot.slane %v1797, 2
    %v2219 = vrot.slane %v1793, 3
    %v2220 = vor.u32 %v2218, %v2219
    %v2221 = vsel %vm1333, %v2216, %v2220
    %v2222 = vrot.slane %v1805, 2
    %v2223 = vrot.slane %v1801, 3
    %v2224 = vor.u32 %v2222, %v2223
    %v2225 = vsel %vm1333, %v2220, %v2224
    %v2227 = vshrl.u32 %v2205, 16
    %v2229 = vrot.slane %v2227, 2
    %v2230 = vshll.u32 %v2205, 16
    %v2232 = vrot.slane %v2230, 3
    %v2233 = vor.u32 %v2229, %v2232
    %v2234 = vsel %vm1333, %v2224, %v2233
    %v2239 = vunpack.c.l.b16 %v2199
    %v2240 = vunpack.c.l.b16 %v2200
    %v2241 = vunpack.c.l.b16 %v2201
    %v2242 = vunpack.c.l.b16 %v2202
    %v2243 = vpack.c.b16 %v2240, %v2239
    %v2244 = vpack.c.b16 %v2242, %v2241
    %v2248 = vsel %vm1090, %v2217, 0
    %v2251 = vsel %vm1090, %v2221, 0
    %v2254 = vsel %vm1090, %v2225, 0
    %v2257 = vsel %vm1090, %v2234, 0
    %v2260 = vsel %vm1090, %v2233, 0
    %2262 = vmatprep.subr.bf16.mxu0 0
    %2263 = vmatpush1.bf16.msra.mxu0 %v2243
    %2264 = vmatprep.subr.bf16.mxu0 0
    %2265 = vmatpush1.bf16.msra.mxu0 %v2244
    %2266 = vmatprep.subr.bf16.mxu0 0
    %2267 = vmatpush1.bf16.msra.mxu0 0
    %2268 = vmatprep.subr.bf16.mxu0 0
    %2269 = vmatpush1.bf16.msra.mxu0 0
    %2270 = vmatprep.subr.bf16.mxu0 0
    %2271 = vmatpush1.bf16.msra.mxu0 0
    %2272 = vmatprep.subr.bf16.mxu0 0
    %2273 = vmatpush1.bf16.msra.mxu0 0
    %2274 = vmatprep.subr.bf16.mxu0 0
    %2275 = vmatpush1.bf16.msra.mxu0 0
    %2276 = vmatprep.subr.bf16.mxu0 0
    %2277 = vmatpush1.bf16.msra.mxu0 0
    %2278 = vmatprep.subr.bf16.mxu0 0
    %2279 = vmatpush1.bf16.msra.mxu0 0
    %2280 = vmatprep.subr.bf16.mxu0 0
    %2281 = vmatpush1.bf16.msra.mxu0 0
    %2282 = vmatprep.subr.bf16.mxu0 0
    %2283 = vmatpush1.bf16.msra.mxu0 0
    %2284 = vmatprep.subr.bf16.mxu0 0
    %2285 = vmatpush1.bf16.msra.mxu0 0
    %2286 = vmatprep.subr.bf16.mxu0 0
    %2287 = vmatpush1.bf16.msra.mxu0 0
    %2288 = vmatprep.subr.bf16.mxu0 0
    %2289 = vmatpush1.bf16.msra.mxu0 0
    %2290 = vmatprep.subr.bf16.mxu0 0
    %2291 = vmatpush1.bf16.msra.mxu0 0
    %2292 = vmatprep.subr.bf16.mxu0 0
    %2293 = vmatpush1.bf16.msra.mxu0 0
    %2294 = vmatprep.mubr.bf16.mxu0 0
    %2295 = vmatmul.mubr.bf16.gmra.mrb[0].mxu0 %v2248
    %v2296 = vpop.f32.mrb[0].mxu0
    %v2297 = vadd.f32 0.0, %v2296
    %v2298 = vpop.f32.mrb[0].mxu0
    %v2299 = vpop.f32.mrb[0].mxu0
    %v2300 = vadd.f32 0.0, %v2299
    %v2301 = vpop.f32.mrb[0].mxu0
    %2302 = vmatprep.mubr.bf16.mxu0 0
    %2303 = vmatmul.mubr.bf16.gmra.mrb[0].mxu0 %v2251
    %v2304 = vpop.f32.mrb[0].mxu0
    %v2305 = vadd.f32 0.0, %v2304
    %v2306 = vpop.f32.mrb[0].mxu0
    %v2307 = vpop.f32.mrb[0].mxu0
    %v2308 = vadd.f32 0.0, %v2307
    %v2309 = vpop.f32.mrb[0].mxu0
    %2310 = vmatprep.mubr.bf16.mxu0 0
    %2311 = vmatmul.mubr.bf16.gmra.mrb[0].mxu0 %v2254
    %v2312 = vpop.f32.mrb[0].mxu0
    %v2313 = vadd.f32 0.0, %v2312
    %v2314 = vpop.f32.mrb[0].mxu0
    %v2315 = vpop.f32.mrb[0].mxu0
    %v2316 = vadd.f32 0.0, %v2315
    %v2317 = vpop.f32.mrb[0].mxu0
    %2318 = vmatprep.mubr.bf16.mxu0 0
    %2319 = vmatmul.mubr.bf16.gmra.mrb[0].mxu0 %v2257
    %v2320 = vpop.f32.mrb[0].mxu0
    %v2321 = vadd.f32 0.0, %v2320
    %v2322 = vpop.f32.mrb[0].mxu0
    %v2323 = vpop.f32.mrb[0].mxu0
    %v2324 = vadd.f32 0.0, %v2323
    %v2325 = vpop.f32.mrb[0].mxu0
    %2326 = vmatprep.mubr.bf16.mxu0 0
    %2327 = vmatmul.mubr.bf16.gmra.mrb[0].mxu0 %v2260
    %v2328 = vpop.f32.mrb[0].mxu0
    %v2329 = vadd.f32 0.0, %v2328
    %v2330 = vpop.f32.mrb[0].mxu0
    %v2331 = vpop.f32.mrb[0].mxu0
    %v2332 = vpop.f32.mrb[0].mxu0
    %2333 = vdwg.mxu0
    %v2334 = vadd.f32 %v2189, %v2297
    %v2335 = vadd.f32 %v2190, %v2300
    %v2336 = vadd.f32 %v2191, %v2305
    %v2337 = vadd.f32 %v2192, %v2308
    %v2338 = vadd.f32 %v2193, %v2313
    %v2339 = vadd.f32 %v2194, %v2316
    %v2340 = vadd.f32 %v2195, %v2321
    %v2341 = vadd.f32 %v2196, %v2324
    %v2342 = vadd.f32 %v2197, %v2329
    %v2343 = vld [vmem:[%s11] sm:$0x1]
    %v2345 = vlaneseq
    %v2346 = vshrl.u32 %v2345, 7
    %v2347 = vsub.s32 0, %v2346
    %v2348 = vrot.slane %v2343, %v2347
    %v2350 = vadd.f32 %v2334, %v2348
    %v2351 = vadd.f32 %v2335, %v2348
    %v2352 = vadd.f32 %v2336, %v2348
    %v2353 = vadd.f32 %v2337, %v2348
    %v2354 = vadd.f32 %v2338, %v2348
    %v2355 = vadd.f32 %v2339, %v2348
    %v2356 = vadd.f32 %v2340, %v2348
    %v2357 = vadd.f32 %v2341, %v2348
    %v2358 = vadd.f32 %v2342, %v2348
    %v2359 = vmax.f32 %v2350, 0.0
    %v2360 = vmax.f32 %v2351, 0.0
    %v2361 = vmax.f32 %v2352, 0.0
    %v2362 = vmax.f32 %v2353, 0.0
    %v2363 = vmax.f32 %v2354, 0.0
    %v2364 = vmax.f32 %v2355, 0.0
    %v2365 = vmax.f32 %v2356, 0.0
    %v2366 = vmax.f32 %v2357, 0.0
    %v2367 = vmax.f32 %v2358, 0.0
    %v2368 = vsel %vm960, %v2359, 0.0
    %v2369 = vsel %vm961, %v2360, 0.0
    %v2370 = vsel %vm962, %v2361, 0.0
    %v2371 = vsel %vm963, %v2362, 0.0
    %v2372 = vsel %vm964, %v2363, 0.0
    %v2373 = vsel %vm965, %v2364, 0.0
    %v2374 = vsel %vm966, %v2365, 0.0
    %v2375 = vsel %vm967, %v2366, 0.0
    %v2376 = vsel %vm968, %v2367, 0.0
    %v2377 = vpack.c.bf16 %v2369, %v2368
    %v2378 = vpack.c.bf16 %v2371, %v2370
    %v2379 = vpack.c.bf16 %v2373, %v2372
    %v2380 = vpack.c.bf16 %v2375, %v2374
    %v2381 = vpack.c.bf16 %v2376, %v2376
    %v2387 = vunpack.c.l.b16 %v2377
    %v2388 = vunpack.c.h.b16 %v2377
    %v2389 = vunpack.c.l.b16 %v2378
    %v2390 = vunpack.c.h.b16 %v2378
    %v2391 = vunpack.c.l.b16 %v2379
    %v2392 = vunpack.c.h.b16 %v2379
    %v2393 = vunpack.c.l.b16 %v2380
    %v2394 = vunpack.c.h.b16 %v2380
    %v2395 = vunpack.c.l.b16 %v2381
    %v2396 = vpack.c.b16 %v2387, %v2387
    %v2397 = vpack.c.b16 %v2388, %v2388
    %v2398 = vpack.c.b16 %v2389, %v2389
    %v2399 = vpack.c.b16 %v2390, %v2390
    %v2400 = vpack.c.b16 %v2391, %v2391
    %v2401 = vpack.c.b16 %v2392, %v2392
    %v2402 = vpack.c.b16 %v2393, %v2393
    %v2403 = vpack.c.b16 %v2394, %v2394
    %v2404 = vpack.c.b16 %v2395, %v2395
    %2414 = vst.msk [vmem:[#allocation2 + $0x4] sm:$0xf] %vm67, %v2396
    %2415 = vst.msk [vmem:[#allocation2 + $0x8] sm:$0xf] %vm67, %v2397
    %2416 = vst.msk [vmem:[#allocation2 + $0xc] sm:$0xf] %vm67, %v2398
    %2417 = vst.msk [vmem:[#allocation2 + $0x10] sm:$0xf] %vm67, %v2399
    %2418 = vst.msk [vmem:[#allocation2 + $0x14] sm:$0xf] %vm67, %v2400
    %2419 = vst.msk [vmem:[#allocation2 + $0x18] sm:$0xf] %vm67, %v2401
    %2420 = vst.msk [vmem:[#allocation2 + $0x1c] sm:$0xf] %vm67, %v2402
    %2421 = vst.msk [vmem:[#allocation2 + $0x20] sm:$0xf] %vm67, %v2403
    %2422 = vst.msk [vmem:[#allocation2 + $0x24] sm:$0xf] %vm67, %v2404
    %v2423 = vld [vmem:[#allocation2] sm:$0xe]
    %v2424 = vld [vmem:[#allocation2 + $0x4] sm:$0xf]
    %v2425 = vld [vmem:[#allocation2 + $0x8] sm:$0xf]
    %v2426 = vld [vmem:[#allocation2 + $0xc] sm:$0xf]
    %v2427 = vld [vmem:[#allocation2 + $0x10] sm:$0xf]
    %v2428 = vld [vmem:[#allocation2 + $0x14] sm:$0xf]
    %v2429 = vld [vmem:[#allocation2 + $0x18] sm:$0xf]
    %v2430 = vld [vmem:[#allocation2 + $0x1c] sm:$0xf]
    %v2431 = vld [vmem:[#allocation2 + $0x20] sm:$0xf]
    %v2432 = vld [vmem:[#allocation2 + $0x24] sm:$0x3]
    %v2433 = vld [vmem:[%s12] sm:$0xf]
    %v2434 = vld [vmem:[%s12 + $0x4] sm:$0xf]
    %v2435 = vld [vmem:[%s12 + $0x8] sm:$0xf]
    %v2436 = vld [vmem:[%s12 + $0xc] sm:$0xf]
    %v2437 = vld [vmem:[#allocation2] sm:$0xc]
    %v2438 = vld [vmem:[%s12 + $0x10] sm:$0xf]
    %v2439 = vld [vmem:[%s12 + $0x14] sm:$0xf]
    %v2440 = vld [vmem:[%s12 + $0x18] sm:$0xf]
    %v2441 = vld [vmem:[%s12 + $0x1c] sm:$0xf]
    %v2452 = vunpack.c.l.b16 %v2437
    %v2453 = vunpack.c.l.b16 %v2424
    %v2454 = vunpack.c.l.b16 %v2425
    %v2455 = vunpack.c.l.b16 %v2426
    %v2456 = vunpack.c.l.b16 %v2427
    %v2457 = vunpack.c.l.b16 %v2428
    %v2458 = vunpack.c.l.b16 %v2429
    %v2459 = vunpack.c.l.b16 %v2430
    %v2460 = vunpack.c.l.b16 %v2431
    %v2461 = vunpack.c.l.b16 %v2432
    %v2462 = vpack.c.b16 %v2453, %v2452
    %v2463 = vpack.c.b16 %v2455, %v2454
    %v2464 = vpack.c.b16 %v2457, %v2456
    %v2465 = vpack.c.b16 %v2459, %v2458
    %v2466 = vpack.c.b16 %v2461, %v2460
    %v2467 = vrot.slane %v2462, 2
    %v2468 = vrot.slane %v2463, 2
    %v2469 = vsel %vm1068, %v2467, %v2468
    %v2470 = vrot.slane %v2464, 2
    %v2471 = vsel %vm1068, %v2468, %v2470
    %v2472 = vrot.slane %v2465, 2
    %v2473 = vsel %vm1068, %v2470, %v2472
    %v2474 = vrot.slane %v2466, 2
    %v2475 = vsel %vm1068, %v2472, %v2474
    %v2480 = vunpack.c.l.b16 %v2438
    %v2481 = vunpack.c.l.b16 %v2439
    %v2482 = vunpack.c.l.b16 %v2440
    %v2483 = vunpack.c.l.b16 %v2441
    %v2484 = vpack.c.b16 %v2481, %v2480
    %v2485 = vpack.c.b16 %v2483, %v2482
    %v2489 = vsel %vm1090, %v2469, 0
    %v2492 = vsel %vm1090, %v2471, 0
    %v2495 = vsel %vm1090, %v2473, 0
    %v2498 = vsel %vm1090, %v2475, 0
    %v2501 = vsel %vm1090, %v2474, 0
    %2503 = vmatprep.subr.bf16.mxu0 0
    %2504 = vmatpush1.bf16.msra.mxu0 %v2484
    %2505 = vmatprep.subr.bf16.mxu0 0
    %2506 = vmatpush1.bf16.msra.mxu0 %v2485
    %2507 = vmatprep.subr.bf16.mxu0 0
    %2508 = vmatpush1.bf16.msra.mxu0 0
    %2509 = vmatprep.subr.bf16.mxu0 0
    %2510 = vmatpush1.bf16.msra.mxu0 0
    %2511 = vmatprep.subr.bf16.mxu0 0
    %2512 = vmatpush1.bf16.msra.mxu0 0
    %2513 = vmatprep.subr.bf16.mxu0 0
    %2514 = vmatpush1.bf16.msra.mxu0 0
    %2515 = vmatprep.subr.bf16.mxu0 0
    %2516 = vmatpush1.bf16.msra.mxu0 0
    %2517 = vmatprep.subr.bf16.mxu0 0
    %2518 = vmatpush1.bf16.msra.mxu0 0
    %2519 = vmatprep.subr.bf16.mxu0 0
    %2520 = vmatpush1.bf16.msra.mxu0 0
    %2521 = vmatprep.subr.bf16.mxu0 0
    %2522 = vmatpush1.bf16.msra.mxu0 0
    %2523 = vmatprep.subr.bf16.mxu0 0
    %2524 = vmatpush1.bf16.msra.mxu0 0
    %2525 = vmatprep.subr.bf16.mxu0 0
    %2526 = vmatpush1.bf16.msra.mxu0 0
    %2527 = vmatprep.subr.bf16.mxu0 0
    %2528 = vmatpush1.bf16.msra.mxu0 0
    %2529 = vmatprep.subr.bf16.mxu0 0
    %2530 = vmatpush1.bf16.msra.mxu0 0
    %2531 = vmatprep.subr.bf16.mxu0 0
    %2532 = vmatpush1.bf16.msra.mxu0 0
    %2533 = vmatprep.subr.bf16.mxu0 0
    %2534 = vmatpush1.bf16.msra.mxu0 0
    %2535 = vmatprep.mubr.bf16.mxu0 0
    %2536 = vmatmul.mubr.bf16.gmra.mrb[0].mxu0 %v2489
    %v2537 = vpop.f32.mrb[0].mxu0
    %v2538 = vadd.f32 0.0, %v2537
    %v2539 = vpop.f32.mrb[0].mxu0
    %v2540 = vpop.f32.mrb[0].mxu0
    %v2541 = vadd.f32 0.0, %v2540
    %v2542 = vpop.f32.mrb[0].mxu0
    %2543 = vmatprep.mubr.bf16.mxu0 0
    %2544 = vmatmul.mubr.bf16.gmra.mrb[0].mxu0 %v2492
    %v2545 = vpop.f32.mrb[0].mxu0
    %v2546 = vadd.f32 0.0, %v2545
    %v2547 = vpop.f32.mrb[0].mxu0
    %v2548 = vpop.f32.mrb[0].mxu0
    %v2549 = vadd.f32 0.0, %v2548
    %v2550 = vpop.f32.mrb[0].mxu0
    %2551 = vmatprep.mubr.bf16.mxu0 0
    %2552 = vmatmul.mubr.bf16.gmra.mrb[0].mxu0 %v2495
    %v2553 = vpop.f32.mrb[0].mxu0
    %v2554 = vadd.f32 0.0, %v2553
    %v2555 = vpop.f32.mrb[0].mxu0
    %v2556 = vpop.f32.mrb[0].mxu0
    %v2557 = vadd.f32 0.0, %v2556
    %v2558 = vpop.f32.mrb[0].mxu0
    %2559 = vmatprep.mubr.bf16.mxu0 0
    %2560 = vmatmul.mubr.bf16.gmra.mrb[0].mxu0 %v2498
    %v2561 = vpop.f32.mrb[0].mxu0
    %v2562 = vadd.f32 0.0, %v2561
    %v2563 = vpop.f32.mrb[0].mxu0
    %v2564 = vpop.f32.mrb[0].mxu0
    %v2565 = vadd.f32 0.0, %v2564
    %v2566 = vpop.f32.mrb[0].mxu0
    %2567 = vmatprep.mubr.bf16.mxu0 0
    %2568 = vmatmul.mubr.bf16.gmra.mrb[0].mxu0 %v2501
    %v2569 = vpop.f32.mrb[0].mxu0
    %v2570 = vadd.f32 0.0, %v2569
    %v2571 = vpop.f32.mrb[0].mxu0
    %v2572 = vpop.f32.mrb[0].mxu0
    %v2573 = vpop.f32.mrb[0].mxu0
    %2574 = vdwg.mxu0
    %v2576 = vunpack.c.l.b16 %v2423
    %v2577 = vpack.c.b16 %v2453, %v2576
    %v2579 = vshrl.u32 %v2577, 16
    %v2581 = vrot.slane %v2579, 1
    %v2582 = vshll.u32 %v2577, 16
    %v2584 = vrot.slane %v2582, 2
    %v2585 = vor.u32 %v2581, %v2584
    %v2587 = vshrl.u32 %v2463, 16
    %v2589 = vrot.slane %v2587, 1
    %v2590 = vshll.u32 %v2463, 16
    %v2592 = vrot.slane %v2590, 2
    %v2593 = vor.u32 %v2589, %v2592
    %v2594 = vsel %vm1181, %v2585, %v2593
    %v2596 = vshrl.u32 %v2464, 16
    %v2598 = vrot.slane %v2596, 1
    %v2599 = vshll.u32 %v2464, 16
    %v2601 = vrot.slane %v2599, 2
    %v2602 = vor.u32 %v2598, %v2601
    %v2603 = vsel %vm1181, %v2593, %v2602
    %v2605 = vshrl.u32 %v2465, 16
    %v2607 = vrot.slane %v2605, 1
    %v2608 = vshll.u32 %v2465, 16
    %v2610 = vrot.slane %v2608, 2
    %v2611 = vor.u32 %v2607, %v2610
    %v2612 = vsel %vm1181, %v2602, %v2611
    %v2614 = vshrl.u32 %v2466, 16
    %v2616 = vrot.slane %v2614, 1
    %v2617 = vshll.u32 %v2466, 16
    %v2619 = vrot.slane %v2617, 2
    %v2620 = vor.u32 %v2616, %v2619
    %v2621 = vsel %vm1181, %v2611, %v2620
    %v2626 = vunpack.c.l.b16 %v2433
    %v2627 = vunpack.c.l.b16 %v2434
    %v2628 = vunpack.c.l.b16 %v2435
    %v2629 = vunpack.c.l.b16 %v2436
    %v2630 = vpack.c.b16 %v2627, %v2626
    %v2631 = vpack.c.b16 %v2629, %v2628
    %v2635 = vsel %vm1090, %v2594, 0
    %v2638 = vsel %vm1090, %v2603, 0
    %v2641 = vsel %vm1090, %v2612, 0
    %v2644 = vsel %vm1090, %v2621, 0
    %v2647 = vsel %vm1090, %v2620, 0
    %2649 = vmatprep.subr.bf16.mxu0 0
    %2650 = vmatpush1.bf16.msra.mxu0 %v2630
    %2651 = vmatprep.subr.bf16.mxu0 0
    %2652 = vmatpush1.bf16.msra.mxu0 %v2631
    %2653 = vmatprep.subr.bf16.mxu0 0
    %2654 = vmatpush1.bf16.msra.mxu0 0
    %2655 = vmatprep.subr.bf16.mxu0 0
    %2656 = vmatpush1.bf16.msra.mxu0 0
    %2657 = vmatprep.subr.bf16.mxu0 0
    %2658 = vmatpush1.bf16.msra.mxu0 0
    %2659 = vmatprep.subr.bf16.mxu0 0
    %2660 = vmatpush1.bf16.msra.mxu0 0
    %2661 = vmatprep.subr.bf16.mxu0 0
    %2662 = vmatpush1.bf16.msra.mxu0 0
    %2663 = vmatprep.subr.bf16.mxu0 0
    %2664 = vmatpush1.bf16.msra.mxu0 0
    %2665 = vmatprep.subr.bf16.mxu0 0
    %2666 = vmatpush1.bf16.msra.mxu0 0
    %2667 = vmatprep.subr.bf16.mxu0 0
    %2668 = vmatpush1.bf16.msra.mxu0 0
    %2669 = vmatprep.subr.bf16.mxu0 0
    %2670 = vmatpush1.bf16.msra.mxu0 0
    %2671 = vmatprep.subr.bf16.mxu0 0
    %2672 = vmatpush1.bf16.msra.mxu0 0
    %2673 = vmatprep.subr.bf16.mxu0 0
    %2674 = vmatpush1.bf16.msra.mxu0 0
    %2675 = vmatprep.subr.bf16.mxu0 0
    %2676 = vmatpush1.bf16.msra.mxu0 0
    %2677 = vmatprep.subr.bf16.mxu0 0
    %2678 = vmatpush1.bf16.msra.mxu0 0
    %2679 = vmatprep.subr.bf16.mxu0 0
    %2680 = vmatpush1.bf16.msra.mxu0 0
    %2681 = vmatprep.mubr.bf16.mxu0 0
    %2682 = vmatmul.mubr.bf16.gmra.mrb[0].mxu0 %v2635
    %v2683 = vpop.f32.mrb[0].mxu0
    %v2684 = vadd.f32 %v2538, %v2683
    %v2685 = vpop.f32.mrb[0].mxu0
    %v2686 = vpop.f32.mrb[0].mxu0
    %v2687 = vadd.f32 %v2541, %v2686
    %v2688 = vpop.f32.mrb[0].mxu0
    %2689 = vmatprep.mubr.bf16.mxu0 0
    %2690 = vmatmul.mubr.bf16.gmra.mrb[0].mxu0 %v2638
    %v2691 = vpop.f32.mrb[0].mxu0
    %v2692 = vadd.f32 %v2546, %v2691
    %v2693 = vpop.f32.mrb[0].mxu0
    %v2694 = vpop.f32.mrb[0].mxu0
    %v2695 = vadd.f32 %v2549, %v2694
    %v2696 = vpop.f32.mrb[0].mxu0
    %2697 = vmatprep.mubr.bf16.mxu0 0
    %2698 = vmatmul.mubr.bf16.gmra.mrb[0].mxu0 %v2641
    %v2699 = vpop.f32.mrb[0].mxu0
    %v2700 = vadd.f32 %v2554, %v2699
    %v2701 = vpop.f32.mrb[0].mxu0
    %v2702 = vpop.f32.mrb[0].mxu0
    %v2703 = vadd.f32 %v2557, %v2702
    %v2704 = vpop.f32.mrb[0].mxu0
    %2705 = vmatprep.mubr.bf16.mxu0 0
    %2706 = vmatmul.mubr.bf16.gmra.mrb[0].mxu0 %v2644
    %v2707 = vpop.f32.mrb[0].mxu0
    %v2708 = vadd.f32 %v2562, %v2707
    %v2709 = vpop.f32.mrb[0].mxu0
    %v2710 = vpop.f32.mrb[0].mxu0
    %v2711 = vadd.f32 %v2565, %v2710
    %v2712 = vpop.f32.mrb[0].mxu0
    %2713 = vmatprep.mubr.bf16.mxu0 0
    %2714 = vmatmul.mubr.bf16.gmra.mrb[0].mxu0 %v2647
    %v2715 = vpop.f32.mrb[0].mxu0
    %v2716 = vadd.f32 %v2570, %v2715
    %v2717 = vpop.f32.mrb[0].mxu0
    %v2718 = vpop.f32.mrb[0].mxu0
    %v2719 = vpop.f32.mrb[0].mxu0
    %2720 = vdwg.mxu0
    %v2721 = vld [vmem:[#allocation2 + $0x24] sm:$0x7]
    %v2722 = vld [vmem:[%s12 + $0x20] sm:$0xf]
    %v2723 = vld [vmem:[%s12 + $0x24] sm:$0xf]
    %v2724 = vld [vmem:[%s12 + $0x28] sm:$0xf]
    %v2725 = vld [vmem:[%s12 + $0x2c] sm:$0xf]
    %v2727 = vunpack.c.l.b16 %v2721
    %v2728 = vpack.c.b16 %v2727, %v2460
    %v2730 = vshrl.u32 %v2462, 16
    %v2732 = vrot.slane %v2730, 2
    %v2733 = vshll.u32 %v2462, 16
    %v2735 = vrot.slane %v2733, 3
    %v2736 = vor.u32 %v2732, %v2735
    %v2737 = vrot.slane %v2587, 2
    %v2738 = vrot.slane %v2590, 3
    %v2739 = vor.u32 %v2737, %v2738
    %v2740 = vsel %vm1333, %v2736, %v2739
    %v2741 = vrot.slane %v2596, 2
    %v2742 = vrot.slane %v2599, 3
    %v2743 = vor.u32 %v2741, %v2742
    %v2744 = vsel %vm1333, %v2739, %v2743
    %v2745 = vrot.slane %v2605, 2
    %v2746 = vrot.slane %v2608, 3
    %v2747 = vor.u32 %v2745, %v2746
    %v2748 = vsel %vm1333, %v2743, %v2747
    %v2750 = vshrl.u32 %v2728, 16
    %v2752 = vrot.slane %v2750, 2
    %v2753 = vshll.u32 %v2728, 16
    %v2755 = vrot.slane %v2753, 3
    %v2756 = vor.u32 %v2752, %v2755
    %v2757 = vsel %vm1333, %v2747, %v2756
    %v2762 = vunpack.c.l.b16 %v2722
    %v2763 = vunpack.c.l.b16 %v2723
    %v2764 = vunpack.c.l.b16 %v2724
    %v2765 = vunpack.c.l.b16 %v2725
    %v2766 = vpack.c.b16 %v2763, %v2762
    %v2767 = vpack.c.b16 %v2765, %v2764
    %v2771 = vsel %vm1090, %v2740, 0
    %v2774 = vsel %vm1090, %v2744, 0
    %v2777 = vsel %vm1090, %v2748, 0
    %v2780 = vsel %vm1090, %v2757, 0
    %v2783 = vsel %vm1090, %v2756, 0
    %2785 = vmatprep.subr.bf16.mxu0 0
    %2786 = vmatpush1.bf16.msra.mxu0 %v2766
    %2787 = vmatprep.subr.bf16.mxu0 0
    %2788 = vmatpush1.bf16.msra.mxu0 %v2767
    %2789 = vmatprep.subr.bf16.mxu0 0
    %2790 = vmatpush1.bf16.msra.mxu0 0
    %2791 = vmatprep.subr.bf16.mxu0 0
    %2792 = vmatpush1.bf16.msra.mxu0 0
    %2793 = vmatprep.subr.bf16.mxu0 0
    %2794 = vmatpush1.bf16.msra.mxu0 0
    %2795 = vmatprep.subr.bf16.mxu0 0
    %2796 = vmatpush1.bf16.msra.mxu0 0
    %2797 = vmatprep.subr.bf16.mxu0 0
    %2798 = vmatpush1.bf16.msra.mxu0 0
    %2799 = vmatprep.subr.bf16.mxu0 0
    %2800 = vmatpush1.bf16.msra.mxu0 0
    %2801 = vmatprep.subr.bf16.mxu0 0
    %2802 = vmatpush1.bf16.msra.mxu0 0
    %2803 = vmatprep.subr.bf16.mxu0 0
    %2804 = vmatpush1.bf16.msra.mxu0 0
    %2805 = vmatprep.subr.bf16.mxu0 0
    %2806 = vmatpush1.bf16.msra.mxu0 0
    %2807 = vmatprep.subr.bf16.mxu0 0
    %2808 = vmatpush1.bf16.msra.mxu0 0
    %2809 = vmatprep.subr.bf16.mxu0 0
    %2810 = vmatpush1.bf16.msra.mxu0 0
    %2811 = vmatprep.subr.bf16.mxu0 0
    %2812 = vmatpush1.bf16.msra.mxu0 0
    %2813 = vmatprep.subr.bf16.mxu0 0
    %2814 = vmatpush1.bf16.msra.mxu0 0
    %2815 = vmatprep.subr.bf16.mxu0 0
    %2816 = vmatpush1.bf16.msra.mxu0 0
    %2817 = vmatprep.mubr.bf16.mxu0 0
    %2818 = vmatmul.mubr.bf16.gmra.mrb[0].mxu0 %v2771
    %v2819 = vpop.f32.mrb[0].mxu0
    %v2820 = vadd.f32 0.0, %v2819
    %v2821 = vpop.f32.mrb[0].mxu0
    %v2822 = vpop.f32.mrb[0].mxu0
    %v2823 = vadd.f32 0.0, %v2822
    %v2824 = vpop.f32.mrb[0].mxu0
    %2825 = vmatprep.mubr.bf16.mxu0 0
    %2826 = vmatmul.mubr.bf16.gmra.mrb[0].mxu0 %v2774
    %v2827 = vpop.f32.mrb[0].mxu0
    %v2828 = vadd.f32 0.0, %v2827
    %v2829 = vpop.f32.mrb[0].mxu0
    %v2830 = vpop.f32.mrb[0].mxu0
    %v2831 = vadd.f32 0.0, %v2830
    %v2832 = vpop.f32.mrb[0].mxu0
    %2833 = vmatprep.mubr.bf16.mxu0 0
    %2834 = vmatmul.mubr.bf16.gmra.mrb[0].mxu0 %v2777
    %v2835 = vpop.f32.mrb[0].mxu0
    %v2836 = vadd.f32 0.0, %v2835
    %v2837 = vpop.f32.mrb[0].mxu0
    %v2838 = vpop.f32.mrb[0].mxu0
    %v2839 = vadd.f32 0.0, %v2838
    %v2840 = vpop.f32.mrb[0].mxu0
    %2841 = vmatprep.mubr.bf16.mxu0 0
    %2842 = vmatmul.mubr.bf16.gmra.mrb[0].mxu0 %v2780
    %v2843 = vpop.f32.mrb[0].mxu0
    %v2844 = vadd.f32 0.0, %v2843
    %v2845 = vpop.f32.mrb[0].mxu0
    %v2846 = vpop.f32.mrb[0].mxu0
    %v2847 = vadd.f32 0.0, %v2846
    %v2848 = vpop.f32.mrb[0].mxu0
    %2849 = vmatprep.mubr.bf16.mxu0 0
    %2850 = vmatmul.mubr.bf16.gmra.mrb[0].mxu0 %v2783
    %v2851 = vpop.f32.mrb[0].mxu0
    %v2852 = vadd.f32 0.0, %v2851
    %v2853 = vpop.f32.mrb[0].mxu0
    %v2854 = vpop.f32.mrb[0].mxu0
    %v2855 = vpop.f32.mrb[0].mxu0
    %2856 = vdwg.mxu0
    %v2857 = vadd.f32 %v2684, %v2820
    %v2858 = vadd.f32 %v2687, %v2823
    %v2859 = vadd.f32 %v2692, %v2828
    %v2860 = vadd.f32 %v2695, %v2831
    %v2861 = vadd.f32 %v2700, %v2836
    %v2862 = vadd.f32 %v2703, %v2839
    %v2863 = vadd.f32 %v2708, %v2844
    %v2864 = vadd.f32 %v2711, %v2847
    %v2865 = vadd.f32 %v2716, %v2852
    %v2866 = vld [vmem:[#allocation2] sm:$0x8]
    %v2867 = vld [vmem:[#allocation2 + $0x24] sm:$0xf]
    %v2868 = vld [vmem:[%s12 + $0x30] sm:$0xf]
    %v2869 = vld [vmem:[%s12 + $0x34] sm:$0xf]
    %v2870 = vld [vmem:[%s12 + $0x38] sm:$0xf]
    %v2871 = vld [vmem:[%s12 + $0x3c] sm:$0xf]
    %v2874 = vunpack.c.l.b16 %v2866
    %v2875 = vunpack.c.l.b16 %v2867
    %v2876 = vpack.c.b16 %v2453, %v2874
    %v2877 = vpack.c.b16 %v2875, %v2460
    %v2879 = vshrl.u32 %v2876, 16
    %v2881 = vrot.slane %v2879, 3
    %v2882 = vshll.u32 %v2876, 16
    %v2884 = vrot.slane %v2882, 4
    %v2885 = vor.u32 %v2881, %v2884
    %v2886 = vrot.slane %v2587, 3
    %v2887 = vrot.slane %v2590, 4
    %v2888 = vor.u32 %v2886, %v2887
    %v2889 = vsel %vm1483, %v2885, %v2888
    %v2890 = vrot.slane %v2596, 3
    %v2891 = vrot.slane %v2599, 4
    %v2892 = vor.u32 %v2890, %v2891
    %v2893 = vsel %vm1483, %v2888, %v2892
    %v2894 = vrot.slane %v2605, 3
    %v2895 = vrot.slane %v2608, 4
    %v2896 = vor.u32 %v2894, %v2895
    %v2897 = vsel %vm1483, %v2892, %v2896
    %v2899 = vshrl.u32 %v2877, 16
    %v2901 = vrot.slane %v2899, 3
    %v2902 = vshll.u32 %v2877, 16
    %v2904 = vrot.slane %v2902, 4
    %v2905 = vor.u32 %v2901, %v2904
    %v2906 = vsel %vm1483, %v2896, %v2905
    %v2911 = vunpack.c.l.b16 %v2868
    %v2912 = vunpack.c.l.b16 %v2869
    %v2913 = vunpack.c.l.b16 %v2870
    %v2914 = vunpack.c.l.b16 %v2871
    %v2915 = vpack.c.b16 %v2912, %v2911
    %v2916 = vpack.c.b16 %v2914, %v2913
    %v2920 = vsel %vm1090, %v2889, 0
    %v2923 = vsel %vm1090, %v2893, 0
    %v2926 = vsel %vm1090, %v2897, 0
    %v2929 = vsel %vm1090, %v2906, 0
    %v2932 = vsel %vm1090, %v2905, 0
    %2934 = vmatprep.subr.bf16.mxu0 0
    %2935 = vmatpush1.bf16.msra.mxu0 %v2915
    %2936 = vmatprep.subr.bf16.mxu0 0
    %2937 = vmatpush1.bf16.msra.mxu0 %v2916
    %2938 = vmatprep.subr.bf16.mxu0 0
    %2939 = vmatpush1.bf16.msra.mxu0 0
    %2940 = vmatprep.subr.bf16.mxu0 0
    %2941 = vmatpush1.bf16.msra.mxu0 0
    %2942 = vmatprep.subr.bf16.mxu0 0
    %2943 = vmatpush1.bf16.msra.mxu0 0
    %2944 = vmatprep.subr.bf16.mxu0 0
    %2945 = vmatpush1.bf16.msra.mxu0 0
    %2946 = vmatprep.subr.bf16.mxu0 0
    %2947 = vmatpush1.bf16.msra.mxu0 0
    %2948 = vmatprep.subr.bf16.mxu0 0
    %2949 = vmatpush1.bf16.msra.mxu0 0
    %2950 = vmatprep.subr.bf16.mxu0 0
    %2951 = vmatpush1.bf16.msra.mxu0 0
    %2952 = vmatprep.subr.bf16.mxu0 0
    %2953 = vmatpush1.bf16.msra.mxu0 0
    %2954 = vmatprep.subr.bf16.mxu0 0
    %2955 = vmatpush1.bf16.msra.mxu0 0
    %2956 = vmatprep.subr.bf16.mxu0 0
    %2957 = vmatpush1.bf16.msra.mxu0 0
    %2958 = vmatprep.subr.bf16.mxu0 0
    %2959 = vmatpush1.bf16.msra.mxu0 0
    %2960 = vmatprep.subr.bf16.mxu0 0
    %2961 = vmatpush1.bf16.msra.mxu0 0
    %2962 = vmatprep.subr.bf16.mxu0 0
    %2963 = vmatpush1.bf16.msra.mxu0 0
    %2964 = vmatprep.subr.bf16.mxu0 0
    %2965 = vmatpush1.bf16.msra.mxu0 0
    %2966 = vmatprep.mubr.bf16.mxu0 0
    %2967 = vmatmul.mubr.bf16.gmra.mrb[0].mxu0 %v2920
    %v2968 = vpop.f32.mrb[0].mxu0
    %v2969 = vadd.f32 0.0, %v2968
    %v2970 = vpop.f32.mrb[0].mxu0
    %v2971 = vpop.f32.mrb[0].mxu0
    %v2972 = vadd.f32 0.0, %v2971
    %v2973 = vpop.f32.mrb[0].mxu0
    %2974 = vmatprep.mubr.bf16.mxu0 0
    %2975 = vmatmul.mubr.bf16.gmra.mrb[0].mxu0 %v2923
    %v2976 = vpop.f32.mrb[0].mxu0
    %v2977 = vadd.f32 0.0, %v2976
    %v2978 = vpop.f32.mrb[0].mxu0
    %v2979 = vpop.f32.mrb[0].mxu0
    %v2980 = vadd.f32 0.0, %v2979
    %v2981 = vpop.f32.mrb[0].mxu0
    %2982 = vmatprep.mubr.bf16.mxu0 0
    %2983 = vmatmul.mubr.bf16.gmra.mrb[0].mxu0 %v2926
    %v2984 = vpop.f32.mrb[0].mxu0
    %v2985 = vadd.f32 0.0, %v2984
    %v2986 = vpop.f32.mrb[0].mxu0
    %v2987 = vpop.f32.mrb[0].mxu0
    %v2988 = vadd.f32 0.0, %v2987
    %v2989 = vpop.f32.mrb[0].mxu0
    %2990 = vmatprep.mubr.bf16.mxu0 0
    %2991 = vmatmul.mubr.bf16.gmra.mrb[0].mxu0 %v2929
    %v2992 = vpop.f32.mrb[0].mxu0
    %v2993 = vadd.f32 0.0, %v2992
    %v2994 = vpop.f32.mrb[0].mxu0
    %v2995 = vpop.f32.mrb[0].mxu0
    %v2996 = vadd.f32 0.0, %v2995
    %v2997 = vpop.f32.mrb[0].mxu0
    %2998 = vmatprep.mubr.bf16.mxu0 0
    %2999 = vmatmul.mubr.bf16.gmra.mrb[0].mxu0 %v2932
    %v3000 = vpop.f32.mrb[0].mxu0
    %v3001 = vadd.f32 0.0, %v3000
    %v3002 = vpop.f32.mrb[0].mxu0
    %v3003 = vpop.f32.mrb[0].mxu0
    %v3004 = vpop.f32.mrb[0].mxu0
    %3005 = vdwg.mxu0
    %v3006 = vadd.f32 %v2857, %v2969
    %v3007 = vadd.f32 %v2858, %v2972
    %v3008 = vadd.f32 %v2859, %v2977
    %v3009 = vadd.f32 %v2860, %v2980
    %v3010 = vadd.f32 %v2861, %v2985
    %v3011 = vadd.f32 %v2862, %v2988
    %v3012 = vadd.f32 %v2863, %v2993
    %v3013 = vadd.f32 %v2864, %v2996
    %v3014 = vadd.f32 %v2865, %v3001
    %v3015 = vld [vmem:[%s12 + $0x40] sm:$0xf]
    %v3016 = vld [vmem:[%s12 + $0x44] sm:$0xf]
    %v3017 = vld [vmem:[%s12 + $0x48] sm:$0xf]
    %v3018 = vld [vmem:[%s12 + $0x4c] sm:$0xf]
    %v3019 = vpack.c.b16 %v2454, %v2453
    %v3020 = vpack.c.b16 %v2456, %v2455
    %v3021 = vpack.c.b16 %v2458, %v2457
    %v3022 = vpack.c.b16 %v2460, %v2459
    %v3023 = vpack.c.b16 %v2875, %v2875
    %v3028 = vunpack.c.l.b16 %v3015
    %v3029 = vunpack.c.l.b16 %v3016
    %v3030 = vunpack.c.l.b16 %v3017
    %v3031 = vunpack.c.l.b16 %v3018
    %v3032 = vpack.c.b16 %v3029, %v3028
    %v3033 = vpack.c.b16 %v3031, %v3030
    %v3037 = vsel %vm1090, %v3019, 0
    %v3040 = vsel %vm1090, %v3020, 0
    %v3043 = vsel %vm1090, %v3021, 0
    %v3046 = vsel %vm1090, %v3022, 0
    %v3049 = vsel %vm1090, %v3023, 0
    %3051 = vmatprep.subr.bf16.mxu0 0
    %3052 = vmatpush1.bf16.msra.mxu0 %v3032
    %3053 = vmatprep.subr.bf16.mxu0 0
    %3054 = vmatpush1.bf16.msra.mxu0 %v3033
    %3055 = vmatprep.subr.bf16.mxu0 0
    %3056 = vmatpush1.bf16.msra.mxu0 0
    %3057 = vmatprep.subr.bf16.mxu0 0
    %3058 = vmatpush1.bf16.msra.mxu0 0
    %3059 = vmatprep.subr.bf16.mxu0 0
    %3060 = vmatpush1.bf16.msra.mxu0 0
    %3061 = vmatprep.subr.bf16.mxu0 0
    %3062 = vmatpush1.bf16.msra.mxu0 0
    %3063 = vmatprep.subr.bf16.mxu0 0
    %3064 = vmatpush1.bf16.msra.mxu0 0
    %3065 = vmatprep.subr.bf16.mxu0 0
    %3066 = vmatpush1.bf16.msra.mxu0 0
    %3067 = vmatprep.subr.bf16.mxu0 0
    %3068 = vmatpush1.bf16.msra.mxu0 0
    %3069 = vmatprep.subr.bf16.mxu0 0
    %3070 = vmatpush1.bf16.msra.mxu0 0
    %3071 = vmatprep.subr.bf16.mxu0 0
    %3072 = vmatpush1.bf16.msra.mxu0 0
    %3073 = vmatprep.subr.bf16.mxu0 0
    %3074 = vmatpush1.bf16.msra.mxu0 0
    %3075 = vmatprep.subr.bf16.mxu0 0
    %3076 = vmatpush1.bf16.msra.mxu0 0
    %3077 = vmatprep.subr.bf16.mxu0 0
    %3078 = vmatpush1.bf16.msra.mxu0 0
    %3079 = vmatprep.subr.bf16.mxu0 0
    %3080 = vmatpush1.bf16.msra.mxu0 0
    %3081 = vmatprep.subr.bf16.mxu0 0
    %3082 = vmatpush1.bf16.msra.mxu0 0
    %3083 = vmatprep.mubr.bf16.mxu0 0
    %3084 = vmatmul.mubr.bf16.gmra.mrb[0].mxu0 %v3037
    %v3085 = vpop.f32.mrb[0].mxu0
    %v3086 = vadd.f32 0.0, %v3085
    %v3087 = vpop.f32.mrb[0].mxu0
    %v3088 = vpop.f32.mrb[0].mxu0
    %v3089 = vadd.f32 0.0, %v3088
    %v3090 = vpop.f32.mrb[0].mxu0
    %3091 = vmatprep.mubr.bf16.mxu0 0
    %3092 = vmatmul.mubr.bf16.gmra.mrb[0].mxu0 %v3040
    %v3093 = vpop.f32.mrb[0].mxu0
    %v3094 = vadd.f32 0.0, %v3093
    %v3095 = vpop.f32.mrb[0].mxu0
    %v3096 = vpop.f32.mrb[0].mxu0
    %v3097 = vadd.f32 0.0, %v3096
    %v3098 = vpop.f32.mrb[0].mxu0
    %3099 = vmatprep.mubr.bf16.mxu0 0
    %3100 = vmatmul.mubr.bf16.gmra.mrb[0].mxu0 %v3043
    %v3101 = vpop.f32.mrb[0].mxu0
    %v3102 = vadd.f32 0.0, %v3101
    %v3103 = vpop.f32.mrb[0].mxu0
    %v3104 = vpop.f32.mrb[0].mxu0
    %v3105 = vadd.f32 0.0, %v3104
    %v3106 = vpop.f32.mrb[0].mxu0
    %3107 = vmatprep.mubr.bf16.mxu0 0
    %3108 = vmatmul.mubr.bf16.gmra.mrb[0].mxu0 %v3046
    %v3109 = vpop.f32.mrb[0].mxu0
    %v3110 = vadd.f32 0.0, %v3109
    %v3111 = vpop.f32.mrb[0].mxu0
    %v3112 = vpop.f32.mrb[0].mxu0
    %v3113 = vadd.f32 0.0, %v3112
    %v3114 = vpop.f32.mrb[0].mxu0
    %3115 = vmatprep.mubr.bf16.mxu0 0
    %3116 = vmatmul.mubr.bf16.gmra.mrb[0].mxu0 %v3049
    %v3117 = vpop.f32.mrb[0].mxu0
    %v3118 = vadd.f32 0.0, %v3117
    %v3119 = vpop.f32.mrb[0].mxu0
    %v3120 = vpop.f32.mrb[0].mxu0
    %v3121 = vpop.f32.mrb[0].mxu0
    %3122 = vdwg.mxu0
    %v3123 = vadd.f32 %v3006, %v3086
    %v3124 = vadd.f32 %v3007, %v3089
    %v3125 = vadd.f32 %v3008, %v3094
    %v3126 = vadd.f32 %v3009, %v3097
    %v3127 = vadd.f32 %v3010, %v3102
    %v3128 = vadd.f32 %v3011, %v3105
    %v3129 = vadd.f32 %v3012, %v3110
    %v3130 = vadd.f32 %v3013, %v3113
    %v3131 = vadd.f32 %v3014, %v3118
    %v3132 = vld [vmem:[#allocation2 + $0x4] sm:$0xf]
    %v3133 = vld [vmem:[#allocation2 + $0x8] sm:$0xf]
    %v3134 = vld [vmem:[#allocation2 + $0xc] sm:$0xf]
    %v3135 = vld [vmem:[#allocation2 + $0x10] sm:$0xf]
    %v3136 = vld [vmem:[#allocation2 + $0x14] sm:$0xf]
    %v3137 = vld [vmem:[#allocation2 + $0x18] sm:$0xf]
    %v3138 = vld [vmem:[#allocation2 + $0x1c] sm:$0xf]
    %v3139 = vld [vmem:[#allocation2 + $0x20] sm:$0xf]
    %v3140 = vld [vmem:[#allocation2 + $0x24] sm:$0xf]
    %v3141 = vld [vmem:[#allocation2 + $0x28] sm:$0x1]
    %v3142 = vld [vmem:[%s12 + $0x50] sm:$0xf]
    %v3143 = vld [vmem:[%s12 + $0x54] sm:$0xf]
    %v3144 = vld [vmem:[%s12 + $0x58] sm:$0xf]
    %v3145 = vld [vmem:[%s12 + $0x5c] sm:$0xf]
    %v3156 = vunpack.c.l.b16 %v3132
    %v3157 = vunpack.c.l.b16 %v3133
    %v3158 = vunpack.c.l.b16 %v3134
    %v3159 = vunpack.c.l.b16 %v3135
    %v3160 = vunpack.c.l.b16 %v3136
    %v3161 = vunpack.c.l.b16 %v3137
    %v3162 = vunpack.c.l.b16 %v3138
    %v3163 = vunpack.c.l.b16 %v3139
    %v3164 = vunpack.c.l.b16 %v3140
    %v3165 = vunpack.c.l.b16 %v3141
    %v3166 = vpack.c.b16 %v3157, %v3156
    %v3167 = vpack.c.b16 %v3159, %v3158
    %v3168 = vpack.c.b16 %v3161, %v3160
    %v3169 = vpack.c.b16 %v3163, %v3162
    %v3170 = vpack.c.b16 %v3165, %v3164
    %v3172 = vshrl.u32 %v3166, 16
    %v3174 = vshll.u32 %v3166, 16
    %v3176 = vrot.slane %v3174, 1
    %v3177 = vor.u32 %v3172, %v3176
    %v3179 = vshll.u32 %v3167, 16
    %v3181 = vrot.slane %v3179, 1
    %v3182 = vsel %vm90, %v3177, %v3181
    %v3183 = vshrl.u32 %v3167, 16
    %v3185 = vor.u32 %v3183, %v3181
    %v3187 = vshll.u32 %v3168, 16
    %v3189 = vrot.slane %v3187, 1
    %v3190 = vsel %vm90, %v3185, %v3189
    %v3191 = vshrl.u32 %v3168, 16
    %v3193 = vor.u32 %v3191, %v3189
    %v3195 = vshll.u32 %v3169, 16
    %v3197 = vrot.slane %v3195, 1
    %v3198 = vsel %vm90, %v3193, %v3197
    %v3199 = vshrl.u32 %v3169, 16
    %v3201 = vor.u32 %v3199, %v3197
    %v3203 = vshll.u32 %v3170, 16
    %v3205 = vrot.slane %v3203, 1
    %v3206 = vsel %vm90, %v3201, %v3205
    %v3207 = vshrl.u32 %v3170, 16
    %v3209 = vor.u32 %v3207, %v3205
    %v3214 = vunpack.c.l.b16 %v3142
    %v3215 = vunpack.c.l.b16 %v3143
    %v3216 = vunpack.c.l.b16 %v3144
    %v3217 = vunpack.c.l.b16 %v3145
    %v3218 = vpack.c.b16 %v3215, %v3214
    %v3219 = vpack.c.b16 %v3217, %v3216
    %v3223 = vsel %vm1090, %v3182, 0
    %v3226 = vsel %vm1090, %v3190, 0
    %v3229 = vsel %vm1090, %v3198, 0
    %v3232 = vsel %vm1090, %v3206, 0
    %v3235 = vsel %vm1090, %v3209, 0
    %3237 = vmatprep.subr.bf16.mxu0 0
    %3238 = vmatpush1.bf16.msra.mxu0 %v3218
    %3239 = vmatprep.subr.bf16.mxu0 0
    %3240 = vmatpush1.bf16.msra.mxu0 %v3219
    %3241 = vmatprep.subr.bf16.mxu0 0
    %3242 = vmatpush1.bf16.msra.mxu0 0
    %3243 = vmatprep.subr.bf16.mxu0 0
    %3244 = vmatpush1.bf16.msra.mxu0 0
    %3245 = vmatprep.subr.bf16.mxu0 0
    %3246 = vmatpush1.bf16.msra.mxu0 0
    %3247 = vmatprep.subr.bf16.mxu0 0
    %3248 = vmatpush1.bf16.msra.mxu0 0
    %3249 = vmatprep.subr.bf16.mxu0 0
    %3250 = vmatpush1.bf16.msra.mxu0 0
    %3251 = vmatprep.subr.bf16.mxu0 0
    %3252 = vmatpush1.bf16.msra.mxu0 0
    %3253 = vmatprep.subr.bf16.mxu0 0
    %3254 = vmatpush1.bf16.msra.mxu0 0
    %3255 = vmatprep.subr.bf16.mxu0 0
    %3256 = vmatpush1.bf16.msra.mxu0 0
    %3257 = vmatprep.subr.bf16.mxu0 0
    %3258 = vmatpush1.bf16.msra.mxu0 0
    %3259 = vmatprep.subr.bf16.mxu0 0
    %3260 = vmatpush1.bf16.msra.mxu0 0
    %3261 = vmatprep.subr.bf16.mxu0 0
    %3262 = vmatpush1.bf16.msra.mxu0 0
    %3263 = vmatprep.subr.bf16.mxu0 0
    %3264 = vmatpush1.bf16.msra.mxu0 0
    %3265 = vmatprep.subr.bf16.mxu0 0
    %3266 = vmatpush1.bf16.msra.mxu0 0
    %3267 = vmatprep.subr.bf16.mxu0 0
    %3268 = vmatpush1.bf16.msra.mxu0 0
    %3269 = vmatprep.mubr.bf16.mxu0 0
    %3270 = vmatmul.mubr.bf16.gmra.mrb[0].mxu0 %v3223
    %v3271 = vpop.f32.mrb[0].mxu0
    %v3272 = vadd.f32 0.0, %v3271
    %v3273 = vpop.f32.mrb[0].mxu0
    %v3274 = vpop.f32.mrb[0].mxu0
    %v3275 = vadd.f32 0.0, %v3274
    %v3276 = vpop.f32.mrb[0].mxu0
    %3277 = vmatprep.mubr.bf16.mxu0 0
    %3278 = vmatmul.mubr.bf16.gmra.mrb[0].mxu0 %v3226
    %v3279 = vpop.f32.mrb[0].mxu0
    %v3280 = vadd.f32 0.0, %v3279
    %v3281 = vpop.f32.mrb[0].mxu0
    %v3282 = vpop.f32.mrb[0].mxu0
    %v3283 = vadd.f32 0.0, %v3282
    %v3284 = vpop.f32.mrb[0].mxu0
    %3285 = vmatprep.mubr.bf16.mxu0 0
    %3286 = vmatmul.mubr.bf16.gmra.mrb[0].mxu0 %v3229
    %v3287 = vpop.f32.mrb[0].mxu0
    %v3288 = vadd.f32 0.0, %v3287
    %v3289 = vpop.f32.mrb[0].mxu0
    %v3290 = vpop.f32.mrb[0].mxu0
    %v3291 = vadd.f32 0.0, %v3290
    %v3292 = vpop.f32.mrb[0].mxu0
    %3293 = vmatprep.mubr.bf16.mxu0 0
    %3294 = vmatmul.mubr.bf16.gmra.mrb[0].mxu0 %v3232
    %v3295 = vpop.f32.mrb[0].mxu0
    %v3296 = vadd.f32 0.0, %v3295
    %v3297 = vpop.f32.mrb[0].mxu0
    %v3298 = vpop.f32.mrb[0].mxu0
    %v3299 = vadd.f32 0.0, %v3298
    %v3300 = vpop.f32.mrb[0].mxu0
    %3301 = vmatprep.mubr.bf16.mxu0 0
    %3302 = vmatmul.mubr.bf16.gmra.mrb[0].mxu0 %v3235
    %v3303 = vpop.f32.mrb[0].mxu0
    %v3304 = vadd.f32 0.0, %v3303
    %v3305 = vpop.f32.mrb[0].mxu0
    %v3306 = vpop.f32.mrb[0].mxu0
    %v3307 = vpop.f32.mrb[0].mxu0
    %3308 = vdwg.mxu0
    %v3309 = vadd.f32 %v3123, %v3272
    %v3310 = vadd.f32 %v3124, %v3275
    %v3311 = vadd.f32 %v3125, %v3280
    %v3312 = vadd.f32 %v3126, %v3283
    %v3313 = vadd.f32 %v3127, %v3288
    %v3314 = vadd.f32 %v3128, %v3291
    %v3315 = vadd.f32 %v3129, %v3296
    %v3316 = vadd.f32 %v3130, %v3299
    %v3317 = vadd.f32 %v3131, %v3304
    %v3318 = vld [vmem:[#allocation2 + $0x4] sm:$0xe]
    %v3319 = vld [vmem:[#allocation2 + $0x28] sm:$0x3]
    %v3320 = vld [vmem:[%s12 + $0x60] sm:$0xf]
    %v3321 = vld [vmem:[%s12 + $0x64] sm:$0xf]
    %v3322 = vld [vmem:[%s12 + $0x68] sm:$0xf]
    %v3323 = vld [vmem:[%s12 + $0x6c] sm:$0xf]
    %v3326 = vunpack.c.l.b16 %v3318
    %v3327 = vunpack.c.l.b16 %v3319
    %v3328 = vpack.c.b16 %v3157, %v3326
    %v3329 = vpack.c.b16 %v3327, %v3164
    %v3331 = vshrl.u32 %v3328, 16
    %v3333 = vrot.slane %v3331, 1
    %v3334 = vshll.u32 %v3328, 16
    %v3336 = vrot.slane %v3334, 2
    %v3337 = vor.u32 %v3333, %v3336
    %v3338 = vrot.slane %v3183, 1
    %v3339 = vrot.slane %v3179, 2
    %v3340 = vor.u32 %v3338, %v3339
    %v3341 = vsel %vm1181, %v3337, %v3340
    %v3342 = vrot.slane %v3191, 1
    %v3343 = vrot.slane %v3187, 2
    %v3344 = vor.u32 %v3342, %v3343
    %v3345 = vsel %vm1181, %v3340, %v3344
    %v3346 = vrot.slane %v3199, 1
    %v3347 = vrot.slane %v3195, 2
    %v3348 = vor.u32 %v3346, %v3347
    %v3349 = vsel %vm1181, %v3344, %v3348
    %v3351 = vshrl.u32 %v3329, 16
    %v3353 = vrot.slane %v3351, 1
    %v3354 = vshll.u32 %v3329, 16
    %v3356 = vrot.slane %v3354, 2
    %v3357 = vor.u32 %v3353, %v3356
    %v3358 = vsel %vm1181, %v3348, %v3357
    %v3363 = vunpack.c.l.b16 %v3320
    %v3364 = vunpack.c.l.b16 %v3321
    %v3365 = vunpack.c.l.b16 %v3322
    %v3366 = vunpack.c.l.b16 %v3323
    %v3367 = vpack.c.b16 %v3364, %v3363
    %v3368 = vpack.c.b16 %v3366, %v3365
    %v3372 = vsel %vm1090, %v3341, 0
    %v3375 = vsel %vm1090, %v3345, 0
    %v3378 = vsel %vm1090, %v3349, 0
    %v3381 = vsel %vm1090, %v3358, 0
    %v3384 = vsel %vm1090, %v3357, 0
    %3386 = vmatprep.subr.bf16.mxu0 0
    %3387 = vmatpush1.bf16.msra.mxu0 %v3367
    %3388 = vmatprep.subr.bf16.mxu0 0
    %3389 = vmatpush1.bf16.msra.mxu0 %v3368
    %3390 = vmatprep.subr.bf16.mxu0 0
    %3391 = vmatpush1.bf16.msra.mxu0 0
    %3392 = vmatprep.subr.bf16.mxu0 0
    %3393 = vmatpush1.bf16.msra.mxu0 0
    %3394 = vmatprep.subr.bf16.mxu0 0
    %3395 = vmatpush1.bf16.msra.mxu0 0
    %3396 = vmatprep.subr.bf16.mxu0 0
    %3397 = vmatpush1.bf16.msra.mxu0 0
    %3398 = vmatprep.subr.bf16.mxu0 0
    %3399 = vmatpush1.bf16.msra.mxu0 0
    %3400 = vmatprep.subr.bf16.mxu0 0
    %3401 = vmatpush1.bf16.msra.mxu0 0
    %3402 = vmatprep.subr.bf16.mxu0 0
    %3403 = vmatpush1.bf16.msra.mxu0 0
    %3404 = vmatprep.subr.bf16.mxu0 0
    %3405 = vmatpush1.bf16.msra.mxu0 0
    %3406 = vmatprep.subr.bf16.mxu0 0
    %3407 = vmatpush1.bf16.msra.mxu0 0
    %3408 = vmatprep.subr.bf16.mxu0 0
    %3409 = vmatpush1.bf16.msra.mxu0 0
    %3410 = vmatprep.subr.bf16.mxu0 0
    %3411 = vmatpush1.bf16.msra.mxu0 0
    %3412 = vmatprep.subr.bf16.mxu0 0
    %3413 = vmatpush1.bf16.msra.mxu0 0
    %3414 = vmatprep.subr.bf16.mxu0 0
    %3415 = vmatpush1.bf16.msra.mxu0 0
    %3416 = vmatprep.subr.bf16.mxu0 0
    %3417 = vmatpush1.bf16.msra.mxu0 0
    %3418 = vmatprep.mubr.bf16.mxu0 0
    %3419 = vmatmul.mubr.bf16.gmra.mrb[0].mxu0 %v3372
    %v3420 = vpop.f32.mrb[0].mxu0
    %v3421 = vadd.f32 0.0, %v3420
    %v3422 = vpop.f32.mrb[0].mxu0
    %v3423 = vpop.f32.mrb[0].mxu0
    %v3424 = vadd.f32 0.0, %v3423
    %v3425 = vpop.f32.mrb[0].mxu0
    %3426 = vmatprep.mubr.bf16.mxu0 0
    %3427 = vmatmul.mubr.bf16.gmra.mrb[0].mxu0 %v3375
    %v3428 = vpop.f32.mrb[0].mxu0
    %v3429 = vadd.f32 0.0, %v3428
    %v3430 = vpop.f32.mrb[0].mxu0
    %v3431 = vpop.f32.mrb[0].mxu0
    %v3432 = vadd.f32 0.0, %v3431
    %v3433 = vpop.f32.mrb[0].mxu0
    %3434 = vmatprep.mubr.bf16.mxu0 0
    %3435 = vmatmul.mubr.bf16.gmra.mrb[0].mxu0 %v3378
    %v3436 = vpop.f32.mrb[0].mxu0
    %v3437 = vadd.f32 0.0, %v3436
    %v3438 = vpop.f32.mrb[0].mxu0
    %v3439 = vpop.f32.mrb[0].mxu0
    %v3440 = vadd.f32 0.0, %v3439
    %v3441 = vpop.f32.mrb[0].mxu0
    %3442 = vmatprep.mubr.bf16.mxu0 0
    %3443 = vmatmul.mubr.bf16.gmra.mrb[0].mxu0 %v3381
    %v3444 = vpop.f32.mrb[0].mxu0
    %v3445 = vadd.f32 0.0, %v3444
    %v3446 = vpop.f32.mrb[0].mxu0
    %v3447 = vpop.f32.mrb[0].mxu0
    %v3448 = vadd.f32 0.0, %v3447
    %v3449 = vpop.f32.mrb[0].mxu0
    %3450 = vmatprep.mubr.bf16.mxu0 0
    %3451 = vmatmul.mubr.bf16.gmra.mrb[0].mxu0 %v3384
    %v3452 = vpop.f32.mrb[0].mxu0
    %v3453 = vadd.f32 0.0, %v3452
    %v3454 = vpop.f32.mrb[0].mxu0
    %v3455 = vpop.f32.mrb[0].mxu0
    %v3456 = vpop.f32.mrb[0].mxu0
    %3457 = vdwg.mxu0
    %v3458 = vadd.f32 %v3309, %v3421
    %v3459 = vadd.f32 %v3310, %v3424
    %v3460 = vadd.f32 %v3311, %v3429
    %v3461 = vadd.f32 %v3312, %v3432
    %v3462 = vadd.f32 %v3313, %v3437
    %v3463 = vadd.f32 %v3314, %v3440
    %v3464 = vadd.f32 %v3315, %v3445
    %v3465 = vadd.f32 %v3316, %v3448
    %v3466 = vadd.f32 %v3317, %v3453
    %v3467 = vld [vmem:[#allocation2 + $0x4] sm:$0xc]
    %v3468 = vld [vmem:[%s12 + $0x70] sm:$0xf]
    %v3469 = vld [vmem:[%s12 + $0x74] sm:$0xf]
    %v3470 = vld [vmem:[%s12 + $0x78] sm:$0xf]
    %v3471 = vld [vmem:[%s12 + $0x7c] sm:$0xf]
    %v3473 = vunpack.c.l.b16 %v3467
    %v3474 = vpack.c.b16 %v3157, %v3473
    %v3475 = vrot.slane %v3474, 2
    %v3476 = vrot.slane %v3167, 2
    %v3477 = vsel %vm1068, %v3475, %v3476
    %v3478 = vrot.slane %v3168, 2
    %v3479 = vsel %vm1068, %v3476, %v3478
    %v3480 = vrot.slane %v3169, 2
    %v3481 = vsel %vm1068, %v3478, %v3480
    %v3482 = vrot.slane %v3329, 2
    %v3483 = vsel %vm1068, %v3480, %v3482
    %v3488 = vunpack.c.l.b16 %v3468
    %v3489 = vunpack.c.l.b16 %v3469
    %v3490 = vunpack.c.l.b16 %v3470
    %v3491 = vunpack.c.l.b16 %v3471
    %v3492 = vpack.c.b16 %v3489, %v3488
    %v3493 = vpack.c.b16 %v3491, %v3490
    %v3497 = vsel %vm1090, %v3477, 0
    %v3500 = vsel %vm1090, %v3479, 0
    %v3503 = vsel %vm1090, %v3481, 0
    %v3506 = vsel %vm1090, %v3483, 0
    %v3509 = vsel %vm1090, %v3482, 0
    %3511 = vmatprep.subr.bf16.mxu0 0
    %3512 = vmatpush1.bf16.msra.mxu0 %v3492
    %3513 = vmatprep.subr.bf16.mxu0 0
    %3514 = vmatpush1.bf16.msra.mxu0 %v3493
    %3515 = vmatprep.subr.bf16.mxu0 0
    %3516 = vmatpush1.bf16.msra.mxu0 0
    %3517 = vmatprep.subr.bf16.mxu0 0
    %3518 = vmatpush1.bf16.msra.mxu0 0
    %3519 = vmatprep.subr.bf16.mxu0 0
    %3520 = vmatpush1.bf16.msra.mxu0 0
    %3521 = vmatprep.subr.bf16.mxu0 0
    %3522 = vmatpush1.bf16.msra.mxu0 0
    %3523 = vmatprep.subr.bf16.mxu0 0
    %3524 = vmatpush1.bf16.msra.mxu0 0
    %3525 = vmatprep.subr.bf16.mxu0 0
    %3526 = vmatpush1.bf16.msra.mxu0 0
    %3527 = vmatprep.subr.bf16.mxu0 0
    %3528 = vmatpush1.bf16.msra.mxu0 0
    %3529 = vmatprep.subr.bf16.mxu0 0
    %3530 = vmatpush1.bf16.msra.mxu0 0
    %3531 = vmatprep.subr.bf16.mxu0 0
    %3532 = vmatpush1.bf16.msra.mxu0 0
    %3533 = vmatprep.subr.bf16.mxu0 0
    %3534 = vmatpush1.bf16.msra.mxu0 0
    %3535 = vmatprep.subr.bf16.mxu0 0
    %3536 = vmatpush1.bf16.msra.mxu0 0
    %3537 = vmatprep.subr.bf16.mxu0 0
    %3538 = vmatpush1.bf16.msra.mxu0 0
    %3539 = vmatprep.subr.bf16.mxu0 0
    %3540 = vmatpush1.bf16.msra.mxu0 0
    %3541 = vmatprep.subr.bf16.mxu0 0
    %3542 = vmatpush1.bf16.msra.mxu0 0
    %3543 = vmatprep.mubr.bf16.mxu0 0
    %3544 = vmatmul.mubr.bf16.gmra.mrb[0].mxu0 %v3497
    %v3545 = vpop.f32.mrb[0].mxu0
    %v3546 = vadd.f32 0.0, %v3545
    %v3547 = vpop.f32.mrb[0].mxu0
    %v3548 = vpop.f32.mrb[0].mxu0
    %v3549 = vadd.f32 0.0, %v3548
    %v3550 = vpop.f32.mrb[0].mxu0
    %3551 = vmatprep.mubr.bf16.mxu0 0
    %3552 = vmatmul.mubr.bf16.gmra.mrb[0].mxu0 %v3500
    %v3553 = vpop.f32.mrb[0].mxu0
    %v3554 = vadd.f32 0.0, %v3553
    %v3555 = vpop.f32.mrb[0].mxu0
    %v3556 = vpop.f32.mrb[0].mxu0
    %v3557 = vadd.f32 0.0, %v3556
    %v3558 = vpop.f32.mrb[0].mxu0
    %3559 = vmatprep.mubr.bf16.mxu0 0
    %3560 = vmatmul.mubr.bf16.gmra.mrb[0].mxu0 %v3503
    %v3561 = vpop.f32.mrb[0].mxu0
    %v3562 = vadd.f32 0.0, %v3561
    %v3563 = vpop.f32.mrb[0].mxu0
    %v3564 = vpop.f32.mrb[0].mxu0
    %v3565 = vadd.f32 0.0, %v3564
    %v3566 = vpop.f32.mrb[0].mxu0
    %3567 = vmatprep.mubr.bf16.mxu0 0
    %3568 = vmatmul.mubr.bf16.gmra.mrb[0].mxu0 %v3506
    %v3569 = vpop.f32.mrb[0].mxu0
    %v3570 = vadd.f32 0.0, %v3569
    %v3571 = vpop.f32.mrb[0].mxu0
    %v3572 = vpop.f32.mrb[0].mxu0
    %v3573 = vadd.f32 0.0, %v3572
    %v3574 = vpop.f32.mrb[0].mxu0
    %3575 = vmatprep.mubr.bf16.mxu0 0
    %3576 = vmatmul.mubr.bf16.gmra.mrb[0].mxu0 %v3509
    %v3577 = vpop.f32.mrb[0].mxu0
    %v3578 = vadd.f32 0.0, %v3577
    %v3579 = vpop.f32.mrb[0].mxu0
    %v3580 = vpop.f32.mrb[0].mxu0
    %v3581 = vpop.f32.mrb[0].mxu0
    %3582 = vdwg.mxu0
    %v3583 = vadd.f32 %v3458, %v3546
    %v3584 = vadd.f32 %v3459, %v3549
    %v3585 = vadd.f32 %v3460, %v3554
    %v3586 = vadd.f32 %v3461, %v3557
    %v3587 = vadd.f32 %v3462, %v3562
    %v3588 = vadd.f32 %v3463, %v3565
    %v3589 = vadd.f32 %v3464, %v3570
    %v3590 = vadd.f32 %v3465, %v3573
    %v3591 = vadd.f32 %v3466, %v3578
    %v3592 = vld [vmem:[#allocation2 + $0x28] sm:$0x7]
    %v3593 = vld [vmem:[%s12 + $0x80] sm:$0xf]
    %v3594 = vld [vmem:[%s12 + $0x84] sm:$0xf]
    %v3595 = vld [vmem:[%s12 + $0x88] sm:$0xf]
    %v3596 = vld [vmem:[%s12 + $0x8c] sm:$0xf]
    %v3598 = vunpack.c.l.b16 %v3592
    %v3599 = vpack.c.b16 %v3598, %v3164
    %v3601 = vshrl.u32 %v3474, 16
    %v3603 = vrot.slane %v3601, 2
    %v3604 = vshll.u32 %v3474, 16
    %v3606 = vrot.slane %v3604, 3
    %v3607 = vor.u32 %v3603, %v3606
    %v3608 = vrot.slane %v3183, 2
    %v3609 = vrot.slane %v3179, 3
    %v3610 = vor.u32 %v3608, %v3609
    %v3611 = vsel %vm1333, %v3607, %v3610
    %v3612 = vrot.slane %v3191, 2
    %v3613 = vrot.slane %v3187, 3
    %v3614 = vor.u32 %v3612, %v3613
    %v3615 = vsel %vm1333, %v3610, %v3614
    %v3616 = vrot.slane %v3199, 2
    %v3617 = vrot.slane %v3195, 3
    %v3618 = vor.u32 %v3616, %v3617
    %v3619 = vsel %vm1333, %v3614, %v3618
    %v3621 = vshrl.u32 %v3599, 16
    %v3623 = vrot.slane %v3621, 2
    %v3624 = vshll.u32 %v3599, 16
    %v3626 = vrot.slane %v3624, 3
    %v3627 = vor.u32 %v3623, %v3626
    %v3628 = vsel %vm1333, %v3618, %v3627
    %v3633 = vunpack.c.l.b16 %v3593
    %v3634 = vunpack.c.l.b16 %v3594
    %v3635 = vunpack.c.l.b16 %v3595
    %v3636 = vunpack.c.l.b16 %v3596
    %v3637 = vpack.c.b16 %v3634, %v3633
    %v3638 = vpack.c.b16 %v3636, %v3635
    %v3642 = vsel %vm1090, %v3611, 0
    %v3645 = vsel %vm1090, %v3615, 0
    %v3648 = vsel %vm1090, %v3619, 0
    %v3651 = vsel %vm1090, %v3628, 0
    %v3654 = vsel %vm1090, %v3627, 0
    %3656 = vmatprep.subr.bf16.mxu0 0
    %3657 = vmatpush1.bf16.msra.mxu0 %v3637
    %3658 = vmatprep.subr.bf16.mxu0 0
    %3659 = vmatpush1.bf16.msra.mxu0 %v3638
    %3660 = vmatprep.subr.bf16.mxu0 0
    %3661 = vmatpush1.bf16.msra.mxu0 0
    %3662 = vmatprep.subr.bf16.mxu0 0
    %3663 = vmatpush1.bf16.msra.mxu0 0
    %3664 = vmatprep.subr.bf16.mxu0 0
    %3665 = vmatpush1.bf16.msra.mxu0 0
    %3666 = vmatprep.subr.bf16.mxu0 0
    %3667 = vmatpush1.bf16.msra.mxu0 0
    %3668 = vmatprep.subr.bf16.mxu0 0
    %3669 = vmatpush1.bf16.msra.mxu0 0
    %3670 = vmatprep.subr.bf16.mxu0 0
    %3671 = vmatpush1.bf16.msra.mxu0 0
    %3672 = vmatprep.subr.bf16.mxu0 0
    %3673 = vmatpush1.bf16.msra.mxu0 0
    %3674 = vmatprep.subr.bf16.mxu0 0
    %3675 = vmatpush1.bf16.msra.mxu0 0
    %3676 = vmatprep.subr.bf16.mxu0 0
    %3677 = vmatpush1.bf16.msra.mxu0 0
    %3678 = vmatprep.subr.bf16.mxu0 0
    %3679 = vmatpush1.bf16.msra.mxu0 0
    %3680 = vmatprep.subr.bf16.mxu0 0
    %3681 = vmatpush1.bf16.msra.mxu0 0
    %3682 = vmatprep.subr.bf16.mxu0 0
    %3683 = vmatpush1.bf16.msra.mxu0 0
    %3684 = vmatprep.subr.bf16.mxu0 0
    %3685 = vmatpush1.bf16.msra.mxu0 0
    %3686 = vmatprep.subr.bf16.mxu0 0
    %3687 = vmatpush1.bf16.msra.mxu0 0
    %3688 = vmatprep.mubr.bf16.mxu0 0
    %3689 = vmatmul.mubr.bf16.gmra.mrb[0].mxu0 %v3642
    %v3690 = vpop.f32.mrb[0].mxu0
    %v3691 = vadd.f32 0.0, %v3690
    %v3692 = vpop.f32.mrb[0].mxu0
    %v3693 = vpop.f32.mrb[0].mxu0
    %v3694 = vadd.f32 0.0, %v3693
    %v3695 = vpop.f32.mrb[0].mxu0
    %3696 = vmatprep.mubr.bf16.mxu0 0
    %3697 = vmatmul.mubr.bf16.gmra.mrb[0].mxu0 %v3645
    %v3698 = vpop.f32.mrb[0].mxu0
    %v3699 = vadd.f32 0.0, %v3698
    %v3700 = vpop.f32.mrb[0].mxu0
    %v3701 = vpop.f32.mrb[0].mxu0
    %v3702 = vadd.f32 0.0, %v3701
    %v3703 = vpop.f32.mrb[0].mxu0
    %3704 = vmatprep.mubr.bf16.mxu0 0
    %3705 = vmatmul.mubr.bf16.gmra.mrb[0].mxu0 %v3648
    %v3706 = vpop.f32.mrb[0].mxu0
    %v3707 = vadd.f32 0.0, %v3706
    %v3708 = vpop.f32.mrb[0].mxu0
    %v3709 = vpop.f32.mrb[0].mxu0
    %v3710 = vadd.f32 0.0, %v3709
    %v3711 = vpop.f32.mrb[0].mxu0
    %3712 = vmatprep.mubr.bf16.mxu0 0
    %3713 = vmatmul.mubr.bf16.gmra.mrb[0].mxu0 %v3651
    %v3714 = vpop.f32.mrb[0].mxu0
    %v3715 = vadd.f32 0.0, %v3714
    %v3716 = vpop.f32.mrb[0].mxu0
    %v3717 = vpop.f32.mrb[0].mxu0
    %v3718 = vadd.f32 0.0, %v3717
    %v3719 = vpop.f32.mrb[0].mxu0
    %3720 = vmatprep.mubr.bf16.mxu0 0
    %3721 = vmatmul.mubr.bf16.gmra.mrb[0].mxu0 %v3654
    %v3722 = vpop.f32.mrb[0].mxu0
    %v3723 = vadd.f32 0.0, %v3722
    %v3724 = vpop.f32.mrb[0].mxu0
    %v3725 = vpop.f32.mrb[0].mxu0
    %v3726 = vpop.f32.mrb[0].mxu0
    %3727 = vdwg.mxu0
    %v3728 = vadd.f32 %v3583, %v3691
    %v3729 = vadd.f32 %v3584, %v3694
    %v3730 = vadd.f32 %v3585, %v3699
    %v3731 = vadd.f32 %v3586, %v3702
    %v3732 = vadd.f32 %v3587, %v3707
    %v3733 = vadd.f32 %v3588, %v3710
    %v3734 = vadd.f32 %v3589, %v3715
    %v3735 = vadd.f32 %v3590, %v3718
    %v3736 = vadd.f32 %v3591, %v3723
    %v3737 = vld [vmem:[%s13] sm:$0x1]
    %v3739 = vlaneseq
    %v3740 = vshrl.u32 %v3739, 7
    %v3741 = vsub.s32 0, %v3740
    %v3742 = vrot.slane %v3737, %v3741
    %v3744 = vadd.f32 %v3728, %v3742
    %v3745 = vadd.f32 %v3729, %v3742
    %v3746 = vadd.f32 %v3730, %v3742
    %v3747 = vadd.f32 %v3731, %v3742
    %v3748 = vadd.f32 %v3732, %v3742
    %v3749 = vadd.f32 %v3733, %v3742
    %v3750 = vadd.f32 %v3734, %v3742
    %v3751 = vadd.f32 %v3735, %v3742
    %v3752 = vadd.f32 %v3736, %v3742
    %v3753 = vmax.f32 %v3744, 0.0
    %v3754 = vmax.f32 %v3745, 0.0
    %v3755 = vmax.f32 %v3746, 0.0
    %v3756 = vmax.f32 %v3747, 0.0
    %v3757 = vmax.f32 %v3748, 0.0
    %v3758 = vmax.f32 %v3749, 0.0
    %v3759 = vmax.f32 %v3750, 0.0
    %v3760 = vmax.f32 %v3751, 0.0
    %v3761 = vmax.f32 %v3752, 0.0
    %v3762 = vsel %vm960, %v3753, 0.0
    %v3763 = vsel %vm961, %v3754, 0.0
    %v3764 = vsel %vm962, %v3755, 0.0
    %v3765 = vsel %vm963, %v3756, 0.0
    %v3766 = vsel %vm964, %v3757, 0.0
    %v3767 = vsel %vm965, %v3758, 0.0
    %v3768 = vsel %vm966, %v3759, 0.0
    %v3769 = vsel %vm967, %v3760, 0.0
    %v3770 = vsel %vm968, %v3761, 0.0
    %v3771 = vadd.f32 %v969, %v3762
    %v3772 = vadd.f32 %v970, %v3763
    %v3773 = vadd.f32 %v971, %v3764
    %v3774 = vadd.f32 %v972, %v3765
    %v3775 = vadd.f32 %v973, %v3766
    %v3776 = vadd.f32 %v974, %v3767
    %v3777 = vadd.f32 %v975, %v3768
    %v3778 = vadd.f32 %v976, %v3769
    %v3779 = vadd.f32 %v977, %v3770
    %v3780 = vpack.c.bf16 %v3772, %v3771
    %v3781 = vpack.c.bf16 %v3774, %v3773
    %v3782 = vpack.c.bf16 %v3776, %v3775
    %v3783 = vpack.c.bf16 %v3778, %v3777
    %v3784 = vpack.c.bf16 %v3779, %v3779
    %v3790 = vunpack.c.l.b16 %v3780
    %v3791 = vunpack.c.h.b16 %v3780
    %v3792 = vunpack.c.l.b16 %v3781
    %v3793 = vunpack.c.h.b16 %v3781
    %v3794 = vunpack.c.l.b16 %v3782
    %v3795 = vunpack.c.h.b16 %v3782
    %v3796 = vunpack.c.l.b16 %v3783
    %v3797 = vunpack.c.h.b16 %v3783
    %v3798 = vunpack.c.l.b16 %v3784
    %v3799 = vpack.c.b16 %v3790, %v3790
    %v3800 = vpack.c.b16 %v3791, %v3791
    %v3801 = vpack.c.b16 %v3792, %v3792
    %v3802 = vpack.c.b16 %v3793, %v3793
    %v3803 = vpack.c.b16 %v3794, %v3794
    %v3804 = vpack.c.b16 %v3795, %v3795
    %v3805 = vpack.c.b16 %v3796, %v3796
    %v3806 = vpack.c.b16 %v3797, %v3797
    %v3807 = vpack.c.b16 %v3798, %v3798
    %3817 = vst.msk [vmem:[#allocation2 + $0x4] sm:$0xf] %vm67, %v3799
    %3818 = vst.msk [vmem:[#allocation2 + $0x8] sm:$0xf] %vm67, %v3800
    %3819 = vst.msk [vmem:[#allocation2 + $0xc] sm:$0xf] %vm67, %v3801
    %3820 = vst.msk [vmem:[#allocation2 + $0x10] sm:$0xf] %vm67, %v3802
    %3821 = vst.msk [vmem:[#allocation2 + $0x14] sm:$0xf] %vm67, %v3803
    %3822 = vst.msk [vmem:[#allocation2 + $0x18] sm:$0xf] %vm67, %v3804
    %3823 = vst.msk [vmem:[#allocation2 + $0x1c] sm:$0xf] %vm67, %v3805
    %3824 = vst.msk [vmem:[#allocation2 + $0x20] sm:$0xf] %vm67, %v3806
    %3825 = vst.msk [vmem:[#allocation2 + $0x24] sm:$0xf] %vm67, %v3807
    %v3826 = vld [vmem:[#allocation2] sm:$0xe]
    %v3827 = vld [vmem:[#allocation2 + $0x4] sm:$0xf]
    %v3828 = vld [vmem:[#allocation2 + $0x8] sm:$0xf]
    %v3829 = vld [vmem:[#allocation2 + $0xc] sm:$0xf]
    %v3830 = vld [vmem:[#allocation2 + $0x10] sm:$0xf]
    %v3831 = vld [vmem:[#allocation2 + $0x14] sm:$0xf]
    %v3832 = vld [vmem:[#allocation2 + $0x18] sm:$0xf]
    %v3833 = vld [vmem:[#allocation2 + $0x1c] sm:$0xf]
    %v3834 = vld [vmem:[#allocation2 + $0x20] sm:$0xf]
    %v3835 = vld [vmem:[#allocation2 + $0x24] sm:$0x3]
    %v3836 = vld [vmem:[%s14] sm:$0xf]
    %v3837 = vld [vmem:[%s14 + $0x4] sm:$0xf]
    %v3838 = vld [vmem:[%s14 + $0x8] sm:$0xf]
    %v3839 = vld [vmem:[%s14 + $0xc] sm:$0xf]
    %v3840 = vld [vmem:[#allocation2] sm:$0xc]
    %v3841 = vld [vmem:[%s14 + $0x10] sm:$0xf]
    %v3842 = vld [vmem:[%s14 + $0x14] sm:$0xf]
    %v3843 = vld [vmem:[%s14 + $0x18] sm:$0xf]
    %v3844 = vld [vmem:[%s14 + $0x1c] sm:$0xf]
    %v3855 = vunpack.c.l.b16 %v3840
    %v3856 = vunpack.c.l.b16 %v3827
    %v3857 = vunpack.c.l.b16 %v3828
    %v3858 = vunpack.c.l.b16 %v3829
    %v3859 = vunpack.c.l.b16 %v3830
    %v3860 = vunpack.c.l.b16 %v3831
    %v3861 = vunpack.c.l.b16 %v3832
    %v3862 = vunpack.c.l.b16 %v3833
    %v3863 = vunpack.c.l.b16 %v3834
    %v3864 = vunpack.c.l.b16 %v3835
    %v3865 = vpack.c.b16 %v3856, %v3855
    %v3866 = vpack.c.b16 %v3858, %v3857
    %v3867 = vpack.c.b16 %v3860, %v3859
    %v3868 = vpack.c.b16 %v3862, %v3861
    %v3869 = vpack.c.b16 %v3864, %v3863
    %v3870 = vrot.slane %v3865, 2
    %v3871 = vrot.slane %v3866, 2
    %v3872 = vsel %vm1068, %v3870, %v3871
    %v3873 = vrot.slane %v3867, 2
    %v3874 = vsel %vm1068, %v3871, %v3873
    %v3875 = vrot.slane %v3868, 2
    %v3876 = vsel %vm1068, %v3873, %v3875
    %v3877 = vrot.slane %v3869, 2
    %v3878 = vsel %vm1068, %v3875, %v3877
    %v3883 = vunpack.c.l.b16 %v3841
    %v3884 = vunpack.c.l.b16 %v3842
    %v3885 = vunpack.c.l.b16 %v3843
    %v3886 = vunpack.c.l.b16 %v3844
    %v3887 = vpack.c.b16 %v3884, %v3883
    %v3888 = vpack.c.b16 %v3886, %v3885
    %v3892 = vsel %vm1090, %v3872, 0
    %v3895 = vsel %vm1090, %v3874, 0
    %v3898 = vsel %vm1090, %v3876, 0
    %v3901 = vsel %vm1090, %v3878, 0
    %v3904 = vsel %vm1090, %v3877, 0
    %3906 = vmatprep.subr.bf16.mxu0 0
    %3907 = vmatpush1.bf16.msra.mxu0 %v3887
    %3908 = vmatprep.subr.bf16.mxu0 0
    %3909 = vmatpush1.bf16.msra.mxu0 %v3888
    %3910 = vmatprep.subr.bf16.mxu0 0
    %3911 = vmatpush1.bf16.msra.mxu0 0
    %3912 = vmatprep.subr.bf16.mxu0 0
    %3913 = vmatpush1.bf16.msra.mxu0 0
    %3914 = vmatprep.subr.bf16.mxu0 0
    %3915 = vmatpush1.bf16.msra.mxu0 0
    %3916 = vmatprep.subr.bf16.mxu0 0
    %3917 = vmatpush1.bf16.msra.mxu0 0
    %3918 = vmatprep.subr.bf16.mxu0 0
    %3919 = vmatpush1.bf16.msra.mxu0 0
    %3920 = vmatprep.subr.bf16.mxu0 0
    %3921 = vmatpush1.bf16.msra.mxu0 0
    %3922 = vmatprep.subr.bf16.mxu0 0
    %3923 = vmatpush1.bf16.msra.mxu0 0
    %3924 = vmatprep.subr.bf16.mxu0 0
    %3925 = vmatpush1.bf16.msra.mxu0 0
    %3926 = vmatprep.subr.bf16.mxu0 0
    %3927 = vmatpush1.bf16.msra.mxu0 0
    %3928 = vmatprep.subr.bf16.mxu0 0
    %3929 = vmatpush1.bf16.msra.mxu0 0
    %3930 = vmatprep.subr.bf16.mxu0 0
    %3931 = vmatpush1.bf16.msra.mxu0 0
    %3932 = vmatprep.subr.bf16.mxu0 0
    %3933 = vmatpush1.bf16.msra.mxu0 0
    %3934 = vmatprep.subr.bf16.mxu0 0
    %3935 = vmatpush1.bf16.msra.mxu0 0
    %3936 = vmatprep.subr.bf16.mxu0 0
    %3937 = vmatpush1.bf16.msra.mxu0 0
    %3938 = vmatprep.mubr.bf16.mxu0 0
    %3939 = vmatmul.mubr.bf16.gmra.mrb[0].mxu0 %v3892
    %v3940 = vpop.f32.mrb[0].mxu0
    %v3941 = vadd.f32 0.0, %v3940
    %v3942 = vpop.f32.mrb[0].mxu0
    %v3943 = vpop.f32.mrb[0].mxu0
    %v3944 = vadd.f32 0.0, %v3943
    %v3945 = vpop.f32.mrb[0].mxu0
    %3946 = vmatprep.mubr.bf16.mxu0 0
    %3947 = vmatmul.mubr.bf16.gmra.mrb[0].mxu0 %v3895
    %v3948 = vpop.f32.mrb[0].mxu0
    %v3949 = vadd.f32 0.0, %v3948
    %v3950 = vpop.f32.mrb[0].mxu0
    %v3951 = vpop.f32.mrb[0].mxu0
    %v3952 = vadd.f32 0.0, %v3951
    %v3953 = vpop.f32.mrb[0].mxu0
    %3954 = vmatprep.mubr.bf16.mxu0 0
    %3955 = vmatmul.mubr.bf16.gmra.mrb[0].mxu0 %v3898
    %v3956 = vpop.f32.mrb[0].mxu0
    %v3957 = vadd.f32 0.0, %v3956
    %v3958 = vpop.f32.mrb[0].mxu0
    %v3959 = vpop.f32.mrb[0].mxu0
    %v3960 = vadd.f32 0.0, %v3959
    %v3961 = vpop.f32.mrb[0].mxu0
    %3962 = vmatprep.mubr.bf16.mxu0 0
    %3963 = vmatmul.mubr.bf16.gmra.mrb[0].mxu0 %v3901
    %v3964 = vpop.f32.mrb[0].mxu0
    %v3965 = vadd.f32 0.0, %v3964
    %v3966 = vpop.f32.mrb[0].mxu0
    %v3967 = vpop.f32.mrb[0].mxu0
    %v3968 = vadd.f32 0.0, %v3967
    %v3969 = vpop.f32.mrb[0].mxu0
    %3970 = vmatprep.mubr.bf16.mxu0 0
    %3971 = vmatmul.mubr.bf16.gmra.mrb[0].mxu0 %v3904
    %v3972 = vpop.f32.mrb[0].mxu0
    %v3973 = vadd.f32 0.0, %v3972
    %v3974 = vpop.f32.mrb[0].mxu0
    %v3975 = vpop.f32.mrb[0].mxu0
    %v3976 = vpop.f32.mrb[0].mxu0
    %3977 = vdwg.mxu0
    %v3979 = vunpack.c.l.b16 %v3826
    %v3980 = vpack.c.b16 %v3856, %v3979
    %v3982 = vshrl.u32 %v3980, 16
    %v3984 = vrot.slane %v3982, 1
    %v3985 = vshll.u32 %v3980, 16
    %v3987 = vrot.slane %v3985, 2
    %v3988 = vor.u32 %v3984, %v3987
    %v3990 = vshrl.u32 %v3866, 16
    %v3992 = vrot.slane %v3990, 1
    %v3993 = vshll.u32 %v3866, 16
    %v3995 = vrot.slane %v3993, 2
    %v3996 = vor.u32 %v3992, %v3995
    %v3997 = vsel %vm1181, %v3988, %v3996
    %v3999 = vshrl.u32 %v3867, 16
    %v4001 = vrot.slane %v3999, 1
    %v4002 = vshll.u32 %v3867, 16
    %v4004 = vrot.slane %v4002, 2
    %v4005 = vor.u32 %v4001, %v4004
    %v4006 = vsel %vm1181, %v3996, %v4005
    %v4008 = vshrl.u32 %v3868, 16
    %v4010 = vrot.slane %v4008, 1
    %v4011 = vshll.u32 %v3868, 16
    %v4013 = vrot.slane %v4011, 2
    %v4014 = vor.u32 %v4010, %v4013
    %v4015 = vsel %vm1181, %v4005, %v4014
    %v4017 = vshrl.u32 %v3869, 16
    %v4019 = vrot.slane %v4017, 1
    %v4020 = vshll.u32 %v3869, 16
    %v4022 = vrot.slane %v4020, 2
    %v4023 = vor.u32 %v4019, %v4022
    %v4024 = vsel %vm1181, %v4014, %v4023
    %v4029 = vunpack.c.l.b16 %v3836
    %v4030 = vunpack.c.l.b16 %v3837
    %v4031 = vunpack.c.l.b16 %v3838
    %v4032 = vunpack.c.l.b16 %v3839
    %v4033 = vpack.c.b16 %v4030, %v4029
    %v4034 = vpack.c.b16 %v4032, %v4031
    %v4038 = vsel %vm1090, %v3997, 0
    %v4041 = vsel %vm1090, %v4006, 0
    %v4044 = vsel %vm1090, %v4015, 0
    %v4047 = vsel %vm1090, %v4024, 0
    %v4050 = vsel %vm1090, %v4023, 0
    %4052 = vmatprep.subr.bf16.mxu0 0
    %4053 = vmatpush1.bf16.msra.mxu0 %v4033
    %4054 = vmatprep.subr.bf16.mxu0 0
    %4055 = vmatpush1.bf16.msra.mxu0 %v4034
    %4056 = vmatprep.subr.bf16.mxu0 0
    %4057 = vmatpush1.bf16.msra.mxu0 0
    %4058 = vmatprep.subr.bf16.mxu0 0
    %4059 = vmatpush1.bf16.msra.mxu0 0
    %4060 = vmatprep.subr.bf16.mxu0 0
    %4061 = vmatpush1.bf16.msra.mxu0 0
    %4062 = vmatprep.subr.bf16.mxu0 0
    %4063 = vmatpush1.bf16.msra.mxu0 0
    %4064 = vmatprep.subr.bf16.mxu0 0
    %4065 = vmatpush1.bf16.msra.mxu0 0
    %4066 = vmatprep.subr.bf16.mxu0 0
    %4067 = vmatpush1.bf16.msra.mxu0 0
    %4068 = vmatprep.subr.bf16.mxu0 0
    %4069 = vmatpush1.bf16.msra.mxu0 0
    %4070 = vmatprep.subr.bf16.mxu0 0
    %4071 = vmatpush1.bf16.msra.mxu0 0
    %4072 = vmatprep.subr.bf16.mxu0 0
    %4073 = vmatpush1.bf16.msra.mxu0 0
    %4074 = vmatprep.subr.bf16.mxu0 0
    %4075 = vmatpush1.bf16.msra.mxu0 0
    %4076 = vmatprep.subr.bf16.mxu0 0
    %4077 = vmatpush1.bf16.msra.mxu0 0
    %4078 = vmatprep.subr.bf16.mxu0 0
    %4079 = vmatpush1.bf16.msra.mxu0 0
    %4080 = vmatprep.subr.bf16.mxu0 0
    %4081 = vmatpush1.bf16.msra.mxu0 0
    %4082 = vmatprep.subr.bf16.mxu0 0
    %4083 = vmatpush1.bf16.msra.mxu0 0
    %4084 = vmatprep.mubr.bf16.mxu0 0
    %4085 = vmatmul.mubr.bf16.gmra.mrb[0].mxu0 %v4038
    %v4086 = vpop.f32.mrb[0].mxu0
    %v4087 = vadd.f32 %v3941, %v4086
    %v4088 = vpop.f32.mrb[0].mxu0
    %v4089 = vpop.f32.mrb[0].mxu0
    %v4090 = vadd.f32 %v3944, %v4089
    %v4091 = vpop.f32.mrb[0].mxu0
    %4092 = vmatprep.mubr.bf16.mxu0 0
    %4093 = vmatmul.mubr.bf16.gmra.mrb[0].mxu0 %v4041
    %v4094 = vpop.f32.mrb[0].mxu0
    %v4095 = vadd.f32 %v3949, %v4094
    %v4096 = vpop.f32.mrb[0].mxu0
    %v4097 = vpop.f32.mrb[0].mxu0
    %v4098 = vadd.f32 %v3952, %v4097
    %v4099 = vpop.f32.mrb[0].mxu0
    %4100 = vmatprep.mubr.bf16.mxu0 0
    %4101 = vmatmul.mubr.bf16.gmra.mrb[0].mxu0 %v4044
    %v4102 = vpop.f32.mrb[0].mxu0
    %v4103 = vadd.f32 %v3957, %v4102
    %v4104 = vpop.f32.mrb[0].mxu0
    %v4105 = vpop.f32.mrb[0].mxu0
    %v4106 = vadd.f32 %v3960, %v4105
    %v4107 = vpop.f32.mrb[0].mxu0
    %4108 = vmatprep.mubr.bf16.mxu0 0
    %4109 = vmatmul.mubr.bf16.gmra.mrb[0].mxu0 %v4047
    %v4110 = vpop.f32.mrb[0].mxu0
    %v4111 = vadd.f32 %v3965, %v4110
    %v4112 = vpop.f32.mrb[0].mxu0
    %v4113 = vpop.f32.mrb[0].mxu0
    %v4114 = vadd.f32 %v3968, %v4113
    %v4115 = vpop.f32.mrb[0].mxu0
    %4116 = vmatprep.mubr.bf16.mxu0 0
    %4117 = vmatmul.mubr.bf16.gmra.mrb[0].mxu0 %v4050
    %v4118 = vpop.f32.mrb[0].mxu0
    %v4119 = vadd.f32 %v3973, %v4118
    %v4120 = vpop.f32.mrb[0].mxu0
    %v4121 = vpop.f32.mrb[0].mxu0
    %v4122 = vpop.f32.mrb[0].mxu0
    %4123 = vdwg.mxu0
    %v4124 = vld [vmem:[#allocation2 + $0x24] sm:$0x7]
    %v4125 = vld [vmem:[%s14 + $0x20] sm:$0xf]
    %v4126 = vld [vmem:[%s14 + $0x24] sm:$0xf]
    %v4127 = vld [vmem:[%s14 + $0x28] sm:$0xf]
    %v4128 = vld [vmem:[%s14 + $0x2c] sm:$0xf]
    %v4130 = vunpack.c.l.b16 %v4124
    %v4131 = vpack.c.b16 %v4130, %v3863
    %v4133 = vshrl.u32 %v3865, 16
    %v4135 = vrot.slane %v4133, 2
    %v4136 = vshll.u32 %v3865, 16
    %v4138 = vrot.slane %v4136, 3
    %v4139 = vor.u32 %v4135, %v4138
    %v4140 = vrot.slane %v3990, 2
    %v4141 = vrot.slane %v3993, 3
    %v4142 = vor.u32 %v4140, %v4141
    %v4143 = vsel %vm1333, %v4139, %v4142
    %v4144 = vrot.slane %v3999, 2
    %v4145 = vrot.slane %v4002, 3
    %v4146 = vor.u32 %v4144, %v4145
    %v4147 = vsel %vm1333, %v4142, %v4146
    %v4148 = vrot.slane %v4008, 2
    %v4149 = vrot.slane %v4011, 3
    %v4150 = vor.u32 %v4148, %v4149
    %v4151 = vsel %vm1333, %v4146, %v4150
    %v4153 = vshrl.u32 %v4131, 16
    %v4155 = vrot.slane %v4153, 2
    %v4156 = vshll.u32 %v4131, 16
    %v4158 = vrot.slane %v4156, 3
    %v4159 = vor.u32 %v4155, %v4158
    %v4160 = vsel %vm1333, %v4150, %v4159
    %v4165 = vunpack.c.l.b16 %v4125
    %v4166 = vunpack.c.l.b16 %v4126
    %v4167 = vunpack.c.l.b16 %v4127
    %v4168 = vunpack.c.l.b16 %v4128
    %v4169 = vpack.c.b16 %v4166, %v4165
    %v4170 = vpack.c.b16 %v4168, %v4167
    %v4174 = vsel %vm1090, %v4143, 0
    %v4177 = vsel %vm1090, %v4147, 0
    %v4180 = vsel %vm1090, %v4151, 0
    %v4183 = vsel %vm1090, %v4160, 0
    %v4186 = vsel %vm1090, %v4159, 0
    %4188 = vmatprep.subr.bf16.mxu0 0
    %4189 = vmatpush1.bf16.msra.mxu0 %v4169
    %4190 = vmatprep.subr.bf16.mxu0 0
    %4191 = vmatpush1.bf16.msra.mxu0 %v4170
    %4192 = vmatprep.subr.bf16.mxu0 0
    %4193 = vmatpush1.bf16.msra.mxu0 0
    %4194 = vmatprep.subr.bf16.mxu0 0
    %4195 = vmatpush1.bf16.msra.mxu0 0
    %4196 = vmatprep.subr.bf16.mxu0 0
    %4197 = vmatpush1.bf16.msra.mxu0 0
    %4198 = vmatprep.subr.bf16.mxu0 0
    %4199 = vmatpush1.bf16.msra.mxu0 0
    %4200 = vmatprep.subr.bf16.mxu0 0
    %4201 = vmatpush1.bf16.msra.mxu0 0
    %4202 = vmatprep.subr.bf16.mxu0 0
    %4203 = vmatpush1.bf16.msra.mxu0 0
    %4204 = vmatprep.subr.bf16.mxu0 0
    %4205 = vmatpush1.bf16.msra.mxu0 0
    %4206 = vmatprep.subr.bf16.mxu0 0
    %4207 = vmatpush1.bf16.msra.mxu0 0
    %4208 = vmatprep.subr.bf16.mxu0 0
    %4209 = vmatpush1.bf16.msra.mxu0 0
    %4210 = vmatprep.subr.bf16.mxu0 0
    %4211 = vmatpush1.bf16.msra.mxu0 0
    %4212 = vmatprep.subr.bf16.mxu0 0
    %4213 = vmatpush1.bf16.msra.mxu0 0
    %4214 = vmatprep.subr.bf16.mxu0 0
    %4215 = vmatpush1.bf16.msra.mxu0 0
    %4216 = vmatprep.subr.bf16.mxu0 0
    %4217 = vmatpush1.bf16.msra.mxu0 0
    %4218 = vmatprep.subr.bf16.mxu0 0
    %4219 = vmatpush1.bf16.msra.mxu0 0
    %4220 = vmatprep.mubr.bf16.mxu0 0
    %4221 = vmatmul.mubr.bf16.gmra.mrb[0].mxu0 %v4174
    %v4222 = vpop.f32.mrb[0].mxu0
    %v4223 = vadd.f32 0.0, %v4222
    %v4224 = vpop.f32.mrb[0].mxu0
    %v4225 = vpop.f32.mrb[0].mxu0
    %v4226 = vadd.f32 0.0, %v4225
    %v4227 = vpop.f32.mrb[0].mxu0
    %4228 = vmatprep.mubr.bf16.mxu0 0
    %4229 = vmatmul.mubr.bf16.gmra.mrb[0].mxu0 %v4177
    %v4230 = vpop.f32.mrb[0].mxu0
    %v4231 = vadd.f32 0.0, %v4230
    %v4232 = vpop.f32.mrb[0].mxu0
    %v4233 = vpop.f32.mrb[0].mxu0
    %v4234 = vadd.f32 0.0, %v4233
    %v4235 = vpop.f32.mrb[0].mxu0
    %4236 = vmatprep.mubr.bf16.mxu0 0
    %4237 = vmatmul.mubr.bf16.gmra.mrb[0].mxu0 %v4180
    %v4238 = vpop.f32.mrb[0].mxu0
    %v4239 = vadd.f32 0.0, %v4238
    %v4240 = vpop.f32.mrb[0].mxu0
    %v4241 = vpop.f32.mrb[0].mxu0
    %v4242 = vadd.f32 0.0, %v4241
    %v4243 = vpop.f32.mrb[0].mxu0
    %4244 = vmatprep.mubr.bf16.mxu0 0
    %4245 = vmatmul.mubr.bf16.gmra.mrb[0].mxu0 %v4183
    %v4246 = vpop.f32.mrb[0].mxu0
    %v4247 = vadd.f32 0.0, %v4246
    %v4248 = vpop.f32.mrb[0].mxu0
    %v4249 = vpop.f32.mrb[0].mxu0
    %v4250 = vadd.f32 0.0, %v4249
    %v4251 = vpop.f32.mrb[0].mxu0
    %4252 = vmatprep.mubr.bf16.mxu0 0
    %4253 = vmatmul.mubr.bf16.gmra.mrb[0].mxu0 %v4186
    %v4254 = vpop.f32.mrb[0].mxu0
    %v4255 = vadd.f32 0.0, %v4254
    %v4256 = vpop.f32.mrb[0].mxu0
    %v4257 = vpop.f32.mrb[0].mxu0
    %v4258 = vpop.f32.mrb[0].mxu0
    %4259 = vdwg.mxu0
    %v4260 = vadd.f32 %v4087, %v4223
    %v4261 = vadd.f32 %v4090, %v4226
    %v4262 = vadd.f32 %v4095, %v4231
    %v4263 = vadd.f32 %v4098, %v4234
    %v4264 = vadd.f32 %v4103, %v4239
    %v4265 = vadd.f32 %v4106, %v4242
    %v4266 = vadd.f32 %v4111, %v4247
    %v4267 = vadd.f32 %v4114, %v4250
    %v4268 = vadd.f32 %v4119, %v4255
    %v4269 = vld [vmem:[#allocation2] sm:$0x8]
    %v4270 = vld [vmem:[#allocation2 + $0x24] sm:$0xf]
    %v4271 = vld [vmem:[%s14 + $0x30] sm:$0xf]
    %v4272 = vld [vmem:[%s14 + $0x34] sm:$0xf]
    %v4273 = vld [vmem:[%s14 + $0x38] sm:$0xf]
    %v4274 = vld [vmem:[%s14 + $0x3c] sm:$0xf]
    %v4277 = vunpack.c.l.b16 %v4269
    %v4278 = vunpack.c.l.b16 %v4270
    %v4279 = vpack.c.b16 %v3856, %v4277
    %v4280 = vpack.c.b16 %v4278, %v3863
    %v4282 = vshrl.u32 %v4279, 16
    %v4284 = vrot.slane %v4282, 3
    %v4285 = vshll.u32 %v4279, 16
    %v4287 = vrot.slane %v4285, 4
    %v4288 = vor.u32 %v4284, %v4287
    %v4289 = vrot.slane %v3990, 3
    %v4290 = vrot.slane %v3993, 4
    %v4291 = vor.u32 %v4289, %v4290
    %v4292 = vsel %vm1483, %v4288, %v4291
    %v4293 = vrot.slane %v3999, 3
    %v4294 = vrot.slane %v4002, 4
    %v4295 = vor.u32 %v4293, %v4294
    %v4296 = vsel %vm1483, %v4291, %v4295
    %v4297 = vrot.slane %v4008, 3
    %v4298 = vrot.slane %v4011, 4
    %v4299 = vor.u32 %v4297, %v4298
    %v4300 = vsel %vm1483, %v4295, %v4299
    %v4302 = vshrl.u32 %v4280, 16
    %v4304 = vrot.slane %v4302, 3
    %v4305 = vshll.u32 %v4280, 16
    %v4307 = vrot.slane %v4305, 4
    %v4308 = vor.u32 %v4304, %v4307
    %v4309 = vsel %vm1483, %v4299, %v4308
    %v4314 = vunpack.c.l.b16 %v4271
    %v4315 = vunpack.c.l.b16 %v4272
    %v4316 = vunpack.c.l.b16 %v4273
    %v4317 = vunpack.c.l.b16 %v4274
    %v4318 = vpack.c.b16 %v4315, %v4314
    %v4319 = vpack.c.b16 %v4317, %v4316
    %v4323 = vsel %vm1090, %v4292, 0
    %v4326 = vsel %vm1090, %v4296, 0
    %v4329 = vsel %vm1090, %v4300, 0
    %v4332 = vsel %vm1090, %v4309, 0
    %v4335 = vsel %vm1090, %v4308, 0
    %4337 = vmatprep.subr.bf16.mxu0 0
    %4338 = vmatpush1.bf16.msra.mxu0 %v4318
    %4339 = vmatprep.subr.bf16.mxu0 0
    %4340 = vmatpush1.bf16.msra.mxu0 %v4319
    %4341 = vmatprep.subr.bf16.mxu0 0
    %4342 = vmatpush1.bf16.msra.mxu0 0
    %4343 = vmatprep.subr.bf16.mxu0 0
    %4344 = vmatpush1.bf16.msra.mxu0 0
    %4345 = vmatprep.subr.bf16.mxu0 0
    %4346 = vmatpush1.bf16.msra.mxu0 0
    %4347 = vmatprep.subr.bf16.mxu0 0
    %4348 = vmatpush1.bf16.msra.mxu0 0
    %4349 = vmatprep.subr.bf16.mxu0 0
    %4350 = vmatpush1.bf16.msra.mxu0 0
    %4351 = vmatprep.subr.bf16.mxu0 0
    %4352 = vmatpush1.bf16.msra.mxu0 0
    %4353 = vmatprep.subr.bf16.mxu0 0
    %4354 = vmatpush1.bf16.msra.mxu0 0
    %4355 = vmatprep.subr.bf16.mxu0 0
    %4356 = vmatpush1.bf16.msra.mxu0 0
    %4357 = vmatprep.subr.bf16.mxu0 0
    %4358 = vmatpush1.bf16.msra.mxu0 0
    %4359 = vmatprep.subr.bf16.mxu0 0
    %4360 = vmatpush1.bf16.msra.mxu0 0
    %4361 = vmatprep.subr.bf16.mxu0 0
    %4362 = vmatpush1.bf16.msra.mxu0 0
    %4363 = vmatprep.subr.bf16.mxu0 0
    %4364 = vmatpush1.bf16.msra.mxu0 0
    %4365 = vmatprep.subr.bf16.mxu0 0
    %4366 = vmatpush1.bf16.msra.mxu0 0
    %4367 = vmatprep.subr.bf16.mxu0 0
    %4368 = vmatpush1.bf16.msra.mxu0 0
    %4369 = vmatprep.mubr.bf16.mxu0 0
    %4370 = vmatmul.mubr.bf16.gmra.mrb[0].mxu0 %v4323
    %v4371 = vpop.f32.mrb[0].mxu0
    %v4372 = vadd.f32 0.0, %v4371
    %v4373 = vpop.f32.mrb[0].mxu0
    %v4374 = vpop.f32.mrb[0].mxu0
    %v4375 = vadd.f32 0.0, %v4374
    %v4376 = vpop.f32.mrb[0].mxu0
    %4377 = vmatprep.mubr.bf16.mxu0 0
    %4378 = vmatmul.mubr.bf16.gmra.mrb[0].mxu0 %v4326
    %v4379 = vpop.f32.mrb[0].mxu0
    %v4380 = vadd.f32 0.0, %v4379
    %v4381 = vpop.f32.mrb[0].mxu0
    %v4382 = vpop.f32.mrb[0].mxu0
    %v4383 = vadd.f32 0.0, %v4382
    %v4384 = vpop.f32.mrb[0].mxu0
    %4385 = vmatprep.mubr.bf16.mxu0 0
    %4386 = vmatmul.mubr.bf16.gmra.mrb[0].mxu0 %v4329
    %v4387 = vpop.f32.mrb[0].mxu0
    %v4388 = vadd.f32 0.0, %v4387
    %v4389 = vpop.f32.mrb[0].mxu0
    %v4390 = vpop.f32.mrb[0].mxu0
    %v4391 = vadd.f32 0.0, %v4390
    %v4392 = vpop.f32.mrb[0].mxu0
    %4393 = vmatprep.mubr.bf16.mxu0 0
    %4394 = vmatmul.mubr.bf16.gmra.mrb[0].mxu0 %v4332
    %v4395 = vpop.f32.mrb[0].mxu0
    %v4396 = vadd.f32 0.0, %v4395
    %v4397 = vpop.f32.mrb[0].mxu0
    %v4398 = vpop.f32.mrb[0].mxu0
    %v4399 = vadd.f32 0.0, %v4398
    %v4400 = vpop.f32.mrb[0].mxu0
    %4401 = vmatprep.mubr.bf16.mxu0 0
    %4402 = vmatmul.mubr.bf16.gmra.mrb[0].mxu0 %v4335
    %v4403 = vpop.f32.mrb[0].mxu0
    %v4404 = vadd.f32 0.0, %v4403
    %v4405 = vpop.f32.mrb[0].mxu0
    %v4406 = vpop.f32.mrb[0].mxu0
    %v4407 = vpop.f32.mrb[0].mxu0
    %4408 = vdwg.mxu0
    %v4409 = vadd.f32 %v4260, %v4372
    %v4410 = vadd.f32 %v4261, %v4375
    %v4411 = vadd.f32 %v4262, %v4380
    %v4412 = vadd.f32 %v4263, %v4383
    %v4413 = vadd.f32 %v4264, %v4388
    %v4414 = vadd.f32 %v4265, %v4391
    %v4415 = vadd.f32 %v4266, %v4396
    %v4416 = vadd.f32 %v4267, %v4399
    %v4417 = vadd.f32 %v4268, %v4404
    %v4418 = vld [vmem:[%s14 + $0x40] sm:$0xf]
    %v4419 = vld [vmem:[%s14 + $0x44] sm:$0xf]
    %v4420 = vld [vmem:[%s14 + $0x48] sm:$0xf]
    %v4421 = vld [vmem:[%s14 + $0x4c] sm:$0xf]
    %v4422 = vpack.c.b16 %v3857, %v3856
    %v4423 = vpack.c.b16 %v3859, %v3858
    %v4424 = vpack.c.b16 %v3861, %v3860
    %v4425 = vpack.c.b16 %v3863, %v3862
    %v4426 = vpack.c.b16 %v4278, %v4278
    %v4431 = vunpack.c.l.b16 %v4418
    %v4432 = vunpack.c.l.b16 %v4419
    %v4433 = vunpack.c.l.b16 %v4420
    %v4434 = vunpack.c.l.b16 %v4421
    %v4435 = vpack.c.b16 %v4432, %v4431
    %v4436 = vpack.c.b16 %v4434, %v4433
    %v4440 = vsel %vm1090, %v4422, 0
    %v4443 = vsel %vm1090, %v4423, 0
    %v4446 = vsel %vm1090, %v4424, 0
    %v4449 = vsel %vm1090, %v4425, 0
    %v4452 = vsel %vm1090, %v4426, 0
    %4454 = vmatprep.subr.bf16.mxu0 0
    %4455 = vmatpush1.bf16.msra.mxu0 %v4435
    %4456 = vmatprep.subr.bf16.mxu0 0
    %4457 = vmatpush1.bf16.msra.mxu0 %v4436
    %4458 = vmatprep.subr.bf16.mxu0 0
    %4459 = vmatpush1.bf16.msra.mxu0 0
    %4460 = vmatprep.subr.bf16.mxu0 0
    %4461 = vmatpush1.bf16.msra.mxu0 0
    %4462 = vmatprep.subr.bf16.mxu0 0
    %4463 = vmatpush1.bf16.msra.mxu0 0
    %4464 = vmatprep.subr.bf16.mxu0 0
    %4465 = vmatpush1.bf16.msra.mxu0 0
    %4466 = vmatprep.subr.bf16.mxu0 0
    %4467 = vmatpush1.bf16.msra.mxu0 0
    %4468 = vmatprep.subr.bf16.mxu0 0
    %4469 = vmatpush1.bf16.msra.mxu0 0
    %4470 = vmatprep.subr.bf16.mxu0 0
    %4471 = vmatpush1.bf16.msra.mxu0 0
    %4472 = vmatprep.subr.bf16.mxu0 0
    %4473 = vmatpush1.bf16.msra.mxu0 0
    %4474 = vmatprep.subr.bf16.mxu0 0
    %4475 = vmatpush1.bf16.msra.mxu0 0
    %4476 = vmatprep.subr.bf16.mxu0 0
    %4477 = vmatpush1.bf16.msra.mxu0 0
    %4478 = vmatprep.subr.bf16.mxu0 0
    %4479 = vmatpush1.bf16.msra.mxu0 0
    %4480 = vmatprep.subr.bf16.mxu0 0
    %4481 = vmatpush1.bf16.msra.mxu0 0
    %4482 = vmatprep.subr.bf16.mxu0 0
    %4483 = vmatpush1.bf16.msra.mxu0 0
    %4484 = vmatprep.subr.bf16.mxu0 0
    %4485 = vmatpush1.bf16.msra.mxu0 0
    %4486 = vmatprep.mubr.bf16.mxu0 0
    %4487 = vmatmul.mubr.bf16.gmra.mrb[0].mxu0 %v4440
    %v4488 = vpop.f32.mrb[0].mxu0
    %v4489 = vadd.f32 0.0, %v4488
    %v4490 = vpop.f32.mrb[0].mxu0
    %v4491 = vpop.f32.mrb[0].mxu0
    %v4492 = vadd.f32 0.0, %v4491
    %v4493 = vpop.f32.mrb[0].mxu0
    %4494 = vmatprep.mubr.bf16.mxu0 0
    %4495 = vmatmul.mubr.bf16.gmra.mrb[0].mxu0 %v4443
    %v4496 = vpop.f32.mrb[0].mxu0
    %v4497 = vadd.f32 0.0, %v4496
    %v4498 = vpop.f32.mrb[0].mxu0
    %v4499 = vpop.f32.mrb[0].mxu0
    %v4500 = vadd.f32 0.0, %v4499
    %v4501 = vpop.f32.mrb[0].mxu0
    %4502 = vmatprep.mubr.bf16.mxu0 0
    %4503 = vmatmul.mubr.bf16.gmra.mrb[0].mxu0 %v4446
    %v4504 = vpop.f32.mrb[0].mxu0
    %v4505 = vadd.f32 0.0, %v4504
    %v4506 = vpop.f32.mrb[0].mxu0
    %v4507 = vpop.f32.mrb[0].mxu0
    %v4508 = vadd.f32 0.0, %v4507
    %v4509 = vpop.f32.mrb[0].mxu0
    %4510 = vmatprep.mubr.bf16.mxu0 0
    %4511 = vmatmul.mubr.bf16.gmra.mrb[0].mxu0 %v4449
    %v4512 = vpop.f32.mrb[0].mxu0
    %v4513 = vadd.f32 0.0, %v4512
    %v4514 = vpop.f32.mrb[0].mxu0
    %v4515 = vpop.f32.mrb[0].mxu0
    %v4516 = vadd.f32 0.0, %v4515
    %v4517 = vpop.f32.mrb[0].mxu0
    %4518 = vmatprep.mubr.bf16.mxu0 0
    %4519 = vmatmul.mubr.bf16.gmra.mrb[0].mxu0 %v4452
    %v4520 = vpop.f32.mrb[0].mxu0
    %v4521 = vadd.f32 0.0, %v4520
    %v4522 = vpop.f32.mrb[0].mxu0
    %v4523 = vpop.f32.mrb[0].mxu0
    %v4524 = vpop.f32.mrb[0].mxu0
    %4525 = vdwg.mxu0
    %v4526 = vadd.f32 %v4409, %v4489
    %v4527 = vadd.f32 %v4410, %v4492
    %v4528 = vadd.f32 %v4411, %v4497
    %v4529 = vadd.f32 %v4412, %v4500
    %v4530 = vadd.f32 %v4413, %v4505
    %v4531 = vadd.f32 %v4414, %v4508
    %v4532 = vadd.f32 %v4415, %v4513
    %v4533 = vadd.f32 %v4416, %v4516
    %v4534 = vadd.f32 %v4417, %v4521
    %v4535 = vld [vmem:[#allocation2 + $0x4] sm:$0xf]
    %v4536 = vld [vmem:[#allocation2 + $0x8] sm:$0xf]
    %v4537 = vld [vmem:[#allocation2 + $0xc] sm:$0xf]
    %v4538 = vld [vmem:[#allocation2 + $0x10] sm:$0xf]
    %v4539 = vld [vmem:[#allocation2 + $0x14] sm:$0xf]
    %v4540 = vld [vmem:[#allocation2 + $0x18] sm:$0xf]
    %v4541 = vld [vmem:[#allocation2 + $0x1c] sm:$0xf]
    %v4542 = vld [vmem:[#allocation2 + $0x20] sm:$0xf]
    %v4543 = vld [vmem:[#allocation2 + $0x24] sm:$0xf]
    %v4544 = vld [vmem:[#allocation2 + $0x28] sm:$0x1]
    %v4545 = vld [vmem:[%s14 + $0x50] sm:$0xf]
    %v4546 = vld [vmem:[%s14 + $0x54] sm:$0xf]
    %v4547 = vld [vmem:[%s14 + $0x58] sm:$0xf]
    %v4548 = vld [vmem:[%s14 + $0x5c] sm:$0xf]
    %v4559 = vunpack.c.l.b16 %v4535
    %v4560 = vunpack.c.l.b16 %v4536
    %v4561 = vunpack.c.l.b16 %v4537
    %v4562 = vunpack.c.l.b16 %v4538
    %v4563 = vunpack.c.l.b16 %v4539
    %v4564 = vunpack.c.l.b16 %v4540
    %v4565 = vunpack.c.l.b16 %v4541
    %v4566 = vunpack.c.l.b16 %v4542
    %v4567 = vunpack.c.l.b16 %v4543
    %v4568 = vunpack.c.l.b16 %v4544
    %v4569 = vpack.c.b16 %v4560, %v4559
    %v4570 = vpack.c.b16 %v4562, %v4561
    %v4571 = vpack.c.b16 %v4564, %v4563
    %v4572 = vpack.c.b16 %v4566, %v4565
    %v4573 = vpack.c.b16 %v4568, %v4567
    %v4575 = vshrl.u32 %v4569, 16
    %v4577 = vshll.u32 %v4569, 16
    %v4579 = vrot.slane %v4577, 1
    %v4580 = vor.u32 %v4575, %v4579
    %v4582 = vshll.u32 %v4570, 16
    %v4584 = vrot.slane %v4582, 1
    %v4585 = vsel %vm90, %v4580, %v4584
    %v4586 = vshrl.u32 %v4570, 16
    %v4588 = vor.u32 %v4586, %v4584
    %v4590 = vshll.u32 %v4571, 16
    %v4592 = vrot.slane %v4590, 1
    %v4593 = vsel %vm90, %v4588, %v4592
    %v4594 = vshrl.u32 %v4571, 16
    %v4596 = vor.u32 %v4594, %v4592
    %v4598 = vshll.u32 %v4572, 16
    %v4600 = vrot.slane %v4598, 1
    %v4601 = vsel %vm90, %v4596, %v4600
    %v4602 = vshrl.u32 %v4572, 16
    %v4604 = vor.u32 %v4602, %v4600
    %v4606 = vshll.u32 %v4573, 16
    %v4608 = vrot.slane %v4606, 1
    %v4609 = vsel %vm90, %v4604, %v4608
    %v4610 = vshrl.u32 %v4573, 16
    %v4612 = vor.u32 %v4610, %v4608
    %v4617 = vunpack.c.l.b16 %v4545
    %v4618 = vunpack.c.l.b16 %v4546
    %v4619 = vunpack.c.l.b16 %v4547
    %v4620 = vunpack.c.l.b16 %v4548
    %v4621 = vpack.c.b16 %v4618, %v4617
    %v4622 = vpack.c.b16 %v4620, %v4619
    %v4626 = vsel %vm1090, %v4585, 0
    %v4629 = vsel %vm1090, %v4593, 0
    %v4632 = vsel %vm1090, %v4601, 0
    %v4635 = vsel %vm1090, %v4609, 0
    %v4638 = vsel %vm1090, %v4612, 0
    %4640 = vmatprep.subr.bf16.mxu0 0
    %4641 = vmatpush1.bf16.msra.mxu0 %v4621
    %4642 = vmatprep.subr.bf16.mxu0 0
    %4643 = vmatpush1.bf16.msra.mxu0 %v4622
    %4644 = vmatprep.subr.bf16.mxu0 0
    %4645 = vmatpush1.bf16.msra.mxu0 0
    %4646 = vmatprep.subr.bf16.mxu0 0
    %4647 = vmatpush1.bf16.msra.mxu0 0
    %4648 = vmatprep.subr.bf16.mxu0 0
    %4649 = vmatpush1.bf16.msra.mxu0 0
    %4650 = vmatprep.subr.bf16.mxu0 0
    %4651 = vmatpush1.bf16.msra.mxu0 0
    %4652 = vmatprep.subr.bf16.mxu0 0
    %4653 = vmatpush1.bf16.msra.mxu0 0
    %4654 = vmatprep.subr.bf16.mxu0 0
    %4655 = vmatpush1.bf16.msra.mxu0 0
    %4656 = vmatprep.subr.bf16.mxu0 0
    %4657 = vmatpush1.bf16.msra.mxu0 0
    %4658 = vmatprep.subr.bf16.mxu0 0
    %4659 = vmatpush1.bf16.msra.mxu0 0
    %4660 = vmatprep.subr.bf16.mxu0 0
    %4661 = vmatpush1.bf16.msra.mxu0 0
    %4662 = vmatprep.subr.bf16.mxu0 0
    %4663 = vmatpush1.bf16.msra.mxu0 0
    %4664 = vmatprep.subr.bf16.mxu0 0
    %4665 = vmatpush1.bf16.msra.mxu0 0
    %4666 = vmatprep.subr.bf16.mxu0 0
    %4667 = vmatpush1.bf16.msra.mxu0 0
    %4668 = vmatprep.subr.bf16.mxu0 0
    %4669 = vmatpush1.bf16.msra.mxu0 0
    %4670 = vmatprep.subr.bf16.mxu0 0
    %4671 = vmatpush1.bf16.msra.mxu0 0
    %4672 = vmatprep.mubr.bf16.mxu0 0
    %4673 = vmatmul.mubr.bf16.gmra.mrb[0].mxu0 %v4626
    %v4674 = vpop.f32.mrb[0].mxu0
    %v4675 = vadd.f32 0.0, %v4674
    %v4676 = vpop.f32.mrb[0].mxu0
    %v4677 = vpop.f32.mrb[0].mxu0
    %v4678 = vadd.f32 0.0, %v4677
    %v4679 = vpop.f32.mrb[0].mxu0
    %4680 = vmatprep.mubr.bf16.mxu0 0
    %4681 = vmatmul.mubr.bf16.gmra.mrb[0].mxu0 %v4629
    %v4682 = vpop.f32.mrb[0].mxu0
    %v4683 = vadd.f32 0.0, %v4682
    %v4684 = vpop.f32.mrb[0].mxu0
    %v4685 = vpop.f32.mrb[0].mxu0
    %v4686 = vadd.f32 0.0, %v4685
    %v4687 = vpop.f32.mrb[0].mxu0
    %4688 = vmatprep.mubr.bf16.mxu0 0
    %4689 = vmatmul.mubr.bf16.gmra.mrb[0].mxu0 %v4632
    %v4690 = vpop.f32.mrb[0].mxu0
    %v4691 = vadd.f32 0.0, %v4690
    %v4692 = vpop.f32.mrb[0].mxu0
    %v4693 = vpop.f32.mrb[0].mxu0
    %v4694 = vadd.f32 0.0, %v4693
    %v4695 = vpop.f32.mrb[0].mxu0
    %4696 = vmatprep.mubr.bf16.mxu0 0
    %4697 = vmatmul.mubr.bf16.gmra.mrb[0].mxu0 %v4635
    %v4698 = vpop.f32.mrb[0].mxu0
    %v4699 = vadd.f32 0.0, %v4698
    %v4700 = vpop.f32.mrb[0].mxu0
    %v4701 = vpop.f32.mrb[0].mxu0
    %v4702 = vadd.f32 0.0, %v4701
    %v4703 = vpop.f32.mrb[0].mxu0
    %4704 = vmatprep.mubr.bf16.mxu0 0
    %4705 = vmatmul.mubr.bf16.gmra.mrb[0].mxu0 %v4638
    %v4706 = vpop.f32.mrb[0].mxu0
    %v4707 = vadd.f32 0.0, %v4706
    %v4708 = vpop.f32.mrb[0].mxu0
    %v4709 = vpop.f32.mrb[0].mxu0
    %v4710 = vpop.f32.mrb[0].mxu0
    %4711 = vdwg.mxu0
    %v4712 = vadd.f32 %v4526, %v4675
    %v4713 = vadd.f32 %v4527, %v4678
    %v4714 = vadd.f32 %v4528, %v4683
    %v4715 = vadd.f32 %v4529, %v4686
    %v4716 = vadd.f32 %v4530, %v4691
    %v4717 = vadd.f32 %v4531, %v4694
    %v4718 = vadd.f32 %v4532, %v4699
    %v4719 = vadd.f32 %v4533, %v4702
    %v4720 = vadd.f32 %v4534, %v4707
    %v4721 = vld [vmem:[#allocation2 + $0x4] sm:$0xe]
    %v4722 = vld [vmem:[#allocation2 + $0x28] sm:$0x3]
    %v4723 = vld [vmem:[%s14 + $0x60] sm:$0xf]
    %v4724 = vld [vmem:[%s14 + $0x64] sm:$0xf]
    %v4725 = vld [vmem:[%s14 + $0x68] sm:$0xf]
    %v4726 = vld [vmem:[%s14 + $0x6c] sm:$0xf]
    %v4729 = vunpack.c.l.b16 %v4721
    %v4730 = vunpack.c.l.b16 %v4722
    %v4731 = vpack.c.b16 %v4560, %v4729
    %v4732 = vpack.c.b16 %v4730, %v4567
    %v4734 = vshrl.u32 %v4731, 16
    %v4736 = vrot.slane %v4734, 1
    %v4737 = vshll.u32 %v4731, 16
    %v4739 = vrot.slane %v4737, 2
    %v4740 = vor.u32 %v4736, %v4739
    %v4741 = vrot.slane %v4586, 1
    %v4742 = vrot.slane %v4582, 2
    %v4743 = vor.u32 %v4741, %v4742
    %v4744 = vsel %vm1181, %v4740, %v4743
    %v4745 = vrot.slane %v4594, 1
    %v4746 = vrot.slane %v4590, 2
    %v4747 = vor.u32 %v4745, %v4746
    %v4748 = vsel %vm1181, %v4743, %v4747
    %v4749 = vrot.slane %v4602, 1
    %v4750 = vrot.slane %v4598, 2
    %v4751 = vor.u32 %v4749, %v4750
    %v4752 = vsel %vm1181, %v4747, %v4751
    %v4754 = vshrl.u32 %v4732, 16
    %v4756 = vrot.slane %v4754, 1
    %v4757 = vshll.u32 %v4732, 16
    %v4759 = vrot.slane %v4757, 2
    %v4760 = vor.u32 %v4756, %v4759
    %v4761 = vsel %vm1181, %v4751, %v4760
    %v4766 = vunpack.c.l.b16 %v4723
    %v4767 = vunpack.c.l.b16 %v4724
    %v4768 = vunpack.c.l.b16 %v4725
    %v4769 = vunpack.c.l.b16 %v4726
    %v4770 = vpack.c.b16 %v4767, %v4766
    %v4771 = vpack.c.b16 %v4769, %v4768
    %v4775 = vsel %vm1090, %v4744, 0
    %v4778 = vsel %vm1090, %v4748, 0
    %v4781 = vsel %vm1090, %v4752, 0
    %v4784 = vsel %vm1090, %v4761, 0
    %v4787 = vsel %vm1090, %v4760, 0
    %4789 = vmatprep.subr.bf16.mxu0 0
    %4790 = vmatpush1.bf16.msra.mxu0 %v4770
    %4791 = vmatprep.subr.bf16.mxu0 0
    %4792 = vmatpush1.bf16.msra.mxu0 %v4771
    %4793 = vmatprep.subr.bf16.mxu0 0
    %4794 = vmatpush1.bf16.msra.mxu0 0
    %4795 = vmatprep.subr.bf16.mxu0 0
    %4796 = vmatpush1.bf16.msra.mxu0 0
    %4797 = vmatprep.subr.bf16.mxu0 0
    %4798 = vmatpush1.bf16.msra.mxu0 0
    %4799 = vmatprep.subr.bf16.mxu0 0
    %4800 = vmatpush1.bf16.msra.mxu0 0
    %4801 = vmatprep.subr.bf16.mxu0 0
    %4802 = vmatpush1.bf16.msra.mxu0 0
    %4803 = vmatprep.subr.bf16.mxu0 0
    %4804 = vmatpush1.bf16.msra.mxu0 0
    %4805 = vmatprep.subr.bf16.mxu0 0
    %4806 = vmatpush1.bf16.msra.mxu0 0
    %4807 = vmatprep.subr.bf16.mxu0 0
    %4808 = vmatpush1.bf16.msra.mxu0 0
    %4809 = vmatprep.subr.bf16.mxu0 0
    %4810 = vmatpush1.bf16.msra.mxu0 0
    %4811 = vmatprep.subr.bf16.mxu0 0
    %4812 = vmatpush1.bf16.msra.mxu0 0
    %4813 = vmatprep.subr.bf16.mxu0 0
    %4814 = vmatpush1.bf16.msra.mxu0 0
    %4815 = vmatprep.subr.bf16.mxu0 0
    %4816 = vmatpush1.bf16.msra.mxu0 0
    %4817 = vmatprep.subr.bf16.mxu0 0
    %4818 = vmatpush1.bf16.msra.mxu0 0
    %4819 = vmatprep.subr.bf16.mxu0 0
    %4820 = vmatpush1.bf16.msra.mxu0 0
    %4821 = vmatprep.mubr.bf16.mxu0 0
    %4822 = vmatmul.mubr.bf16.gmra.mrb[0].mxu0 %v4775
    %v4823 = vpop.f32.mrb[0].mxu0
    %v4824 = vadd.f32 0.0, %v4823
    %v4825 = vpop.f32.mrb[0].mxu0
    %v4826 = vpop.f32.mrb[0].mxu0
    %v4827 = vadd.f32 0.0, %v4826
    %v4828 = vpop.f32.mrb[0].mxu0
    %4829 = vmatprep.mubr.bf16.mxu0 0
    %4830 = vmatmul.mubr.bf16.gmra.mrb[0].mxu0 %v4778
    %v4831 = vpop.f32.mrb[0].mxu0
    %v4832 = vadd.f32 0.0, %v4831
    %v4833 = vpop.f32.mrb[0].mxu0
    %v4834 = vpop.f32.mrb[0].mxu0
    %v4835 = vadd.f32 0.0, %v4834
    %v4836 = vpop.f32.mrb[0].mxu0
    %4837 = vmatprep.mubr.bf16.mxu0 0
    %4838 = vmatmul.mubr.bf16.gmra.mrb[0].mxu0 %v4781
    %v4839 = vpop.f32.mrb[0].mxu0
    %v4840 = vadd.f32 0.0, %v4839
    %v4841 = vpop.f32.mrb[0].mxu0
    %v4842 = vpop.f32.mrb[0].mxu0
    %v4843 = vadd.f32 0.0, %v4842
    %v4844 = vpop.f32.mrb[0].mxu0
    %4845 = vmatprep.mubr.bf16.mxu0 0
    %4846 = vmatmul.mubr.bf16.gmra.mrb[0].mxu0 %v4784
    %v4847 = vpop.f32.mrb[0].mxu0
    %v4848 = vadd.f32 0.0, %v4847
    %v4849 = vpop.f32.mrb[0].mxu0
    %v4850 = vpop.f32.mrb[0].mxu0
    %v4851 = vadd.f32 0.0, %v4850
    %v4852 = vpop.f32.mrb[0].mxu0
    %4853 = vmatprep.mubr.bf16.mxu0 0
    %4854 = vmatmul.mubr.bf16.gmra.mrb[0].mxu0 %v4787
    %v4855 = vpop.f32.mrb[0].mxu0
    %v4856 = vadd.f32 0.0, %v4855
    %v4857 = vpop.f32.mrb[0].mxu0
    %v4858 = vpop.f32.mrb[0].mxu0
    %v4859 = vpop.f32.mrb[0].mxu0
    %4860 = vdwg.mxu0
    %v4861 = vadd.f32 %v4712, %v4824
    %v4862 = vadd.f32 %v4713, %v4827
    %v4863 = vadd.f32 %v4714, %v4832
    %v4864 = vadd.f32 %v4715, %v4835
    %v4865 = vadd.f32 %v4716, %v4840
    %v4866 = vadd.f32 %v4717, %v4843
    %v4867 = vadd.f32 %v4718, %v4848
    %v4868 = vadd.f32 %v4719, %v4851
    %v4869 = vadd.f32 %v4720, %v4856
    %v4870 = vld [vmem:[#allocation2 + $0x4] sm:$0xc]
    %v4871 = vld [vmem:[%s14 + $0x70] sm:$0xf]
    %v4872 = vld [vmem:[%s14 + $0x74] sm:$0xf]
    %v4873 = vld [vmem:[%s14 + $0x78] sm:$0xf]
    %v4874 = vld [vmem:[%s14 + $0x7c] sm:$0xf]
    %v4876 = vunpack.c.l.b16 %v4870
    %v4877 = vpack.c.b16 %v4560, %v4876
    %v4878 = vrot.slane %v4877, 2
    %v4879 = vrot.slane %v4570, 2
    %v4880 = vsel %vm1068, %v4878, %v4879
    %v4881 = vrot.slane %v4571, 2
    %v4882 = vsel %vm1068, %v4879, %v4881
    %v4883 = vrot.slane %v4572, 2
    %v4884 = vsel %vm1068, %v4881, %v4883
    %v4885 = vrot.slane %v4732, 2
    %v4886 = vsel %vm1068, %v4883, %v4885
    %v4891 = vunpack.c.l.b16 %v4871
    %v4892 = vunpack.c.l.b16 %v4872
    %v4893 = vunpack.c.l.b16 %v4873
    %v4894 = vunpack.c.l.b16 %v4874
    %v4895 = vpack.c.b16 %v4892, %v4891
    %v4896 = vpack.c.b16 %v4894, %v4893
    %v4900 = vsel %vm1090, %v4880, 0
    %v4903 = vsel %vm1090, %v4882, 0
    %v4906 = vsel %vm1090, %v4884, 0
    %v4909 = vsel %vm1090, %v4886, 0
    %v4912 = vsel %vm1090, %v4885, 0
    %4914 = vmatprep.subr.bf16.mxu0 0
    %4915 = vmatpush1.bf16.msra.mxu0 %v4895
    %4916 = vmatprep.subr.bf16.mxu0 0
    %4917 = vmatpush1.bf16.msra.mxu0 %v4896
    %4918 = vmatprep.subr.bf16.mxu0 0
    %4919 = vmatpush1.bf16.msra.mxu0 0
    %4920 = vmatprep.subr.bf16.mxu0 0
    %4921 = vmatpush1.bf16.msra.mxu0 0
    %4922 = vmatprep.subr.bf16.mxu0 0
    %4923 = vmatpush1.bf16.msra.mxu0 0
    %4924 = vmatprep.subr.bf16.mxu0 0
    %4925 = vmatpush1.bf16.msra.mxu0 0
    %4926 = vmatprep.subr.bf16.mxu0 0
    %4927 = vmatpush1.bf16.msra.mxu0 0
    %4928 = vmatprep.subr.bf16.mxu0 0
    %4929 = vmatpush1.bf16.msra.mxu0 0
    %4930 = vmatprep.subr.bf16.mxu0 0
    %4931 = vmatpush1.bf16.msra.mxu0 0
    %4932 = vmatprep.subr.bf16.mxu0 0
    %4933 = vmatpush1.bf16.msra.mxu0 0
    %4934 = vmatprep.subr.bf16.mxu0 0
    %4935 = vmatpush1.bf16.msra.mxu0 0
    %4936 = vmatprep.subr.bf16.mxu0 0
    %4937 = vmatpush1.bf16.msra.mxu0 0
    %4938 = vmatprep.subr.bf16.mxu0 0
    %4939 = vmatpush1.bf16.msra.mxu0 0
    %4940 = vmatprep.subr.bf16.mxu0 0
    %4941 = vmatpush1.bf16.msra.mxu0 0
    %4942 = vmatprep.subr.bf16.mxu0 0
    %4943 = vmatpush1.bf16.msra.mxu0 0
    %4944 = vmatprep.subr.bf16.mxu0 0
    %4945 = vmatpush1.bf16.msra.mxu0 0
    %4946 = vmatprep.mubr.bf16.mxu0 0
    %4947 = vmatmul.mubr.bf16.gmra.mrb[0].mxu0 %v4900
    %v4948 = vpop.f32.mrb[0].mxu0
    %v4949 = vadd.f32 0.0, %v4948
    %v4950 = vpop.f32.mrb[0].mxu0
    %v4951 = vpop.f32.mrb[0].mxu0
    %v4952 = vadd.f32 0.0, %v4951
    %v4953 = vpop.f32.mrb[0].mxu0
    %4954 = vmatprep.mubr.bf16.mxu0 0
    %4955 = vmatmul.mubr.bf16.gmra.mrb[0].mxu0 %v4903
    %v4956 = vpop.f32.mrb[0].mxu0
    %v4957 = vadd.f32 0.0, %v4956
    %v4958 = vpop.f32.mrb[0].mxu0
    %v4959 = vpop.f32.mrb[0].mxu0
    %v4960 = vadd.f32 0.0, %v4959
    %v4961 = vpop.f32.mrb[0].mxu0
    %4962 = vmatprep.mubr.bf16.mxu0 0
    %4963 = vmatmul.mubr.bf16.gmra.mrb[0].mxu0 %v4906
    %v4964 = vpop.f32.mrb[0].mxu0
    %v4965 = vadd.f32 0.0, %v4964
    %v4966 = vpop.f32.mrb[0].mxu0
    %v4967 = vpop.f32.mrb[0].mxu0
    %v4968 = vadd.f32 0.0, %v4967
    %v4969 = vpop.f32.mrb[0].mxu0
    %4970 = vmatprep.mubr.bf16.mxu0 0
    %4971 = vmatmul.mubr.bf16.gmra.mrb[0].mxu0 %v4909
    %v4972 = vpop.f32.mrb[0].mxu0
    %v4973 = vadd.f32 0.0, %v4972
    %v4974 = vpop.f32.mrb[0].mxu0
    %v4975 = vpop.f32.mrb[0].mxu0
    %v4976 = vadd.f32 0.0, %v4975
    %v4977 = vpop.f32.mrb[0].mxu0
    %4978 = vmatprep.mubr.bf16.mxu0 0
    %4979 = vmatmul.mubr.bf16.gmra.mrb[0].mxu0 %v4912
    %v4980 = vpop.f32.mrb[0].mxu0
    %v4981 = vadd.f32 0.0, %v4980
    %v4982 = vpop.f32.mrb[0].mxu0
    %v4983 = vpop.f32.mrb[0].mxu0
    %v4984 = vpop.f32.mrb[0].mxu0
    %4985 = vdwg.mxu0
    %v4986 = vadd.f32 %v4861, %v4949
    %v4987 = vadd.f32 %v4862, %v4952
    %v4988 = vadd.f32 %v4863, %v4957
    %v4989 = vadd.f32 %v4864, %v4960
    %v4990 = vadd.f32 %v4865, %v4965
    %v4991 = vadd.f32 %v4866, %v4968
    %v4992 = vadd.f32 %v4867, %v4973
    %v4993 = vadd.f32 %v4868, %v4976
    %v4994 = vadd.f32 %v4869, %v4981
    %v4995 = vld [vmem:[#allocation2 + $0x28] sm:$0x7]
    %v4996 = vld [vmem:[%s14 + $0x80] sm:$0xf]
    %v4997 = vld [vmem:[%s14 + $0x84] sm:$0xf]
    %v4998 = vld [vmem:[%s14 + $0x88] sm:$0xf]
    %v4999 = vld [vmem:[%s14 + $0x8c] sm:$0xf]
    %v5001 = vunpack.c.l.b16 %v4995
    %v5002 = vpack.c.b16 %v5001, %v4567
    %v5004 = vshrl.u32 %v4877, 16
    %v5006 = vrot.slane %v5004, 2
    %v5007 = vshll.u32 %v4877, 16
    %v5009 = vrot.slane %v5007, 3
    %v5010 = vor.u32 %v5006, %v5009
    %v5011 = vrot.slane %v4586, 2
    %v5012 = vrot.slane %v4582, 3
    %v5013 = vor.u32 %v5011, %v5012
    %v5014 = vsel %vm1333, %v5010, %v5013
    %v5015 = vrot.slane %v4594, 2
    %v5016 = vrot.slane %v4590, 3
    %v5017 = vor.u32 %v5015, %v5016
    %v5018 = vsel %vm1333, %v5013, %v5017
    %v5019 = vrot.slane %v4602, 2
    %v5020 = vrot.slane %v4598, 3
    %v5021 = vor.u32 %v5019, %v5020
    %v5022 = vsel %vm1333, %v5017, %v5021
    %v5024 = vshrl.u32 %v5002, 16
    %v5026 = vrot.slane %v5024, 2
    %v5027 = vshll.u32 %v5002, 16
    %v5029 = vrot.slane %v5027, 3
    %v5030 = vor.u32 %v5026, %v5029
    %v5031 = vsel %vm1333, %v5021, %v5030
    %v5036 = vunpack.c.l.b16 %v4996
    %v5037 = vunpack.c.l.b16 %v4997
    %v5038 = vunpack.c.l.b16 %v4998
    %v5039 = vunpack.c.l.b16 %v4999
    %v5040 = vpack.c.b16 %v5037, %v5036
    %v5041 = vpack.c.b16 %v5039, %v5038
    %v5045 = vsel %vm1090, %v5014, 0
    %v5048 = vsel %vm1090, %v5018, 0
    %v5051 = vsel %vm1090, %v5022, 0
    %v5054 = vsel %vm1090, %v5031, 0
    %v5057 = vsel %vm1090, %v5030, 0
    %5059 = vmatprep.subr.bf16.mxu0 0
    %5060 = vmatpush1.bf16.msra.mxu0 %v5040
    %5061 = vmatprep.subr.bf16.mxu0 0
    %5062 = vmatpush1.bf16.msra.mxu0 %v5041
    %5063 = vmatprep.subr.bf16.mxu0 0
    %5064 = vmatpush1.bf16.msra.mxu0 0
    %5065 = vmatprep.subr.bf16.mxu0 0
    %5066 = vmatpush1.bf16.msra.mxu0 0
    %5067 = vmatprep.subr.bf16.mxu0 0
    %5068 = vmatpush1.bf16.msra.mxu0 0
    %5069 = vmatprep.subr.bf16.mxu0 0
    %5070 = vmatpush1.bf16.msra.mxu0 0
    %5071 = vmatprep.subr.bf16.mxu0 0
    %5072 = vmatpush1.bf16.msra.mxu0 0
    %5073 = vmatprep.subr.bf16.mxu0 0
    %5074 = vmatpush1.bf16.msra.mxu0 0
    %5075 = vmatprep.subr.bf16.mxu0 0
    %5076 = vmatpush1.bf16.msra.mxu0 0
    %5077 = vmatprep.subr.bf16.mxu0 0
    %5078 = vmatpush1.bf16.msra.mxu0 0
    %5079 = vmatprep.subr.bf16.mxu0 0
    %5080 = vmatpush1.bf16.msra.mxu0 0
    %5081 = vmatprep.subr.bf16.mxu0 0
    %5082 = vmatpush1.bf16.msra.mxu0 0
    %5083 = vmatprep.subr.bf16.mxu0 0
    %5084 = vmatpush1.bf16.msra.mxu0 0
    %5085 = vmatprep.subr.bf16.mxu0 0
    %5086 = vmatpush1.bf16.msra.mxu0 0
    %5087 = vmatprep.subr.bf16.mxu0 0
    %5088 = vmatpush1.bf16.msra.mxu0 0
    %5089 = vmatprep.subr.bf16.mxu0 0
    %5090 = vmatpush1.bf16.msra.mxu0 0
    %5091 = vmatprep.mubr.bf16.mxu0 0
    %5092 = vmatmul.mubr.bf16.gmra.mrb[0].mxu0 %v5045
    %v5093 = vpop.f32.mrb[0].mxu0
    %v5094 = vadd.f32 0.0, %v5093
    %v5095 = vpop.f32.mrb[0].mxu0
    %v5096 = vpop.f32.mrb[0].mxu0
    %v5097 = vadd.f32 0.0, %v5096
    %v5098 = vpop.f32.mrb[0].mxu0
    %5099 = vmatprep.mubr.bf16.mxu0 0
    %5100 = vmatmul.mubr.bf16.gmra.mrb[0].mxu0 %v5048
    %v5101 = vpop.f32.mrb[0].mxu0
    %v5102 = vadd.f32 0.0, %v5101
    %v5103 = vpop.f32.mrb[0].mxu0
    %v5104 = vpop.f32.mrb[0].mxu0
    %v5105 = vadd.f32 0.0, %v5104
    %v5106 = vpop.f32.mrb[0].mxu0
    %5107 = vmatprep.mubr.bf16.mxu0 0
    %5108 = vmatmul.mubr.bf16.gmra.mrb[0].mxu0 %v5051
    %v5109 = vpop.f32.mrb[0].mxu0
    %v5110 = vadd.f32 0.0, %v5109
    %v5111 = vpop.f32.mrb[0].mxu0
    %v5112 = vpop.f32.mrb[0].mxu0
    %v5113 = vadd.f32 0.0, %v5112
    %v5114 = vpop.f32.mrb[0].mxu0
    %5115 = vmatprep.mubr.bf16.mxu0 0
    %5116 = vmatmul.mubr.bf16.gmra.mrb[0].mxu0 %v5054
    %v5117 = vpop.f32.mrb[0].mxu0
    %v5118 = vadd.f32 0.0, %v5117
    %v5119 = vpop.f32.mrb[0].mxu0
    %v5120 = vpop.f32.mrb[0].mxu0
    %v5121 = vadd.f32 0.0, %v5120
    %v5122 = vpop.f32.mrb[0].mxu0
    %5123 = vmatprep.mubr.bf16.mxu0 0
    %5124 = vmatmul.mubr.bf16.gmra.mrb[0].mxu0 %v5057
    %v5125 = vpop.f32.mrb[0].mxu0
    %v5126 = vadd.f32 0.0, %v5125
    %v5127 = vpop.f32.mrb[0].mxu0
    %v5128 = vpop.f32.mrb[0].mxu0
    %v5129 = vpop.f32.mrb[0].mxu0
    %5130 = vdwg.mxu0
    %v5131 = vadd.f32 %v4986, %v5094
    %v5132 = vadd.f32 %v4987, %v5097
    %v5133 = vadd.f32 %v4988, %v5102
    %v5134 = vadd.f32 %v4989, %v5105
    %v5135 = vadd.f32 %v4990, %v5110
    %v5136 = vadd.f32 %v4991, %v5113
    %v5137 = vadd.f32 %v4992, %v5118
    %v5138 = vadd.f32 %v4993, %v5121
    %v5139 = vadd.f32 %v4994, %v5126
    %v5140 = vld [vmem:[%s15] sm:$0x1]
    %v5142 = vlaneseq
    %v5143 = vshrl.u32 %v5142, 7
    %v5144 = vsub.s32 0, %v5143
    %v5145 = vrot.slane %v5140, %v5144
    %v5147 = vadd.f32 %v5131, %v5145
    %v5148 = vadd.f32 %v5132, %v5145
    %v5149 = vadd.f32 %v5133, %v5145
    %v5150 = vadd.f32 %v5134, %v5145
    %v5151 = vadd.f32 %v5135, %v5145
    %v5152 = vadd.f32 %v5136, %v5145
    %v5153 = vadd.f32 %v5137, %v5145
    %v5154 = vadd.f32 %v5138, %v5145
    %v5155 = vadd.f32 %v5139, %v5145
    %v5156 = vmax.f32 %v5147, 0.0
    %v5157 = vmax.f32 %v5148, 0.0
    %v5158 = vmax.f32 %v5149, 0.0
    %v5159 = vmax.f32 %v5150, 0.0
    %v5160 = vmax.f32 %v5151, 0.0
    %v5161 = vmax.f32 %v5152, 0.0
    %v5162 = vmax.f32 %v5153, 0.0
    %v5163 = vmax.f32 %v5154, 0.0
    %v5164 = vmax.f32 %v5155, 0.0
    %v5165 = vsel %vm960, %v5156, 0.0
    %v5166 = vsel %vm961, %v5157, 0.0
    %v5167 = vsel %vm962, %v5158, 0.0
    %v5168 = vsel %vm963, %v5159, 0.0
    %v5169 = vsel %vm964, %v5160, 0.0
    %v5170 = vsel %vm965, %v5161, 0.0
    %v5171 = vsel %vm966, %v5162, 0.0
    %v5172 = vsel %vm967, %v5163, 0.0
    %v5173 = vsel %vm968, %v5164, 0.0
    %v5174 = vpack.c.bf16 %v5166, %v5165
    %v5175 = vpack.c.bf16 %v5168, %v5167
    %v5176 = vpack.c.bf16 %v5170, %v5169
    %v5177 = vpack.c.bf16 %v5172, %v5171
    %v5178 = vpack.c.bf16 %v5173, %v5173
    %v5184 = vunpack.c.l.b16 %v5174
    %v5185 = vunpack.c.h.b16 %v5174
    %v5186 = vunpack.c.l.b16 %v5175
    %v5187 = vunpack.c.h.b16 %v5175
    %v5188 = vunpack.c.l.b16 %v5176
    %v5189 = vunpack.c.h.b16 %v5176
    %v5190 = vunpack.c.l.b16 %v5177
    %v5191 = vunpack.c.h.b16 %v5177
    %v5192 = vunpack.c.l.b16 %v5178
    %v5193 = vpack.c.b16 %v5184, %v5184
    %v5194 = vpack.c.b16 %v5185, %v5185
    %v5195 = vpack.c.b16 %v5186, %v5186
    %v5196 = vpack.c.b16 %v5187, %v5187
    %v5197 = vpack.c.b16 %v5188, %v5188
    %v5198 = vpack.c.b16 %v5189, %v5189
    %v5199 = vpack.c.b16 %v5190, %v5190
    %v5200 = vpack.c.b16 %v5191, %v5191
    %v5201 = vpack.c.b16 %v5192, %v5192
    %5211 = vst.msk [vmem:[#allocation3 + $0x4] sm:$0xf] %vm70, %v5193
    %5212 = vst.msk [vmem:[#allocation3 + $0x8] sm:$0xf] %vm70, %v5194
    %5213 = vst.msk [vmem:[#allocation3 + $0xc] sm:$0xf] %vm70, %v5195
    %5214 = vst.msk [vmem:[#allocation3 + $0x10] sm:$0xf] %vm70, %v5196
    %5215 = vst.msk [vmem:[#allocation3 + $0x14] sm:$0xf] %vm70, %v5197
    %5216 = vst.msk [vmem:[#allocation3 + $0x18] sm:$0xf] %vm70, %v5198
    %5217 = vst.msk [vmem:[#allocation3 + $0x1c] sm:$0xf] %vm70, %v5199
    %5218 = vst.msk [vmem:[#allocation3 + $0x20] sm:$0xf] %vm70, %v5200
    %5219 = vst.msk [vmem:[#allocation3 + $0x24] sm:$0xf] %vm70, %v5201
    %v5220 = vld [vmem:[#allocation3] sm:$0xe]
    %v5221 = vld [vmem:[#allocation3 + $0x4] sm:$0xf]
    %v5222 = vld [vmem:[#allocation3 + $0x8] sm:$0xf]
    %v5223 = vld [vmem:[#allocation3 + $0xc] sm:$0xf]
    %v5224 = vld [vmem:[#allocation3 + $0x10] sm:$0xf]
    %v5225 = vld [vmem:[#allocation3 + $0x14] sm:$0xf]
    %v5226 = vld [vmem:[#allocation3 + $0x18] sm:$0xf]
    %v5227 = vld [vmem:[#allocation3 + $0x1c] sm:$0xf]
    %v5228 = vld [vmem:[#allocation3 + $0x20] sm:$0xf]
    %v5229 = vld [vmem:[#allocation3 + $0x24] sm:$0x3]
    %v5230 = vld [vmem:[%s16] sm:$0xf]
    %v5231 = vld [vmem:[%s16 + $0x4] sm:$0xf]
    %v5232 = vld [vmem:[%s16 + $0x8] sm:$0xf]
    %v5233 = vld [vmem:[%s16 + $0xc] sm:$0xf]
    %v5234 = vld [vmem:[%s16 + $0x10] sm:$0xf]
    %v5235 = vld [vmem:[%s16 + $0x14] sm:$0xf]
    %v5236 = vld [vmem:[%s16 + $0x18] sm:$0xf]
    %v5237 = vld [vmem:[%s16 + $0x1c] sm:$0xf]
    %v5238 = vld [vmem:[#allocation3] sm:$0xc]
    %v5239 = vld [vmem:[%s16 + $0x20] sm:$0xf]
    %v5240 = vld [vmem:[%s16 + $0x24] sm:$0xf]
    %v5241 = vld [vmem:[%s16 + $0x28] sm:$0xf]
    %v5242 = vld [vmem:[%s16 + $0x2c] sm:$0xf]
    %v5243 = vld [vmem:[%s16 + $0x30] sm:$0xf]
    %v5244 = vld [vmem:[%s16 + $0x34] sm:$0xf]
    %v5245 = vld [vmem:[%s16 + $0x38] sm:$0xf]
    %v5246 = vld [vmem:[%s16 + $0x3c] sm:$0xf]
    %v5257 = vunpack.c.l.b16 %v5238
    %v5258 = vunpack.c.l.b16 %v5221
    %v5259 = vunpack.c.l.b16 %v5222
    %v5260 = vunpack.c.l.b16 %v5223
    %v5261 = vunpack.c.l.b16 %v5224
    %v5262 = vunpack.c.l.b16 %v5225
    %v5263 = vunpack.c.l.b16 %v5226
    %v5264 = vunpack.c.l.b16 %v5227
    %v5265 = vunpack.c.l.b16 %v5228
    %v5266 = vunpack.c.l.b16 %v5229
    %v5267 = vpack.c.b16 %v5258, %v5257
    %v5268 = vpack.c.b16 %v5260, %v5259
    %v5269 = vpack.c.b16 %v5262, %v5261
    %v5270 = vpack.c.b16 %v5264, %v5263
    %v5271 = vpack.c.b16 %v5266, %v5265
    %v5272 = vrot.slane %v5267, 2
    %v5273 = vrot.slane %v5268, 2
    %v5274 = vsel %vm1068, %v5272, %v5273
    %v5275 = vrot.slane %v5269, 2
    %v5276 = vsel %vm1068, %v5273, %v5275
    %v5277 = vrot.slane %v5270, 2
    %v5278 = vsel %vm1068, %v5275, %v5277
    %v5279 = vrot.slane %v5271, 2
    %v5280 = vsel %vm1068, %v5277, %v5279
    %v5289 = vunpack.c.l.b16 %v5239
    %v5290 = vunpack.c.l.b16 %v5240
    %v5291 = vunpack.c.l.b16 %v5241
    %v5292 = vunpack.c.l.b16 %v5242
    %v5293 = vunpack.c.l.b16 %v5243
    %v5294 = vunpack.c.l.b16 %v5244
    %v5295 = vunpack.c.l.b16 %v5245
    %v5296 = vunpack.c.l.b16 %v5246
    %v5297 = vpack.c.b16 %v5290, %v5289
    %v5298 = vpack.c.b16 %v5292, %v5291
    %v5299 = vpack.c.b16 %v5294, %v5293
    %v5300 = vpack.c.b16 %v5296, %v5295
    %vm5305 = vcmask 523264
    %v5307 = vsel %vm5305, %v5274, 0
    %v5310 = vsel %vm5305, %v5276, 0
    %v5313 = vsel %vm5305, %v5278, 0
    %v5316 = vsel %vm5305, %v5280, 0
    %v5319 = vsel %vm5305, %v5279, 0
    %5321 = vmatprep.subr.bf16.mxu0 0
    %5322 = vmatpush1.bf16.msra.mxu0 %v5297
    %5323 = vmatprep.subr.bf16.mxu0 0
    %5324 = vmatpush1.bf16.msra.mxu0 %v5298
    %5325 = vmatprep.subr.bf16.mxu0 0
    %5326 = vmatpush1.bf16.msra.mxu0 %v5299
    %5327 = vmatprep.subr.bf16.mxu0 0
    %5328 = vmatpush1.bf16.msra.mxu0 %v5300
    %5329 = vmatprep.subr.bf16.mxu0 0
    %5330 = vmatpush1.bf16.msra.mxu0 0
    %5331 = vmatprep.subr.bf16.mxu0 0
    %5332 = vmatpush1.bf16.msra.mxu0 0
    %5333 = vmatprep.subr.bf16.mxu0 0
    %5334 = vmatpush1.bf16.msra.mxu0 0
    %5335 = vmatprep.subr.bf16.mxu0 0
    %5336 = vmatpush1.bf16.msra.mxu0 0
    %5337 = vmatprep.subr.bf16.mxu0 0
    %5338 = vmatpush1.bf16.msra.mxu0 0
    %5339 = vmatprep.subr.bf16.mxu0 0
    %5340 = vmatpush1.bf16.msra.mxu0 0
    %5341 = vmatprep.subr.bf16.mxu0 0
    %5342 = vmatpush1.bf16.msra.mxu0 0
    %5343 = vmatprep.subr.bf16.mxu0 0
    %5344 = vmatpush1.bf16.msra.mxu0 0
    %5345 = vmatprep.subr.bf16.mxu0 0
    %5346 = vmatpush1.bf16.msra.mxu0 0
    %5347 = vmatprep.subr.bf16.mxu0 0
    %5348 = vmatpush1.bf16.msra.mxu0 0
    %5349 = vmatprep.subr.bf16.mxu0 0
    %5350 = vmatpush1.bf16.msra.mxu0 0
    %5351 = vmatprep.subr.bf16.mxu0 0
    %5352 = vmatpush1.bf16.msra.mxu0 0
    %5353 = vmatprep.mubr.bf16.mxu0 0
    %5354 = vmatmul.mubr.bf16.gmra.mrb[0].mxu0 %v5307
    %v5355 = vpop.f32.mrb[0].mxu0
    %v5356 = vadd.f32 0.0, %v5355
    %v5357 = vpop.f32.mrb[0].mxu0
    %v5358 = vpop.f32.mrb[0].mxu0
    %v5359 = vadd.f32 0.0, %v5358
    %v5360 = vpop.f32.mrb[0].mxu0
    %5361 = vmatprep.mubr.bf16.mxu0 0
    %5362 = vmatmul.mubr.bf16.gmra.mrb[0].mxu0 %v5310
    %v5363 = vpop.f32.mrb[0].mxu0
    %v5364 = vadd.f32 0.0, %v5363
    %v5365 = vpop.f32.mrb[0].mxu0
    %v5366 = vpop.f32.mrb[0].mxu0
    %v5367 = vadd.f32 0.0, %v5366
    %v5368 = vpop.f32.mrb[0].mxu0
    %5369 = vmatprep.mubr.bf16.mxu0 0
    %5370 = vmatmul.mubr.bf16.gmra.mrb[0].mxu0 %v5313
    %v5371 = vpop.f32.mrb[0].mxu0
    %v5372 = vadd.f32 0.0, %v5371
    %v5373 = vpop.f32.mrb[0].mxu0
    %v5374 = vpop.f32.mrb[0].mxu0
    %v5375 = vadd.f32 0.0, %v5374
    %v5376 = vpop.f32.mrb[0].mxu0
    %5377 = vmatprep.mubr.bf16.mxu0 0
    %5378 = vmatmul.mubr.bf16.gmra.mrb[0].mxu0 %v5316
    %v5379 = vpop.f32.mrb[0].mxu0
    %v5380 = vadd.f32 0.0, %v5379
    %v5381 = vpop.f32.mrb[0].mxu0
    %v5382 = vpop.f32.mrb[0].mxu0
    %v5383 = vadd.f32 0.0, %v5382
    %v5384 = vpop.f32.mrb[0].mxu0
    %5385 = vmatprep.mubr.bf16.mxu0 0
    %5386 = vmatmul.mubr.bf16.gmra.mrb[0].mxu0 %v5319
    %v5387 = vpop.f32.mrb[0].mxu0
    %v5388 = vadd.f32 0.0, %v5387
    %v5389 = vpop.f32.mrb[0].mxu0
    %v5390 = vpop.f32.mrb[0].mxu0
    %v5391 = vpop.f32.mrb[0].mxu0
    %5392 = vdwg.mxu0
    %v5394 = vunpack.c.l.b16 %v5220
    %v5395 = vpack.c.b16 %v5258, %v5394
    %v5397 = vshrl.u32 %v5395, 16
    %v5399 = vrot.slane %v5397, 1
    %v5400 = vshll.u32 %v5395, 16
    %v5402 = vrot.slane %v5400, 2
    %v5403 = vor.u32 %v5399, %v5402
    %v5405 = vshrl.u32 %v5268, 16
    %v5407 = vrot.slane %v5405, 1
    %v5408 = vshll.u32 %v5268, 16
    %v5410 = vrot.slane %v5408, 2
    %v5411 = vor.u32 %v5407, %v5410
    %v5412 = vsel %vm1181, %v5403, %v5411
    %v5414 = vshrl.u32 %v5269, 16
    %v5416 = vrot.slane %v5414, 1
    %v5417 = vshll.u32 %v5269, 16
    %v5419 = vrot.slane %v5417, 2
    %v5420 = vor.u32 %v5416, %v5419
    %v5421 = vsel %vm1181, %v5411, %v5420
    %v5423 = vshrl.u32 %v5270, 16
    %v5425 = vrot.slane %v5423, 1
    %v5426 = vshll.u32 %v5270, 16
    %v5428 = vrot.slane %v5426, 2
    %v5429 = vor.u32 %v5425, %v5428
    %v5430 = vsel %vm1181, %v5420, %v5429
    %v5432 = vshrl.u32 %v5271, 16
    %v5434 = vrot.slane %v5432, 1
    %v5435 = vshll.u32 %v5271, 16
    %v5437 = vrot.slane %v5435, 2
    %v5438 = vor.u32 %v5434, %v5437
    %v5439 = vsel %vm1181, %v5429, %v5438
    %v5448 = vunpack.c.l.b16 %v5230
    %v5449 = vunpack.c.l.b16 %v5231
    %v5450 = vunpack.c.l.b16 %v5232
    %v5451 = vunpack.c.l.b16 %v5233
    %v5452 = vunpack.c.l.b16 %v5234
    %v5453 = vunpack.c.l.b16 %v5235
    %v5454 = vunpack.c.l.b16 %v5236
    %v5455 = vunpack.c.l.b16 %v5237
    %v5456 = vpack.c.b16 %v5449, %v5448
    %v5457 = vpack.c.b16 %v5451, %v5450
    %v5458 = vpack.c.b16 %v5453, %v5452
    %v5459 = vpack.c.b16 %v5455, %v5454
    %v5465 = vsel %vm5305, %v5412, 0
    %v5468 = vsel %vm5305, %v5421, 0
    %v5471 = vsel %vm5305, %v5430, 0
    %v5474 = vsel %vm5305, %v5439, 0
    %v5477 = vsel %vm5305, %v5438, 0
    %5479 = vmatprep.subr.bf16.mxu0 0
    %5480 = vmatpush1.bf16.msra.mxu0 %v5456
    %5481 = vmatprep.subr.bf16.mxu0 0
    %5482 = vmatpush1.bf16.msra.mxu0 %v5457
    %5483 = vmatprep.subr.bf16.mxu0 0
    %5484 = vmatpush1.bf16.msra.mxu0 %v5458
    %5485 = vmatprep.subr.bf16.mxu0 0
    %5486 = vmatpush1.bf16.msra.mxu0 %v5459
    %5487 = vmatprep.subr.bf16.mxu0 0
    %5488 = vmatpush1.bf16.msra.mxu0 0
    %5489 = vmatprep.subr.bf16.mxu0 0
    %5490 = vmatpush1.bf16.msra.mxu0 0
    %5491 = vmatprep.subr.bf16.mxu0 0
    %5492 = vmatpush1.bf16.msra.mxu0 0
    %5493 = vmatprep.subr.bf16.mxu0 0
    %5494 = vmatpush1.bf16.msra.mxu0 0
    %5495 = vmatprep.subr.bf16.mxu0 0
    %5496 = vmatpush1.bf16.msra.mxu0 0
    %5497 = vmatprep.subr.bf16.mxu0 0
    %5498 = vmatpush1.bf16.msra.mxu0 0
    %5499 = vmatprep.subr.bf16.mxu0 0
    %5500 = vmatpush1.bf16.msra.mxu0 0
    %5501 = vmatprep.subr.bf16.mxu0 0
    %5502 = vmatpush1.bf16.msra.mxu0 0
    %5503 = vmatprep.subr.bf16.mxu0 0
    %5504 = vmatpush1.bf16.msra.mxu0 0
    %5505 = vmatprep.subr.bf16.mxu0 0
    %5506 = vmatpush1.bf16.msra.mxu0 0
    %5507 = vmatprep.subr.bf16.mxu0 0
    %5508 = vmatpush1.bf16.msra.mxu0 0
    %5509 = vmatprep.subr.bf16.mxu0 0
    %5510 = vmatpush1.bf16.msra.mxu0 0
    %5511 = vmatprep.mubr.bf16.mxu0 0
    %5512 = vmatmul.mubr.bf16.gmra.mrb[0].mxu0 %v5465
    %v5513 = vpop.f32.mrb[0].mxu0
    %v5514 = vadd.f32 %v5356, %v5513
    %v5515 = vpop.f32.mrb[0].mxu0
    %v5516 = vpop.f32.mrb[0].mxu0
    %v5517 = vadd.f32 %v5359, %v5516
    %v5518 = vpop.f32.mrb[0].mxu0
    %5519 = vmatprep.mubr.bf16.mxu0 0
    %5520 = vmatmul.mubr.bf16.gmra.mrb[0].mxu0 %v5468
    %v5521 = vpop.f32.mrb[0].mxu0
    %v5522 = vadd.f32 %v5364, %v5521
    %v5523 = vpop.f32.mrb[0].mxu0
    %v5524 = vpop.f32.mrb[0].mxu0
    %v5525 = vadd.f32 %v5367, %v5524
    %v5526 = vpop.f32.mrb[0].mxu0
    %5527 = vmatprep.mubr.bf16.mxu0 0
    %5528 = vmatmul.mubr.bf16.gmra.mrb[0].mxu0 %v5471
    %v5529 = vpop.f32.mrb[0].mxu0
    %v5530 = vadd.f32 %v5372, %v5529
    %v5531 = vpop.f32.mrb[0].mxu0
    %v5532 = vpop.f32.mrb[0].mxu0
    %v5533 = vadd.f32 %v5375, %v5532
    %v5534 = vpop.f32.mrb[0].mxu0
    %5535 = vmatprep.mubr.bf16.mxu0 0
    %5536 = vmatmul.mubr.bf16.gmra.mrb[0].mxu0 %v5474
    %v5537 = vpop.f32.mrb[0].mxu0
    %v5538 = vadd.f32 %v5380, %v5537
    %v5539 = vpop.f32.mrb[0].mxu0
    %v5540 = vpop.f32.mrb[0].mxu0
    %v5541 = vadd.f32 %v5383, %v5540
    %v5542 = vpop.f32.mrb[0].mxu0
    %5543 = vmatprep.mubr.bf16.mxu0 0
    %5544 = vmatmul.mubr.bf16.gmra.mrb[0].mxu0 %v5477
    %v5545 = vpop.f32.mrb[0].mxu0
    %v5546 = vadd.f32 %v5388, %v5545
    %v5547 = vpop.f32.mrb[0].mxu0
    %v5548 = vpop.f32.mrb[0].mxu0
    %v5549 = vpop.f32.mrb[0].mxu0
    %5550 = vdwg.mxu0
    %v5551 = vld [vmem:[#allocation3 + $0x24] sm:$0x7]
    %v5552 = vld [vmem:[%s16 + $0x40] sm:$0xf]
    %v5553 = vld [vmem:[%s16 + $0x44] sm:$0xf]
    %v5554 = vld [vmem:[%s16 + $0x48] sm:$0xf]
    %v5555 = vld [vmem:[%s16 + $0x4c] sm:$0xf]
    %v5556 = vld [vmem:[%s16 + $0x50] sm:$0xf]
    %v5557 = vld [vmem:[%s16 + $0x54] sm:$0xf]
    %v5558 = vld [vmem:[%s16 + $0x58] sm:$0xf]
    %v5559 = vld [vmem:[%s16 + $0x5c] sm:$0xf]
    %v5561 = vunpack.c.l.b16 %v5551
    %v5562 = vpack.c.b16 %v5561, %v5265
    %v5564 = vshrl.u32 %v5267, 16
    %v5566 = vrot.slane %v5564, 2
    %v5567 = vshll.u32 %v5267, 16
    %v5569 = vrot.slane %v5567, 3
    %v5570 = vor.u32 %v5566, %v5569
    %v5571 = vrot.slane %v5405, 2
    %v5572 = vrot.slane %v5408, 3
    %v5573 = vor.u32 %v5571, %v5572
    %v5574 = vsel %vm1333, %v5570, %v5573
    %v5575 = vrot.slane %v5414, 2
    %v5576 = vrot.slane %v5417, 3
    %v5577 = vor.u32 %v5575, %v5576
    %v5578 = vsel %vm1333, %v5573, %v5577
    %v5579 = vrot.slane %v5423, 2
    %v5580 = vrot.slane %v5426, 3
    %v5581 = vor.u32 %v5579, %v5580
    %v5582 = vsel %vm1333, %v5577, %v5581
    %v5584 = vshrl.u32 %v5562, 16
    %v5586 = vrot.slane %v5584, 2
    %v5587 = vshll.u32 %v5562, 16
    %v5589 = vrot.slane %v5587, 3
    %v5590 = vor.u32 %v5586, %v5589
    %v5591 = vsel %vm1333, %v5581, %v5590
    %v5600 = vunpack.c.l.b16 %v5552
    %v5601 = vunpack.c.l.b16 %v5553
    %v5602 = vunpack.c.l.b16 %v5554
    %v5603 = vunpack.c.l.b16 %v5555
    %v5604 = vunpack.c.l.b16 %v5556
    %v5605 = vunpack.c.l.b16 %v5557
    %v5606 = vunpack.c.l.b16 %v5558
    %v5607 = vunpack.c.l.b16 %v5559
    %v5608 = vpack.c.b16 %v5601, %v5600
    %v5609 = vpack.c.b16 %v5603, %v5602
    %v5610 = vpack.c.b16 %v5605, %v5604
    %v5611 = vpack.c.b16 %v5607, %v5606
    %v5617 = vsel %vm5305, %v5574, 0
    %v5620 = vsel %vm5305, %v5578, 0
    %v5623 = vsel %vm5305, %v5582, 0
    %v5626 = vsel %vm5305, %v5591, 0
    %v5629 = vsel %vm5305, %v5590, 0
    %5631 = vmatprep.subr.bf16.mxu0 0
    %5632 = vmatpush1.bf16.msra.mxu0 %v5608
    %5633 = vmatprep.subr.bf16.mxu0 0
    %5634 = vmatpush1.bf16.msra.mxu0 %v5609
    %5635 = vmatprep.subr.bf16.mxu0 0
    %5636 = vmatpush1.bf16.msra.mxu0 %v5610
    %5637 = vmatprep.subr.bf16.mxu0 0
    %5638 = vmatpush1.bf16.msra.mxu0 %v5611
    %5639 = vmatprep.subr.bf16.mxu0 0
    %5640 = vmatpush1.bf16.msra.mxu0 0
    %5641 = vmatprep.subr.bf16.mxu0 0
    %5642 = vmatpush1.bf16.msra.mxu0 0
    %5643 = vmatprep.subr.bf16.mxu0 0
    %5644 = vmatpush1.bf16.msra.mxu0 0
    %5645 = vmatprep.subr.bf16.mxu0 0
    %5646 = vmatpush1.bf16.msra.mxu0 0
    %5647 = vmatprep.subr.bf16.mxu0 0
    %5648 = vmatpush1.bf16.msra.mxu0 0
    %5649 = vmatprep.subr.bf16.mxu0 0
    %5650 = vmatpush1.bf16.msra.mxu0 0
    %5651 = vmatprep.subr.bf16.mxu0 0
    %5652 = vmatpush1.bf16.msra.mxu0 0
    %5653 = vmatprep.subr.bf16.mxu0 0
    %5654 = vmatpush1.bf16.msra.mxu0 0
    %5655 = vmatprep.subr.bf16.mxu0 0
    %5656 = vmatpush1.bf16.msra.mxu0 0
    %5657 = vmatprep.subr.bf16.mxu0 0
    %5658 = vmatpush1.bf16.msra.mxu0 0
    %5659 = vmatprep.subr.bf16.mxu0 0
    %5660 = vmatpush1.bf16.msra.mxu0 0
    %5661 = vmatprep.subr.bf16.mxu0 0
    %5662 = vmatpush1.bf16.msra.mxu0 0
    %5663 = vmatprep.mubr.bf16.mxu0 0
    %5664 = vmatmul.mubr.bf16.gmra.mrb[0].mxu0 %v5617
    %v5665 = vpop.f32.mrb[0].mxu0
    %v5666 = vadd.f32 0.0, %v5665
    %v5667 = vpop.f32.mrb[0].mxu0
    %v5668 = vpop.f32.mrb[0].mxu0
    %v5669 = vadd.f32 0.0, %v5668
    %v5670 = vpop.f32.mrb[0].mxu0
    %5671 = vmatprep.mubr.bf16.mxu0 0
    %5672 = vmatmul.mubr.bf16.gmra.mrb[0].mxu0 %v5620
    %v5673 = vpop.f32.mrb[0].mxu0
    %v5674 = vadd.f32 0.0, %v5673
    %v5675 = vpop.f32.mrb[0].mxu0
    %v5676 = vpop.f32.mrb[0].mxu0
    %v5677 = vadd.f32 0.0, %v5676
    %v5678 = vpop.f32.mrb[0].mxu0
    %5679 = vmatprep.mubr.bf16.mxu0 0
    %5680 = vmatmul.mubr.bf16.gmra.mrb[0].mxu0 %v5623
    %v5681 = vpop.f32.mrb[0].mxu0
    %v5682 = vadd.f32 0.0, %v5681
    %v5683 = vpop.f32.mrb[0].mxu0
    %v5684 = vpop.f32.mrb[0].mxu0
    %v5685 = vadd.f32 0.0, %v5684
    %v5686 = vpop.f32.mrb[0].mxu0
    %5687 = vmatprep.mubr.bf16.mxu0 0
    %5688 = vmatmul.mubr.bf16.gmra.mrb[0].mxu0 %v5626
    %v5689 = vpop.f32.mrb[0].mxu0
    %v5690 = vadd.f32 0.0, %v5689
    %v5691 = vpop.f32.mrb[0].mxu0
    %v5692 = vpop.f32.mrb[0].mxu0
    %v5693 = vadd.f32 0.0, %v5692
    %v5694 = vpop.f32.mrb[0].mxu0
    %5695 = vmatprep.mubr.bf16.mxu0 0
    %5696 = vmatmul.mubr.bf16.gmra.mrb[0].mxu0 %v5629
    %v5697 = vpop.f32.mrb[0].mxu0
    %v5698 = vadd.f32 0.0, %v5697
    %v5699 = vpop.f32.mrb[0].mxu0
    %v5700 = vpop.f32.mrb[0].mxu0
    %v5701 = vpop.f32.mrb[0].mxu0
    %5702 = vdwg.mxu0
    %v5703 = vadd.f32 %v5514, %v5666
    %v5704 = vadd.f32 %v5517, %v5669
    %v5705 = vadd.f32 %v5522, %v5674
    %v5706 = vadd.f32 %v5525, %v5677
    %v5707 = vadd.f32 %v5530, %v5682
    %v5708 = vadd.f32 %v5533, %v5685
    %v5709 = vadd.f32 %v5538, %v5690
    %v5710 = vadd.f32 %v5541, %v5693
    %v5711 = vadd.f32 %v5546, %v5698
    %v5712 = vld [vmem:[#allocation3] sm:$0x8]
    %v5713 = vld [vmem:[#allocation3 + $0x24] sm:$0xf]
    %v5714 = vld [vmem:[%s16 + $0x60] sm:$0xf]
    %v5715 = vld [vmem:[%s16 + $0x64] sm:$0xf]
    %v5716 = vld [vmem:[%s16 + $0x68] sm:$0xf]
    %v5717 = vld [vmem:[%s16 + $0x6c] sm:$0xf]
    %v5718 = vld [vmem:[%s16 + $0x70] sm:$0xf]
    %v5719 = vld [vmem:[%s16 + $0x74] sm:$0xf]
    %v5720 = vld [vmem:[%s16 + $0x78] sm:$0xf]
    %v5721 = vld [vmem:[%s16 + $0x7c] sm:$0xf]
    %v5724 = vunpack.c.l.b16 %v5712
    %v5725 = vunpack.c.l.b16 %v5713
    %v5726 = vpack.c.b16 %v5258, %v5724
    %v5727 = vpack.c.b16 %v5725, %v5265
    %v5729 = vshrl.u32 %v5726, 16
    %v5731 = vrot.slane %v5729, 3
    %v5732 = vshll.u32 %v5726, 16
    %v5734 = vrot.slane %v5732, 4
    %v5735 = vor.u32 %v5731, %v5734
    %v5736 = vrot.slane %v5405, 3
    %v5737 = vrot.slane %v5408, 4
    %v5738 = vor.u32 %v5736, %v5737
    %v5739 = vsel %vm1483, %v5735, %v5738
    %v5740 = vrot.slane %v5414, 3
    %v5741 = vrot.slane %v5417, 4
    %v5742 = vor.u32 %v5740, %v5741
    %v5743 = vsel %vm1483, %v5738, %v5742
    %v5744 = vrot.slane %v5423, 3
    %v5745 = vrot.slane %v5426, 4
    %v5746 = vor.u32 %v5744, %v5745
    %v5747 = vsel %vm1483, %v5742, %v5746
    %v5749 = vshrl.u32 %v5727, 16
    %v5751 = vrot.slane %v5749, 3
    %v5752 = vshll.u32 %v5727, 16
    %v5754 = vrot.slane %v5752, 4
    %v5755 = vor.u32 %v5751, %v5754
    %v5756 = vsel %vm1483, %v5746, %v5755
    %v5765 = vunpack.c.l.b16 %v5714
    %v5766 = vunpack.c.l.b16 %v5715
    %v5767 = vunpack.c.l.b16 %v5716
    %v5768 = vunpack.c.l.b16 %v5717
    %v5769 = vunpack.c.l.b16 %v5718
    %v5770 = vunpack.c.l.b16 %v5719
    %v5771 = vunpack.c.l.b16 %v5720
    %v5772 = vunpack.c.l.b16 %v5721
    %v5773 = vpack.c.b16 %v5766, %v5765
    %v5774 = vpack.c.b16 %v5768, %v5767
    %v5775 = vpack.c.b16 %v5770, %v5769
    %v5776 = vpack.c.b16 %v5772, %v5771
    %v5782 = vsel %vm5305, %v5739, 0
    %v5785 = vsel %vm5305, %v5743, 0
    %v5788 = vsel %vm5305, %v5747, 0
    %v5791 = vsel %vm5305, %v5756, 0
    %v5794 = vsel %vm5305, %v5755, 0
    %5796 = vmatprep.subr.bf16.mxu0 0
    %5797 = vmatpush1.bf16.msra.mxu0 %v5773
    %5798 = vmatprep.subr.bf16.mxu0 0
    %5799 = vmatpush1.bf16.msra.mxu0 %v5774
    %5800 = vmatprep.subr.bf16.mxu0 0
    %5801 = vmatpush1.bf16.msra.mxu0 %v5775
    %5802 = vmatprep.subr.bf16.mxu0 0
    %5803 = vmatpush1.bf16.msra.mxu0 %v5776
    %5804 = vmatprep.subr.bf16.mxu0 0
    %5805 = vmatpush1.bf16.msra.mxu0 0
    %5806 = vmatprep.subr.bf16.mxu0 0
    %5807 = vmatpush1.bf16.msra.mxu0 0
    %5808 = vmatprep.subr.bf16.mxu0 0
    %5809 = vmatpush1.bf16.msra.mxu0 0
    %5810 = vmatprep.subr.bf16.mxu0 0
    %5811 = vmatpush1.bf16.msra.mxu0 0
    %5812 = vmatprep.subr.bf16.mxu0 0
    %5813 = vmatpush1.bf16.msra.mxu0 0
    %5814 = vmatprep.subr.bf16.mxu0 0
    %5815 = vmatpush1.bf16.msra.mxu0 0
    %5816 = vmatprep.subr.bf16.mxu0 0
    %5817 = vmatpush1.bf16.msra.mxu0 0
    %5818 = vmatprep.subr.bf16.mxu0 0
    %5819 = vmatpush1.bf16.msra.mxu0 0
    %5820 = vmatprep.subr.bf16.mxu0 0
    %5821 = vmatpush1.bf16.msra.mxu0 0
    %5822 = vmatprep.subr.bf16.mxu0 0
    %5823 = vmatpush1.bf16.msra.mxu0 0
    %5824 = vmatprep.subr.bf16.mxu0 0
    %5825 = vmatpush1.bf16.msra.mxu0 0
    %5826 = vmatprep.subr.bf16.mxu0 0
    %5827 = vmatpush1.bf16.msra.mxu0 0
    %5828 = vmatprep.mubr.bf16.mxu0 0
    %5829 = vmatmul.mubr.bf16.gmra.mrb[0].mxu0 %v5782
    %v5830 = vpop.f32.mrb[0].mxu0
    %v5831 = vadd.f32 0.0, %v5830
    %v5832 = vpop.f32.mrb[0].mxu0
    %v5833 = vpop.f32.mrb[0].mxu0
    %v5834 = vadd.f32 0.0, %v5833
    %v5835 = vpop.f32.mrb[0].mxu0
    %5836 = vmatprep.mubr.bf16.mxu0 0
    %5837 = vmatmul.mubr.bf16.gmra.mrb[0].mxu0 %v5785
    %v5838 = vpop.f32.mrb[0].mxu0
    %v5839 = vadd.f32 0.0, %v5838
    %v5840 = vpop.f32.mrb[0].mxu0
    %v5841 = vpop.f32.mrb[0].mxu0
    %v5842 = vadd.f32 0.0, %v5841
    %v5843 = vpop.f32.mrb[0].mxu0
    %5844 = vmatprep.mubr.bf16.mxu0 0
    %5845 = vmatmul.mubr.bf16.gmra.mrb[0].mxu0 %v5788
    %v5846 = vpop.f32.mrb[0].mxu0
    %v5847 = vadd.f32 0.0, %v5846
    %v5848 = vpop.f32.mrb[0].mxu0
    %v5849 = vpop.f32.mrb[0].mxu0
    %v5850 = vadd.f32 0.0, %v5849
    %v5851 = vpop.f32.mrb[0].mxu0
    %5852 = vmatprep.mubr.bf16.mxu0 0
    %5853 = vmatmul.mubr.bf16.gmra.mrb[0].mxu0 %v5791
    %v5854 = vpop.f32.mrb[0].mxu0
    %v5855 = vadd.f32 0.0, %v5854
    %v5856 = vpop.f32.mrb[0].mxu0
    %v5857 = vpop.f32.mrb[0].mxu0
    %v5858 = vadd.f32 0.0, %v5857
    %v5859 = vpop.f32.mrb[0].mxu0
    %5860 = vmatprep.mubr.bf16.mxu0 0
    %5861 = vmatmul.mubr.bf16.gmra.mrb[0].mxu0 %v5794
    %v5862 = vpop.f32.mrb[0].mxu0
    %v5863 = vadd.f32 0.0, %v5862
    %v5864 = vpop.f32.mrb[0].mxu0
    %v5865 = vpop.f32.mrb[0].mxu0
    %v5866 = vpop.f32.mrb[0].mxu0
    %5867 = vdwg.mxu0
    %v5868 = vadd.f32 %v5703, %v5831
    %v5869 = vadd.f32 %v5704, %v5834
    %v5870 = vadd.f32 %v5705, %v5839
    %v5871 = vadd.f32 %v5706, %v5842
    %v5872 = vadd.f32 %v5707, %v5847
    %v5873 = vadd.f32 %v5708, %v5850
    %v5874 = vadd.f32 %v5709, %v5855
    %v5875 = vadd.f32 %v5710, %v5858
    %v5876 = vadd.f32 %v5711, %v5863
    %v5877 = vld [vmem:[%s16 + $0x80] sm:$0xf]
    %v5878 = vld [vmem:[%s16 + $0x84] sm:$0xf]
    %v5879 = vld [vmem:[%s16 + $0x88] sm:$0xf]
    %v5880 = vld [vmem:[%s16 + $0x8c] sm:$0xf]
    %v5881 = vld [vmem:[%s16 + $0x90] sm:$0xf]
    %v5882 = vld [vmem:[%s16 + $0x94] sm:$0xf]
    %v5883 = vld [vmem:[%s16 + $0x98] sm:$0xf]
    %v5884 = vld [vmem:[%s16 + $0x9c] sm:$0xf]
    %v5885 = vpack.c.b16 %v5259, %v5258
    %v5886 = vpack.c.b16 %v5261, %v5260
    %v5887 = vpack.c.b16 %v5263, %v5262
    %v5888 = vpack.c.b16 %v5265, %v5264
    %v5889 = vpack.c.b16 %v5725, %v5725
    %v5898 = vunpack.c.l.b16 %v5877
    %v5899 = vunpack.c.l.b16 %v5878
    %v5900 = vunpack.c.l.b16 %v5879
    %v5901 = vunpack.c.l.b16 %v5880
    %v5902 = vunpack.c.l.b16 %v5881
    %v5903 = vunpack.c.l.b16 %v5882
    %v5904 = vunpack.c.l.b16 %v5883
    %v5905 = vunpack.c.l.b16 %v5884
    %v5906 = vpack.c.b16 %v5899, %v5898
    %v5907 = vpack.c.b16 %v5901, %v5900
    %v5908 = vpack.c.b16 %v5903, %v5902
    %v5909 = vpack.c.b16 %v5905, %v5904
    %v5915 = vsel %vm5305, %v5885, 0
    %v5918 = vsel %vm5305, %v5886, 0
    %v5921 = vsel %vm5305, %v5887, 0
    %v5924 = vsel %vm5305, %v5888, 0
    %v5927 = vsel %vm5305, %v5889, 0
    %5929 = vmatprep.subr.bf16.mxu0 0
    %5930 = vmatpush1.bf16.msra.mxu0 %v5906
    %5931 = vmatprep.subr.bf16.mxu0 0
    %5932 = vmatpush1.bf16.msra.mxu0 %v5907
    %5933 = vmatprep.subr.bf16.mxu0 0
    %5934 = vmatpush1.bf16.msra.mxu0 %v5908
    %5935 = vmatprep.subr.bf16.mxu0 0
    %5936 = vmatpush1.bf16.msra.mxu0 %v5909
    %5937 = vmatprep.subr.bf16.mxu0 0
    %5938 = vmatpush1.bf16.msra.mxu0 0
    %5939 = vmatprep.subr.bf16.mxu0 0
    %5940 = vmatpush1.bf16.msra.mxu0 0
    %5941 = vmatprep.subr.bf16.mxu0 0
    %5942 = vmatpush1.bf16.msra.mxu0 0
    %5943 = vmatprep.subr.bf16.mxu0 0
    %5944 = vmatpush1.bf16.msra.mxu0 0
    %5945 = vmatprep.subr.bf16.mxu0 0
    %5946 = vmatpush1.bf16.msra.mxu0 0
    %5947 = vmatprep.subr.bf16.mxu0 0
    %5948 = vmatpush1.bf16.msra.mxu0 0
    %5949 = vmatprep.subr.bf16.mxu0 0
    %5950 = vmatpush1.bf16.msra.mxu0 0
    %5951 = vmatprep.subr.bf16.mxu0 0
    %5952 = vmatpush1.bf16.msra.mxu0 0
    %5953 = vmatprep.subr.bf16.mxu0 0
    %5954 = vmatpush1.bf16.msra.mxu0 0
    %5955 = vmatprep.subr.bf16.mxu0 0
    %5956 = vmatpush1.bf16.msra.mxu0 0
    %5957 = vmatprep.subr.bf16.mxu0 0
    %5958 = vmatpush1.bf16.msra.mxu0 0
    %5959 = vmatprep.subr.bf16.mxu0 0
    %5960 = vmatpush1.bf16.msra.mxu0 0
    %5961 = vmatprep.mubr.bf16.mxu0 0
    %5962 = vmatmul.mubr.bf16.gmra.mrb[0].mxu0 %v5915
    %v5963 = vpop.f32.mrb[0].mxu0
    %v5964 = vadd.f32 0.0, %v5963
    %v5965 = vpop.f32.mrb[0].mxu0
    %v5966 = vpop.f32.mrb[0].mxu0
    %v5967 = vadd.f32 0.0, %v5966
    %v5968 = vpop.f32.mrb[0].mxu0
    %5969 = vmatprep.mubr.bf16.mxu0 0
    %5970 = vmatmul.mubr.bf16.gmra.mrb[0].mxu0 %v5918
    %v5971 = vpop.f32.mrb[0].mxu0
    %v5972 = vadd.f32 0.0, %v5971
    %v5973 = vpop.f32.mrb[0].mxu0
    %v5974 = vpop.f32.mrb[0].mxu0
    %v5975 = vadd.f32 0.0, %v5974
    %v5976 = vpop.f32.mrb[0].mxu0
    %5977 = vmatprep.mubr.bf16.mxu0 0
    %5978 = vmatmul.mubr.bf16.gmra.mrb[0].mxu0 %v5921
    %v5979 = vpop.f32.mrb[0].mxu0
    %v5980 = vadd.f32 0.0, %v5979
    %v5981 = vpop.f32.mrb[0].mxu0
    %v5982 = vpop.f32.mrb[0].mxu0
    %v5983 = vadd.f32 0.0, %v5982
    %v5984 = vpop.f32.mrb[0].mxu0
    %5985 = vmatprep.mubr.bf16.mxu0 0
    %5986 = vmatmul.mubr.bf16.gmra.mrb[0].mxu0 %v5924
    %v5987 = vpop.f32.mrb[0].mxu0
    %v5988 = vadd.f32 0.0, %v5987
    %v5989 = vpop.f32.mrb[0].mxu0
    %v5990 = vpop.f32.mrb[0].mxu0
    %v5991 = vadd.f32 0.0, %v5990
    %v5992 = vpop.f32.mrb[0].mxu0
    %5993 = vmatprep.mubr.bf16.mxu0 0
    %5994 = vmatmul.mubr.bf16.gmra.mrb[0].mxu0 %v5927
    %v5995 = vpop.f32.mrb[0].mxu0
    %v5996 = vadd.f32 0.0, %v5995
    %v5997 = vpop.f32.mrb[0].mxu0
    %v5998 = vpop.f32.mrb[0].mxu0
    %v5999 = vpop.f32.mrb[0].mxu0
    %6000 = vdwg.mxu0
    %v6001 = vadd.f32 %v5868, %v5964
    %v6002 = vadd.f32 %v5869, %v5967
    %v6003 = vadd.f32 %v5870, %v5972
    %v6004 = vadd.f32 %v5871, %v5975
    %v6005 = vadd.f32 %v5872, %v5980
    %v6006 = vadd.f32 %v5873, %v5983
    %v6007 = vadd.f32 %v5874, %v5988
    %v6008 = vadd.f32 %v5875, %v5991
    %v6009 = vadd.f32 %v5876, %v5996
    %v6010 = vld [vmem:[#allocation3 + $0x4] sm:$0xf]
    %v6011 = vld [vmem:[#allocation3 + $0x8] sm:$0xf]
    %v6012 = vld [vmem:[#allocation3 + $0xc] sm:$0xf]
    %v6013 = vld [vmem:[#allocation3 + $0x10] sm:$0xf]
    %v6014 = vld [vmem:[#allocation3 + $0x14] sm:$0xf]
    %v6015 = vld [vmem:[#allocation3 + $0x18] sm:$0xf]
    %v6016 = vld [vmem:[#allocation3 + $0x1c] sm:$0xf]
    %v6017 = vld [vmem:[#allocation3 + $0x20] sm:$0xf]
    %v6018 = vld [vmem:[#allocation3 + $0x24] sm:$0xf]
    %v6019 = vld [vmem:[#allocation3 + $0x28] sm:$0x1]
    %v6020 = vld [vmem:[%s16 + $0xa0] sm:$0xf]
    %v6021 = vld [vmem:[%s16 + $0xa4] sm:$0xf]
    %v6022 = vld [vmem:[%s16 + $0xa8] sm:$0xf]
    %v6023 = vld [vmem:[%s16 + $0xac] sm:$0xf]
    %v6024 = vld [vmem:[%s16 + $0xb0] sm:$0xf]
    %v6025 = vld [vmem:[%s16 + $0xb4] sm:$0xf]
    %v6026 = vld [vmem:[%s16 + $0xb8] sm:$0xf]
    %v6027 = vld [vmem:[%s16 + $0xbc] sm:$0xf]
    %v6038 = vunpack.c.l.b16 %v6010
    %v6039 = vunpack.c.l.b16 %v6011
    %v6040 = vunpack.c.l.b16 %v6012
    %v6041 = vunpack.c.l.b16 %v6013
    %v6042 = vunpack.c.l.b16 %v6014
    %v6043 = vunpack.c.l.b16 %v6015
    %v6044 = vunpack.c.l.b16 %v6016
    %v6045 = vunpack.c.l.b16 %v6017
    %v6046 = vunpack.c.l.b16 %v6018
    %v6047 = vunpack.c.l.b16 %v6019
    %v6048 = vpack.c.b16 %v6039, %v6038
    %v6049 = vpack.c.b16 %v6041, %v6040
    %v6050 = vpack.c.b16 %v6043, %v6042
    %v6051 = vpack.c.b16 %v6045, %v6044
    %v6052 = vpack.c.b16 %v6047, %v6046
    %v6054 = vshrl.u32 %v6048, 16
    %v6056 = vshll.u32 %v6048, 16
    %v6058 = vrot.slane %v6056, 1
    %v6059 = vor.u32 %v6054, %v6058
    %v6061 = vshll.u32 %v6049, 16
    %v6063 = vrot.slane %v6061, 1
    %v6064 = vsel %vm90, %v6059, %v6063
    %v6065 = vshrl.u32 %v6049, 16
    %v6067 = vor.u32 %v6065, %v6063
    %v6069 = vshll.u32 %v6050, 16
    %v6071 = vrot.slane %v6069, 1
    %v6072 = vsel %vm90, %v6067, %v6071
    %v6073 = vshrl.u32 %v6050, 16
    %v6075 = vor.u32 %v6073, %v6071
    %v6077 = vshll.u32 %v6051, 16
    %v6079 = vrot.slane %v6077, 1
    %v6080 = vsel %vm90, %v6075, %v6079
    %v6081 = vshrl.u32 %v6051, 16
    %v6083 = vor.u32 %v6081, %v6079
    %v6085 = vshll.u32 %v6052, 16
    %v6087 = vrot.slane %v6085, 1
    %v6088 = vsel %vm90, %v6083, %v6087
    %v6089 = vshrl.u32 %v6052, 16
    %v6091 = vor.u32 %v6089, %v6087
    %v6100 = vunpack.c.l.b16 %v6020
    %v6101 = vunpack.c.l.b16 %v6021
    %v6102 = vunpack.c.l.b16 %v6022
    %v6103 = vunpack.c.l.b16 %v6023
    %v6104 = vunpack.c.l.b16 %v6024
    %v6105 = vunpack.c.l.b16 %v6025
    %v6106 = vunpack.c.l.b16 %v6026
    %v6107 = vunpack.c.l.b16 %v6027
    %v6108 = vpack.c.b16 %v6101, %v6100
    %v6109 = vpack.c.b16 %v6103, %v6102
    %v6110 = vpack.c.b16 %v6105, %v6104
    %v6111 = vpack.c.b16 %v6107, %v6106
    %v6117 = vsel %vm5305, %v6064, 0
    %v6120 = vsel %vm5305, %v6072, 0
    %v6123 = vsel %vm5305, %v6080, 0
    %v6126 = vsel %vm5305, %v6088, 0
    %v6129 = vsel %vm5305, %v6091, 0
    %6131 = vmatprep.subr.bf16.mxu0 0
    %6132 = vmatpush1.bf16.msra.mxu0 %v6108
    %6133 = vmatprep.subr.bf16.mxu0 0
    %6134 = vmatpush1.bf16.msra.mxu0 %v6109
    %6135 = vmatprep.subr.bf16.mxu0 0
    %6136 = vmatpush1.bf16.msra.mxu0 %v6110
    %6137 = vmatprep.subr.bf16.mxu0 0
    %6138 = vmatpush1.bf16.msra.mxu0 %v6111
    %6139 = vmatprep.subr.bf16.mxu0 0
    %6140 = vmatpush1.bf16.msra.mxu0 0
    %6141 = vmatprep.subr.bf16.mxu0 0
    %6142 = vmatpush1.bf16.msra.mxu0 0
    %6143 = vmatprep.subr.bf16.mxu0 0
    %6144 = vmatpush1.bf16.msra.mxu0 0
    %6145 = vmatprep.subr.bf16.mxu0 0
    %6146 = vmatpush1.bf16.msra.mxu0 0
    %6147 = vmatprep.subr.bf16.mxu0 0
    %6148 = vmatpush1.bf16.msra.mxu0 0
    %6149 = vmatprep.subr.bf16.mxu0 0
    %6150 = vmatpush1.bf16.msra.mxu0 0
    %6151 = vmatprep.subr.bf16.mxu0 0
    %6152 = vmatpush1.bf16.msra.mxu0 0
    %6153 = vmatprep.subr.bf16.mxu0 0
    %6154 = vmatpush1.bf16.msra.mxu0 0
    %6155 = vmatprep.subr.bf16.mxu0 0
    %6156 = vmatpush1.bf16.msra.mxu0 0
    %6157 = vmatprep.subr.bf16.mxu0 0
    %6158 = vmatpush1.bf16.msra.mxu0 0
    %6159 = vmatprep.subr.bf16.mxu0 0
    %6160 = vmatpush1.bf16.msra.mxu0 0
    %6161 = vmatprep.subr.bf16.mxu0 0
    %6162 = vmatpush1.bf16.msra.mxu0 0
    %6163 = vmatprep.mubr.bf16.mxu0 0
    %6164 = vmatmul.mubr.bf16.gmra.mrb[0].mxu0 %v6117
    %v6165 = vpop.f32.mrb[0].mxu0
    %v6166 = vadd.f32 0.0, %v6165
    %v6167 = vpop.f32.mrb[0].mxu0
    %v6168 = vpop.f32.mrb[0].mxu0
    %v6169 = vadd.f32 0.0, %v6168
    %v6170 = vpop.f32.mrb[0].mxu0
    %6171 = vmatprep.mubr.bf16.mxu0 0
    %6172 = vmatmul.mubr.bf16.gmra.mrb[0].mxu0 %v6120
    %v6173 = vpop.f32.mrb[0].mxu0
    %v6174 = vadd.f32 0.0, %v6173
    %v6175 = vpop.f32.mrb[0].mxu0
    %v6176 = vpop.f32.mrb[0].mxu0
    %v6177 = vadd.f32 0.0, %v6176
    %v6178 = vpop.f32.mrb[0].mxu0
    %6179 = vmatprep.mubr.bf16.mxu0 0
    %6180 = vmatmul.mubr.bf16.gmra.mrb[0].mxu0 %v6123
    %v6181 = vpop.f32.mrb[0].mxu0
    %v6182 = vadd.f32 0.0, %v6181
    %v6183 = vpop.f32.mrb[0].mxu0
    %v6184 = vpop.f32.mrb[0].mxu0
    %v6185 = vadd.f32 0.0, %v6184
    %v6186 = vpop.f32.mrb[0].mxu0
    %6187 = vmatprep.mubr.bf16.mxu0 0
    %6188 = vmatmul.mubr.bf16.gmra.mrb[0].mxu0 %v6126
    %v6189 = vpop.f32.mrb[0].mxu0
    %v6190 = vadd.f32 0.0, %v6189
    %v6191 = vpop.f32.mrb[0].mxu0
    %v6192 = vpop.f32.mrb[0].mxu0
    %v6193 = vadd.f32 0.0, %v6192
    %v6194 = vpop.f32.mrb[0].mxu0
    %6195 = vmatprep.mubr.bf16.mxu0 0
    %6196 = vmatmul.mubr.bf16.gmra.mrb[0].mxu0 %v6129
    %v6197 = vpop.f32.mrb[0].mxu0
    %v6198 = vadd.f32 0.0, %v6197
    %v6199 = vpop.f32.mrb[0].mxu0
    %v6200 = vpop.f32.mrb[0].mxu0
    %v6201 = vpop.f32.mrb[0].mxu0
    %6202 = vdwg.mxu0
    %v6203 = vadd.f32 %v6001, %v6166
    %v6204 = vadd.f32 %v6002, %v6169
    %v6205 = vadd.f32 %v6003, %v6174
    %v6206 = vadd.f32 %v6004, %v6177
    %v6207 = vadd.f32 %v6005, %v6182
    %v6208 = vadd.f32 %v6006, %v6185
    %v6209 = vadd.f32 %v6007, %v6190
    %v6210 = vadd.f32 %v6008, %v6193
    %v6211 = vadd.f32 %v6009, %v6198
    %v6212 = vld [vmem:[#allocation3 + $0x4] sm:$0xe]
    %v6213 = vld [vmem:[#allocation3 + $0x28] sm:$0x3]
    %v6214 = vld [vmem:[%s16 + $0xc0] sm:$0xf]
    %v6215 = vld [vmem:[%s16 + $0xc4] sm:$0xf]
    %v6216 = vld [vmem:[%s16 + $0xc8] sm:$0xf]
    %v6217 = vld [vmem:[%s16 + $0xcc] sm:$0xf]
    %v6218 = vld [vmem:[%s16 + $0xd0] sm:$0xf]
    %v6219 = vld [vmem:[%s16 + $0xd4] sm:$0xf]
    %v6220 = vld [vmem:[%s16 + $0xd8] sm:$0xf]
    %v6221 = vld [vmem:[%s16 + $0xdc] sm:$0xf]
    %v6224 = vunpack.c.l.b16 %v6212
    %v6225 = vunpack.c.l.b16 %v6213
    %v6226 = vpack.c.b16 %v6039, %v6224
    %v6227 = vpack.c.b16 %v6225, %v6046
    %v6229 = vshrl.u32 %v6226, 16
    %v6231 = vrot.slane %v6229, 1
    %v6232 = vshll.u32 %v6226, 16
    %v6234 = vrot.slane %v6232, 2
    %v6235 = vor.u32 %v6231, %v6234
    %v6236 = vrot.slane %v6065, 1
    %v6237 = vrot.slane %v6061, 2
    %v6238 = vor.u32 %v6236, %v6237
    %v6239 = vsel %vm1181, %v6235, %v6238
    %v6240 = vrot.slane %v6073, 1
    %v6241 = vrot.slane %v6069, 2
    %v6242 = vor.u32 %v6240, %v6241
    %v6243 = vsel %vm1181, %v6238, %v6242
    %v6244 = vrot.slane %v6081, 1
    %v6245 = vrot.slane %v6077, 2
    %v6246 = vor.u32 %v6244, %v6245
    %v6247 = vsel %vm1181, %v6242, %v6246
    %v6249 = vshrl.u32 %v6227, 16
    %v6251 = vrot.slane %v6249, 1
    %v6252 = vshll.u32 %v6227, 16
    %v6254 = vrot.slane %v6252, 2
    %v6255 = vor.u32 %v6251, %v6254
    %v6256 = vsel %vm1181, %v6246, %v6255
    %v6265 = vunpack.c.l.b16 %v6214
    %v6266 = vunpack.c.l.b16 %v6215
    %v6267 = vunpack.c.l.b16 %v6216
    %v6268 = vunpack.c.l.b16 %v6217
    %v6269 = vunpack.c.l.b16 %v6218
    %v6270 = vunpack.c.l.b16 %v6219
    %v6271 = vunpack.c.l.b16 %v6220
    %v6272 = vunpack.c.l.b16 %v6221
    %v6273 = vpack.c.b16 %v6266, %v6265
    %v6274 = vpack.c.b16 %v6268, %v6267
    %v6275 = vpack.c.b16 %v6270, %v6269
    %v6276 = vpack.c.b16 %v6272, %v6271
    %v6282 = vsel %vm5305, %v6239, 0
    %v6285 = vsel %vm5305, %v6243, 0
    %v6288 = vsel %vm5305, %v6247, 0
    %v6291 = vsel %vm5305, %v6256, 0
    %v6294 = vsel %vm5305, %v6255, 0
    %6296 = vmatprep.subr.bf16.mxu0 0
    %6297 = vmatpush1.bf16.msra.mxu0 %v6273
    %6298 = vmatprep.subr.bf16.mxu0 0
    %6299 = vmatpush1.bf16.msra.mxu0 %v6274
    %6300 = vmatprep.subr.bf16.mxu0 0
    %6301 = vmatpush1.bf16.msra.mxu0 %v6275
    %6302 = vmatprep.subr.bf16.mxu0 0
    %6303 = vmatpush1.bf16.msra.mxu0 %v6276
    %6304 = vmatprep.subr.bf16.mxu0 0
    %6305 = vmatpush1.bf16.msra.mxu0 0
    %6306 = vmatprep.subr.bf16.mxu0 0
    %6307 = vmatpush1.bf16.msra.mxu0 0
    %6308 = vmatprep.subr.bf16.mxu0 0
    %6309 = vmatpush1.bf16.msra.mxu0 0
    %6310 = vmatprep.subr.bf16.mxu0 0
    %6311 = vmatpush1.bf16.msra.mxu0 0
    %6312 = vmatprep.subr.bf16.mxu0 0
    %6313 = vmatpush1.bf16.msra.mxu0 0
    %6314 = vmatprep.subr.bf16.mxu0 0
    %6315 = vmatpush1.bf16.msra.mxu0 0
    %6316 = vmatprep.subr.bf16.mxu0 0
    %6317 = vmatpush1.bf16.msra.mxu0 0
    %6318 = vmatprep.subr.bf16.mxu0 0
    %6319 = vmatpush1.bf16.msra.mxu0 0
    %6320 = vmatprep.subr.bf16.mxu0 0
    %6321 = vmatpush1.bf16.msra.mxu0 0
    %6322 = vmatprep.subr.bf16.mxu0 0
    %6323 = vmatpush1.bf16.msra.mxu0 0
    %6324 = vmatprep.subr.bf16.mxu0 0
    %6325 = vmatpush1.bf16.msra.mxu0 0
    %6326 = vmatprep.subr.bf16.mxu0 0
    %6327 = vmatpush1.bf16.msra.mxu0 0
    %6328 = vmatprep.mubr.bf16.mxu0 0
    %6329 = vmatmul.mubr.bf16.gmra.mrb[0].mxu0 %v6282
    %v6330 = vpop.f32.mrb[0].mxu0
    %v6331 = vadd.f32 0.0, %v6330
    %v6332 = vpop.f32.mrb[0].mxu0
    %v6333 = vpop.f32.mrb[0].mxu0
    %v6334 = vadd.f32 0.0, %v6333
    %v6335 = vpop.f32.mrb[0].mxu0
    %6336 = vmatprep.mubr.bf16.mxu0 0
    %6337 = vmatmul.mubr.bf16.gmra.mrb[0].mxu0 %v6285
    %v6338 = vpop.f32.mrb[0].mxu0
    %v6339 = vadd.f32 0.0, %v6338
    %v6340 = vpop.f32.mrb[0].mxu0
    %v6341 = vpop.f32.mrb[0].mxu0
    %v6342 = vadd.f32 0.0, %v6341
    %v6343 = vpop.f32.mrb[0].mxu0
    %6344 = vmatprep.mubr.bf16.mxu0 0
    %6345 = vmatmul.mubr.bf16.gmra.mrb[0].mxu0 %v6288
    %v6346 = vpop.f32.mrb[0].mxu0
    %v6347 = vadd.f32 0.0, %v6346
    %v6348 = vpop.f32.mrb[0].mxu0
    %v6349 = vpop.f32.mrb[0].mxu0
    %v6350 = vadd.f32 0.0, %v6349
    %v6351 = vpop.f32.mrb[0].mxu0
    %6352 = vmatprep.mubr.bf16.mxu0 0
    %6353 = vmatmul.mubr.bf16.gmra.mrb[0].mxu0 %v6291
    %v6354 = vpop.f32.mrb[0].mxu0
    %v6355 = vadd.f32 0.0, %v6354
    %v6356 = vpop.f32.mrb[0].mxu0
    %v6357 = vpop.f32.mrb[0].mxu0
    %v6358 = vadd.f32 0.0, %v6357
    %v6359 = vpop.f32.mrb[0].mxu0
    %6360 = vmatprep.mubr.bf16.mxu0 0
    %6361 = vmatmul.mubr.bf16.gmra.mrb[0].mxu0 %v6294
    %v6362 = vpop.f32.mrb[0].mxu0
    %v6363 = vadd.f32 0.0, %v6362
    %v6364 = vpop.f32.mrb[0].mxu0
    %v6365 = vpop.f32.mrb[0].mxu0
    %v6366 = vpop.f32.mrb[0].mxu0
    %6367 = vdwg.mxu0
    %v6368 = vadd.f32 %v6203, %v6331
    %v6369 = vadd.f32 %v6204, %v6334
    %v6370 = vadd.f32 %v6205, %v6339
    %v6371 = vadd.f32 %v6206, %v6342
    %v6372 = vadd.f32 %v6207, %v6347
    %v6373 = vadd.f32 %v6208, %v6350
    %v6374 = vadd.f32 %v6209, %v6355
    %v6375 = vadd.f32 %v6210, %v6358
    %v6376 = vadd.f32 %v6211, %v6363
    %v6377 = vld [vmem:[#allocation3 + $0x4] sm:$0xc]
    %v6378 = vld [vmem:[%s16 + $0xe0] sm:$0xf]
    %v6379 = vld [vmem:[%s16 + $0xe4] sm:$0xf]
    %v6380 = vld [vmem:[%s16 + $0xe8] sm:$0xf]
    %v6381 = vld [vmem:[%s16 + $0xec] sm:$0xf]
    %v6382 = vld [vmem:[%s16 + $0xf0] sm:$0xf]
    %v6383 = vld [vmem:[%s16 + $0xf4] sm:$0xf]
    %v6384 = vld [vmem:[%s16 + $0xf8] sm:$0xf]
    %v6385 = vld [vmem:[%s16 + $0xfc] sm:$0xf]
    %v6387 = vunpack.c.l.b16 %v6377
    %v6388 = vpack.c.b16 %v6039, %v6387
    %v6389 = vrot.slane %v6388, 2
    %v6390 = vrot.slane %v6049, 2
    %v6391 = vsel %vm1068, %v6389, %v6390
    %v6392 = vrot.slane %v6050, 2
    %v6393 = vsel %vm1068, %v6390, %v6392
    %v6394 = vrot.slane %v6051, 2
    %v6395 = vsel %vm1068, %v6392, %v6394
    %v6396 = vrot.slane %v6227, 2
    %v6397 = vsel %vm1068, %v6394, %v6396
    %v6406 = vunpack.c.l.b16 %v6378
    %v6407 = vunpack.c.l.b16 %v6379
    %v6408 = vunpack.c.l.b16 %v6380
    %v6409 = vunpack.c.l.b16 %v6381
    %v6410 = vunpack.c.l.b16 %v6382
    %v6411 = vunpack.c.l.b16 %v6383
    %v6412 = vunpack.c.l.b16 %v6384
    %v6413 = vunpack.c.l.b16 %v6385
    %v6414 = vpack.c.b16 %v6407, %v6406
    %v6415 = vpack.c.b16 %v6409, %v6408
    %v6416 = vpack.c.b16 %v6411, %v6410
    %v6417 = vpack.c.b16 %v6413, %v6412
    %v6423 = vsel %vm5305, %v6391, 0
    %v6426 = vsel %vm5305, %v6393, 0
    %v6429 = vsel %vm5305, %v6395, 0
    %v6432 = vsel %vm5305, %v6397, 0
    %v6435 = vsel %vm5305, %v6396, 0
    %6437 = vmatprep.subr.bf16.mxu0 0
    %6438 = vmatpush1.bf16.msra.mxu0 %v6414
    %6439 = vmatprep.subr.bf16.mxu0 0
    %6440 = vmatpush1.bf16.msra.mxu0 %v6415
    %6441 = vmatprep.subr.bf16.mxu0 0
    %6442 = vmatpush1.bf16.msra.mxu0 %v6416
    %6443 = vmatprep.subr.bf16.mxu0 0
    %6444 = vmatpush1.bf16.msra.mxu0 %v6417
    %6445 = vmatprep.subr.bf16.mxu0 0
    %6446 = vmatpush1.bf16.msra.mxu0 0
    %6447 = vmatprep.subr.bf16.mxu0 0
    %6448 = vmatpush1.bf16.msra.mxu0 0
    %6449 = vmatprep.subr.bf16.mxu0 0
    %6450 = vmatpush1.bf16.msra.mxu0 0
    %6451 = vmatprep.subr.bf16.mxu0 0
    %6452 = vmatpush1.bf16.msra.mxu0 0
    %6453 = vmatprep.subr.bf16.mxu0 0
    %6454 = vmatpush1.bf16.msra.mxu0 0
    %6455 = vmatprep.subr.bf16.mxu0 0
    %6456 = vmatpush1.bf16.msra.mxu0 0
    %6457 = vmatprep.subr.bf16.mxu0 0
    %6458 = vmatpush1.bf16.msra.mxu0 0
    %6459 = vmatprep.subr.bf16.mxu0 0
    %6460 = vmatpush1.bf16.msra.mxu0 0
    %6461 = vmatprep.subr.bf16.mxu0 0
    %6462 = vmatpush1.bf16.msra.mxu0 0
    %6463 = vmatprep.subr.bf16.mxu0 0
    %6464 = vmatpush1.bf16.msra.mxu0 0
    %6465 = vmatprep.subr.bf16.mxu0 0
    %6466 = vmatpush1.bf16.msra.mxu0 0
    %6467 = vmatprep.subr.bf16.mxu0 0
    %6468 = vmatpush1.bf16.msra.mxu0 0
    %6469 = vmatprep.mubr.bf16.mxu0 0
    %6470 = vmatmul.mubr.bf16.gmra.mrb[0].mxu0 %v6423
    %v6471 = vpop.f32.mrb[0].mxu0
    %v6472 = vadd.f32 0.0, %v6471
    %v6473 = vpop.f32.mrb[0].mxu0
    %v6474 = vpop.f32.mrb[0].mxu0
    %v6475 = vadd.f32 0.0, %v6474
    %v6476 = vpop.f32.mrb[0].mxu0
    %6477 = vmatprep.mubr.bf16.mxu0 0
    %6478 = vmatmul.mubr.bf16.gmra.mrb[0].mxu0 %v6426
    %v6479 = vpop.f32.mrb[0].mxu0
    %v6480 = vadd.f32 0.0, %v6479
    %v6481 = vpop.f32.mrb[0].mxu0
    %v6482 = vpop.f32.mrb[0].mxu0
    %v6483 = vadd.f32 0.0, %v6482
    %v6484 = vpop.f32.mrb[0].mxu0
    %6485 = vmatprep.mubr.bf16.mxu0 0
    %6486 = vmatmul.mubr.bf16.gmra.mrb[0].mxu0 %v6429
    %v6487 = vpop.f32.mrb[0].mxu0
    %v6488 = vadd.f32 0.0, %v6487
    %v6489 = vpop.f32.mrb[0].mxu0
    %v6490 = vpop.f32.mrb[0].mxu0
    %v6491 = vadd.f32 0.0, %v6490
    %v6492 = vpop.f32.mrb[0].mxu0
    %6493 = vmatprep.mubr.bf16.mxu0 0
    %6494 = vmatmul.mubr.bf16.gmra.mrb[0].mxu0 %v6432
    %v6495 = vpop.f32.mrb[0].mxu0
    %v6496 = vadd.f32 0.0, %v6495
    %v6497 = vpop.f32.mrb[0].mxu0
    %v6498 = vpop.f32.mrb[0].mxu0
    %v6499 = vadd.f32 0.0, %v6498
    %v6500 = vpop.f32.mrb[0].mxu0
    %6501 = vmatprep.mubr.bf16.mxu0 0
    %6502 = vmatmul.mubr.bf16.gmra.mrb[0].mxu0 %v6435
    %v6503 = vpop.f32.mrb[0].mxu0
    %v6504 = vadd.f32 0.0, %v6503
    %v6505 = vpop.f32.mrb[0].mxu0
    %v6506 = vpop.f32.mrb[0].mxu0
    %v6507 = vpop.f32.mrb[0].mxu0
    %6508 = vdwg.mxu0
    %v6509 = vadd.f32 %v6368, %v6472
    %v6510 = vadd.f32 %v6369, %v6475
    %v6511 = vadd.f32 %v6370, %v6480
    %v6512 = vadd.f32 %v6371, %v6483
    %v6513 = vadd.f32 %v6372, %v6488
    %v6514 = vadd.f32 %v6373, %v6491
    %v6515 = vadd.f32 %v6374, %v6496
    %v6516 = vadd.f32 %v6375, %v6499
    %v6517 = vadd.f32 %v6376, %v6504
    %v6518 = vld [vmem:[#allocation3 + $0x28] sm:$0x7]
    %v6519 = vld [vmem:[%s16 + $0x100] sm:$0xf]
    %v6520 = vld [vmem:[%s16 + $0x104] sm:$0xf]
    %v6521 = vld [vmem:[%s16 + $0x108] sm:$0xf]
    %v6522 = vld [vmem:[%s16 + $0x10c] sm:$0xf]
    %v6523 = vld [vmem:[%s16 + $0x110] sm:$0xf]
    %v6524 = vld [vmem:[%s16 + $0x114] sm:$0xf]
    %v6525 = vld [vmem:[%s16 + $0x118] sm:$0xf]
    %v6526 = vld [vmem:[%s16 + $0x11c] sm:$0xf]
    %v6528 = vunpack.c.l.b16 %v6518
    %v6529 = vpack.c.b16 %v6528, %v6046
    %v6531 = vshrl.u32 %v6388, 16
    %v6533 = vrot.slane %v6531, 2
    %v6534 = vshll.u32 %v6388, 16
    %v6536 = vrot.slane %v6534, 3
    %v6537 = vor.u32 %v6533, %v6536
    %v6538 = vrot.slane %v6065, 2
    %v6539 = vrot.slane %v6061, 3
    %v6540 = vor.u32 %v6538, %v6539
    %v6541 = vsel %vm1333, %v6537, %v6540
    %v6542 = vrot.slane %v6073, 2
    %v6543 = vrot.slane %v6069, 3
    %v6544 = vor.u32 %v6542, %v6543
    %v6545 = vsel %vm1333, %v6540, %v6544
    %v6546 = vrot.slane %v6081, 2
    %v6547 = vrot.slane %v6077, 3
    %v6548 = vor.u32 %v6546, %v6547
    %v6549 = vsel %vm1333, %v6544, %v6548
    %v6551 = vshrl.u32 %v6529, 16
    %v6553 = vrot.slane %v6551, 2
    %v6554 = vshll.u32 %v6529, 16
    %v6556 = vrot.slane %v6554, 3
    %v6557 = vor.u32 %v6553, %v6556
    %v6558 = vsel %vm1333, %v6548, %v6557
    %v6567 = vunpack.c.l.b16 %v6519
    %v6568 = vunpack.c.l.b16 %v6520
    %v6569 = vunpack.c.l.b16 %v6521
    %v6570 = vunpack.c.l.b16 %v6522
    %v6571 = vunpack.c.l.b16 %v6523
    %v6572 = vunpack.c.l.b16 %v6524
    %v6573 = vunpack.c.l.b16 %v6525
    %v6574 = vunpack.c.l.b16 %v6526
    %v6575 = vpack.c.b16 %v6568, %v6567
    %v6576 = vpack.c.b16 %v6570, %v6569
    %v6577 = vpack.c.b16 %v6572, %v6571
    %v6578 = vpack.c.b16 %v6574, %v6573
    %v6584 = vsel %vm5305, %v6541, 0
    %v6587 = vsel %vm5305, %v6545, 0
    %v6590 = vsel %vm5305, %v6549, 0
    %v6593 = vsel %vm5305, %v6558, 0
    %v6596 = vsel %vm5305, %v6557, 0
    %6598 = vmatprep.subr.bf16.mxu0 0
    %6599 = vmatpush1.bf16.msra.mxu0 %v6575
    %6600 = vmatprep.subr.bf16.mxu0 0
    %6601 = vmatpush1.bf16.msra.mxu0 %v6576
    %6602 = vmatprep.subr.bf16.mxu0 0
    %6603 = vmatpush1.bf16.msra.mxu0 %v6577
    %6604 = vmatprep.subr.bf16.mxu0 0
    %6605 = vmatpush1.bf16.msra.mxu0 %v6578
    %6606 = vmatprep.subr.bf16.mxu0 0
    %6607 = vmatpush1.bf16.msra.mxu0 0
    %6608 = vmatprep.subr.bf16.mxu0 0
    %6609 = vmatpush1.bf16.msra.mxu0 0
    %6610 = vmatprep.subr.bf16.mxu0 0
    %6611 = vmatpush1.bf16.msra.mxu0 0
    %6612 = vmatprep.subr.bf16.mxu0 0
    %6613 = vmatpush1.bf16.msra.mxu0 0
    %6614 = vmatprep.subr.bf16.mxu0 0
    %6615 = vmatpush1.bf16.msra.mxu0 0
    %6616 = vmatprep.subr.bf16.mxu0 0
    %6617 = vmatpush1.bf16.msra.mxu0 0
    %6618 = vmatprep.subr.bf16.mxu0 0
    %6619 = vmatpush1.bf16.msra.mxu0 0
    %6620 = vmatprep.subr.bf16.mxu0 0
    %6621 = vmatpush1.bf16.msra.mxu0 0
    %6622 = vmatprep.subr.bf16.mxu0 0
    %6623 = vmatpush1.bf16.msra.mxu0 0
    %6624 = vmatprep.subr.bf16.mxu0 0
    %6625 = vmatpush1.bf16.msra.mxu0 0
    %6626 = vmatprep.subr.bf16.mxu0 0
    %6627 = vmatpush1.bf16.msra.mxu0 0
    %6628 = vmatprep.subr.bf16.mxu0 0
    %6629 = vmatpush1.bf16.msra.mxu0 0
    %6630 = vmatprep.mubr.bf16.mxu0 0
    %6631 = vmatmul.mubr.bf16.gmra.mrb[0].mxu0 %v6584
    %v6632 = vpop.f32.mrb[0].mxu0
    %v6633 = vadd.f32 0.0, %v6632
    %v6634 = vpop.f32.mrb[0].mxu0
    %v6635 = vpop.f32.mrb[0].mxu0
    %v6636 = vadd.f32 0.0, %v6635
    %v6637 = vpop.f32.mrb[0].mxu0
    %6638 = vmatprep.mubr.bf16.mxu0 0
    %6639 = vmatmul.mubr.bf16.gmra.mrb[0].mxu0 %v6587
    %v6640 = vpop.f32.mrb[0].mxu0
    %v6641 = vadd.f32 0.0, %v6640
    %v6642 = vpop.f32.mrb[0].mxu0
    %v6643 = vpop.f32.mrb[0].mxu0
    %v6644 = vadd.f32 0.0, %v6643
    %v6645 = vpop.f32.mrb[0].mxu0
    %6646 = vmatprep.mubr.bf16.mxu0 0
    %6647 = vmatmul.mubr.bf16.gmra.mrb[0].mxu0 %v6590
    %v6648 = vpop.f32.mrb[0].mxu0
    %v6649 = vadd.f32 0.0, %v6648
    %v6650 = vpop.f32.mrb[0].mxu0
    %v6651 = vpop.f32.mrb[0].mxu0
    %v6652 = vadd.f32 0.0, %v6651
    %v6653 = vpop.f32.mrb[0].mxu0
    %6654 = vmatprep.mubr.bf16.mxu0 0
    %6655 = vmatmul.mubr.bf16.gmra.mrb[0].mxu0 %v6593
    %v6656 = vpop.f32.mrb[0].mxu0
    %v6657 = vadd.f32 0.0, %v6656
    %v6658 = vpop.f32.mrb[0].mxu0
    %v6659 = vpop.f32.mrb[0].mxu0
    %v6660 = vadd.f32 0.0, %v6659
    %v6661 = vpop.f32.mrb[0].mxu0
    %6662 = vmatprep.mubr.bf16.mxu0 0
    %6663 = vmatmul.mubr.bf16.gmra.mrb[0].mxu0 %v6596
    %v6664 = vpop.f32.mrb[0].mxu0
    %v6665 = vadd.f32 0.0, %v6664
    %v6666 = vpop.f32.mrb[0].mxu0
    %v6667 = vpop.f32.mrb[0].mxu0
    %v6668 = vpop.f32.mrb[0].mxu0
    %6669 = vdwg.mxu0
    %v6670 = vadd.f32 %v6509, %v6633
    %v6671 = vadd.f32 %v6510, %v6636
    %v6672 = vadd.f32 %v6511, %v6641
    %v6673 = vadd.f32 %v6512, %v6644
    %v6674 = vadd.f32 %v6513, %v6649
    %v6675 = vadd.f32 %v6514, %v6652
    %v6676 = vadd.f32 %v6515, %v6657
    %v6677 = vadd.f32 %v6516, %v6660
    %v6678 = vadd.f32 %v6517, %v6665
    %v6679 = vld [vmem:[%s17] sm:$0x1]
    %v6681 = vlaneseq
    %v6682 = vshrl.u32 %v6681, 7
    %v6683 = vsub.s32 0, %v6682
    %v6684 = vrot.slane %v6679, %v6683
    %v6686 = vadd.f32 %v6670, %v6684
    %v6687 = vadd.f32 %v6671, %v6684
    %v6688 = vadd.f32 %v6672, %v6684
    %v6689 = vadd.f32 %v6673, %v6684
    %v6690 = vadd.f32 %v6674, %v6684
    %v6691 = vadd.f32 %v6675, %v6684
    %v6692 = vadd.f32 %v6676, %v6684
    %v6693 = vadd.f32 %v6677, %v6684
    %v6694 = vadd.f32 %v6678, %v6684
    %v6695 = vmax.f32 %v6686, 0.0
    %v6696 = vmax.f32 %v6687, 0.0
    %v6697 = vmax.f32 %v6688, 0.0
    %v6698 = vmax.f32 %v6689, 0.0
    %v6699 = vmax.f32 %v6690, 0.0
    %v6700 = vmax.f32 %v6691, 0.0
    %v6701 = vmax.f32 %v6692, 0.0
    %v6702 = vmax.f32 %v6693, 0.0
    %v6703 = vmax.f32 %v6694, 0.0
    %v6704 = vsel %vm960, %v6695, 0.0
    %v6705 = vsel %vm961, %v6696, 0.0
    %v6706 = vsel %vm962, %v6697, 0.0
    %v6707 = vsel %vm963, %v6698, 0.0
    %v6708 = vsel %vm964, %v6699, 0.0
    %v6709 = vsel %vm965, %v6700, 0.0
    %v6710 = vsel %vm966, %v6701, 0.0
    %v6711 = vsel %vm967, %v6702, 0.0
    %v6712 = vsel %vm968, %v6703, 0.0
    %v6713 = vld [vmem:[%s3] sm:$0x1]
    %v6714 = vpack.c.bf16 %v6705, %v6704
    %v6715 = vpack.c.bf16 %v6707, %v6706
    %v6716 = vpack.c.bf16 %v6709, %v6708
    %v6717 = vpack.c.bf16 %v6711, %v6710
    %v6718 = vpack.c.bf16 %v6712, %v6712
    %vm6719 = vcmask 588800
    %v6721 = vsel %vm6719, %v6713, 0
    %vm6723 = vcmask 1043456
    %v6725 = vsel %vm6723, %v6718, 0
    %6727 = vmatprep.subr.bf16.mxu0 0
    %6728 = vmatpush1.bf16.msra.mxu0 %v6714
    %6729 = vmatprep.subr.bf16.mxu0 0
    %6730 = vmatpush1.bf16.msra.mxu0 %v6715
    %6731 = vmatprep.subr.bf16.mxu0 0
    %6732 = vmatpush1.bf16.msra.mxu0 %v6716
    %6733 = vmatprep.subr.bf16.mxu0 0
    %6734 = vmatpush1.bf16.msra.mxu0 %v6717
    %6735 = vmatprep.subr.bf16.mxu0 0
    %6736 = vmatpush1.bf16.msra.mxu0 %v6725
    %6737 = vmatprep.subr.bf16.mxu0 0
    %6738 = vmatpush1.bf16.msra.mxu0 0
    %6739 = vmatprep.subr.bf16.mxu0 0
    %6740 = vmatpush1.bf16.msra.mxu0 0
    %6741 = vmatprep.subr.bf16.mxu0 0
    %6742 = vmatpush1.bf16.msra.mxu0 0
    %6743 = vmatprep.subr.bf16.mxu0 0
    %6744 = vmatpush1.bf16.msra.mxu0 0
    %6745 = vmatprep.subr.bf16.mxu0 0
    %6746 = vmatpush1.bf16.msra.mxu0 0
    %6747 = vmatprep.subr.bf16.mxu0 0
    %6748 = vmatpush1.bf16.msra.mxu0 0
    %6749 = vmatprep.subr.bf16.mxu0 0
    %6750 = vmatpush1.bf16.msra.mxu0 0
    %6751 = vmatprep.subr.bf16.mxu0 0
    %6752 = vmatpush1.bf16.msra.mxu0 0
    %6753 = vmatprep.subr.bf16.mxu0 0
    %6754 = vmatpush1.bf16.msra.mxu0 0
    %6755 = vmatprep.subr.bf16.mxu0 0
    %6756 = vmatpush1.bf16.msra.mxu0 0
    %6757 = vmatprep.subr.bf16.mxu0 0
    %6758 = vmatpush1.bf16.msra.mxu0 0
    %6759 = vmatprep.mubr.bf16.mxu0 0
    %6760 = vmatmul.mubr.bf16.gmra.mrb[0].mxu0 %v6721
    %v6761 = vpop.f32.mrb[0].mxu0
    %v6762 = vadd.f32 0.0, %v6761
    %v6763 = vpop.f32.mrb[0].mxu0
    %v6764 = vpop.f32.mrb[0].mxu0
    %v6765 = vpop.f32.mrb[0].mxu0
    %6766 = vdwg.mxu0
    %v6767 = vmul.f32 %v6762, 0.071428575
    %v6768 = vpack.c.bf16 %v6767, %v6767
    %v6769 = vld [vmem:[%s18] sm:$0xf]
    %v6770 = vld [vmem:[%s18 + $0x4] sm:$0xf]
    %v6771 = vld [vmem:[%s18 + $0x8] sm:$0xf]
    %v6772 = vld [vmem:[%s18 + $0xc] sm:$0xf]
    %v6773 = vld [vmem:[%s18 + $0x10] sm:$0xf]
    %v6774 = vld [vmem:[%s18 + $0x14] sm:$0xf]
    %v6775 = vld [vmem:[%s18 + $0x18] sm:$0xf]
    %v6776 = vld [vmem:[%s18 + $0x1c] sm:$0xf]
    %v6777 = vld [vmem:[%s19] sm:$0x1]
    %v6779 = vlaneseq
    %v6780 = vshrl.u32 %v6779, 7
    %v6781 = vsub.s32 0, %v6780
    %v6782 = vrot.slane %v6777, %v6781
    %v6792 = vunpack.c.l.b16 %v6769
    %v6793 = vunpack.c.l.b16 %v6770
    %v6794 = vunpack.c.l.b16 %v6771
    %v6795 = vunpack.c.l.b16 %v6772
    %v6796 = vunpack.c.l.b16 %v6773
    %v6797 = vunpack.c.l.b16 %v6774
    %v6798 = vunpack.c.l.b16 %v6775
    %v6799 = vunpack.c.l.b16 %v6776
    %v6800 = vpack.c.b16 %v6793, %v6792
    %v6801 = vpack.c.b16 %v6795, %v6794
    %v6802 = vpack.c.b16 %v6797, %v6796
    %v6803 = vpack.c.b16 %v6799, %v6798
    %v6809 = vsel %vm5305, %v6768, 0
    %6811 = vmatprep.subr.bf16.mxu0 0
    %6812 = vmatpush1.bf16.msra.mxu0 %v6800
    %6813 = vmatprep.subr.bf16.mxu0 0
    %6814 = vmatpush1.bf16.msra.mxu0 %v6801
    %6815 = vmatprep.subr.bf16.mxu0 0
    %6816 = vmatpush1.bf16.msra.mxu0 %v6802
    %6817 = vmatprep.subr.bf16.mxu0 0
    %6818 = vmatpush1.bf16.msra.mxu0 %v6803
    %6819 = vmatprep.subr.bf16.mxu0 0
    %6820 = vmatpush1.bf16.msra.mxu0 0
    %6821 = vmatprep.subr.bf16.mxu0 0
    %6822 = vmatpush1.bf16.msra.mxu0 0
    %6823 = vmatprep.subr.bf16.mxu0 0
    %6824 = vmatpush1.bf16.msra.mxu0 0
    %6825 = vmatprep.subr.bf16.mxu0 0
    %6826 = vmatpush1.bf16.msra.mxu0 0
    %6827 = vmatprep.subr.bf16.mxu0 0
    %6828 = vmatpush1.bf16.msra.mxu0 0
    %6829 = vmatprep.subr.bf16.mxu0 0
    %6830 = vmatpush1.bf16.msra.mxu0 0
    %6831 = vmatprep.subr.bf16.mxu0 0
    %6832 = vmatpush1.bf16.msra.mxu0 0
    %6833 = vmatprep.subr.bf16.mxu0 0
    %6834 = vmatpush1.bf16.msra.mxu0 0
    %6835 = vmatprep.subr.bf16.mxu0 0
    %6836 = vmatpush1.bf16.msra.mxu0 0
    %6837 = vmatprep.subr.bf16.mxu0 0
    %6838 = vmatpush1.bf16.msra.mxu0 0
    %6839 = vmatprep.subr.bf16.mxu0 0
    %6840 = vmatpush1.bf16.msra.mxu0 0
    %6841 = vmatprep.subr.bf16.mxu0 0
    %6842 = vmatpush1.bf16.msra.mxu0 0
    %6843 = vmatprep.mubr.bf16.mxu0 0
    %6844 = vmatmul.mubr.bf16.gmra.mrb[0].mxu0 %v6809
    %v6845 = vpop.f32.mrb[0].mxu0
    %v6846 = vadd.f32 %v6782, %v6845
    %v6847 = vpop.f32.mrb[0].mxu0
    %v6848 = vpop.f32.mrb[0].mxu0
    %v6849 = vpop.f32.mrb[0].mxu0
    %6850 = vdwg.mxu0
    %vm6851 = vcmask 156672
    %6852 = vst.msk [vmem:[#allocation4] sm:$0x3] %vm6851, %v6846
    // Predicated region
    $region82: #{cnn_forward.1} parent=1 // pred_check
      _
    $region83: #{cnn_forward.1} parent=1 // pred_check_branch
      %6854 = sbr.rel (0) target = $region85
    $region84: #{cnn_forward.1} parent=1 // pred_region
      %s6856 = ssub.s32 32, 32
      %6857 = vsyncadd [#allocation5], %s6856
      %s6859 = sshll.u32 [#allocation4], 4
      %s6860 = int_to_ptr.vmem [resolvable:$true] %s6859
      %6862 = dma.vmem_to_hbm [thread:$0]  %s6860, 32, %s20, [#allocation5]
    $region85: #{cnn_forward.1} parent=1 // pred_fallthru
      _
    // Predicated region
    $region86: #{cnn_forward.1} parent=1 // pred_check
      _
    $region87: #{cnn_forward.1} parent=1 // pred_check_branch
      %6864 = sbr.rel (0) target = $region89
    $region88: #{cnn_forward.1} parent=1 // pred_region
      %6865 = dma.done [#allocation5], 32
    $region89: #{cnn_forward.1} parent=1 // pred_fallthru
      _
    %6866 = vsyncpa [#allocation5], 1

</llo_original>
